<compile_context>
chip_gen: v5e
topology: v5e:2x2
jax: 0.10.0
libtpu: 0.0.40
codegen_flags: <defaults>
</compile_context>

<pallas_src>
import functools

import jax
import jax.numpy as jnp
from jax.experimental import pallas as pl
from jax.experimental.pallas import tpu as pltpu


def _round_up(x, m):
    return (x + m - 1) // m * m


# ---- architecture geometry constants --------------------------------------
C1_OUT = 64                 # conv1 output channels
C2_OUT = 64                 # conv2 output channels padded 50 -> 64
PHASE_HW = 6                # conv2 input (12x12) phase-split -> 6x6 grid
PHASE_ROWS = 40             # 36 grid rows padded to a sublane multiple
FEAT_DIM = PHASE_ROWS * C2_OUT   # 2560: flattened feature width seen by head
N_PAD = 128                 # padded FC width (100 / 10 / 2 -> 128 lanes)


# ----------------------------- Pallas kernels ------------------------------ #

def _conv1_kernel(xa_ref, xb_ref, xc_ref, xd_ref, w_ref, shift_ref, o_ref):
    """conv1-as-matmul (4 pool-window corners) + folded BN + maxpool + ReLU.

    xa..xd: (TM, K) bf16 im2col patches, one per 2x2 pool-window corner
    w:      (K, 64) bf16 weight (BN scale already folded into columns)
    shift:  (1, 64) f32  folded BN shift (common across corners)
    o:      (TM, 64) bf16 pooled + ReLU'd activation
    """
    w = w_ref[...]

    def branch(x_ref):
        return jnp.dot(x_ref[...], w, preferred_element_type=jnp.float32)

    m = jnp.maximum(jnp.maximum(branch(xa_ref), branch(xb_ref)),
                    jnp.maximum(branch(xc_ref), branch(xd_ref)))
    o_ref[...] = jnp.maximum(m + shift_ref[...], 0.0).astype(o_ref.dtype)


def _conv2_kernel(p00_ref, p01_ref, p10_ref, p11_ref, w_ref, shift_ref, o_ref):
    """conv2 + folded BN + 2x2 maxpool + ReLU with **in-VMEM** im2col.

    p{pi}{pj}: (TM, 64) bf16 phase blocks of the conv2 input
               (rows = (image, i*6+j) on the 6x6 phase grid, 40 rows / image)
    w:         (1600, 64) bf16 weight, rows ordered (di, dj, c), BN scale folded
    shift:     (1, 64) f32 folded BN shift
    o:         (TM, 64) bf16 pooled + ReLU'd feature rows

    For pool corner (oi,oj) and conv tap (di,dj), the needed input slab is the
    phase block (pi,pj)=((oi+di)%2,(oj+dj)%2) shifted up by q*6+r rows
    (q=(oi+di)//2, r=(oj+dj)//2).  Concatenating the 25 shifted slabs along
    lanes rebuilds the im2col matrix in VMEM (never in HBM); one K=1600 matmul
    per corner then feeds the max / shift / ReLU.  Shift wrap-around only
    touches rows that are discarded by the (zero) fc1 weight columns.
    """
    phases = ((p00_ref[...], p01_ref[...]), (p10_ref[...], p11_ref[...]))
    w = w_ref[...]

    cache = {}

    def shifted(pi, pj, off):
        key = (pi, pj, off)
        if key not in cache:
            x = phases[pi][pj]
            if off == 0:
                cache[key] = x
            else:
                cache[key] = jnp.concatenate([x[off:, :], x[:off, :]], axis=0)
        return cache[key]

    result = None
    for oi in range(2):
        for oj in range(2):
            cols = []
            for di in range(5):
                for dj in range(5):
                    pi, q = (oi + di) % 2, (oi + di) // 2
                    pj, r = (oj + dj) % 2, (oj + dj) // 2
                    cols.append(shifted(pi, pj, q * PHASE_HW + r))
            lhs = jnp.concatenate(cols, axis=1)                   # (TM, 1600)
            acc = jnp.dot(lhs, w, preferred_element_type=jnp.float32)
            result = acc if result is None else jnp.maximum(result, acc)

    o_ref[...] = jnp.maximum(result + shift_ref[...], 0.0).astype(o_ref.dtype)


def _head_kernel(f_ref,
                 wc1_ref, bc1_ref, wc2_ref, bc2_ref, wc3_ref, bc3_ref,
                 wd1_ref, bd1_ref, wd2_ref, bd2_ref,
                 cls_ref, dom_ref):
    """Entire classifier head for one batch tile; intermediates stay in VMEM.

    BN scales are folded into the weights, so each layer is dot + shift
    (+ ReLU).  Dropout is identity (eval); ReverseLayerF is identity forward.
    """
    feat = f_ref[...]                                             # (TB, 2560)

    # class classifier: fc1+bn1+relu -> (drop=id) -> fc2+bn2+relu -> fc3
    h = jnp.dot(feat, wc1_ref[...], preferred_element_type=jnp.float32)
    h = jnp.maximum(h + bc1_ref[...], 0.0).astype(jnp.bfloat16)
    h = jnp.dot(h, wc2_ref[...], preferred_element_type=jnp.float32)
    h = jnp.maximum(h + bc2_ref[...], 0.0).astype(jnp.bfloat16)
    cls_ref[...] = (jnp.dot(h, wc3_ref[...], preferred_element_type=jnp.float32)
                    + bc3_ref[...])

    # domain classifier: fc1+bn1+relu -> fc2
    g = jnp.dot(feat, wd1_ref[...], preferred_element_type=jnp.float32)
    g = jnp.maximum(g + bd1_ref[...], 0.0).astype(jnp.bfloat16)
    dom_ref[...] = (jnp.dot(g, wd2_ref[...], preferred_element_type=jnp.float32)
                    + bd2_ref[...])


# ------------------------------ Pallas wrappers ----------------------------- #

def corner_patches(x, k):
    """x: (B,H,W,C) NHWC -> 4 pool-corner im2col matrices (B*Hp*Wp, k*k*C)."""
    B, H, W, C = x.shape
    Ho, Wo = H - k + 1, W - k + 1
    Hp, Wp = Ho // 2, Wo // 2
    corners = []
    for oi in range(2):
        for oj in range(2):
            taps = []
            for di in range(k):
                for dj in range(k):
                    r0, c0 = oi + di, oj + dj
                    taps.append(x[:, r0:r0 + 2 * Hp:2, c0:c0 + 2 * Wp:2, :])
            corners.append(
                jnp.concatenate(taps, axis=-1).reshape(B * Hp * Wp, k * k * C))
    return corners, (B, Hp, Wp)


def conv1_bn_pool_relu(x, layer, tm_rows=2304):
    """x: (B,28,28,C1) bf16 -> (B,12,12,64) bf16 (conv1+bn1+pool1+relu1).

    # TODO(synk): conv1 still builds its (small, K<=80) im2col corner matrices
    # on the XLA side; an in-kernel tap reduction would remove the remaining
    # ~2x HBM amplification of this (already minor) stage.
    """
    w, shift = layer['w'], layer['shift']
    Kp, N = w.shape

    corners, (B, Hp, Wp) = corner_patches(x, 5)
    K = corners[0].shape[1]
    Mp = B * Hp * Wp
    TM = min(tm_rows, _round_up(Mp, 8))
    Mpad = _round_up(Mp, TM)

    padded = [jnp.pad(c, ((0, Mpad - Mp), (0, Kp - K))).astype(jnp.bfloat16)
              for c in corners]

    cost = pl.CostEstimate(
        flops=2 * 4 * Mpad * Kp * N,
        transcendentals=0,
        bytes_accessed=(4 * Mpad * Kp + Kp * N + Mpad * N) * 2 + N * 4)

    out = pl.pallas_call(
        _conv1_kernel,
        out_shape=jax.ShapeDtypeStruct((Mpad, N), jnp.bfloat16),
        grid=(Mpad // TM,),
        in_specs=[pl.BlockSpec((TM, Kp), lambda i: (i, 0)) for _ in range(4)]
                 + [pl.BlockSpec((Kp, N), lambda i: (0, 0)),
                    pl.BlockSpec((1, N), lambda i: (0, 0))],
        out_specs=pl.BlockSpec((TM, N), lambda i: (i, 0)),
        compiler_params=pltpu.CompilerParams(
            dimension_semantics=("parallel",)),
        cost_estimate=cost,
    )(*padded, w, shift)

    if Mpad > Mp:
        out = out[:Mp]
    return out.reshape(B, Hp, Wp, N)


def conv2_bn_pool_relu_feature(y1, layer, images_per_tile=12):
    """y1: (B,12,12,64) bf16 -> feature (B, 2560) bf16.

    The wrapper only phase-splits y1 (space-to-depth by 2, no duplication);
    all im2col duplication happens inside the kernel in VMEM.
    """
    w, shift = layer['w'], layer['shift']
    B = y1.shape[0]

    TB = max(1, min(images_per_tile, B))
    Bpad = _round_up(B, TB)
    if Bpad > B:
        y1 = jnp.pad(y1, ((0, Bpad - B), (0, 0), (0, 0), (0, 0)))

    phases = []
    for pi in range(2):
        for pj in range(2):
            p = y1[:, pi::2, pj::2, :]                       # (Bpad, 6, 6, 64)
            p = p.reshape(Bpad, PHASE_HW * PHASE_HW, C1_OUT)
            p = jnp.pad(p, ((0, 0), (0, PHASE_ROWS - PHASE_HW * PHASE_HW),
                            (0, 0)))
            phases.append(p.reshape(Bpad * PHASE_ROWS, C1_OUT))

    M = Bpad * PHASE_ROWS
    TM = TB * PHASE_ROWS

    cost = pl.CostEstimate(
        flops=2 * 4 * M * 1600 * C2_OUT,
        transcendentals=0,
        bytes_accessed=(4 * M * C1_OUT + 1600 * C2_OUT + M * C2_OUT) * 2
                       + C2_OUT * 4)

    out = pl.pallas_call(
        _conv2_kernel,
        out_shape=jax.ShapeDtypeStruct((M, C2_OUT), jnp.bfloat16),
        grid=(M // TM,),
        in_specs=[pl.BlockSpec((TM, C1_OUT), lambda i: (i, 0))
                  for _ in range(4)]
                 + [pl.BlockSpec((1600, C2_OUT), lambda i: (0, 0)),
                    pl.BlockSpec((1, C2_OUT), lambda i: (0, 0))],
        out_specs=pl.BlockSpec((TM, C2_OUT), lambda i: (i, 0)),
        compiler_params=pltpu.CompilerParams(
            dimension_semantics=("parallel",),
            vmem_limit_bytes=32 * 1024 * 1024),
        cost_estimate=cost,
    )(*phases, w, shift)

    return out[:B * PHASE_ROWS].reshape(B, FEAT_DIM)


def classifier_head(feature, head_params, batch_tile=256):
    """feature: (B, 2560) bf16 -> (class (B,128) f32, domain (B,128) f32)."""
    B, F = feature.shape
    TB = min(batch_tile, _round_up(B, 8))
    Bpad = _round_up(B, TB)
    if Bpad > B:
        feature = jnp.pad(feature, ((0, Bpad - B), (0, 0)))

    in_specs = [pl.BlockSpec((TB, F), lambda i: (i, 0))]
    for p in head_params:
        in_specs.append(pl.BlockSpec(p.shape, lambda i: (0, 0)))

    cost = pl.CostEstimate(
        flops=2 * Bpad * (2 * F * N_PAD + 3 * N_PAD * N_PAD),
        transcendentals=0,
        bytes_accessed=(Bpad * F + 2 * F * N_PAD + 3 * N_PAD * N_PAD) * 2
                       + 5 * N_PAD * 4 + 2 * Bpad * N_PAD * 4)

    cls, dom = pl.pallas_call(
        _head_kernel,
        out_shape=(jax.ShapeDtypeStruct((Bpad, N_PAD), jnp.float32),
                   jax.ShapeDtypeStruct((Bpad, N_PAD), jnp.float32)),
        grid=(Bpad // TB,),
        in_specs=in_specs,
        out_specs=(pl.BlockSpec((TB, N_PAD), lambda i: (i, 0)),
                   pl.BlockSpec((TB, N_PAD), lambda i: (i, 0))),
        compiler_params=pltpu.CompilerParams(
            dimension_semantics=("parallel",)),
        cost_estimate=cost,
    )(feature, *head_params)

    return cls[:B], dom[:B]


# --------------------------- parameter preparation -------------------------- #

def _fold_bn(bias, bn, eps=1e-5):
    gamma, beta, mean, var = bn
    scale = gamma / jnp.sqrt(var + eps)
    shift = (bias - mean) * scale + beta
    return scale, shift


def _prep_conv1(w, b, bn, in_channels):
    """conv1 weight (64,3,5,5) -> padded (K,64) bf16 matmul weight with the
    BN scale folded into its columns; 1->3 channel expand folded when the
    network input has a single channel."""
    if in_channels == 1:
        w = w.sum(axis=1, keepdims=True)        # expand() replication fold
    O, I, kh, kw = w.shape
    scale, shift = _fold_bn(b, bn)
    wt = jnp.transpose(w, (2, 3, 1, 0)).reshape(kh * kw * I, O)   # rows (di,dj,c)
    wt = wt * scale                                              # fold BN scale
    kp = _round_up(kh * kw * I, 8)
    wt = jnp.pad(wt, ((0, kp - kh * kw * I), (0, 0)))
    return dict(w=wt.astype(jnp.bfloat16),
                shift=shift.reshape(1, O).astype(jnp.float32))


def _prep_conv2(w, b, bn):
    """conv2 weight (50,64,5,5) -> (1600,64) bf16 weight, rows ordered
    (di, dj, c) to match the kernel's in-VMEM im2col; BN scale folded."""
    O, I, kh, kw = w.shape
    scale, shift = _fold_bn(b, bn)
    wt = jnp.transpose(w, (2, 3, 1, 0))          # (di, dj, c, O)
    wt = wt * scale                              # fold BN scale into columns
    wt = wt.reshape(kh * kw * I, O)              # (1600, 50)
    wt = jnp.pad(wt, ((0, 0), (0, C2_OUT - O)))
    shift = jnp.pad(shift, (0, C2_OUT - O))
    return dict(w=wt.astype(jnp.bfloat16),
                shift=shift.reshape(1, C2_OUT).astype(jnp.float32))


def _prep_fc1_from_feature(w, b, bn):
    """fc1 weights (100, 800=NCHW 50*4*4) -> (2560, 128) matching the conv2
    kernel's (phase-grid row, padded channel) feature layout; rows for the
    unused grid positions / padded channels are zero, BN scale folded."""
    O = w.shape[0]
    scale, shift = _fold_bn(b, bn)
    wt = w.reshape(O, 50, 4, 4)                          # (O, c, hp, wp)
    wt = jnp.transpose(wt, (2, 3, 1, 0))                 # (hp, wp, c, O)
    wt = wt * scale                                      # fold BN scale
    wt = jnp.pad(wt, ((0, PHASE_HW - 4), (0, PHASE_HW - 4),
                      (0, C2_OUT - 50), (0, N_PAD - O)))  # (6,6,64,128)
    wt = wt.reshape(PHASE_HW * PHASE_HW, C2_OUT, N_PAD)
    wt = jnp.pad(wt, ((0, PHASE_ROWS - PHASE_HW * PHASE_HW), (0, 0), (0, 0)))
    wm = wt.reshape(FEAT_DIM, N_PAD)
    shift = jnp.pad(shift, (0, N_PAD - O))
    return (wm.astype(jnp.bfloat16),
            shift.reshape(1, N_PAD).astype(jnp.float32))


def _prep_fc(w, b, bn, in_pad=N_PAD, out_pad=N_PAD):
    """PyTorch Linear (O,I) -> padded (in_pad, out_pad) bf16 weight (BN scale
    folded into columns when bn is given) + (1, out_pad) f32 shift."""
    O, I = w.shape
    if bn is not None:
        scale, shift = _fold_bn(b, bn)
    else:
        scale, shift = jnp.ones((O,), jnp.float32), b
    wt = w.T * scale
    wt = jnp.pad(wt, ((0, in_pad - I), (0, out_pad - O)))
    shift = jnp.pad(shift, (0, out_pad - O))
    return (wt.astype(jnp.bfloat16),
            shift.reshape(1, out_pad).astype(jnp.float32))


def prepare_params(p, in_channels=1):
    """Hoist all constant-weight preprocessing out of the forward pass."""
    prep = {'in_channels': in_channels}
    prep['conv1'] = _prep_conv1(p['conv1_w'], p['conv1_b'], p['bn1'],
                                in_channels)
    prep['conv2'] = _prep_conv2(p['conv2_w'], p['conv2_b'], p['bn2'])
    wc1, bc1 = _prep_fc1_from_feature(p['c_fc1_w'], p['c_fc1_b'], p['c_bn1'])
    wc2, bc2 = _prep_fc(p['c_fc2_w'], p['c_fc2_b'], p['c_bn2'])
    wc3, bc3 = _prep_fc(p['c_fc3_w'], p['c_fc3_b'], None)
    wd1, bd1 = _prep_fc1_from_feature(p['d_fc1_w'], p['d_fc1_b'], p['d_bn1'])
    wd2, bd2 = _prep_fc(p['d_fc2_w'], p['d_fc2_b'], None)
    prep['head'] = (wc1, bc1, wc2, bc2, wc3, bc3, wd1, bd1, wd2, bd2)
    return prep


# ------------------------------- parameters -------------------------------- #

def init_params(key):
    ks = jax.random.split(key, 16)
    p = {}

    def conv_w(k, o, i, kh, kw):
        return jax.random.normal(k, (o, i, kh, kw), jnp.float32) * 0.05

    def lin_w(k, o, i):
        return jax.random.normal(k, (o, i), jnp.float32) * 0.05

    def lin_b(k, o):
        return jax.random.normal(k, (o,), jnp.float32) * 0.05

    def bn(c):
        # gamma, beta, running_mean, running_var (PyTorch eval-mode defaults)
        return (jnp.ones((c,), jnp.float32), jnp.zeros((c,), jnp.float32),
                jnp.zeros((c,), jnp.float32), jnp.ones((c,), jnp.float32))

    # feature extractor
    p['conv1_w'], p['conv1_b'] = conv_w(ks[0], 64, 3, 5, 5), lin_b(ks[1], 64)
    p['bn1'] = bn(64)
    p['conv2_w'], p['conv2_b'] = conv_w(ks[2], 50, 64, 5, 5), lin_b(ks[3], 50)
    p['bn2'] = bn(50)
    # class classifier
    p['c_fc1_w'], p['c_fc1_b'] = lin_w(ks[4], 100, 800), lin_b(ks[5], 100)
    p['c_bn1'] = bn(100)
    p['c_fc2_w'], p['c_fc2_b'] = lin_w(ks[6], 100, 100), lin_b(ks[7], 100)
    p['c_bn2'] = bn(100)
    p['c_fc3_w'], p['c_fc3_b'] = lin_w(ks[8], 10, 100), lin_b(ks[9], 10)
    # domain classifier
    p['d_fc1_w'], p['d_fc1_b'] = lin_w(ks[10], 100, 800), lin_b(ks[11], 100)
    p['d_bn1'] = bn(100)
    p['d_fc2_w'], p['d_fc2_b'] = lin_w(ks[12], 2, 100), lin_b(ks[13], 2)
    return p


# --------------------------------- forward --------------------------------- #

def cnn_model_forward(prepared, input_data, alpha):
    """input_data: (B, 1 or 3, 28, 28) NCHW.  Returns (class (B,10), domain (B,2))."""
    B, C_in, H, W = input_data.shape
    assert C_in in (1, 3) and H == 28 and W == 28, "expects (B,{1,3},28,28)"
    assert C_in == prepared['in_channels'], \
        "prepare_params(in_channels=...) must match the input"

    # input_data.expand(B, 3, 28, 28): replication is folded into the conv1
    # weight when C_in == 1, so we never materialize the 3-channel copy.
    x = jnp.transpose(input_data, (0, 2, 3, 1)).astype(jnp.bfloat16)   # NHWC

    # f_conv1 + f_bn1 + f_pool1 + f_relu1 (one fused Pallas kernel)
    y1 = conv1_bn_pool_relu(x, prepared['conv1'], tm_rows=2304)  # (B,12,12,64)

    # f_conv2 + f_bn2 (+ f_drop1 = id) + f_pool2 + f_relu2 (one fused kernel,
    # im2col built in VMEM from phase-split inputs).  The returned (B,2560)
    # feature layout is matched exactly by the fc1 weight permutation.
    # TODO(synk): the conv1->conv2 phase re-layout is still an XLA pass
    # (~18 KB/img read+write); conv1 could emit the phase layout directly.
    feature = conv2_bn_pool_relu_feature(y1, prepared['conv2'],
                                         images_per_tile=12)

    # ReverseLayerF: identity in forward (alpha only flips/scales gradients)
    # TODO(synk): gradient-reversal (backward pass) is not represented here.
    del alpha

    cls_pad, dom_pad = classifier_head(feature, prepared['head'])
    return cls_pad[:, :10], dom_pad[:, :2]


# ----------------------------------- main ----------------------------------- #

if __name__ == "__main__":
    key = jax.random.PRNGKey(0)
    k_in, k_par = jax.random.split(key)

    params = init_params(k_par)
    prepared = prepare_params(params, in_channels=1)   # constant prep hoisted

    # MNIST-like single-channel input; the expand() to 3 channels is folded
    # into the conv1 weight.
    x = jax.random.normal(k_in, (2, 1, 28, 28), jnp.float32)
    alpha = jnp.float32(0.5)

    fwd = jax.jit(functools.partial(cnn_model_forward, prepared))
    class_out, domain_out = fwd(x, alpha)
    jax.block_until_ready((class_out, domain_out))

    assert class_out.shape == (2, 10) and domain_out.shape == (2, 2)
    assert bool(jnp.all(jnp.isfinite(class_out)))
    assert bool(jnp.all(jnp.isfinite(domain_out)))
    print("KERNEL_OK")
</pallas_src>

<mosaic_0001>
module attributes {stable_mosaic.version = 11 : i64} {
  func.func @_conv1_kernel(%arg0: i32, %arg1: memref<288x32xbf16, #tpu.memory_space<vmem>>, %arg2: memref<288x32xbf16, #tpu.memory_space<vmem>>, %arg3: memref<288x32xbf16, #tpu.memory_space<vmem>>, %arg4: memref<288x32xbf16, #tpu.memory_space<vmem>>, %arg5: memref<32x64xbf16, #tpu.memory_space<vmem>>, %arg6: memref<1x64xf32, #tpu.memory_space<vmem>>, %arg7: memref<288x64xbf16, #tpu.memory_space<vmem>>) attributes {dimension_semantics = [#tpu.dimension_semantics<parallel>], iteration_bounds = array<i64: 1>, scalar_prefetch = 0 : i64, scratch_operands = 0 : i64, tpu.core_type = #tpu.core_type<tc>, window_params = [{transform_indices = @transform_0, window_bounds = array<i64: 288, 32>}, {transform_indices = @transform_1, window_bounds = array<i64: 288, 32>}, {transform_indices = @transform_2, window_bounds = array<i64: 288, 32>}, {transform_indices = @transform_3, window_bounds = array<i64: 288, 32>}, {pipeline_mode = #tpu.pipeline_mode<synchronous>, transform_indices = @transform_4, window_bounds = array<i64: 32, 64>}, {pipeline_mode = #tpu.pipeline_mode<synchronous>, transform_indices = @transform_5, window_bounds = array<i64: 1, 64>}, {transform_indices = @transform_6, window_bounds = array<i64: 288, 64>}]} {
    %c0 = arith.constant 0 : index
    %c0_0 = arith.constant 0 : index
    %0 = vector.load %arg5[%c0, %c0_0] : memref<32x64xbf16, #tpu.memory_space<vmem>>, vector<32x64xbf16>
    %c0_1 = arith.constant 0 : index
    %c0_2 = arith.constant 0 : index
    %1 = vector.load %arg1[%c0_1, %c0_2] : memref<288x32xbf16, #tpu.memory_space<vmem>>, vector<288x32xbf16>
    %cst = arith.constant dense<0.000000e+00> : vector<288x64xf32>
    %2 = tpu.matmul %1, %0, %cst {dimension_numbers = #tpu.dot_dimension_numbers<[1], [0], [0], [1], [0, 0, 1, 1], [], []>} : vector<288x32xbf16>, vector<32x64xbf16>, vector<288x64xf32> -> vector<288x64xf32>
    %c0_3 = arith.constant 0 : index
    %c0_4 = arith.constant 0 : index
    %3 = vector.load %arg2[%c0_3, %c0_4] : memref<288x32xbf16, #tpu.memory_space<vmem>>, vector<288x32xbf16>
    %cst_5 = arith.constant dense<0.000000e+00> : vector<288x64xf32>
    %4 = tpu.matmul %3, %0, %cst_5 {dimension_numbers = #tpu.dot_dimension_numbers<[1], [0], [0], [1], [0, 0, 1, 1], [], []>} : vector<288x32xbf16>, vector<32x64xbf16>, vector<288x64xf32> -> vector<288x64xf32>
    %5 = arith.maximumf %2, %4 : vector<288x64xf32>
    %c0_6 = arith.constant 0 : index
    %c0_7 = arith.constant 0 : index
    %6 = vector.load %arg3[%c0_6, %c0_7] : memref<288x32xbf16, #tpu.memory_space<vmem>>, vector<288x32xbf16>
    %cst_8 = arith.constant dense<0.000000e+00> : vector<288x64xf32>
    %7 = tpu.matmul %6, %0, %cst_8 {dimension_numbers = #tpu.dot_dimension_numbers<[1], [0], [0], [1], [0, 0, 1, 1], [], []>} : vector<288x32xbf16>, vector<32x64xbf16>, vector<288x64xf32> -> vector<288x64xf32>
    %c0_9 = arith.constant 0 : index
    %c0_10 = arith.constant 0 : index
    %8 = vector.load %arg4[%c0_9, %c0_10] : memref<288x32xbf16, #tpu.memory_space<vmem>>, vector<288x32xbf16>
    %cst_11 = arith.constant dense<0.000000e+00> : vector<288x64xf32>
    %9 = tpu.matmul %8, %0, %cst_11 {dimension_numbers = #tpu.dot_dimension_numbers<[1], [0], [0], [1], [0, 0, 1, 1], [], []>} : vector<288x32xbf16>, vector<32x64xbf16>, vector<288x64xf32> -> vector<288x64xf32>
    %10 = arith.maximumf %7, %9 : vector<288x64xf32>
    %11 = arith.maximumf %5, %10 : vector<288x64xf32>
    %c0_12 = arith.constant 0 : index
    %c0_13 = arith.constant 0 : index
    %12 = vector.load %arg6[%c0_12, %c0_13] : memref<1x64xf32, #tpu.memory_space<vmem>>, vector<1x64xf32>
    %13 = vector.broadcast %12 : vector<1x64xf32> to vector<288x64xf32>
    %14 = arith.addf %11, %13 : vector<288x64xf32>
    %cst_14 = arith.constant 0.000000e+00 : f32
    %15 = vector.broadcast %cst_14 : f32 to vector<288x64xf32>
    %16 = arith.maximumf %14, %15 : vector<288x64xf32>
    %17 = arith.truncf %16 : vector<288x64xf32> to vector<288x64xbf16>
    %c0_15 = arith.constant 0 : index
    %c0_16 = arith.constant 0 : index
    %18 = vector.load %arg7[%c0_15, %c0_16] : memref<288x64xbf16, #tpu.memory_space<vmem>>, vector<288x64xbf16>
    tpu.vector_store %arg7[%c0_15, %c0_16], %17 {strides = array<i32>} : memref<288x64xbf16, #tpu.memory_space<vmem>>, vector<288x64xbf16>,
    return
  }
  func.func @transform_0(%arg0: i32) -> (i32, i32) {
    %c0_i32 = arith.constant 0 : i32
    %c0_i32_0 = arith.constant 0 : i32
    return %arg0, %c0_i32 : i32, i32
  }
  func.func @transform_1(%arg0: i32) -> (i32, i32) {
    %c0_i32 = arith.constant 0 : i32
    %c0_i32_0 = arith.constant 0 : i32
    return %arg0, %c0_i32 : i32, i32
  }
  func.func @transform_2(%arg0: i32) -> (i32, i32) {
    %c0_i32 = arith.constant 0 : i32
    %c0_i32_0 = arith.constant 0 : i32
    return %arg0, %c0_i32 : i32, i32
  }
  func.func @transform_3(%arg0: i32) -> (i32, i32) {
    %c0_i32 = arith.constant 0 : i32
    %c0_i32_0 = arith.constant 0 : i32
    return %arg0, %c0_i32 : i32, i32
  }
  func.func @transform_4(%arg0: i32) -> (i32, i32) {
    %c0_i32 = arith.constant 0 : i32
    %c0_i32_0 = arith.constant 0 : i32
    %c0_i32_1 = arith.constant 0 : i32
    return %c0_i32, %c0_i32_0 : i32, i32
  }
  func.func @transform_5(%arg0: i32) -> (i32, i32) {
    %c0_i32 = arith.constant 0 : i32
    %c0_i32_0 = arith.constant 0 : i32
    %c0_i32_1 = arith.constant 0 : i32
    return %c0_i32, %c0_i32_0 : i32, i32
  }
  func.func @transform_6(%arg0: i32) -> (i32, i32) {
    %c0_i32 = arith.constant 0 : i32
    %c0_i32_0 = arith.constant 0 : i32
    return %arg0, %c0_i32 : i32, i32
  }
}

module attributes {stable_mosaic.version = 11 : i64} {
  func.func @_conv2_kernel(%arg0: i32, %arg1: memref<80x64xbf16, #tpu.memory_space<vmem>>, %arg2: memref<80x64xbf16, #tpu.memory_space<vmem>>, %arg3: memref<80x64xbf16, #tpu.memory_space<vmem>>, %arg4: memref<80x64xbf16, #tpu.memory_space<vmem>>, %arg5: memref<1600x64xbf16, #tpu.memory_space<vmem>>, %arg6: memref<1x64xf32, #tpu.memory_space<vmem>>, %arg7: memref<80x64xbf16, #tpu.memory_space<vmem>>) attributes {dimension_semantics = [#tpu.dimension_semantics<parallel>], iteration_bounds = array<i64: 1>, scalar_prefetch = 0 : i64, scratch_operands = 0 : i64, tpu.core_type = #tpu.core_type<tc>, window_params = [{transform_indices = @transform_0, window_bounds = array<i64: 80, 64>}, {transform_indices = @transform_1, window_bounds = array<i64: 80, 64>}, {transform_indices = @transform_2, window_bounds = array<i64: 80, 64>}, {transform_indices = @transform_3, window_bounds = array<i64: 80, 64>}, {pipeline_mode = #tpu.pipeline_mode<synchronous>, transform_indices = @transform_4, window_bounds = array<i64: 1600, 64>}, {pipeline_mode = #tpu.pipeline_mode<synchronous>, transform_indices = @transform_5, window_bounds = array<i64: 1, 64>}, {transform_indices = @transform_6, window_bounds = array<i64: 80, 64>}]} {
    %c0 = arith.constant 0 : index
    %c0_0 = arith.constant 0 : index
    %0 = vector.load %arg1[%c0, %c0_0] : memref<80x64xbf16, #tpu.memory_space<vmem>>, vector<80x64xbf16>
    %c0_1 = arith.constant 0 : index
    %c0_2 = arith.constant 0 : index
    %1 = vector.load %arg2[%c0_1, %c0_2] : memref<80x64xbf16, #tpu.memory_space<vmem>>, vector<80x64xbf16>
    %c0_3 = arith.constant 0 : index
    %c0_4 = arith.constant 0 : index
    %2 = vector.load %arg3[%c0_3, %c0_4] : memref<80x64xbf16, #tpu.memory_space<vmem>>, vector<80x64xbf16>
    %c0_5 = arith.constant 0 : index
    %c0_6 = arith.constant 0 : index
    %3 = vector.load %arg4[%c0_5, %c0_6] : memref<80x64xbf16, #tpu.memory_space<vmem>>, vector<80x64xbf16>
    %c0_7 = arith.constant 0 : index
    %c0_8 = arith.constant 0 : index
    %4 = vector.load %arg5[%c0_7, %c0_8] : memref<1600x64xbf16, #tpu.memory_space<vmem>>, vector<1600x64xbf16>
    %5 = vector.extract_strided_slice %0 {offsets = [1, 0], sizes = [79, 64], strides = [1, 1]} : vector<80x64xbf16> to vector<79x64xbf16>
    %6 = vector.extract_strided_slice %0 {offsets = [0, 0], sizes = [1, 64], strides = [1, 1]} : vector<80x64xbf16> to vector<1x64xbf16>
    %7 = tpu.concatenate %5, %6 in 0 : vector<79x64xbf16>, vector<1x64xbf16> -> vector<80x64xbf16>
    %8 = vector.extract_strided_slice %1 {offsets = [1, 0], sizes = [79, 64], strides = [1, 1]} : vector<80x64xbf16> to vector<79x64xbf16>
    %9 = vector.extract_strided_slice %1 {offsets = [0, 0], sizes = [1, 64], strides = [1, 1]} : vector<80x64xbf16> to vector<1x64xbf16>
    %10 = tpu.concatenate %8, %9 in 0 : vector<79x64xbf16>, vector<1x64xbf16> -> vector<80x64xbf16>
    %11 = vector.extract_strided_slice %0 {offsets = [2, 0], sizes = [78, 64], strides = [1, 1]} : vector<80x64xbf16> to vector<78x64xbf16>
    %12 = vector.extract_strided_slice %0 {offsets = [0, 0], sizes = [2, 64], strides = [1, 1]} : vector<80x64xbf16> to vector<2x64xbf16>
    %13 = tpu.concatenate %11, %12 in 0 : vector<78x64xbf16>, vector<2x64xbf16> -> vector<80x64xbf16>
    %14 = vector.extract_strided_slice %2 {offsets = [1, 0], sizes = [79, 64], strides = [1, 1]} : vector<80x64xbf16> to vector<79x64xbf16>
    %15 = vector.extract_strided_slice %2 {offsets = [0, 0], sizes = [1, 64], strides = [1, 1]} : vector<80x64xbf16> to vector<1x64xbf16>
    %16 = tpu.concatenate %14, %15 in 0 : vector<79x64xbf16>, vector<1x64xbf16> -> vector<80x64xbf16>
    %17 = vector.extract_strided_slice %3 {offsets = [1, 0], sizes = [79, 64], strides = [1, 1]} : vector<80x64xbf16> to vector<79x64xbf16>
    %18 = vector.extract_strided_slice %3 {offsets = [0, 0], sizes = [1, 64], strides = [1, 1]} : vector<80x64xbf16> to vector<1x64xbf16>
    %19 = tpu.concatenate %17, %18 in 0 : vector<79x64xbf16>, vector<1x64xbf16> -> vector<80x64xbf16>
    %20 = vector.extract_strided_slice %2 {offsets = [2, 0], sizes = [78, 64], strides = [1, 1]} : vector<80x64xbf16> to vector<78x64xbf16>
    %21 = vector.extract_strided_slice %2 {offsets = [0, 0], sizes = [2, 64], strides = [1, 1]} : vector<80x64xbf16> to vector<2x64xbf16>
    %22 = tpu.concatenate %20, %21 in 0 : vector<78x64xbf16>, vector<2x64xbf16> -> vector<80x64xbf16>
    %23 = vector.extract_strided_slice %0 {offsets = [6, 0], sizes = [74, 64], strides = [1, 1]} : vector<80x64xbf16> to vector<74x64xbf16>
    %24 = vector.extract_strided_slice %0 {offsets = [0, 0], sizes = [6, 64], strides = [1, 1]} : vector<80x64xbf16> to vector<6x64xbf16>
    %25 = tpu.concatenate %23, %24 in 0 : vector<74x64xbf16>, vector<6x64xbf16> -> vector<80x64xbf16>
    %26 = vector.extract_strided_slice %1 {offsets = [6, 0], sizes = [74, 64], strides = [1, 1]} : vector<80x64xbf16> to vector<74x64xbf16>
    %27 = vector.extract_strided_slice %1 {offsets = [0, 0], sizes = [6, 64], strides = [1, 1]} : vector<80x64xbf16> to vector<6x64xbf16>
    %28 = tpu.concatenate %26, %27 in 0 : vector<74x64xbf16>, vector<6x64xbf16> -> vector<80x64xbf16>
    %29 = vector.extract_strided_slice %0 {offsets = [7, 0], sizes = [73, 64], strides = [1, 1]} : vector<80x64xbf16> to vector<73x64xbf16>
    %30 = vector.extract_strided_slice %0 {offsets = [0, 0], sizes = [7, 64], strides = [1, 1]} : vector<80x64xbf16> to vector<7x64xbf16>
    %31 = tpu.concatenate %29, %30 in 0 : vector<73x64xbf16>, vector<7x64xbf16> -> vector<80x64xbf16>
    %32 = vector.extract_strided_slice %1 {offsets = [7, 0], sizes = [73, 64], strides = [1, 1]} : vector<80x64xbf16> to vector<73x64xbf16>
    %33 = vector.extract_strided_slice %1 {offsets = [0, 0], sizes = [7, 64], strides = [1, 1]} : vector<80x64xbf16> to vector<7x64xbf16>
    %34 = tpu.concatenate %32, %33 in 0 : vector<73x64xbf16>, vector<7x64xbf16> -> vector<80x64xbf16>
    %35 = vector.extract_strided_slice %0 {offsets = [8, 0], sizes = [72, 64], strides = [1, 1]} : vector<80x64xbf16> to vector<72x64xbf16>
    %36 = vector.extract_strided_slice %0 {offsets = [0, 0], sizes = [8, 64], strides = [1, 1]} : vector<80x64xbf16> to vector<8x64xbf16>
    %37 = tpu.concatenate %35, %36 in 0 : vector<72x64xbf16>, vector<8x64xbf16> -> vector<80x64xbf16>
    %38 = vector.extract_strided_slice %2 {offsets = [6, 0], sizes = [74, 64], strides = [1, 1]} : vector<80x64xbf16> to vector<74x64xbf16>
    %39 = vector.extract_strided_slice %2 {offsets = [0, 0], sizes = [6, 64], strides = [1, 1]} : vector<80x64xbf16> to vector<6x64xbf16>
    %40 = tpu.concatenate %38, %39 in 0 : vector<74x64xbf16>, vector<6x64xbf16> -> vector<80x64xbf16>
    %41 = vector.extract_strided_slice %3 {offsets = [6, 0], sizes = [74, 64], strides = [1, 1]} : vector<80x64xbf16> to vector<74x64xbf16>
    %42 = vector.extract_strided_slice %3 {offsets = [0, 0], sizes = [6, 64], strides = [1, 1]} : vector<80x64xbf16> to vector<6x64xbf16>
    %43 = tpu.concatenate %41, %42 in 0 : vector<74x64xbf16>, vector<6x64xbf16> -> vector<80x64xbf16>
    %44 = vector.extract_strided_slice %2 {offsets = [7, 0], sizes = [73, 64], strides = [1, 1]} : vector<80x64xbf16> to vector<73x64xbf16>
    %45 = vector.extract_strided_slice %2 {offsets = [0, 0], sizes = [7, 64], strides = [1, 1]} : vector<80x64xbf16> to vector<7x64xbf16>
    %46 = tpu.concatenate %44, %45 in 0 : vector<73x64xbf16>, vector<7x64xbf16> -> vector<80x64xbf16>
    %47 = vector.extract_strided_slice %3 {offsets = [7, 0], sizes = [73, 64], strides = [1, 1]} : vector<80x64xbf16> to vector<73x64xbf16>
    %48 = vector.extract_strided_slice %3 {offsets = [0, 0], sizes = [7, 64], strides = [1, 1]} : vector<80x64xbf16> to vector<7x64xbf16>
    %49 = tpu.concatenate %47, %48 in 0 : vector<73x64xbf16>, vector<7x64xbf16> -> vector<80x64xbf16>
    %50 = vector.extract_strided_slice %2 {offsets = [8, 0], sizes = [72, 64], strides = [1, 1]} : vector<80x64xbf16> to vector<72x64xbf16>
    %51 = vector.extract_strided_slice %2 {offsets = [0, 0], sizes = [8, 64], strides = [1, 1]} : vector<80x64xbf16> to vector<8x64xbf16>
    %52 = tpu.concatenate %50, %51 in 0 : vector<72x64xbf16>, vector<8x64xbf16> -> vector<80x64xbf16>
    %53 = vector.extract_strided_slice %0 {offsets = [12, 0], sizes = [68, 64], strides = [1, 1]} : vector<80x64xbf16> to vector<68x64xbf16>
    %54 = vector.extract_strided_slice %0 {offsets = [0, 0], sizes = [12, 64], strides = [1, 1]} : vector<80x64xbf16> to vector<12x64xbf16>
    %55 = tpu.concatenate %53, %54 in 0 : vector<68x64xbf16>, vector<12x64xbf16> -> vector<80x64xbf16>
    %56 = vector.extract_strided_slice %1 {offsets = [12, 0], sizes = [68, 64], strides = [1, 1]} : vector<80x64xbf16> to vector<68x64xbf16>
    %57 = vector.extract_strided_slice %1 {offsets = [0, 0], sizes = [12, 64], strides = [1, 1]} : vector<80x64xbf16> to vector<12x64xbf16>
    %58 = tpu.concatenate %56, %57 in 0 : vector<68x64xbf16>, vector<12x64xbf16> -> vector<80x64xbf16>
    %59 = vector.extract_strided_slice %0 {offsets = [13, 0], sizes = [67, 64], strides = [1, 1]} : vector<80x64xbf16> to vector<67x64xbf16>
    %60 = vector.extract_strided_slice %0 {offsets = [0, 0], sizes = [13, 64], strides = [1, 1]} : vector<80x64xbf16> to vector<13x64xbf16>
    %61 = tpu.concatenate %59, %60 in 0 : vector<67x64xbf16>, vector<13x64xbf16> -> vector<80x64xbf16>
    %62 = vector.extract_strided_slice %1 {offsets = [13, 0], sizes = [67, 64], strides = [1, 1]} : vector<80x64xbf16> to vector<67x64xbf16>
    %63 = vector.extract_strided_slice %1 {offsets = [0, 0], sizes = [13, 64], strides = [1, 1]} : vector<80x64xbf16> to vector<13x64xbf16>
    %64 = tpu.concatenate %62, %63 in 0 : vector<67x64xbf16>, vector<13x64xbf16> -> vector<80x64xbf16>
    %65 = vector.extract_strided_slice %0 {offsets = [14, 0], sizes = [66, 64], strides = [1, 1]} : vector<80x64xbf16> to vector<66x64xbf16>
    %66 = vector.extract_strided_slice %0 {offsets = [0, 0], sizes = [14, 64], strides = [1, 1]} : vector<80x64xbf16> to vector<14x64xbf16>
    %67 = tpu.concatenate %65, %66 in 0 : vector<66x64xbf16>, vector<14x64xbf16> -> vector<80x64xbf16>
    %68 = tpu.concatenate %0, %1, %7, %10, %13, %2, %3, %16, %19, %22, %25, %28, %31, %34, %37, %40 in 1 : vector<80x64xbf16>, vector<80x64xbf16>, vector<80x64xbf16>, vector<80x64xbf16>, vector<80x64xbf16>, vector<80x64xbf16>, vector<80x64xbf16>, vector<80x64xbf16>, vector<80x64xbf16>, vector<80x64xbf16>, vector<80x64xbf16>, vector<80x64xbf16>, vector<80x64xbf16>, vector<80x64xbf16>, vector<80x64xbf16>, vector<80x64xbf16> -> vector<80x1024xbf16>
    %69 = tpu.concatenate %43, %46, %49, %52, %55, %58, %61, %64, %67 in 1 : vector<80x64xbf16>, vector<80x64xbf16>, vector<80x64xbf16>, vector<80x64xbf16>, vector<80x64xbf16>, vector<80x64xbf16>, vector<80x64xbf16>, vector<80x64xbf16>, vector<80x64xbf16> -> vector<80x576xbf16>
    %70 = tpu.concatenate %68, %69 in 1 : vector<80x1024xbf16>, vector<80x576xbf16> -> vector<80x1600xbf16>
    %cst = arith.constant dense<0.000000e+00> : vector<80x64xf32>
    %71 = tpu.matmul %70, %4, %cst {dimension_numbers = #tpu.dot_dimension_numbers<[1], [0], [0], [1], [0, 0, 1, 1], [], []>} : vector<80x1600xbf16>, vector<1600x64xbf16>, vector<80x64xf32> -> vector<80x64xf32>
    %72 = vector.extract_strided_slice %1 {offsets = [2, 0], sizes = [78, 64], strides = [1, 1]} : vector<80x64xbf16> to vector<78x64xbf16>
    %73 = vector.extract_strided_slice %1 {offsets = [0, 0], sizes = [2, 64], strides = [1, 1]} : vector<80x64xbf16> to vector<2x64xbf16>
    %74 = tpu.concatenate %72, %73 in 0 : vector<78x64xbf16>, vector<2x64xbf16> -> vector<80x64xbf16>
    %75 = vector.extract_strided_slice %3 {offsets = [2, 0], sizes = [78, 64], strides = [1, 1]} : vector<80x64xbf16> to vector<78x64xbf16>
    %76 = vector.extract_strided_slice %3 {offsets = [0, 0], sizes = [2, 64], strides = [1, 1]} : vector<80x64xbf16> to vector<2x64xbf16>
    %77 = tpu.concatenate %75, %76 in 0 : vector<78x64xbf16>, vector<2x64xbf16> -> vector<80x64xbf16>
    %78 = vector.extract_strided_slice %1 {offsets = [8, 0], sizes = [72, 64], strides = [1, 1]} : vector<80x64xbf16> to vector<72x64xbf16>
    %79 = vector.extract_strided_slice %1 {offsets = [0, 0], sizes = [8, 64], strides = [1, 1]} : vector<80x64xbf16> to vector<8x64xbf16>
    %80 = tpu.concatenate %78, %79 in 0 : vector<72x64xbf16>, vector<8x64xbf16> -> vector<80x64xbf16>
    %81 = vector.extract_strided_slice %3 {offsets = [8, 0], sizes = [72, 64], strides = [1, 1]} : vector<80x64xbf16> to vector<72x64xbf16>
    %82 = vector.extract_strided_slice %3 {offsets = [0, 0], sizes = [8, 64], strides = [1, 1]} : vector<80x64xbf16> to vector<8x64xbf16>
    %83 = tpu.concatenate %81, %82 in 0 : vector<72x64xbf16>, vector<8x64xbf16> -> vector<80x64xbf16>
    %84 = vector.extract_strided_slice %1 {offsets = [14, 0], sizes = [66, 64], strides = [1, 1]} : vector<80x64xbf16> to vector<66x64xbf16>
    %85 = vector.extract_strided_slice %1 {offsets = [0, 0], sizes = [14, 64], strides = [1, 1]} : vector<80x64xbf16> to vector<14x64xbf16>
    %86 = tpu.concatenate %84, %85 in 0 : vector<66x64xbf16>, vector<14x64xbf16> -> vector<80x64xbf16>
    %87 = tpu.concatenate %1, %7, %10, %13, %74, %3, %16, %19, %22, %77, %28, %31, %34, %37, %80, %43 in 1 : vector<80x64xbf16>, vector<80x64xbf16>, vector<80x64xbf16>, vector<80x64xbf16>, vector<80x64xbf16>, vector<80x64xbf16>, vector<80x64xbf16>, vector<80x64xbf16>, vector<80x64xbf16>, vector<80x64xbf16>, vector<80x64xbf16>, vector<80x64xbf16>, vector<80x64xbf16>, vector<80x64xbf16>, vector<80x64xbf16>, vector<80x64xbf16> -> vector<80x1024xbf16>
    %88 = tpu.concatenate %46, %49, %52, %83, %58, %61, %64, %67, %86 in 1 : vector<80x64xbf16>, vector<80x64xbf16>, vector<80x64xbf16>, vector<80x64xbf16>, vector<80x64xbf16>, vector<80x64xbf16>, vector<80x64xbf16>, vector<80x64xbf16>, vector<80x64xbf16> -> vector<80x576xbf16>
    %89 = tpu.concatenate %87, %88 in 1 : vector<80x1024xbf16>, vector<80x576xbf16> -> vector<80x1600xbf16>
    %cst_9 = arith.constant dense<0.000000e+00> : vector<80x64xf32>
    %90 = tpu.matmul %89, %4, %cst_9 {dimension_numbers = #tpu.dot_dimension_numbers<[1], [0], [0], [1], [0, 0, 1, 1], [], []>} : vector<80x1600xbf16>, vector<1600x64xbf16>, vector<80x64xf32> -> vector<80x64xf32>
    %91 = arith.maximumf %71, %90 : vector<80x64xf32>
    %92 = vector.extract_strided_slice %2 {offsets = [12, 0], sizes = [68, 64], strides = [1, 1]} : vector<80x64xbf16> to vector<68x64xbf16>
    %93 = vector.extract_strided_slice %2 {offsets = [0, 0], sizes = [12, 64], strides = [1, 1]} : vector<80x64xbf16> to vector<12x64xbf16>
    %94 = tpu.concatenate %92, %93 in 0 : vector<68x64xbf16>, vector<12x64xbf16> -> vector<80x64xbf16>
    %95 = vector.extract_strided_slice %3 {offsets = [12, 0], sizes = [68, 64], strides = [1, 1]} : vector<80x64xbf16> to vector<68x64xbf16>
    %96 = vector.extract_strided_slice %3 {offsets = [0, 0], sizes = [12, 64], strides = [1, 1]} : vector<80x64xbf16> to vector<12x64xbf16>
    %97 = tpu.concatenate %95, %96 in 0 : vector<68x64xbf16>, vector<12x64xbf16> -> vector<80x64xbf16>
    %98 = vector.extract_strided_slice %2 {offsets = [13, 0], sizes = [67, 64], strides = [1, 1]} : vector<80x64xbf16> to vector<67x64xbf16>
    %99 = vector.extract_strided_slice %2 {offsets = [0, 0], sizes = [13, 64], strides = [1, 1]} : vector<80x64xbf16> to vector<13x64xbf16>
    %100 = tpu.concatenate %98, %99 in 0 : vector<67x64xbf16>, vector<13x64xbf16> -> vector<80x64xbf16>
    %101 = vector.extract_strided_slice %3 {offsets = [13, 0], sizes = [67, 64], strides = [1, 1]} : vector<80x64xbf16> to vector<67x64xbf16>
    %102 = vector.extract_strided_slice %3 {offsets = [0, 0], sizes = [13, 64], strides = [1, 1]} : vector<80x64xbf16> to vector<13x64xbf16>
    %103 = tpu.concatenate %101, %102 in 0 : vector<67x64xbf16>, vector<13x64xbf16> -> vector<80x64xbf16>
    %104 = vector.extract_strided_slice %2 {offsets = [14, 0], sizes = [66, 64], strides = [1, 1]} : vector<80x64xbf16> to vector<66x64xbf16>
    %105 = vector.extract_strided_slice %2 {offsets = [0, 0], sizes = [14, 64], strides = [1, 1]} : vector<80x64xbf16> to vector<14x64xbf16>
    %106 = tpu.concatenate %104, %105 in 0 : vector<66x64xbf16>, vector<14x64xbf16> -> vector<80x64xbf16>
    %107 = tpu.concatenate %2, %3, %16, %19, %22, %25, %28, %31, %34, %37, %40, %43, %46, %49, %52, %55 in 1 : vector<80x64xbf16>, vector<80x64xbf16>, vector<80x64xbf16>, vector<80x64xbf16>, vector<80x64xbf16>, vector<80x64xbf16>, vector<80x64xbf16>, vector<80x64xbf16>, vector<80x64xbf16>, vector<80x64xbf16>, vector<80x64xbf16>, vector<80x64xbf16>, vector<80x64xbf16>, vector<80x64xbf16>, vector<80x64xbf16>, vector<80x64xbf16> -> vector<80x1024xbf16>
    %108 = tpu.concatenate %58, %61, %64, %67, %94, %97, %100, %103, %106 in 1 : vector<80x64xbf16>, vector<80x64xbf16>, vector<80x64xbf16>, vector<80x64xbf16>, vector<80x64xbf16>, vector<80x64xbf16>, vector<80x64xbf16>, vector<80x64xbf16>, vector<80x64xbf16> -> vector<80x576xbf16>
    %109 = tpu.concatenate %107, %108 in 1 : vector<80x1024xbf16>, vector<80x576xbf16> -> vector<80x1600xbf16>
    %cst_10 = arith.constant dense<0.000000e+00> : vector<80x64xf32>
    %110 = tpu.matmul %109, %4, %cst_10 {dimension_numbers = #tpu.dot_dimension_numbers<[1], [0], [0], [1], [0, 0, 1, 1], [], []>} : vector<80x1600xbf16>, vector<1600x64xbf16>, vector<80x64xf32> -> vector<80x64xf32>
    %111 = arith.maximumf %91, %110 : vector<80x64xf32>
    %112 = vector.extract_strided_slice %3 {offsets = [14, 0], sizes = [66, 64], strides = [1, 1]} : vector<80x64xbf16> to vector<66x64xbf16>
    %113 = vector.extract_strided_slice %3 {offsets = [0, 0], sizes = [14, 64], strides = [1, 1]} : vector<80x64xbf16> to vector<14x64xbf16>
    %114 = tpu.concatenate %112, %113 in 0 : vector<66x64xbf16>, vector<14x64xbf16> -> vector<80x64xbf16>
    %115 = tpu.concatenate %3, %16, %19, %22, %77, %28, %31, %34, %37, %80, %43, %46, %49, %52, %83, %58 in 1 : vector<80x64xbf16>, vector<80x64xbf16>, vector<80x64xbf16>, vector<80x64xbf16>, vector<80x64xbf16>, vector<80x64xbf16>, vector<80x64xbf16>, vector<80x64xbf16>, vector<80x64xbf16>, vector<80x64xbf16>, vector<80x64xbf16>, vector<80x64xbf16>, vector<80x64xbf16>, vector<80x64xbf16>, vector<80x64xbf16>, vector<80x64xbf16> -> vector<80x1024xbf16>
    %116 = tpu.concatenate %61, %64, %67, %86, %97, %100, %103, %106, %114 in 1 : vector<80x64xbf16>, vector<80x64xbf16>, vector<80x64xbf16>, vector<80x64xbf16>, vector<80x64xbf16>, vector<80x64xbf16>, vector<80x64xbf16>, vector<80x64xbf16>, vector<80x64xbf16> -> vector<80x576xbf16>
    %117 = tpu.concatenate %115, %116 in 1 : vector<80x1024xbf16>, vector<80x576xbf16> -> vector<80x1600xbf16>
    %cst_11 = arith.constant dense<0.000000e+00> : vector<80x64xf32>
    %118 = tpu.matmul %117, %4, %cst_11 {dimension_numbers = #tpu.dot_dimension_numbers<[1], [0], [0], [1], [0, 0, 1, 1], [], []>} : vector<80x1600xbf16>, vector<1600x64xbf16>, vector<80x64xf32> -> vector<80x64xf32>
    %119 = arith.maximumf %111, %118 : vector<80x64xf32>
    %c0_12 = arith.constant 0 : index
    %c0_13 = arith.constant 0 : index
    %120 = vector.load %arg6[%c0_12, %c0_13] : memref<1x64xf32, #tpu.memory_space<vmem>>, vector<1x64xf32>
    %121 = vector.broadcast %120 : vector<1x64xf32> to vector<80x64xf32>
    %122 = arith.addf %119, %121 : vector<80x64xf32>
    %cst_14 = arith.constant 0.000000e+00 : f32
    %123 = vector.broadcast %cst_14 : f32 to vector<80x64xf32>
    %124 = arith.maximumf %122, %123 : vector<80x64xf32>
    %125 = arith.truncf %124 : vector<80x64xf32> to vector<80x64xbf16>
    %c0_15 = arith.constant 0 : index
    %c0_16 = arith.constant 0 : index
    %126 = vector.load %arg7[%c0_15, %c0_16] : memref<80x64xbf16, #tpu.memory_space<vmem>>, vector<80x64xbf16>
    tpu.vector_store %arg7[%c0_15, %c0_16], %125 {strides = array<i32>} : memref<80x64xbf16, #tpu.memory_space<vmem>>, vector<80x64xbf16>,
    return
  }
  func.func @transform_0(%arg0: i32) -> (i32, i32) {
    %c0_i32 = arith.constant 0 : i32
    %c0_i32_0 = arith.constant 0 : i32
    return %arg0, %c0_i32 : i32, i32
  }
  func.func @transform_1(%arg0: i32) -> (i32, i32) {
    %c0_i32 = arith.constant 0 : i32
    %c0_i32_0 = arith.constant 0 : i32
    return %arg0, %c0_i32 : i32, i32
  }
  func.func @transform_2(%arg0: i32) -> (i32, i32) {
    %c0_i32 = arith.constant 0 : i32
    %c0_i32_0 = arith.constant 0 : i32
    return %arg0, %c0_i32 : i32, i32
  }
  func.func @transform_3(%arg0: i32) -> (i32, i32) {
    %c0_i32 = arith.constant 0 : i32
    %c0_i32_0 = arith.constant 0 : i32
    return %arg0, %c0_i32 : i32, i32
  }
  func.func @transform_4(%arg0: i32) -> (i32, i32) {
    %c0_i32 = arith.constant 0 : i32
    %c0_i32_0 = arith.constant 0 : i32
    %c0_i32_1 = arith.constant 0 : i32
    return %c0_i32, %c0_i32_0 : i32, i32
  }
  func.func @transform_5(%arg0: i32) -> (i32, i32) {
    %c0_i32 = arith.constant 0 : i32
    %c0_i32_0 = arith.constant 0 : i32
    %c0_i32_1 = arith.constant 0 : i32
    return %c0_i32, %c0_i32_0 : i32, i32
  }
  func.func @transform_6(%arg0: i32) -> (i32, i32) {
    %c0_i32 = arith.constant 0 : i32
    %c0_i32_0 = arith.constant 0 : i32
    return %arg0, %c0_i32 : i32, i32
  }
}

module attributes {stable_mosaic.version = 11 : i64} {
  func.func @_head_kernel(%arg0: i32, %arg1: memref<8x2560xbf16, #tpu.memory_space<vmem>>, %arg2: memref<2560x128xbf16, #tpu.memory_space<vmem>>, %arg3: memref<1x128xf32, #tpu.memory_space<vmem>>, %arg4: memref<128x128xbf16, #tpu.memory_space<vmem>>, %arg5: memref<1x128xf32, #tpu.memory_space<vmem>>, %arg6: memref<128x128xbf16, #tpu.memory_space<vmem>>, %arg7: memref<1x128xf32, #tpu.memory_space<vmem>>, %arg8: memref<2560x128xbf16, #tpu.memory_space<vmem>>, %arg9: memref<1x128xf32, #tpu.memory_space<vmem>>, %arg10: memref<128x128xbf16, #tpu.memory_space<vmem>>, %arg11: memref<1x128xf32, #tpu.memory_space<vmem>>, %arg12: memref<8x128xf32, #tpu.memory_space<vmem>>, %arg13: memref<8x128xf32, #tpu.memory_space<vmem>>) attributes {dimension_semantics = [#tpu.dimension_semantics<parallel>], iteration_bounds = array<i64: 1>, scalar_prefetch = 0 : i64, scratch_operands = 0 : i64, tpu.core_type = #tpu.core_type<tc>, window_params = [{transform_indices = @transform_0, window_bounds = array<i64: 8, 2560>}, {pipeline_mode = #tpu.pipeline_mode<synchronous>, transform_indices = @transform_1, window_bounds = array<i64: 2560, 128>}, {pipeline_mode = #tpu.pipeline_mode<synchronous>, transform_indices = @transform_2, window_bounds = array<i64: 1, 128>}, {pipeline_mode = #tpu.pipeline_mode<synchronous>, transform_indices = @transform_3, window_bounds = array<i64: 128, 128>}, {pipeline_mode = #tpu.pipeline_mode<synchronous>, transform_indices = @transform_4, window_bounds = array<i64: 1, 128>}, {pipeline_mode = #tpu.pipeline_mode<synchronous>, transform_indices = @transform_5, window_bounds = array<i64: 128, 128>}, {pipeline_mode = #tpu.pipeline_mode<synchronous>, transform_indices = @transform_6, window_bounds = array<i64: 1, 128>}, {pipeline_mode = #tpu.pipeline_mode<synchronous>, transform_indices = @transform_7, window_bounds = array<i64: 2560, 128>}, {pipeline_mode = #tpu.pipeline_mode<synchronous>, transform_indices = @transform_8, window_bounds = array<i64: 1, 128>}, {pipeline_mode = #tpu.pipeline_mode<synchronous>, transform_indices = @transform_9, window_bounds = array<i64: 128, 128>}, {pipeline_mode = #tpu.pipeline_mode<synchronous>, transform_indices = @transform_10, window_bounds = array<i64: 1, 128>}, {transform_indices = @transform_11, window_bounds = array<i64: 8, 128>}, {transform_indices = @transform_12, window_bounds = array<i64: 8, 128>}]} {
    %c0 = arith.constant 0 : index
    %c0_0 = arith.constant 0 : index
    %0 = vector.load %arg1[%c0, %c0_0] : memref<8x2560xbf16, #tpu.memory_space<vmem>>, vector<8x2560xbf16>
    %c0_1 = arith.constant 0 : index
    %c0_2 = arith.constant 0 : index
    %1 = vector.load %arg2[%c0_1, %c0_2] : memref<2560x128xbf16, #tpu.memory_space<vmem>>, vector<2560x128xbf16>
    %cst = arith.constant dense<0.000000e+00> : vector<8x128xf32>
    %2 = tpu.matmul %0, %1, %cst {dimension_numbers = #tpu.dot_dimension_numbers<[1], [0], [0], [1], [0, 0, 1, 1], [], []>} : vector<8x2560xbf16>, vector<2560x128xbf16>, vector<8x128xf32> -> vector<8x128xf32>
    %c0_3 = arith.constant 0 : index
    %c0_4 = arith.constant 0 : index
    %3 = vector.load %arg3[%c0_3, %c0_4] : memref<1x128xf32, #tpu.memory_space<vmem>>, vector<1x128xf32>
    %4 = vector.broadcast %3 : vector<1x128xf32> to vector<8x128xf32>
    %5 = arith.addf %2, %4 : vector<8x128xf32>
    %cst_5 = arith.constant 0.000000e+00 : f32
    %6 = vector.broadcast %cst_5 : f32 to vector<8x128xf32>
    %7 = arith.maximumf %5, %6 : vector<8x128xf32>
    %8 = arith.truncf %7 : vector<8x128xf32> to vector<8x128xbf16>
    %c0_6 = arith.constant 0 : index
    %c0_7 = arith.constant 0 : index
    %9 = vector.load %arg4[%c0_6, %c0_7] : memref<128x128xbf16, #tpu.memory_space<vmem>>, vector<128x128xbf16>
    %cst_8 = arith.constant dense<0.000000e+00> : vector<8x128xf32>
    %10 = tpu.matmul %8, %9, %cst_8 {dimension_numbers = #tpu.dot_dimension_numbers<[1], [0], [0], [1], [0, 0, 1, 1], [], []>} : vector<8x128xbf16>, vector<128x128xbf16>, vector<8x128xf32> -> vector<8x128xf32>
    %c0_9 = arith.constant 0 : index
    %c0_10 = arith.constant 0 : index
    %11 = vector.load %arg5[%c0_9, %c0_10] : memref<1x128xf32, #tpu.memory_space<vmem>>, vector<1x128xf32>
    %12 = vector.broadcast %11 : vector<1x128xf32> to vector<8x128xf32>
    %13 = arith.addf %10, %12 : vector<8x128xf32>
    %cst_11 = arith.constant 0.000000e+00 : f32
    %14 = vector.broadcast %cst_11 : f32 to vector<8x128xf32>
    %15 = arith.maximumf %13, %14 : vector<8x128xf32>
    %16 = arith.truncf %15 : vector<8x128xf32> to vector<8x128xbf16>
    %c0_12 = arith.constant 0 : index
    %c0_13 = arith.constant 0 : index
    %17 = vector.load %arg6[%c0_12, %c0_13] : memref<128x128xbf16, #tpu.memory_space<vmem>>, vector<128x128xbf16>
    %cst_14 = arith.constant dense<0.000000e+00> : vector<8x128xf32>
    %18 = tpu.matmul %16, %17, %cst_14 {dimension_numbers = #tpu.dot_dimension_numbers<[1], [0], [0], [1], [0, 0, 1, 1], [], []>} : vector<8x128xbf16>, vector<128x128xbf16>, vector<8x128xf32> -> vector<8x128xf32>
    %c0_15 = arith.constant 0 : index
    %c0_16 = arith.constant 0 : index
    %19 = vector.load %arg7[%c0_15, %c0_16] : memref<1x128xf32, #tpu.memory_space<vmem>>, vector<1x128xf32>
    %20 = vector.broadcast %19 : vector<1x128xf32> to vector<8x128xf32>
    %21 = arith.addf %18, %20 : vector<8x128xf32>
    %c0_17 = arith.constant 0 : index
    %c0_18 = arith.constant 0 : index
    %22 = vector.load %arg12[%c0_17, %c0_18] : memref<8x128xf32, #tpu.memory_space<vmem>>, vector<8x128xf32>
    tpu.vector_store %arg12[%c0_17, %c0_18], %21 {strides = array<i32>} : memref<8x128xf32, #tpu.memory_space<vmem>>, vector<8x128xf32>,
    %c0_19 = arith.constant 0 : index
    %c0_20 = arith.constant 0 : index
    %23 = vector.load %arg8[%c0_19, %c0_20] : memref<2560x128xbf16, #tpu.memory_space<vmem>>, vector<2560x128xbf16>
    %cst_21 = arith.constant dense<0.000000e+00> : vector<8x128xf32>
    %24 = tpu.matmul %0, %23, %cst_21 {dimension_numbers = #tpu.dot_dimension_numbers<[1], [0], [0], [1], [0, 0, 1, 1], [], []>} : vector<8x2560xbf16>, vector<2560x128xbf16>, vector<8x128xf32> -> vector<8x128xf32>
    %c0_22 = arith.constant 0 : index
    %c0_23 = arith.constant 0 : index
    %25 = vector.load %arg9[%c0_22, %c0_23] : memref<1x128xf32, #tpu.memory_space<vmem>>, vector<1x128xf32>
    %26 = vector.broadcast %25 : vector<1x128xf32> to vector<8x128xf32>
    %27 = arith.addf %24, %26 : vector<8x128xf32>
    %cst_24 = arith.constant 0.000000e+00 : f32
    %28 = vector.broadcast %cst_24 : f32 to vector<8x128xf32>
    %29 = arith.maximumf %27, %28 : vector<8x128xf32>
    %30 = arith.truncf %29 : vector<8x128xf32> to vector<8x128xbf16>
    %c0_25 = arith.constant 0 : index
    %c0_26 = arith.constant 0 : index
    %31 = vector.load %arg10[%c0_25, %c0_26] : memref<128x128xbf16, #tpu.memory_space<vmem>>, vector<128x128xbf16>
    %cst_27 = arith.constant dense<0.000000e+00> : vector<8x128xf32>
    %32 = tpu.matmul %30, %31, %cst_27 {dimension_numbers = #tpu.dot_dimension_numbers<[1], [0], [0], [1], [0, 0, 1, 1], [], []>} : vector<8x128xbf16>, vector<128x128xbf16>, vector<8x128xf32> -> vector<8x128xf32>
    %c0_28 = arith.constant 0 : index
    %c0_29 = arith.constant 0 : index
    %33 = vector.load %arg11[%c0_28, %c0_29] : memref<1x128xf32, #tpu.memory_space<vmem>>, vector<1x128xf32>
    %34 = vector.broadcast %33 : vector<1x128xf32> to vector<8x128xf32>
    %35 = arith.addf %32, %34 : vector<8x128xf32>
    %c0_30 = arith.constant 0 : index
    %c0_31 = arith.constant 0 : index
    %36 = vector.load %arg13[%c0_30, %c0_31] : memref<8x128xf32, #tpu.memory_space<vmem>>, vector<8x128xf32>
    tpu.vector_store %arg13[%c0_30, %c0_31], %35 {strides = array<i32>} : memref<8x128xf32, #tpu.memory_space<vmem>>, vector<8x128xf32>,
    return
  }
  func.func @transform_0(%arg0: i32) -> (i32, i32) {
    %c0_i32 = arith.constant 0 : i32
    %c0_i32_0 = arith.constant 0 : i32
    return %arg0, %c0_i32 : i32, i32
  }
  func.func @transform_1(%arg0: i32) -> (i32, i32) {
    %c0_i32 = arith.constant 0 : i32
    %c0_i32_0 = arith.constant 0 : i32
    %c0_i32_1 = arith.constant 0 : i32
    return %c0_i32, %c0_i32_0 : i32, i32
  }
  func.func @transform_2(%arg0: i32) -> (i32, i32) {
    %c0_i32 = arith.constant 0 : i32
    %c0_i32_0 = arith.constant 0 : i32
    %c0_i32_1 = arith.constant 0 : i32
    return %c0_i32, %c0_i32_0 : i32, i32
  }
  func.func @transform_3(%arg0: i32) -> (i32, i32) {
    %c0_i32 = arith.constant 0 : i32
    %c0_i32_0 = arith.constant 0 : i32
    %c0_i32_1 = arith.constant 0 : i32
    return %c0_i32, %c0_i32_0 : i32, i32
  }
  func.func @transform_4(%arg0: i32) -> (i32, i32) {
    %c0_i32 = arith.constant 0 : i32
    %c0_i32_0 = arith.constant 0 : i32
    %c0_i32_1 = arith.constant 0 : i32
    return %c0_i32, %c0_i32_0 : i32, i32
  }
  func.func @transform_5(%arg0: i32) -> (i32, i32) {
    %c0_i32 = arith.constant 0 : i32
    %c0_i32_0 = arith.constant 0 : i32
    %c0_i32_1 = arith.constant 0 : i32
    return %c0_i32, %c0_i32_0 : i32, i32
  }
  func.func @transform_6(%arg0: i32) -> (i32, i32) {
    %c0_i32 = arith.constant 0 : i32
    %c0_i32_0 = arith.constant 0 : i32
    %c0_i32_1 = arith.constant 0 : i32
    return %c0_i32, %c0_i32_0 : i32, i32
  }
  func.func @transform_7(%arg0: i32) -> (i32, i32) {
    %c0_i32 = arith.constant 0 : i32
    %c0_i32_0 = arith.constant 0 : i32
    %c0_i32_1 = arith.constant 0 : i32
    return %c0_i32, %c0_i32_0 : i32, i32
  }
  func.func @transform_8(%arg0: i32) -> (i32, i32) {
    %c0_i32 = arith.constant 0 : i32
    %c0_i32_0 = arith.constant 0 : i32
    %c0_i32_1 = arith.constant 0 : i32
    return %c0_i32, %c0_i32_0 : i32, i32
  }
  func.func @transform_9(%arg0: i32) -> (i32, i32) {
    %c0_i32 = arith.constant 0 : i32
    %c0_i32_0 = arith.constant 0 : i32
    %c0_i32_1 = arith.constant 0 : i32
    return %c0_i32, %c0_i32_0 : i32, i32
  }
  func.func @transform_10(%arg0: i32) -> (i32, i32) {
    %c0_i32 = arith.constant 0 : i32
    %c0_i32_0 = arith.constant 0 : i32
    %c0_i32_1 = arith.constant 0 : i32
    return %c0_i32, %c0_i32_0 : i32, i32
  }
  func.func @transform_11(%arg0: i32) -> (i32, i32) {
    %c0_i32 = arith.constant 0 : i32
    %c0_i32_0 = arith.constant 0 : i32
    return %arg0, %c0_i32 : i32, i32
  }
  func.func @transform_12(%arg0: i32) -> (i32, i32) {
    %c0_i32 = arith.constant 0 : i32
    %c0_i32_0 = arith.constant 0 : i32
    return %arg0, %c0_i32 : i32, i32
  }
}

</mosaic_0001>

<llo_original>
// kernel: cnn_model_forward.3
$region0: #{cnn_model_forward.3}
  #allocation0 [shape = 'u32[]', space=smem, size = 0x4, offset = 0x4, fixed_abs, tag = 'smem constant byte address 0x4 - core index']
  #allocation1 [shape = 'u32[72,128]{1,0:T(1,128)}', space=vmem, size = 0x9000, scoped, tag = 'internal scratch']
  %s0 = inlined_call_operand.vmem [shape: bf16[288,32], index: 0, kind: input, shape index: {}]
  %s1 = inlined_call_operand.vmem [shape: bf16[288,32], index: 1, kind: input, shape index: {}]
  %s2 = inlined_call_operand.vmem [shape: bf16[288,32], index: 2, kind: input, shape index: {}]
  %s3 = inlined_call_operand.vmem [shape: bf16[288,32], index: 3, kind: input, shape index: {}]
  %s4 = inlined_call_operand.vmem [shape: bf16[32,64], index: 4, kind: input, shape index: {}]
  %s5 = inlined_call_operand.vmem [shape: f32[1,64], index: 5, kind: input, shape index: {}]
  %s6 = inlined_call_operand.vmem [shape: bf16[288,64], index: 6, kind: output, shape index: {}]
  %s7 = sld [smem:[#allocation0]]
  $region34: #{cnn_model_forward.3} parent=0
    _
  %s9 = ssub.s32 1, %s7
  %s10 = scalar_select 0, %s9, %s7
  // Predicated region
  $region2: #{cnn_model_forward.3} parent=0 // pred_check
    _
  $region3: #{cnn_model_forward.3} parent=0 // pred_check_branch
    %12 = sbr.rel (0) target = $region5
  $region4: #{cnn_model_forward.3} parent=0 // pred_region
    _
  $region5: #{cnn_model_forward.3} parent=0 // pred_fallthru
    _
  // Predicated region
  $region6: #{cnn_model_forward.3} parent=0 // pred_check
    _
  $region7: #{cnn_model_forward.3} parent=0 // pred_check_branch
    %14 = sbr.rel (0) target = $region9
  $region8: #{cnn_model_forward.3} parent=0 // pred_region
    _
  $region9: #{cnn_model_forward.3} parent=0 // pred_fallthru
    _
  // Predicated region
  $region10: #{cnn_model_forward.3} parent=0 // pred_check
    _
  $region11: #{cnn_model_forward.3} parent=0 // pred_check_branch
    %16 = sbr.rel (0) target = $region13
  $region12: #{cnn_model_forward.3} parent=0 // pred_region
    _
  $region13: #{cnn_model_forward.3} parent=0 // pred_fallthru
    _
  // Predicated region
  $region14: #{cnn_model_forward.3} parent=0 // pred_check
    _
  $region15: #{cnn_model_forward.3} parent=0 // pred_check_branch
    %18 = sbr.rel (0) target = $region17
  $region16: #{cnn_model_forward.3} parent=0 // pred_region
    _
  $region17: #{cnn_model_forward.3} parent=0 // pred_fallthru
    _
  // Predicated region
  $region18: #{cnn_model_forward.3} parent=0 // pred_check
    _
  $region19: #{cnn_model_forward.3} parent=0 // pred_check_branch
    %20 = sbr.rel (0) target = $region21
  $region20: #{cnn_model_forward.3} parent=0 // pred_region
    _
  $region21: #{cnn_model_forward.3} parent=0 // pred_fallthru
    _
  // Predicated region
  $region22: #{cnn_model_forward.3} parent=0 // pred_check
    _
  $region23: #{cnn_model_forward.3} parent=0 // pred_check_branch
    %22 = sbr.rel (0) target = $region25
  $region24: #{cnn_model_forward.3} parent=0 // pred_region
    _
  $region25: #{cnn_model_forward.3} parent=0 // pred_fallthru
    _
  %v24 = vld [vmem:[%s4] sm:$0xf]
  %v25 = vld [vmem:[%s4 + $0x4] sm:$0xf]
  %v26 = vld [vmem:[%s4 + $0x8] sm:$0xf]
  %v27 = vld [vmem:[%s4 + $0xc] sm:$0xf]
  %v28 = vld [vmem:[%s0] sm:$0xf]
  %v29 = vld [vmem:[%s0 + $0x4] sm:$0xf]
  %v30 = vld [vmem:[%s0 + $0x8] sm:$0xf]
  %v31 = vld [vmem:[%s0 + $0xc] sm:$0xf]
  %v32 = vld [vmem:[%s0 + $0x10] sm:$0xf]
  %v33 = vld [vmem:[%s0 + $0x14] sm:$0xf]
  %v34 = vld [vmem:[%s0 + $0x18] sm:$0xf]
  %v35 = vld [vmem:[%s0 + $0x1c] sm:$0xf]
  %v36 = vld [vmem:[%s0 + $0x20] sm:$0xf]
  %v37 = vld [vmem:[%s0 + $0x24] sm:$0xf]
  %v38 = vld [vmem:[%s0 + $0x28] sm:$0xf]
  %v39 = vld [vmem:[%s0 + $0x2c] sm:$0xf]
  %v40 = vld [vmem:[%s0 + $0x30] sm:$0xf]
  %v41 = vld [vmem:[%s0 + $0x34] sm:$0xf]
  %v42 = vld [vmem:[%s0 + $0x38] sm:$0xf]
  %v43 = vld [vmem:[%s0 + $0x3c] sm:$0xf]
  %v44 = vld [vmem:[%s0 + $0x40] sm:$0xf]
  %v45 = vld [vmem:[%s0 + $0x44] sm:$0xf]
  %v46 = vld [vmem:[%s0 + $0x48] sm:$0xf]
  %v47 = vld [vmem:[%s0 + $0x4c] sm:$0xf]
  %v48 = vld [vmem:[%s0 + $0x50] sm:$0xf]
  %v49 = vld [vmem:[%s0 + $0x54] sm:$0xf]
  %v50 = vld [vmem:[%s0 + $0x58] sm:$0xf]
  %v51 = vld [vmem:[%s0 + $0x5c] sm:$0xf]
  %v52 = vld [vmem:[%s0 + $0x60] sm:$0xf]
  %v53 = vld [vmem:[%s0 + $0x64] sm:$0xf]
  %v54 = vld [vmem:[%s0 + $0x68] sm:$0xf]
  %v55 = vld [vmem:[%s0 + $0x6c] sm:$0xf]
  %v56 = vld [vmem:[%s0 + $0x70] sm:$0xf]
  %v57 = vld [vmem:[%s0 + $0x74] sm:$0xf]
  %v58 = vld [vmem:[%s0 + $0x78] sm:$0xf]
  %v59 = vld [vmem:[%s0 + $0x7c] sm:$0xf]
  %v60 = vld [vmem:[%s0 + $0x80] sm:$0xf]
  %v61 = vld [vmem:[%s0 + $0x84] sm:$0xf]
  %v62 = vld [vmem:[%s0 + $0x88] sm:$0xf]
  %v63 = vld [vmem:[%s0 + $0x8c] sm:$0xf]
  %v100 = vunpack.c.l.b16 %v28
  %v101 = vunpack.c.l.b16 %v29
  %v102 = vunpack.c.l.b16 %v30
  %v103 = vunpack.c.l.b16 %v31
  %v104 = vunpack.c.l.b16 %v32
  %v105 = vunpack.c.l.b16 %v33
  %v106 = vunpack.c.l.b16 %v34
  %v107 = vunpack.c.l.b16 %v35
  %v108 = vunpack.c.l.b16 %v36
  %v109 = vunpack.c.l.b16 %v37
  %v110 = vunpack.c.l.b16 %v38
  %v111 = vunpack.c.l.b16 %v39
  %v112 = vunpack.c.l.b16 %v40
  %v113 = vunpack.c.l.b16 %v41
  %v114 = vunpack.c.l.b16 %v42
  %v115 = vunpack.c.l.b16 %v43
  %v116 = vunpack.c.l.b16 %v44
  %v117 = vunpack.c.l.b16 %v45
  %v118 = vunpack.c.l.b16 %v46
  %v119 = vunpack.c.l.b16 %v47
  %v120 = vunpack.c.l.b16 %v48
  %v121 = vunpack.c.l.b16 %v49
  %v122 = vunpack.c.l.b16 %v50
  %v123 = vunpack.c.l.b16 %v51
  %v124 = vunpack.c.l.b16 %v52
  %v125 = vunpack.c.l.b16 %v53
  %v126 = vunpack.c.l.b16 %v54
  %v127 = vunpack.c.l.b16 %v55
  %v128 = vunpack.c.l.b16 %v56
  %v129 = vunpack.c.l.b16 %v57
  %v130 = vunpack.c.l.b16 %v58
  %v131 = vunpack.c.l.b16 %v59
  %v132 = vunpack.c.l.b16 %v60
  %v133 = vunpack.c.l.b16 %v61
  %v134 = vunpack.c.l.b16 %v62
  %v135 = vunpack.c.l.b16 %v63
  %v136 = vpack.c.b16 %v101, %v100
  %v137 = vpack.c.b16 %v103, %v102
  %v138 = vpack.c.b16 %v105, %v104
  %v139 = vpack.c.b16 %v107, %v106
  %v140 = vpack.c.b16 %v109, %v108
  %v141 = vpack.c.b16 %v111, %v110
  %v142 = vpack.c.b16 %v113, %v112
  %v143 = vpack.c.b16 %v115, %v114
  %v144 = vpack.c.b16 %v117, %v116
  %v145 = vpack.c.b16 %v119, %v118
  %v146 = vpack.c.b16 %v121, %v120
  %v147 = vpack.c.b16 %v123, %v122
  %v148 = vpack.c.b16 %v125, %v124
  %v149 = vpack.c.b16 %v127, %v126
  %v150 = vpack.c.b16 %v129, %v128
  %v151 = vpack.c.b16 %v131, %v130
  %v152 = vpack.c.b16 %v133, %v132
  %v153 = vpack.c.b16 %v135, %v134
  %v158 = vunpack.c.l.b16 %v24
  %v159 = vunpack.c.l.b16 %v25
  %v160 = vunpack.c.l.b16 %v26
  %v161 = vunpack.c.l.b16 %v27
  %v162 = vpack.c.b16 %v159, %v158
  %v163 = vpack.c.b16 %v161, %v160
  %vm166 = vcmask 261120
  %v168 = vsel %vm166, %v136, 0
  %v171 = vsel %vm166, %v137, 0
  %v174 = vsel %vm166, %v138, 0
  %v177 = vsel %vm166, %v139, 0
  %v180 = vsel %vm166, %v140, 0
  %v183 = vsel %vm166, %v141, 0
  %v186 = vsel %vm166, %v142, 0
  %v189 = vsel %vm166, %v143, 0
  %v192 = vsel %vm166, %v144, 0
  %v195 = vsel %vm166, %v145, 0
  %v198 = vsel %vm166, %v146, 0
  %v201 = vsel %vm166, %v147, 0
  %v204 = vsel %vm166, %v148, 0
  %v207 = vsel %vm166, %v149, 0
  %v210 = vsel %vm166, %v150, 0
  %v213 = vsel %vm166, %v151, 0
  %v216 = vsel %vm166, %v152, 0
  %v219 = vsel %vm166, %v153, 0
  %221 = vmatpush.bf16.msra.mxu0 0
  %222 = vmatpush.bf16.msra.mxu0 0
  %223 = vmatpush.bf16.msra.mxu0 0
  %224 = vmatpush.bf16.msra.mxu0 0
  %225 = vmatpush.bf16.msra.mxu0 0
  %226 = vmatpush.bf16.msra.mxu0 0
  %227 = vmatpush.bf16.msra.mxu0 %v163
  %228 = vmatpush.bf16.msra.mxu0 %v162
  %229 = vmatmul.bf16.gmra.mxu0 %v168
  %v230 = vpop.f32.mrf.mxu0
  %v231 = vadd.f32 0.0, %v230
  %v232 = vpop.f32.mrf.mxu0
  %v233 = vadd.f32 0.0, %v232
  %234 = vmatmul.bf16.gmra.mxu0 %v171
  %v235 = vpop.f32.mrf.mxu0
  %v236 = vadd.f32 0.0, %v235
  %v237 = vpop.f32.mrf.mxu0
  %v238 = vadd.f32 0.0, %v237
  %239 = vmatmul.bf16.gmra.mxu0 %v174
  %v240 = vpop.f32.mrf.mxu0
  %v241 = vadd.f32 0.0, %v240
  %v242 = vpop.f32.mrf.mxu0
  %v243 = vadd.f32 0.0, %v242
  %244 = vmatmul.bf16.gmra.mxu0 %v177
  %v245 = vpop.f32.mrf.mxu0
  %v246 = vadd.f32 0.0, %v245
  %v247 = vpop.f32.mrf.mxu0
  %v248 = vadd.f32 0.0, %v247
  %249 = vmatmul.bf16.gmra.mxu0 %v180
  %v250 = vpop.f32.mrf.mxu0
  %v251 = vadd.f32 0.0, %v250
  %v252 = vpop.f32.mrf.mxu0
  %v253 = vadd.f32 0.0, %v252
  %254 = vmatmul.bf16.gmra.mxu0 %v183
  %v255 = vpop.f32.mrf.mxu0
  %v256 = vadd.f32 0.0, %v255
  %v257 = vpop.f32.mrf.mxu0
  %v258 = vadd.f32 0.0, %v257
  %259 = vmatmul.bf16.gmra.mxu0 %v186
  %v260 = vpop.f32.mrf.mxu0
  %v261 = vadd.f32 0.0, %v260
  %v262 = vpop.f32.mrf.mxu0
  %v263 = vadd.f32 0.0, %v262
  %264 = vmatmul.bf16.gmra.mxu0 %v189
  %v265 = vpop.f32.mrf.mxu0
  %v266 = vadd.f32 0.0, %v265
  %v267 = vpop.f32.mrf.mxu0
  %v268 = vadd.f32 0.0, %v267
  %269 = vmatmul.bf16.gmra.mxu0 %v192
  %v270 = vpop.f32.mrf.mxu0
  %v271 = vadd.f32 0.0, %v270
  %v272 = vpop.f32.mrf.mxu0
  %v273 = vadd.f32 0.0, %v272
  %274 = vmatmul.bf16.gmra.mxu0 %v195
  %v275 = vpop.f32.mrf.mxu0
  %v276 = vadd.f32 0.0, %v275
  %v277 = vpop.f32.mrf.mxu0
  %v278 = vadd.f32 0.0, %v277
  %279 = vmatmul.bf16.gmra.mxu0 %v198
  %v280 = vpop.f32.mrf.mxu0
  %v281 = vadd.f32 0.0, %v280
  %v282 = vpop.f32.mrf.mxu0
  %v283 = vadd.f32 0.0, %v282
  %284 = vmatmul.bf16.gmra.mxu0 %v201
  %v285 = vpop.f32.mrf.mxu0
  %v286 = vadd.f32 0.0, %v285
  %v287 = vpop.f32.mrf.mxu0
  %v288 = vadd.f32 0.0, %v287
  %289 = vmatmul.bf16.gmra.mxu0 %v204
  %v290 = vpop.f32.mrf.mxu0
  %v291 = vadd.f32 0.0, %v290
  %v292 = vpop.f32.mrf.mxu0
  %v293 = vadd.f32 0.0, %v292
  %294 = vmatmul.bf16.gmra.mxu0 %v207
  %v295 = vpop.f32.mrf.mxu0
  %v296 = vadd.f32 0.0, %v295
  %v297 = vpop.f32.mrf.mxu0
  %v298 = vadd.f32 0.0, %v297
  %299 = vmatmul.bf16.gmra.mxu0 %v210
  %v300 = vpop.f32.mrf.mxu0
  %v301 = vadd.f32 0.0, %v300
  %v302 = vpop.f32.mrf.mxu0
  %v303 = vadd.f32 0.0, %v302
  %304 = vmatmul.bf16.gmra.mxu0 %v213
  %v305 = vpop.f32.mrf.mxu0
  %v306 = vadd.f32 0.0, %v305
  %v307 = vpop.f32.mrf.mxu0
  %v308 = vadd.f32 0.0, %v307
  %309 = vmatmul.bf16.gmra.mxu0 %v216
  %v310 = vpop.f32.mrf.mxu0
  %v311 = vadd.f32 0.0, %v310
  %v312 = vpop.f32.mrf.mxu0
  %v313 = vadd.f32 0.0, %v312
  %314 = vmatmul.bf16.gmra.mxu0 %v219
  %v315 = vpop.f32.mrf.mxu0
  %v316 = vadd.f32 0.0, %v315
  %v317 = vpop.f32.mrf.mxu0
  %v318 = vadd.f32 0.0, %v317
  %319 = vdwg.mxu0
  %v320 = vld [vmem:[%s1] sm:$0xf]
  %v321 = vld [vmem:[%s1 + $0x4] sm:$0xf]
  %v322 = vld [vmem:[%s1 + $0x8] sm:$0xf]
  %v323 = vld [vmem:[%s1 + $0xc] sm:$0xf]
  %v324 = vld [vmem:[%s1 + $0x10] sm:$0xf]
  %v325 = vld [vmem:[%s1 + $0x14] sm:$0xf]
  %v326 = vld [vmem:[%s1 + $0x18] sm:$0xf]
  %v327 = vld [vmem:[%s1 + $0x1c] sm:$0xf]
  %v328 = vld [vmem:[%s1 + $0x20] sm:$0xf]
  %v329 = vld [vmem:[%s1 + $0x24] sm:$0xf]
  %v330 = vld [vmem:[%s1 + $0x28] sm:$0xf]
  %v331 = vld [vmem:[%s1 + $0x2c] sm:$0xf]
  %v332 = vld [vmem:[%s1 + $0x30] sm:$0xf]
  %v333 = vld [vmem:[%s1 + $0x34] sm:$0xf]
  %v334 = vld [vmem:[%s1 + $0x38] sm:$0xf]
  %v335 = vld [vmem:[%s1 + $0x3c] sm:$0xf]
  %v336 = vld [vmem:[%s1 + $0x40] sm:$0xf]
  %v337 = vld [vmem:[%s1 + $0x44] sm:$0xf]
  %v338 = vld [vmem:[%s1 + $0x48] sm:$0xf]
  %v339 = vld [vmem:[%s1 + $0x4c] sm:$0xf]
  %v340 = vld [vmem:[%s1 + $0x50] sm:$0xf]
  %v341 = vld [vmem:[%s1 + $0x54] sm:$0xf]
  %v342 = vld [vmem:[%s1 + $0x58] sm:$0xf]
  %v343 = vld [vmem:[%s1 + $0x5c] sm:$0xf]
  %v344 = vld [vmem:[%s1 + $0x60] sm:$0xf]
  %v345 = vld [vmem:[%s1 + $0x64] sm:$0xf]
  %v346 = vld [vmem:[%s1 + $0x68] sm:$0xf]
  %v347 = vld [vmem:[%s1 + $0x6c] sm:$0xf]
  %v348 = vld [vmem:[%s1 + $0x70] sm:$0xf]
  %v349 = vld [vmem:[%s1 + $0x74] sm:$0xf]
  %v350 = vld [vmem:[%s1 + $0x78] sm:$0xf]
  %v351 = vld [vmem:[%s1 + $0x7c] sm:$0xf]
  %v352 = vld [vmem:[%s1 + $0x80] sm:$0xf]
  %v353 = vld [vmem:[%s1 + $0x84] sm:$0xf]
  %v354 = vld [vmem:[%s1 + $0x88] sm:$0xf]
  %v355 = vld [vmem:[%s1 + $0x8c] sm:$0xf]
  %v392 = vunpack.c.l.b16 %v320
  %v393 = vunpack.c.l.b16 %v321
  %v394 = vunpack.c.l.b16 %v322
  %v395 = vunpack.c.l.b16 %v323
  %v396 = vunpack.c.l.b16 %v324
  %v397 = vunpack.c.l.b16 %v325
  %v398 = vunpack.c.l.b16 %v326
  %v399 = vunpack.c.l.b16 %v327
  %v400 = vunpack.c.l.b16 %v328
  %v401 = vunpack.c.l.b16 %v329
  %v402 = vunpack.c.l.b16 %v330
  %v403 = vunpack.c.l.b16 %v331
  %v404 = vunpack.c.l.b16 %v332
  %v405 = vunpack.c.l.b16 %v333
  %v406 = vunpack.c.l.b16 %v334
  %v407 = vunpack.c.l.b16 %v335
  %v408 = vunpack.c.l.b16 %v336
  %v409 = vunpack.c.l.b16 %v337
  %v410 = vunpack.c.l.b16 %v338
  %v411 = vunpack.c.l.b16 %v339
  %v412 = vunpack.c.l.b16 %v340
  %v413 = vunpack.c.l.b16 %v341
  %v414 = vunpack.c.l.b16 %v342
  %v415 = vunpack.c.l.b16 %v343
  %v416 = vunpack.c.l.b16 %v344
  %v417 = vunpack.c.l.b16 %v345
  %v418 = vunpack.c.l.b16 %v346
  %v419 = vunpack.c.l.b16 %v347
  %v420 = vunpack.c.l.b16 %v348
  %v421 = vunpack.c.l.b16 %v349
  %v422 = vunpack.c.l.b16 %v350
  %v423 = vunpack.c.l.b16 %v351
  %v424 = vunpack.c.l.b16 %v352
  %v425 = vunpack.c.l.b16 %v353
  %v426 = vunpack.c.l.b16 %v354
  %v427 = vunpack.c.l.b16 %v355
  %v428 = vpack.c.b16 %v393, %v392
  %v429 = vpack.c.b16 %v395, %v394
  %v430 = vpack.c.b16 %v397, %v396
  %v431 = vpack.c.b16 %v399, %v398
  %v432 = vpack.c.b16 %v401, %v400
  %v433 = vpack.c.b16 %v403, %v402
  %v434 = vpack.c.b16 %v405, %v404
  %v435 = vpack.c.b16 %v407, %v406
  %v436 = vpack.c.b16 %v409, %v408
  %v437 = vpack.c.b16 %v411, %v410
  %v438 = vpack.c.b16 %v413, %v412
  %v439 = vpack.c.b16 %v415, %v414
  %v440 = vpack.c.b16 %v417, %v416
  %v441 = vpack.c.b16 %v419, %v418
  %v442 = vpack.c.b16 %v421, %v420
  %v443 = vpack.c.b16 %v423, %v422
  %v444 = vpack.c.b16 %v425, %v424
  %v445 = vpack.c.b16 %v427, %v426
  %v447 = vsel %vm166, %v428, 0
  %v450 = vsel %vm166, %v429, 0
  %v453 = vsel %vm166, %v430, 0
  %v456 = vsel %vm166, %v431, 0
  %v459 = vsel %vm166, %v432, 0
  %v462 = vsel %vm166, %v433, 0
  %v465 = vsel %vm166, %v434, 0
  %v468 = vsel %vm166, %v435, 0
  %v471 = vsel %vm166, %v436, 0
  %v474 = vsel %vm166, %v437, 0
  %v477 = vsel %vm166, %v438, 0
  %v480 = vsel %vm166, %v439, 0
  %v483 = vsel %vm166, %v440, 0
  %v486 = vsel %vm166, %v441, 0
  %v489 = vsel %vm166, %v442, 0
  %v492 = vsel %vm166, %v443, 0
  %v495 = vsel %vm166, %v444, 0
  %v498 = vsel %vm166, %v445, 0
  %500 = vmatpush.bf16.msra.mxu0 0
  %501 = vmatpush.bf16.msra.mxu0 0
  %502 = vmatpush.bf16.msra.mxu0 0
  %503 = vmatpush.bf16.msra.mxu0 0
  %504 = vmatpush.bf16.msra.mxu0 0
  %505 = vmatpush.bf16.msra.mxu0 0
  %506 = vmatpush.bf16.msra.mxu0 %v163
  %507 = vmatpush.bf16.msra.mxu0 %v162
  %508 = vmatmul.bf16.gmra.mxu0 %v447
  %v509 = vpop.f32.mrf.mxu0
  %v510 = vadd.f32 0.0, %v509
  %v511 = vpop.f32.mrf.mxu0
  %v512 = vadd.f32 0.0, %v511
  %513 = vmatmul.bf16.gmra.mxu0 %v450
  %v514 = vpop.f32.mrf.mxu0
  %v515 = vadd.f32 0.0, %v514
  %v516 = vpop.f32.mrf.mxu0
  %v517 = vadd.f32 0.0, %v516
  %518 = vmatmul.bf16.gmra.mxu0 %v453
  %v519 = vpop.f32.mrf.mxu0
  %v520 = vadd.f32 0.0, %v519
  %v521 = vpop.f32.mrf.mxu0
  %v522 = vadd.f32 0.0, %v521
  %523 = vmatmul.bf16.gmra.mxu0 %v456
  %v524 = vpop.f32.mrf.mxu0
  %v525 = vadd.f32 0.0, %v524
  %v526 = vpop.f32.mrf.mxu0
  %v527 = vadd.f32 0.0, %v526
  %528 = vmatmul.bf16.gmra.mxu0 %v459
  %v529 = vpop.f32.mrf.mxu0
  %v530 = vadd.f32 0.0, %v529
  %v531 = vpop.f32.mrf.mxu0
  %v532 = vadd.f32 0.0, %v531
  %533 = vmatmul.bf16.gmra.mxu0 %v462
  %v534 = vpop.f32.mrf.mxu0
  %v535 = vadd.f32 0.0, %v534
  %v536 = vpop.f32.mrf.mxu0
  %v537 = vadd.f32 0.0, %v536
  %538 = vmatmul.bf16.gmra.mxu0 %v465
  %v539 = vpop.f32.mrf.mxu0
  %v540 = vadd.f32 0.0, %v539
  %v541 = vpop.f32.mrf.mxu0
  %v542 = vadd.f32 0.0, %v541
  %543 = vmatmul.bf16.gmra.mxu0 %v468
  %v544 = vpop.f32.mrf.mxu0
  %v545 = vadd.f32 0.0, %v544
  %v546 = vpop.f32.mrf.mxu0
  %v547 = vadd.f32 0.0, %v546
  %548 = vmatmul.bf16.gmra.mxu0 %v471
  %v549 = vpop.f32.mrf.mxu0
  %v550 = vadd.f32 0.0, %v549
  %v551 = vpop.f32.mrf.mxu0
  %v552 = vadd.f32 0.0, %v551
  %553 = vmatmul.bf16.gmra.mxu0 %v474
  %v554 = vpop.f32.mrf.mxu0
  %v555 = vadd.f32 0.0, %v554
  %v556 = vpop.f32.mrf.mxu0
  %v557 = vadd.f32 0.0, %v556
  %558 = vmatmul.bf16.gmra.mxu0 %v477
  %v559 = vpop.f32.mrf.mxu0
  %v560 = vadd.f32 0.0, %v559
  %v561 = vpop.f32.mrf.mxu0
  %v562 = vadd.f32 0.0, %v561
  %563 = vmatmul.bf16.gmra.mxu0 %v480
  %v564 = vpop.f32.mrf.mxu0
  %v565 = vadd.f32 0.0, %v564
  %v566 = vpop.f32.mrf.mxu0
  %v567 = vadd.f32 0.0, %v566
  %568 = vmatmul.bf16.gmra.mxu0 %v483
  %v569 = vpop.f32.mrf.mxu0
  %v570 = vadd.f32 0.0, %v569
  %v571 = vpop.f32.mrf.mxu0
  %v572 = vadd.f32 0.0, %v571
  %573 = vmatmul.bf16.gmra.mxu0 %v486
  %v574 = vpop.f32.mrf.mxu0
  %v575 = vadd.f32 0.0, %v574
  %v576 = vpop.f32.mrf.mxu0
  %v577 = vadd.f32 0.0, %v576
  %578 = vmatmul.bf16.gmra.mxu0 %v489
  %v579 = vpop.f32.mrf.mxu0
  %v580 = vadd.f32 0.0, %v579
  %v581 = vpop.f32.mrf.mxu0
  %v582 = vadd.f32 0.0, %v581
  %583 = vmatmul.bf16.gmra.mxu0 %v492
  %v584 = vpop.f32.mrf.mxu0
  %v585 = vadd.f32 0.0, %v584
  %v586 = vpop.f32.mrf.mxu0
  %v587 = vadd.f32 0.0, %v586
  %588 = vmatmul.bf16.gmra.mxu0 %v495
  %v589 = vpop.f32.mrf.mxu0
  %v590 = vadd.f32 0.0, %v589
  %v591 = vpop.f32.mrf.mxu0
  %v592 = vadd.f32 0.0, %v591
  %593 = vmatmul.bf16.gmra.mxu0 %v498
  %v594 = vpop.f32.mrf.mxu0
  %v595 = vadd.f32 0.0, %v594
  %v596 = vpop.f32.mrf.mxu0
  %v597 = vadd.f32 0.0, %v596
  %598 = vdwg.mxu0
  %v599 = vmax.f32 %v231, %v510
  %v600 = vmax.f32 %v233, %v512
  %v601 = vmax.f32 %v236, %v515
  %v602 = vmax.f32 %v238, %v517
  %v603 = vmax.f32 %v241, %v520
  %v604 = vmax.f32 %v243, %v522
  %v605 = vmax.f32 %v246, %v525
  %v606 = vmax.f32 %v248, %v527
  %v607 = vmax.f32 %v251, %v530
  %v608 = vmax.f32 %v253, %v532
  %v609 = vmax.f32 %v256, %v535
  %v610 = vmax.f32 %v258, %v537
  %v611 = vmax.f32 %v261, %v540
  %v612 = vmax.f32 %v263, %v542
  %v613 = vmax.f32 %v266, %v545
  %v614 = vmax.f32 %v268, %v547
  %v615 = vmax.f32 %v271, %v550
  %v616 = vmax.f32 %v273, %v552
  %v617 = vmax.f32 %v276, %v555
  %v618 = vmax.f32 %v278, %v557
  %v619 = vmax.f32 %v281, %v560
  %v620 = vmax.f32 %v283, %v562
  %v621 = vmax.f32 %v286, %v565
  %v622 = vmax.f32 %v288, %v567
  %v623 = vmax.f32 %v291, %v570
  %v624 = vmax.f32 %v293, %v572
  %v625 = vmax.f32 %v296, %v575
  %v626 = vmax.f32 %v298, %v577
  %v627 = vmax.f32 %v301, %v580
  %v628 = vmax.f32 %v303, %v582
  %v629 = vmax.f32 %v306, %v585
  %v630 = vmax.f32 %v308, %v587
  %v631 = vmax.f32 %v311, %v590
  %v632 = vmax.f32 %v313, %v592
  %v633 = vmax.f32 %v316, %v595
  %v634 = vmax.f32 %v318, %v597
  %v635 = vld [vmem:[%s2] sm:$0xf]
  %v636 = vld [vmem:[%s2 + $0x4] sm:$0xf]
  %v637 = vld [vmem:[%s2 + $0x8] sm:$0xf]
  %v638 = vld [vmem:[%s2 + $0xc] sm:$0xf]
  %v639 = vld [vmem:[%s2 + $0x10] sm:$0xf]
  %v640 = vld [vmem:[%s2 + $0x14] sm:$0xf]
  %v641 = vld [vmem:[%s2 + $0x18] sm:$0xf]
  %v642 = vld [vmem:[%s2 + $0x1c] sm:$0xf]
  %v643 = vld [vmem:[%s2 + $0x20] sm:$0xf]
  %v644 = vld [vmem:[%s2 + $0x24] sm:$0xf]
  %v645 = vld [vmem:[%s2 + $0x28] sm:$0xf]
  %v646 = vld [vmem:[%s2 + $0x2c] sm:$0xf]
  %v647 = vld [vmem:[%s2 + $0x30] sm:$0xf]
  %v648 = vld [vmem:[%s2 + $0x34] sm:$0xf]
  %v649 = vld [vmem:[%s2 + $0x38] sm:$0xf]
  %v650 = vld [vmem:[%s2 + $0x3c] sm:$0xf]
  %v651 = vld [vmem:[%s2 + $0x40] sm:$0xf]
  %v652 = vld [vmem:[%s2 + $0x44] sm:$0xf]
  %v653 = vld [vmem:[%s2 + $0x48] sm:$0xf]
  %v654 = vld [vmem:[%s2 + $0x4c] sm:$0xf]
  %v655 = vld [vmem:[%s2 + $0x50] sm:$0xf]
  %v656 = vld [vmem:[%s2 + $0x54] sm:$0xf]
  %v657 = vld [vmem:[%s2 + $0x58] sm:$0xf]
  %v658 = vld [vmem:[%s2 + $0x5c] sm:$0xf]
  %v659 = vld [vmem:[%s2 + $0x60] sm:$0xf]
  %v660 = vld [vmem:[%s2 + $0x64] sm:$0xf]
  %v661 = vld [vmem:[%s2 + $0x68] sm:$0xf]
  %v662 = vld [vmem:[%s2 + $0x6c] sm:$0xf]
  %v663 = vld [vmem:[%s2 + $0x70] sm:$0xf]
  %v664 = vld [vmem:[%s2 + $0x74] sm:$0xf]
  %v665 = vld [vmem:[%s2 + $0x78] sm:$0xf]
  %v666 = vld [vmem:[%s2 + $0x7c] sm:$0xf]
  %v667 = vld [vmem:[%s2 + $0x80] sm:$0xf]
  %v668 = vld [vmem:[%s2 + $0x84] sm:$0xf]
  %v669 = vld [vmem:[%s2 + $0x88] sm:$0xf]
  %v670 = vld [vmem:[%s2 + $0x8c] sm:$0xf]
  %v707 = vunpack.c.l.b16 %v635
  %v708 = vunpack.c.l.b16 %v636
  %v709 = vunpack.c.l.b16 %v637
  %v710 = vunpack.c.l.b16 %v638
  %v711 = vunpack.c.l.b16 %v639
  %v712 = vunpack.c.l.b16 %v640
  %v713 = vunpack.c.l.b16 %v641
  %v714 = vunpack.c.l.b16 %v642
  %v715 = vunpack.c.l.b16 %v643
  %v716 = vunpack.c.l.b16 %v644
  %v717 = vunpack.c.l.b16 %v645
  %v718 = vunpack.c.l.b16 %v646
  %v719 = vunpack.c.l.b16 %v647
  %v720 = vunpack.c.l.b16 %v648
  %v721 = vunpack.c.l.b16 %v649
  %v722 = vunpack.c.l.b16 %v650
  %v723 = vunpack.c.l.b16 %v651
  %v724 = vunpack.c.l.b16 %v652
  %v725 = vunpack.c.l.b16 %v653
  %v726 = vunpack.c.l.b16 %v654
  %v727 = vunpack.c.l.b16 %v655
  %v728 = vunpack.c.l.b16 %v656
  %v729 = vunpack.c.l.b16 %v657
  %v730 = vunpack.c.l.b16 %v658
  %v731 = vunpack.c.l.b16 %v659
  %v732 = vunpack.c.l.b16 %v660
  %v733 = vunpack.c.l.b16 %v661
  %v734 = vunpack.c.l.b16 %v662
  %v735 = vunpack.c.l.b16 %v663
  %v736 = vunpack.c.l.b16 %v664
  %v737 = vunpack.c.l.b16 %v665
  %v738 = vunpack.c.l.b16 %v666
  %v739 = vunpack.c.l.b16 %v667
  %v740 = vunpack.c.l.b16 %v668
  %v741 = vunpack.c.l.b16 %v669
  %v742 = vunpack.c.l.b16 %v670
  %v743 = vpack.c.b16 %v708, %v707
  %v744 = vpack.c.b16 %v710, %v709
  %v745 = vpack.c.b16 %v712, %v711
  %v746 = vpack.c.b16 %v714, %v713
  %v747 = vpack.c.b16 %v716, %v715
  %v748 = vpack.c.b16 %v718, %v717
  %v749 = vpack.c.b16 %v720, %v719
  %v750 = vpack.c.b16 %v722, %v721
  %v751 = vpack.c.b16 %v724, %v723
  %v752 = vpack.c.b16 %v726, %v725
  %v753 = vpack.c.b16 %v728, %v727
  %v754 = vpack.c.b16 %v730, %v729
  %v755 = vpack.c.b16 %v732, %v731
  %v756 = vpack.c.b16 %v734, %v733
  %v757 = vpack.c.b16 %v736, %v735
  %v758 = vpack.c.b16 %v738, %v737
  %v759 = vpack.c.b16 %v740, %v739
  %v760 = vpack.c.b16 %v742, %v741
  %v762 = vsel %vm166, %v743, 0
  %v765 = vsel %vm166, %v744, 0
  %v768 = vsel %vm166, %v745, 0
  %v771 = vsel %vm166, %v746, 0
  %v774 = vsel %vm166, %v747, 0
  %v777 = vsel %vm166, %v748, 0
  %v780 = vsel %vm166, %v749, 0
  %v783 = vsel %vm166, %v750, 0
  %v786 = vsel %vm166, %v751, 0
  %v789 = vsel %vm166, %v752, 0
  %v792 = vsel %vm166, %v753, 0
  %v795 = vsel %vm166, %v754, 0
  %v798 = vsel %vm166, %v755, 0
  %v801 = vsel %vm166, %v756, 0
  %v804 = vsel %vm166, %v757, 0
  %v807 = vsel %vm166, %v758, 0
  %v810 = vsel %vm166, %v759, 0
  %v813 = vsel %vm166, %v760, 0
  %815 = vmatpush.bf16.msra.mxu0 0
  %816 = vmatpush.bf16.msra.mxu0 0
  %817 = vmatpush.bf16.msra.mxu0 0
  %818 = vmatpush.bf16.msra.mxu0 0
  %819 = vmatpush.bf16.msra.mxu0 0
  %820 = vmatpush.bf16.msra.mxu0 0
  %821 = vmatpush.bf16.msra.mxu0 %v163
  %822 = vmatpush.bf16.msra.mxu0 %v162
  %823 = vmatmul.bf16.gmra.mxu0 %v762
  %v824 = vpop.f32.mrf.mxu0
  %v825 = vadd.f32 0.0, %v824
  %v826 = vpop.f32.mrf.mxu0
  %v827 = vadd.f32 0.0, %v826
  %828 = vmatmul.bf16.gmra.mxu0 %v765
  %v829 = vpop.f32.mrf.mxu0
  %v830 = vadd.f32 0.0, %v829
  %v831 = vpop.f32.mrf.mxu0
  %v832 = vadd.f32 0.0, %v831
  %833 = vmatmul.bf16.gmra.mxu0 %v768
  %v834 = vpop.f32.mrf.mxu0
  %v835 = vadd.f32 0.0, %v834
  %v836 = vpop.f32.mrf.mxu0
  %v837 = vadd.f32 0.0, %v836
  %838 = vmatmul.bf16.gmra.mxu0 %v771
  %v839 = vpop.f32.mrf.mxu0
  %v840 = vadd.f32 0.0, %v839
  %v841 = vpop.f32.mrf.mxu0
  %v842 = vadd.f32 0.0, %v841
  %843 = vmatmul.bf16.gmra.mxu0 %v774
  %v844 = vpop.f32.mrf.mxu0
  %v845 = vadd.f32 0.0, %v844
  %v846 = vpop.f32.mrf.mxu0
  %v847 = vadd.f32 0.0, %v846
  %848 = vmatmul.bf16.gmra.mxu0 %v777
  %v849 = vpop.f32.mrf.mxu0
  %v850 = vadd.f32 0.0, %v849
  %v851 = vpop.f32.mrf.mxu0
  %v852 = vadd.f32 0.0, %v851
  %853 = vmatmul.bf16.gmra.mxu0 %v780
  %v854 = vpop.f32.mrf.mxu0
  %v855 = vadd.f32 0.0, %v854
  %v856 = vpop.f32.mrf.mxu0
  %v857 = vadd.f32 0.0, %v856
  %858 = vmatmul.bf16.gmra.mxu0 %v783
  %v859 = vpop.f32.mrf.mxu0
  %v860 = vadd.f32 0.0, %v859
  %v861 = vpop.f32.mrf.mxu0
  %v862 = vadd.f32 0.0, %v861
  %863 = vmatmul.bf16.gmra.mxu0 %v786
  %v864 = vpop.f32.mrf.mxu0
  %v865 = vadd.f32 0.0, %v864
  %v866 = vpop.f32.mrf.mxu0
  %v867 = vadd.f32 0.0, %v866
  %868 = vmatmul.bf16.gmra.mxu0 %v789
  %v869 = vpop.f32.mrf.mxu0
  %v870 = vadd.f32 0.0, %v869
  %v871 = vpop.f32.mrf.mxu0
  %v872 = vadd.f32 0.0, %v871
  %873 = vmatmul.bf16.gmra.mxu0 %v792
  %v874 = vpop.f32.mrf.mxu0
  %v875 = vadd.f32 0.0, %v874
  %v876 = vpop.f32.mrf.mxu0
  %v877 = vadd.f32 0.0, %v876
  %878 = vmatmul.bf16.gmra.mxu0 %v795
  %v879 = vpop.f32.mrf.mxu0
  %v880 = vadd.f32 0.0, %v879
  %v881 = vpop.f32.mrf.mxu0
  %v882 = vadd.f32 0.0, %v881
  %883 = vmatmul.bf16.gmra.mxu0 %v798
  %v884 = vpop.f32.mrf.mxu0
  %v885 = vadd.f32 0.0, %v884
  %v886 = vpop.f32.mrf.mxu0
  %v887 = vadd.f32 0.0, %v886
  %888 = vmatmul.bf16.gmra.mxu0 %v801
  %v889 = vpop.f32.mrf.mxu0
  %v890 = vadd.f32 0.0, %v889
  %v891 = vpop.f32.mrf.mxu0
  %v892 = vadd.f32 0.0, %v891
  %893 = vmatmul.bf16.gmra.mxu0 %v804
  %v894 = vpop.f32.mrf.mxu0
  %v895 = vadd.f32 0.0, %v894
  %v896 = vpop.f32.mrf.mxu0
  %v897 = vadd.f32 0.0, %v896
  %898 = vmatmul.bf16.gmra.mxu0 %v807
  %v899 = vpop.f32.mrf.mxu0
  %v900 = vadd.f32 0.0, %v899
  %v901 = vpop.f32.mrf.mxu0
  %v902 = vadd.f32 0.0, %v901
  %903 = vmatmul.bf16.gmra.mxu0 %v810
  %v904 = vpop.f32.mrf.mxu0
  %v905 = vadd.f32 0.0, %v904
  %v906 = vpop.f32.mrf.mxu0
  %v907 = vadd.f32 0.0, %v906
  %908 = vmatmul.bf16.gmra.mxu0 %v813
  %v909 = vpop.f32.mrf.mxu0
  %v910 = vadd.f32 0.0, %v909
  %v911 = vpop.f32.mrf.mxu0
  %v912 = vadd.f32 0.0, %v911
  %913 = vdwg.mxu0
  %v914 = vld [vmem:[%s3] sm:$0xf]
  %v915 = vld [vmem:[%s3 + $0x4] sm:$0xf]
  %v916 = vld [vmem:[%s3 + $0x8] sm:$0xf]
  %v917 = vld [vmem:[%s3 + $0xc] sm:$0xf]
  %v918 = vld [vmem:[%s3 + $0x10] sm:$0xf]
  %v919 = vld [vmem:[%s3 + $0x14] sm:$0xf]
  %v920 = vld [vmem:[%s3 + $0x18] sm:$0xf]
  %v921 = vld [vmem:[%s3 + $0x1c] sm:$0xf]
  %v922 = vld [vmem:[%s3 + $0x20] sm:$0xf]
  %v923 = vld [vmem:[%s3 + $0x24] sm:$0xf]
  %v924 = vld [vmem:[%s3 + $0x28] sm:$0xf]
  %v925 = vld [vmem:[%s3 + $0x2c] sm:$0xf]
  %v926 = vld [vmem:[%s3 + $0x30] sm:$0xf]
  %v927 = vld [vmem:[%s3 + $0x34] sm:$0xf]
  %v928 = vld [vmem:[%s3 + $0x38] sm:$0xf]
  %v929 = vld [vmem:[%s3 + $0x3c] sm:$0xf]
  %v930 = vld [vmem:[%s3 + $0x40] sm:$0xf]
  %v931 = vld [vmem:[%s3 + $0x44] sm:$0xf]
  %v932 = vld [vmem:[%s3 + $0x48] sm:$0xf]
  %v933 = vld [vmem:[%s3 + $0x4c] sm:$0xf]
  %v934 = vld [vmem:[%s3 + $0x50] sm:$0xf]
  %v935 = vld [vmem:[%s3 + $0x54] sm:$0xf]
  %v936 = vld [vmem:[%s3 + $0x58] sm:$0xf]
  %v937 = vld [vmem:[%s3 + $0x5c] sm:$0xf]
  %v938 = vld [vmem:[%s3 + $0x60] sm:$0xf]
  %v939 = vld [vmem:[%s3 + $0x64] sm:$0xf]
  %v940 = vld [vmem:[%s3 + $0x68] sm:$0xf]
  %v941 = vld [vmem:[%s3 + $0x6c] sm:$0xf]
  %v942 = vld [vmem:[%s3 + $0x70] sm:$0xf]
  %v943 = vld [vmem:[%s3 + $0x74] sm:$0xf]
  %v944 = vld [vmem:[%s3 + $0x78] sm:$0xf]
  %v945 = vld [vmem:[%s3 + $0x7c] sm:$0xf]
  %v946 = vld [vmem:[%s3 + $0x80] sm:$0xf]
  %v947 = vld [vmem:[%s3 + $0x84] sm:$0xf]
  %v948 = vld [vmem:[%s3 + $0x88] sm:$0xf]
  %v949 = vld [vmem:[%s3 + $0x8c] sm:$0xf]
  %v986 = vunpack.c.l.b16 %v914
  %v987 = vunpack.c.l.b16 %v915
  %v988 = vunpack.c.l.b16 %v916
  %v989 = vunpack.c.l.b16 %v917
  %v990 = vunpack.c.l.b16 %v918
  %v991 = vunpack.c.l.b16 %v919
  %v992 = vunpack.c.l.b16 %v920
  %v993 = vunpack.c.l.b16 %v921
  %v994 = vunpack.c.l.b16 %v922
  %v995 = vunpack.c.l.b16 %v923
  %v996 = vunpack.c.l.b16 %v924
  %v997 = vunpack.c.l.b16 %v925
  %v998 = vunpack.c.l.b16 %v926
  %v999 = vunpack.c.l.b16 %v927
  %v1000 = vunpack.c.l.b16 %v928
  %v1001 = vunpack.c.l.b16 %v929
  %v1002 = vunpack.c.l.b16 %v930
  %v1003 = vunpack.c.l.b16 %v931
  %v1004 = vunpack.c.l.b16 %v932
  %v1005 = vunpack.c.l.b16 %v933
  %v1006 = vunpack.c.l.b16 %v934
  %v1007 = vunpack.c.l.b16 %v935
  %v1008 = vunpack.c.l.b16 %v936
  %v1009 = vunpack.c.l.b16 %v937
  %v1010 = vunpack.c.l.b16 %v938
  %v1011 = vunpack.c.l.b16 %v939
  %v1012 = vunpack.c.l.b16 %v940
  %v1013 = vunpack.c.l.b16 %v941
  %v1014 = vunpack.c.l.b16 %v942
  %v1015 = vunpack.c.l.b16 %v943
  %v1016 = vunpack.c.l.b16 %v944
  %v1017 = vunpack.c.l.b16 %v945
  %v1018 = vunpack.c.l.b16 %v946
  %v1019 = vunpack.c.l.b16 %v947
  %v1020 = vunpack.c.l.b16 %v948
  %v1021 = vunpack.c.l.b16 %v949
  %v1022 = vpack.c.b16 %v987, %v986
  %v1023 = vpack.c.b16 %v989, %v988
  %v1024 = vpack.c.b16 %v991, %v990
  %v1025 = vpack.c.b16 %v993, %v992
  %v1026 = vpack.c.b16 %v995, %v994
  %v1027 = vpack.c.b16 %v997, %v996
  %v1028 = vpack.c.b16 %v999, %v998
  %v1029 = vpack.c.b16 %v1001, %v1000
  %v1030 = vpack.c.b16 %v1003, %v1002
  %v1031 = vpack.c.b16 %v1005, %v1004
  %v1032 = vpack.c.b16 %v1007, %v1006
  %v1033 = vpack.c.b16 %v1009, %v1008
  %v1034 = vpack.c.b16 %v1011, %v1010
  %v1035 = vpack.c.b16 %v1013, %v1012
  %v1036 = vpack.c.b16 %v1015, %v1014
  %v1037 = vpack.c.b16 %v1017, %v1016
  %v1038 = vpack.c.b16 %v1019, %v1018
  %v1039 = vpack.c.b16 %v1021, %v1020
  %v1041 = vsel %vm166, %v1022, 0
  %v1044 = vsel %vm166, %v1023, 0
  %v1047 = vsel %vm166, %v1024, 0
  %v1050 = vsel %vm166, %v1025, 0
  %v1053 = vsel %vm166, %v1026, 0
  %v1056 = vsel %vm166, %v1027, 0
  %v1059 = vsel %vm166, %v1028, 0
  %v1062 = vsel %vm166, %v1029, 0
  %v1065 = vsel %vm166, %v1030, 0
  %v1068 = vsel %vm166, %v1031, 0
  %v1071 = vsel %vm166, %v1032, 0
  %v1074 = vsel %vm166, %v1033, 0
  %v1077 = vsel %vm166, %v1034, 0
  %v1080 = vsel %vm166, %v1035, 0
  %v1083 = vsel %vm166, %v1036, 0
  %v1086 = vsel %vm166, %v1037, 0
  %v1089 = vsel %vm166, %v1038, 0
  %v1092 = vsel %vm166, %v1039, 0
  %1094 = vmatpush.bf16.msra.mxu0 0
  %1095 = vmatpush.bf16.msra.mxu0 0
  %1096 = vmatpush.bf16.msra.mxu0 0
  %1097 = vmatpush.bf16.msra.mxu0 0
  %1098 = vmatpush.bf16.msra.mxu0 0
  %1099 = vmatpush.bf16.msra.mxu0 0
  %1100 = vmatpush.bf16.msra.mxu0 %v163
  %1101 = vmatpush.bf16.msra.mxu0 %v162
  %1102 = vmatmul.bf16.gmra.mxu0 %v1041
  %v1103 = vpop.f32.mrf.mxu0
  %v1104 = vadd.f32 0.0, %v1103
  %v1105 = vpop.f32.mrf.mxu0
  %v1106 = vadd.f32 0.0, %v1105
  %1107 = vmatmul.bf16.gmra.mxu0 %v1044
  %v1108 = vpop.f32.mrf.mxu0
  %v1109 = vadd.f32 0.0, %v1108
  %v1110 = vpop.f32.mrf.mxu0
  %v1111 = vadd.f32 0.0, %v1110
  %1112 = vmatmul.bf16.gmra.mxu0 %v1047
  %v1113 = vpop.f32.mrf.mxu0
  %v1114 = vadd.f32 0.0, %v1113
  %v1115 = vpop.f32.mrf.mxu0
  %v1116 = vadd.f32 0.0, %v1115
  %1117 = vmatmul.bf16.gmra.mxu0 %v1050
  %v1118 = vpop.f32.mrf.mxu0
  %v1119 = vadd.f32 0.0, %v1118
  %v1120 = vpop.f32.mrf.mxu0
  %v1121 = vadd.f32 0.0, %v1120
  %1122 = vmatmul.bf16.gmra.mxu0 %v1053
  %v1123 = vpop.f32.mrf.mxu0
  %v1124 = vadd.f32 0.0, %v1123
  %v1125 = vpop.f32.mrf.mxu0
  %v1126 = vadd.f32 0.0, %v1125
  %1127 = vmatmul.bf16.gmra.mxu0 %v1056
  %v1128 = vpop.f32.mrf.mxu0
  %v1129 = vadd.f32 0.0, %v1128
  %v1130 = vpop.f32.mrf.mxu0
  %v1131 = vadd.f32 0.0, %v1130
  %1132 = vmatmul.bf16.gmra.mxu0 %v1059
  %v1133 = vpop.f32.mrf.mxu0
  %v1134 = vadd.f32 0.0, %v1133
  %v1135 = vpop.f32.mrf.mxu0
  %v1136 = vadd.f32 0.0, %v1135
  %1137 = vmatmul.bf16.gmra.mxu0 %v1062
  %v1138 = vpop.f32.mrf.mxu0
  %v1139 = vadd.f32 0.0, %v1138
  %v1140 = vpop.f32.mrf.mxu0
  %v1141 = vadd.f32 0.0, %v1140
  %1142 = vmatmul.bf16.gmra.mxu0 %v1065
  %v1143 = vpop.f32.mrf.mxu0
  %v1144 = vadd.f32 0.0, %v1143
  %v1145 = vpop.f32.mrf.mxu0
  %v1146 = vadd.f32 0.0, %v1145
  %1147 = vmatmul.bf16.gmra.mxu0 %v1068
  %v1148 = vpop.f32.mrf.mxu0
  %v1149 = vadd.f32 0.0, %v1148
  %v1150 = vpop.f32.mrf.mxu0
  %v1151 = vadd.f32 0.0, %v1150
  %1152 = vmatmul.bf16.gmra.mxu0 %v1071
  %v1153 = vpop.f32.mrf.mxu0
  %v1154 = vadd.f32 0.0, %v1153
  %v1155 = vpop.f32.mrf.mxu0
  %v1156 = vadd.f32 0.0, %v1155
  %1157 = vmatmul.bf16.gmra.mxu0 %v1074
  %v1158 = vpop.f32.mrf.mxu0
  %v1159 = vadd.f32 0.0, %v1158
  %v1160 = vpop.f32.mrf.mxu0
  %v1161 = vadd.f32 0.0, %v1160
  %1162 = vmatmul.bf16.gmra.mxu0 %v1077
  %v1163 = vpop.f32.mrf.mxu0
  %v1164 = vadd.f32 0.0, %v1163
  %v1165 = vpop.f32.mrf.mxu0
  %v1166 = vadd.f32 0.0, %v1165
  %1167 = vmatmul.bf16.gmra.mxu0 %v1080
  %v1168 = vpop.f32.mrf.mxu0
  %v1169 = vadd.f32 0.0, %v1168
  %v1170 = vpop.f32.mrf.mxu0
  %v1171 = vadd.f32 0.0, %v1170
  %1172 = vmatmul.bf16.gmra.mxu0 %v1083
  %v1173 = vpop.f32.mrf.mxu0
  %v1174 = vadd.f32 0.0, %v1173
  %v1175 = vpop.f32.mrf.mxu0
  %v1176 = vadd.f32 0.0, %v1175
  %1177 = vmatmul.bf16.gmra.mxu0 %v1086
  %v1178 = vpop.f32.mrf.mxu0
  %v1179 = vadd.f32 0.0, %v1178
  %v1180 = vpop.f32.mrf.mxu0
  %v1181 = vadd.f32 0.0, %v1180
  %1182 = vmatmul.bf16.gmra.mxu0 %v1089
  %v1183 = vpop.f32.mrf.mxu0
  %v1184 = vadd.f32 0.0, %v1183
  %v1185 = vpop.f32.mrf.mxu0
  %v1186 = vadd.f32 0.0, %v1185
  %1187 = vmatmul.bf16.gmra.mxu0 %v1092
  %v1188 = vpop.f32.mrf.mxu0
  %v1189 = vadd.f32 0.0, %v1188
  %v1190 = vpop.f32.mrf.mxu0
  %v1191 = vadd.f32 0.0, %v1190
  %1192 = vdwg.mxu0
  %v1193 = vmax.f32 %v825, %v1104
  %v1194 = vmax.f32 %v827, %v1106
  %v1195 = vmax.f32 %v830, %v1109
  %v1196 = vmax.f32 %v832, %v1111
  %v1197 = vmax.f32 %v835, %v1114
  %v1198 = vmax.f32 %v837, %v1116
  %v1199 = vmax.f32 %v840, %v1119
  %v1200 = vmax.f32 %v842, %v1121
  %v1201 = vmax.f32 %v845, %v1124
  %v1202 = vmax.f32 %v847, %v1126
  %v1203 = vmax.f32 %v850, %v1129
  %v1204 = vmax.f32 %v852, %v1131
  %v1205 = vmax.f32 %v855, %v1134
  %v1206 = vmax.f32 %v857, %v1136
  %v1207 = vmax.f32 %v860, %v1139
  %v1208 = vmax.f32 %v862, %v1141
  %v1209 = vmax.f32 %v865, %v1144
  %v1210 = vmax.f32 %v867, %v1146
  %v1211 = vmax.f32 %v870, %v1149
  %v1212 = vmax.f32 %v872, %v1151
  %v1213 = vmax.f32 %v875, %v1154
  %v1214 = vmax.f32 %v877, %v1156
  %v1215 = vmax.f32 %v880, %v1159
  %v1216 = vmax.f32 %v882, %v1161
  %v1217 = vmax.f32 %v885, %v1164
  %v1218 = vmax.f32 %v887, %v1166
  %v1219 = vmax.f32 %v890, %v1169
  %v1220 = vmax.f32 %v892, %v1171
  %v1221 = vmax.f32 %v895, %v1174
  %v1222 = vmax.f32 %v897, %v1176
  %v1223 = vmax.f32 %v900, %v1179
  %v1224 = vmax.f32 %v902, %v1181
  %v1225 = vmax.f32 %v905, %v1184
  %v1226 = vmax.f32 %v907, %v1186
  %v1227 = vmax.f32 %v910, %v1189
  %v1228 = vmax.f32 %v912, %v1191
  %v1229 = vmax.f32 %v599, %v1193
  %v1230 = vmax.f32 %v600, %v1194
  %v1231 = vmax.f32 %v601, %v1195
  %v1232 = vmax.f32 %v602, %v1196
  %v1233 = vmax.f32 %v603, %v1197
  %v1234 = vmax.f32 %v604, %v1198
  %v1235 = vmax.f32 %v605, %v1199
  %v1236 = vmax.f32 %v606, %v1200
  %v1237 = vmax.f32 %v607, %v1201
  %v1238 = vmax.f32 %v608, %v1202
  %v1239 = vmax.f32 %v609, %v1203
  %v1240 = vmax.f32 %v610, %v1204
  %v1241 = vmax.f32 %v611, %v1205
  %v1242 = vmax.f32 %v612, %v1206
  %v1243 = vmax.f32 %v613, %v1207
  %v1244 = vmax.f32 %v614, %v1208
  %v1245 = vmax.f32 %v615, %v1209
  %v1246 = vmax.f32 %v616, %v1210
  %v1247 = vmax.f32 %v617, %v1211
  %v1248 = vmax.f32 %v618, %v1212
  %v1249 = vmax.f32 %v619, %v1213
  %v1250 = vmax.f32 %v620, %v1214
  %v1251 = vmax.f32 %v621, %v1215
  %v1252 = vmax.f32 %v622, %v1216
  %v1253 = vmax.f32 %v623, %v1217
  %v1254 = vmax.f32 %v624, %v1218
  %v1255 = vmax.f32 %v625, %v1219
  %v1256 = vmax.f32 %v626, %v1220
  %v1257 = vmax.f32 %v627, %v1221
  %v1258 = vmax.f32 %v628, %v1222
  %v1259 = vmax.f32 %v629, %v1223
  %v1260 = vmax.f32 %v630, %v1224
  %v1261 = vmax.f32 %v631, %v1225
  %v1262 = vmax.f32 %v632, %v1226
  %v1263 = vmax.f32 %v633, %v1227
  %v1264 = vmax.f32 %v634, %v1228
  %v1265 = vld [vmem:[%s5] sm:$0x1]
  %v1267 = vperm.slane %v1265, 0
  %v1269 = vadd.f32 %v1229, %v1267
  %v1270 = vadd.f32 %v1230, %v1267
  %v1271 = vadd.f32 %v1231, %v1267
  %v1272 = vadd.f32 %v1232, %v1267
  %v1273 = vadd.f32 %v1233, %v1267
  %v1274 = vadd.f32 %v1234, %v1267
  %v1275 = vadd.f32 %v1235, %v1267
  %v1276 = vadd.f32 %v1236, %v1267
  %v1277 = vadd.f32 %v1237, %v1267
  %v1278 = vadd.f32 %v1238, %v1267
  %v1279 = vadd.f32 %v1239, %v1267
  %v1280 = vadd.f32 %v1240, %v1267
  %v1281 = vadd.f32 %v1241, %v1267
  %v1282 = vadd.f32 %v1242, %v1267
  %v1283 = vadd.f32 %v1243, %v1267
  %v1284 = vadd.f32 %v1244, %v1267
  %v1285 = vadd.f32 %v1245, %v1267
  %v1286 = vadd.f32 %v1246, %v1267
  %v1287 = vadd.f32 %v1247, %v1267
  %v1288 = vadd.f32 %v1248, %v1267
  %v1289 = vadd.f32 %v1249, %v1267
  %v1290 = vadd.f32 %v1250, %v1267
  %v1291 = vadd.f32 %v1251, %v1267
  %v1292 = vadd.f32 %v1252, %v1267
  %v1293 = vadd.f32 %v1253, %v1267
  %v1294 = vadd.f32 %v1254, %v1267
  %v1295 = vadd.f32 %v1255, %v1267
  %v1296 = vadd.f32 %v1256, %v1267
  %v1297 = vadd.f32 %v1257, %v1267
  %v1298 = vadd.f32 %v1258, %v1267
  %v1299 = vadd.f32 %v1259, %v1267
  %v1300 = vadd.f32 %v1260, %v1267
  %v1301 = vadd.f32 %v1261, %v1267
  %v1302 = vadd.f32 %v1262, %v1267
  %v1303 = vadd.f32 %v1263, %v1267
  %v1304 = vadd.f32 %v1264, %v1267
  %v1305 = vmax.f32 %v1269, 0.0
  %v1306 = vmax.f32 %v1270, 0.0
  %v1307 = vmax.f32 %v1271, 0.0
  %v1308 = vmax.f32 %v1272, 0.0
  %v1309 = vmax.f32 %v1273, 0.0
  %v1310 = vmax.f32 %v1274, 0.0
  %v1311 = vmax.f32 %v1275, 0.0
  %v1312 = vmax.f32 %v1276, 0.0
  %v1313 = vmax.f32 %v1277, 0.0
  %v1314 = vmax.f32 %v1278, 0.0
  %v1315 = vmax.f32 %v1279, 0.0
  %v1316 = vmax.f32 %v1280, 0.0
  %v1317 = vmax.f32 %v1281, 0.0
  %v1318 = vmax.f32 %v1282, 0.0
  %v1319 = vmax.f32 %v1283, 0.0
  %v1320 = vmax.f32 %v1284, 0.0
  %v1321 = vmax.f32 %v1285, 0.0
  %v1322 = vmax.f32 %v1286, 0.0
  %v1323 = vmax.f32 %v1287, 0.0
  %v1324 = vmax.f32 %v1288, 0.0
  %v1325 = vmax.f32 %v1289, 0.0
  %v1326 = vmax.f32 %v1290, 0.0
  %v1327 = vmax.f32 %v1291, 0.0
  %v1328 = vmax.f32 %v1292, 0.0
  %v1329 = vmax.f32 %v1293, 0.0
  %v1330 = vmax.f32 %v1294, 0.0
  %v1331 = vmax.f32 %v1295, 0.0
  %v1332 = vmax.f32 %v1296, 0.0
  %v1333 = vmax.f32 %v1297, 0.0
  %v1334 = vmax.f32 %v1298, 0.0
  %v1335 = vmax.f32 %v1299, 0.0
  %v1336 = vmax.f32 %v1300, 0.0
  %v1337 = vmax.f32 %v1301, 0.0
  %v1338 = vmax.f32 %v1302, 0.0
  %v1339 = vmax.f32 %v1303, 0.0
  %v1340 = vmax.f32 %v1304, 0.0
  %v1341 = vpack.c.bf16 %v1305, %v1305
  %v1342 = vpack.c.bf16 %v1306, %v1306
  %v1343 = vpack.c.bf16 %v1307, %v1307
  %v1344 = vpack.c.bf16 %v1308, %v1308
  %v1345 = vpack.c.bf16 %v1309, %v1309
  %v1346 = vpack.c.bf16 %v1310, %v1310
  %v1347 = vpack.c.bf16 %v1311, %v1311
  %v1348 = vpack.c.bf16 %v1312, %v1312
  %v1349 = vpack.c.bf16 %v1313, %v1313
  %v1350 = vpack.c.bf16 %v1314, %v1314
  %v1351 = vpack.c.bf16 %v1315, %v1315
  %v1352 = vpack.c.bf16 %v1316, %v1316
  %v1353 = vpack.c.bf16 %v1317, %v1317
  %v1354 = vpack.c.bf16 %v1318, %v1318
  %v1355 = vpack.c.bf16 %v1319, %v1319
  %v1356 = vpack.c.bf16 %v1320, %v1320
  %v1357 = vpack.c.bf16 %v1321, %v1321
  %v1358 = vpack.c.bf16 %v1322, %v1322
  %v1359 = vpack.c.bf16 %v1323, %v1323
  %v1360 = vpack.c.bf16 %v1324, %v1324
  %v1361 = vpack.c.bf16 %v1325, %v1325
  %v1362 = vpack.c.bf16 %v1326, %v1326
  %v1363 = vpack.c.bf16 %v1327, %v1327
  %v1364 = vpack.c.bf16 %v1328, %v1328
  %v1365 = vpack.c.bf16 %v1329, %v1329
  %v1366 = vpack.c.bf16 %v1330, %v1330
  %v1367 = vpack.c.bf16 %v1331, %v1331
  %v1368 = vpack.c.bf16 %v1332, %v1332
  %v1369 = vpack.c.bf16 %v1333, %v1333
  %v1370 = vpack.c.bf16 %v1334, %v1334
  %v1371 = vpack.c.bf16 %v1335, %v1335
  %v1372 = vpack.c.bf16 %v1336, %v1336
  %v1373 = vpack.c.bf16 %v1337, %v1337
  %v1374 = vpack.c.bf16 %v1338, %v1338
  %v1375 = vpack.c.bf16 %v1339, %v1339
  %v1376 = vpack.c.bf16 %v1340, %v1340
  %vm1377 = vcmask 519168
  %1378 = vst.msk [vmem:[%s6] sm:$0xf] %vm1377, %v1341
  %1379 = vst.msk [vmem:[%s6 + $0x4] sm:$0xf] %vm1377, %v1342
  %1380 = vst.msk [vmem:[%s6 + $0x8] sm:$0xf] %vm1377, %v1343
  %1381 = vst.msk [vmem:[%s6 + $0xc] sm:$0xf] %vm1377, %v1344
  %1382 = vst.msk [vmem:[%s6 + $0x10] sm:$0xf] %vm1377, %v1345
  %1383 = vst.msk [vmem:[%s6 + $0x14] sm:$0xf] %vm1377, %v1346
  %1384 = vst.msk [vmem:[%s6 + $0x18] sm:$0xf] %vm1377, %v1347
  %1385 = vst.msk [vmem:[%s6 + $0x1c] sm:$0xf] %vm1377, %v1348
  %1386 = vst.msk [vmem:[%s6 + $0x20] sm:$0xf] %vm1377, %v1349
  %1387 = vst.msk [vmem:[%s6 + $0x24] sm:$0xf] %vm1377, %v1350
  %1388 = vst.msk [vmem:[%s6 + $0x28] sm:$0xf] %vm1377, %v1351
  %1389 = vst.msk [vmem:[%s6 + $0x2c] sm:$0xf] %vm1377, %v1352
  %1390 = vst.msk [vmem:[%s6 + $0x30] sm:$0xf] %vm1377, %v1353
  %1391 = vst.msk [vmem:[%s6 + $0x34] sm:$0xf] %vm1377, %v1354
  %1392 = vst.msk [vmem:[%s6 + $0x38] sm:$0xf] %vm1377, %v1355
  %1393 = vst.msk [vmem:[%s6 + $0x3c] sm:$0xf] %vm1377, %v1356
  %1394 = vst.msk [vmem:[%s6 + $0x40] sm:$0xf] %vm1377, %v1357
  %1395 = vst.msk [vmem:[%s6 + $0x44] sm:$0xf] %vm1377, %v1358
  %1396 = vst.msk [vmem:[%s6 + $0x48] sm:$0xf] %vm1377, %v1359
  %1397 = vst.msk [vmem:[%s6 + $0x4c] sm:$0xf] %vm1377, %v1360
  %1398 = vst.msk [vmem:[%s6 + $0x50] sm:$0xf] %vm1377, %v1361
  %1399 = vst.msk [vmem:[%s6 + $0x54] sm:$0xf] %vm1377, %v1362
  %1400 = vst.msk [vmem:[%s6 + $0x58] sm:$0xf] %vm1377, %v1363
  %1401 = vst.msk [vmem:[%s6 + $0x5c] sm:$0xf] %vm1377, %v1364
  %1402 = vst.msk [vmem:[%s6 + $0x60] sm:$0xf] %vm1377, %v1365
  %1403 = vst.msk [vmem:[%s6 + $0x64] sm:$0xf] %vm1377, %v1366
  %1404 = vst.msk [vmem:[%s6 + $0x68] sm:$0xf] %vm1377, %v1367
  %1405 = vst.msk [vmem:[%s6 + $0x6c] sm:$0xf] %vm1377, %v1368
  %1406 = vst.msk [vmem:[%s6 + $0x70] sm:$0xf] %vm1377, %v1369
  %1407 = vst.msk [vmem:[%s6 + $0x74] sm:$0xf] %vm1377, %v1370
  %1408 = vst.msk [vmem:[%s6 + $0x78] sm:$0xf] %vm1377, %v1371
  %1409 = vst.msk [vmem:[%s6 + $0x7c] sm:$0xf] %vm1377, %v1372
  %1410 = vst.msk [vmem:[%s6 + $0x80] sm:$0xf] %vm1377, %v1373
  %1411 = vst.msk [vmem:[%s6 + $0x84] sm:$0xf] %vm1377, %v1374
  %1412 = vst.msk [vmem:[%s6 + $0x88] sm:$0xf] %vm1377, %v1375
  %1413 = vst.msk [vmem:[%s6 + $0x8c] sm:$0xf] %vm1377, %v1376
  // Predicated region
  $region26: #{cnn_model_forward.3} parent=0 // pred_check
    _
  $region27: #{cnn_model_forward.3} parent=0 // pred_check_branch
    %1415 = sbr.rel (0) target = $region29
  $region28: #{cnn_model_forward.3} parent=0 // pred_region
    _
  $region29: #{cnn_model_forward.3} parent=0 // pred_fallthru
    _
  // Predicated region
  $region30: #{cnn_model_forward.3} parent=0 // pred_check
    _
  $region31: #{cnn_model_forward.3} parent=0 // pred_check_branch
    %1417 = sbr.rel (0) target = $region33
  $region32: #{cnn_model_forward.3} parent=0 // pred_region
    _
  $region33: #{cnn_model_forward.3} parent=0 // pred_fallthru
    _

// kernel: cnn_model_forward.5
$region0: #{cnn_model_forward.5}
  #allocation0 [shape = 'u32[]', space=smem, size = 0x4, offset = 0x4, fixed_abs, tag = 'smem constant byte address 0x4 - core index']
  #allocation1 [shape = 'u32[72,128]{1,0:T(1,128)}', space=vmem, size = 0x9000, scoped, tag = 'internal scratch']
  %s0 = inlined_call_operand.vmem [shape: bf16[8,2560], index: 0, kind: input, shape index: {}]
  %s1 = inlined_call_operand.vmem [shape: bf16[2560,128], index: 1, kind: input, shape index: {}]
  %s2 = inlined_call_operand.vmem [shape: f32[1,128], index: 2, kind: input, shape index: {}]
  %s3 = inlined_call_operand.vmem [shape: bf16[128,128], index: 3, kind: input, shape index: {}]
  %s4 = inlined_call_operand.vmem [shape: f32[1,128], index: 4, kind: input, shape index: {}]
  %s5 = inlined_call_operand.vmem [shape: bf16[128,128], index: 5, kind: input, shape index: {}]
  %s6 = inlined_call_operand.vmem [shape: f32[1,128], index: 6, kind: input, shape index: {}]
  %s7 = inlined_call_operand.vmem [shape: bf16[2560,128], index: 7, kind: input, shape index: {}]
  %s8 = inlined_call_operand.vmem [shape: f32[1,128], index: 8, kind: input, shape index: {}]
  %s9 = inlined_call_operand.vmem [shape: bf16[128,128], index: 9, kind: input, shape index: {}]
  %s10 = inlined_call_operand.vmem [shape: f32[1,128], index: 10, kind: input, shape index: {}]
  %s11 = inlined_call_operand.vmem [shape: f32[8,128], index: 11, kind: output, shape index: {0}]
  %s12 = inlined_call_operand.vmem [shape: f32[8,128], index: 12, kind: output, shape index: {1}]
  %13 = xla_tuple %s11, %s12
  %s14 = sld [smem:[#allocation0]]
  $region62: #{cnn_model_forward.5} parent=0
    _
  %s16 = ssub.s32 1, %s14
  %s17 = scalar_select 0, %s16, %s14
  // Predicated region
  $region2: #{cnn_model_forward.5} parent=0 // pred_check
    _
  $region3: #{cnn_model_forward.5} parent=0 // pred_check_branch
    %19 = sbr.rel (0) target = $region5
  $region4: #{cnn_model_forward.5} parent=0 // pred_region
    _
  $region5: #{cnn_model_forward.5} parent=0 // pred_fallthru
    _
  // Predicated region
  $region6: #{cnn_model_forward.5} parent=0 // pred_check
    _
  $region7: #{cnn_model_forward.5} parent=0 // pred_check_branch
    %21 = sbr.rel (0) target = $region9
  $region8: #{cnn_model_forward.5} parent=0 // pred_region
    _
  $region9: #{cnn_model_forward.5} parent=0 // pred_fallthru
    _
  // Predicated region
  $region10: #{cnn_model_forward.5} parent=0 // pred_check
    _
  $region11: #{cnn_model_forward.5} parent=0 // pred_check_branch
    %23 = sbr.rel (0) target = $region13
  $region12: #{cnn_model_forward.5} parent=0 // pred_region
    _
  $region13: #{cnn_model_forward.5} parent=0 // pred_fallthru
    _
  // Predicated region
  $region14: #{cnn_model_forward.5} parent=0 // pred_check
    _
  $region15: #{cnn_model_forward.5} parent=0 // pred_check_branch
    %25 = sbr.rel (0) target = $region17
  $region16: #{cnn_model_forward.5} parent=0 // pred_region
    _
  $region17: #{cnn_model_forward.5} parent=0 // pred_fallthru
    _
  // Predicated region
  $region18: #{cnn_model_forward.5} parent=0 // pred_check
    _
  $region19: #{cnn_model_forward.5} parent=0 // pred_check_branch
    %27 = sbr.rel (0) target = $region21
  $region20: #{cnn_model_forward.5} parent=0 // pred_region
    _
  $region21: #{cnn_model_forward.5} parent=0 // pred_fallthru
    _
  // Predicated region
  $region22: #{cnn_model_forward.5} parent=0 // pred_check
    _
  $region23: #{cnn_model_forward.5} parent=0 // pred_check_branch
    %29 = sbr.rel (0) target = $region25
  $region24: #{cnn_model_forward.5} parent=0 // pred_region
    _
  $region25: #{cnn_model_forward.5} parent=0 // pred_fallthru
    _
  // Predicated region
  $region26: #{cnn_model_forward.5} parent=0 // pred_check
    _
  $region27: #{cnn_model_forward.5} parent=0 // pred_check_branch
    %31 = sbr.rel (0) target = $region29
  $region28: #{cnn_model_forward.5} parent=0 // pred_region
    _
  $region29: #{cnn_model_forward.5} parent=0 // pred_fallthru
    _
  // Predicated region
  $region30: #{cnn_model_forward.5} parent=0 // pred_check
    _
  $region31: #{cnn_model_forward.5} parent=0 // pred_check_branch
    %33 = sbr.rel (0) target = $region33
  $region32: #{cnn_model_forward.5} parent=0 // pred_region
    _
  $region33: #{cnn_model_forward.5} parent=0 // pred_fallthru
    _
  // Predicated region
  $region34: #{cnn_model_forward.5} parent=0 // pred_check
    _
  $region35: #{cnn_model_forward.5} parent=0 // pred_check_branch
    %35 = sbr.rel (0) target = $region37
  $region36: #{cnn_model_forward.5} parent=0 // pred_region
    _
  $region37: #{cnn_model_forward.5} parent=0 // pred_fallthru
    _
  // Predicated region
  $region38: #{cnn_model_forward.5} parent=0 // pred_check
    _
  $region39: #{cnn_model_forward.5} parent=0 // pred_check_branch
    %37 = sbr.rel (0) target = $region41
  $region40: #{cnn_model_forward.5} parent=0 // pred_region
    _
  $region41: #{cnn_model_forward.5} parent=0 // pred_fallthru
    _
  // Predicated region
  $region42: #{cnn_model_forward.5} parent=0 // pred_check
    _
  $region43: #{cnn_model_forward.5} parent=0 // pred_check_branch
    %39 = sbr.rel (0) target = $region45
  $region44: #{cnn_model_forward.5} parent=0 // pred_region
    _
  $region45: #{cnn_model_forward.5} parent=0 // pred_fallthru
    _
  %v40 = vld [vmem:[%s0] sm:$0xff]
  %v41 = vld [vmem:[%s0 + $0x8] sm:$0xff]
  %v42 = vld [vmem:[%s0 + $0x10] sm:$0xff]
  %v43 = vld [vmem:[%s0 + $0x18] sm:$0xff]
  %v44 = vld [vmem:[%s0 + $0x20] sm:$0xff]
  %v45 = vld [vmem:[%s0 + $0x28] sm:$0xff]
  %v46 = vld [vmem:[%s0 + $0x30] sm:$0xff]
  %v47 = vld [vmem:[%s0 + $0x38] sm:$0xff]
  %v48 = vld [vmem:[%s0 + $0x40] sm:$0xff]
  %v49 = vld [vmem:[%s0 + $0x48] sm:$0xff]
  %v50 = vld [vmem:[%s1] sm:$0xf]
  %v51 = vld [vmem:[%s1 + $0x4] sm:$0xf]
  %v52 = vld [vmem:[%s1 + $0x8] sm:$0xf]
  %v53 = vld [vmem:[%s1 + $0xc] sm:$0xf]
  %v54 = vld [vmem:[%s1 + $0x10] sm:$0xf]
  %v55 = vld [vmem:[%s1 + $0x14] sm:$0xf]
  %v56 = vld [vmem:[%s1 + $0x18] sm:$0xf]
  %v57 = vld [vmem:[%s1 + $0x1c] sm:$0xf]
  %v58 = vld [vmem:[%s1 + $0x20] sm:$0xf]
  %v59 = vld [vmem:[%s1 + $0x24] sm:$0xf]
  %v60 = vld [vmem:[%s1 + $0x28] sm:$0xf]
  %v61 = vld [vmem:[%s1 + $0x2c] sm:$0xf]
  %v62 = vld [vmem:[%s1 + $0x30] sm:$0xf]
  %v63 = vld [vmem:[%s1 + $0x34] sm:$0xf]
  %v64 = vld [vmem:[%s1 + $0x38] sm:$0xf]
  %v65 = vld [vmem:[%s1 + $0x3c] sm:$0xf]
  %v66 = vld [vmem:[%s1 + $0x40] sm:$0xf]
  %v67 = vld [vmem:[%s1 + $0x44] sm:$0xf]
  %v68 = vld [vmem:[%s1 + $0x48] sm:$0xf]
  %v69 = vld [vmem:[%s1 + $0x4c] sm:$0xf]
  %v70 = vld [vmem:[%s1 + $0x50] sm:$0xf]
  %v71 = vld [vmem:[%s1 + $0x54] sm:$0xf]
  %v72 = vld [vmem:[%s1 + $0x58] sm:$0xf]
  %v73 = vld [vmem:[%s1 + $0x5c] sm:$0xf]
  %v74 = vld [vmem:[%s1 + $0x60] sm:$0xf]
  %v75 = vld [vmem:[%s1 + $0x64] sm:$0xf]
  %v76 = vld [vmem:[%s1 + $0x68] sm:$0xf]
  %v77 = vld [vmem:[%s1 + $0x6c] sm:$0xf]
  %v78 = vld [vmem:[%s1 + $0x70] sm:$0xf]
  %v79 = vld [vmem:[%s1 + $0x74] sm:$0xf]
  %v80 = vld [vmem:[%s1 + $0x78] sm:$0xf]
  %v81 = vld [vmem:[%s1 + $0x7c] sm:$0xf]
  %v82 = vld [vmem:[%s1 + $0x80] sm:$0xf]
  %v83 = vld [vmem:[%s1 + $0x84] sm:$0xf]
  %v84 = vld [vmem:[%s1 + $0x88] sm:$0xf]
  %v85 = vld [vmem:[%s1 + $0x8c] sm:$0xf]
  %v86 = vld [vmem:[%s1 + $0x90] sm:$0xf]
  %v87 = vld [vmem:[%s1 + $0x94] sm:$0xf]
  %v88 = vld [vmem:[%s1 + $0x98] sm:$0xf]
  %v89 = vld [vmem:[%s1 + $0x9c] sm:$0xf]
  %v90 = vld [vmem:[%s1 + $0xa0] sm:$0xf]
  %v91 = vld [vmem:[%s1 + $0xa4] sm:$0xf]
  %v92 = vld [vmem:[%s1 + $0xa8] sm:$0xf]
  %v93 = vld [vmem:[%s1 + $0xac] sm:$0xf]
  %v94 = vld [vmem:[%s1 + $0xb0] sm:$0xf]
  %v95 = vld [vmem:[%s1 + $0xb4] sm:$0xf]
  %v96 = vld [vmem:[%s1 + $0xb8] sm:$0xf]
  %v97 = vld [vmem:[%s1 + $0xbc] sm:$0xf]
  %v98 = vld [vmem:[%s1 + $0xc0] sm:$0xf]
  %v99 = vld [vmem:[%s1 + $0xc4] sm:$0xf]
  %v100 = vld [vmem:[%s1 + $0xc8] sm:$0xf]
  %v101 = vld [vmem:[%s1 + $0xcc] sm:$0xf]
  %v102 = vld [vmem:[%s1 + $0xd0] sm:$0xf]
  %v103 = vld [vmem:[%s1 + $0xd4] sm:$0xf]
  %v104 = vld [vmem:[%s1 + $0xd8] sm:$0xf]
  %v105 = vld [vmem:[%s1 + $0xdc] sm:$0xf]
  %v106 = vld [vmem:[%s1 + $0xe0] sm:$0xf]
  %v107 = vld [vmem:[%s1 + $0xe4] sm:$0xf]
  %v108 = vld [vmem:[%s1 + $0xe8] sm:$0xf]
  %v109 = vld [vmem:[%s1 + $0xec] sm:$0xf]
  %v110 = vld [vmem:[%s1 + $0xf0] sm:$0xf]
  %v111 = vld [vmem:[%s1 + $0xf4] sm:$0xf]
  %v112 = vld [vmem:[%s1 + $0xf8] sm:$0xf]
  %v113 = vld [vmem:[%s1 + $0xfc] sm:$0xf]
  %v114 = vld [vmem:[%s1 + $0x100] sm:$0xf]
  %v115 = vld [vmem:[%s1 + $0x104] sm:$0xf]
  %v116 = vld [vmem:[%s1 + $0x108] sm:$0xf]
  %v117 = vld [vmem:[%s1 + $0x10c] sm:$0xf]
  %v118 = vld [vmem:[%s1 + $0x110] sm:$0xf]
  %v119 = vld [vmem:[%s1 + $0x114] sm:$0xf]
  %v120 = vld [vmem:[%s1 + $0x118] sm:$0xf]
  %v121 = vld [vmem:[%s1 + $0x11c] sm:$0xf]
  %v122 = vld [vmem:[%s1 + $0x120] sm:$0xf]
  %v123 = vld [vmem:[%s1 + $0x124] sm:$0xf]
  %v124 = vld [vmem:[%s1 + $0x128] sm:$0xf]
  %v125 = vld [vmem:[%s1 + $0x12c] sm:$0xf]
  %v126 = vld [vmem:[%s1 + $0x130] sm:$0xf]
  %v127 = vld [vmem:[%s1 + $0x134] sm:$0xf]
  %v128 = vld [vmem:[%s1 + $0x138] sm:$0xf]
  %v129 = vld [vmem:[%s1 + $0x13c] sm:$0xf]
  %v130 = vld [vmem:[%s1 + $0x140] sm:$0xf]
  %v131 = vld [vmem:[%s1 + $0x144] sm:$0xf]
  %v132 = vld [vmem:[%s1 + $0x148] sm:$0xf]
  %v133 = vld [vmem:[%s1 + $0x14c] sm:$0xf]
  %v134 = vld [vmem:[%s1 + $0x150] sm:$0xf]
  %v135 = vld [vmem:[%s1 + $0x154] sm:$0xf]
  %v136 = vld [vmem:[%s1 + $0x158] sm:$0xf]
  %v137 = vld [vmem:[%s1 + $0x15c] sm:$0xf]
  %v138 = vld [vmem:[%s1 + $0x160] sm:$0xf]
  %v139 = vld [vmem:[%s1 + $0x164] sm:$0xf]
  %v140 = vld [vmem:[%s1 + $0x168] sm:$0xf]
  %v141 = vld [vmem:[%s1 + $0x16c] sm:$0xf]
  %v142 = vld [vmem:[%s1 + $0x170] sm:$0xf]
  %v143 = vld [vmem:[%s1 + $0x174] sm:$0xf]
  %v144 = vld [vmem:[%s1 + $0x178] sm:$0xf]
  %v145 = vld [vmem:[%s1 + $0x17c] sm:$0xf]
  %v146 = vld [vmem:[%s1 + $0x180] sm:$0xf]
  %v147 = vld [vmem:[%s1 + $0x184] sm:$0xf]
  %v148 = vld [vmem:[%s1 + $0x188] sm:$0xf]
  %v149 = vld [vmem:[%s1 + $0x18c] sm:$0xf]
  %v150 = vld [vmem:[%s1 + $0x190] sm:$0xf]
  %v151 = vld [vmem:[%s1 + $0x194] sm:$0xf]
  %v152 = vld [vmem:[%s1 + $0x198] sm:$0xf]
  %v153 = vld [vmem:[%s1 + $0x19c] sm:$0xf]
  %v154 = vld [vmem:[%s1 + $0x1a0] sm:$0xf]
  %v155 = vld [vmem:[%s1 + $0x1a4] sm:$0xf]
  %v156 = vld [vmem:[%s1 + $0x1a8] sm:$0xf]
  %v157 = vld [vmem:[%s1 + $0x1ac] sm:$0xf]
  %v158 = vld [vmem:[%s1 + $0x1b0] sm:$0xf]
  %v159 = vld [vmem:[%s1 + $0x1b4] sm:$0xf]
  %v160 = vld [vmem:[%s1 + $0x1b8] sm:$0xf]
  %v161 = vld [vmem:[%s1 + $0x1bc] sm:$0xf]
  %v162 = vld [vmem:[%s1 + $0x1c0] sm:$0xf]
  %v163 = vld [vmem:[%s1 + $0x1c4] sm:$0xf]
  %v164 = vld [vmem:[%s1 + $0x1c8] sm:$0xf]
  %v165 = vld [vmem:[%s1 + $0x1cc] sm:$0xf]
  %v166 = vld [vmem:[%s1 + $0x1d0] sm:$0xf]
  %v167 = vld [vmem:[%s1 + $0x1d4] sm:$0xf]
  %v168 = vld [vmem:[%s1 + $0x1d8] sm:$0xf]
  %v169 = vld [vmem:[%s1 + $0x1dc] sm:$0xf]
  %v170 = vld [vmem:[%s1 + $0x1e0] sm:$0xf]
  %v171 = vld [vmem:[%s1 + $0x1e4] sm:$0xf]
  %v172 = vld [vmem:[%s1 + $0x1e8] sm:$0xf]
  %v173 = vld [vmem:[%s1 + $0x1ec] sm:$0xf]
  %v174 = vld [vmem:[%s1 + $0x1f0] sm:$0xf]
  %v175 = vld [vmem:[%s1 + $0x1f4] sm:$0xf]
  %v176 = vld [vmem:[%s1 + $0x1f8] sm:$0xf]
  %v177 = vld [vmem:[%s1 + $0x1fc] sm:$0xf]
  %v178 = vld [vmem:[%s1 + $0x200] sm:$0xf]
  %v179 = vld [vmem:[%s1 + $0x204] sm:$0xf]
  %v180 = vld [vmem:[%s1 + $0x208] sm:$0xf]
  %v181 = vld [vmem:[%s1 + $0x20c] sm:$0xf]
  %v182 = vld [vmem:[%s1 + $0x210] sm:$0xf]
  %v183 = vld [vmem:[%s1 + $0x214] sm:$0xf]
  %v184 = vld [vmem:[%s1 + $0x218] sm:$0xf]
  %v185 = vld [vmem:[%s1 + $0x21c] sm:$0xf]
  %v186 = vld [vmem:[%s1 + $0x220] sm:$0xf]
  %v187 = vld [vmem:[%s1 + $0x224] sm:$0xf]
  %v188 = vld [vmem:[%s1 + $0x228] sm:$0xf]
  %v189 = vld [vmem:[%s1 + $0x22c] sm:$0xf]
  %v190 = vld [vmem:[%s1 + $0x230] sm:$0xf]
  %v191 = vld [vmem:[%s1 + $0x234] sm:$0xf]
  %v192 = vld [vmem:[%s1 + $0x238] sm:$0xf]
  %v193 = vld [vmem:[%s1 + $0x23c] sm:$0xf]
  %v194 = vld [vmem:[%s1 + $0x240] sm:$0xf]
  %v195 = vld [vmem:[%s1 + $0x244] sm:$0xf]
  %v196 = vld [vmem:[%s1 + $0x248] sm:$0xf]
  %v197 = vld [vmem:[%s1 + $0x24c] sm:$0xf]
  %v198 = vld [vmem:[%s1 + $0x250] sm:$0xf]
  %v199 = vld [vmem:[%s1 + $0x254] sm:$0xf]
  %v200 = vld [vmem:[%s1 + $0x258] sm:$0xf]
  %v201 = vld [vmem:[%s1 + $0x25c] sm:$0xf]
  %v202 = vld [vmem:[%s1 + $0x260] sm:$0xf]
  %v203 = vld [vmem:[%s1 + $0x264] sm:$0xf]
  %v204 = vld [vmem:[%s1 + $0x268] sm:$0xf]
  %v205 = vld [vmem:[%s1 + $0x26c] sm:$0xf]
  %v206 = vld [vmem:[%s1 + $0x270] sm:$0xf]
  %v207 = vld [vmem:[%s1 + $0x274] sm:$0xf]
  %v208 = vld [vmem:[%s1 + $0x278] sm:$0xf]
  %v209 = vld [vmem:[%s1 + $0x27c] sm:$0xf]
  %v210 = vld [vmem:[%s1 + $0x280] sm:$0xf]
  %v211 = vld [vmem:[%s1 + $0x284] sm:$0xf]
  %v212 = vld [vmem:[%s1 + $0x288] sm:$0xf]
  %v213 = vld [vmem:[%s1 + $0x28c] sm:$0xf]
  %v214 = vld [vmem:[%s1 + $0x290] sm:$0xf]
  %v215 = vld [vmem:[%s1 + $0x294] sm:$0xf]
  %v216 = vld [vmem:[%s1 + $0x298] sm:$0xf]
  %v217 = vld [vmem:[%s1 + $0x29c] sm:$0xf]
  %v218 = vld [vmem:[%s1 + $0x2a0] sm:$0xf]
  %v219 = vld [vmem:[%s1 + $0x2a4] sm:$0xf]
  %v220 = vld [vmem:[%s1 + $0x2a8] sm:$0xf]
  %v221 = vld [vmem:[%s1 + $0x2ac] sm:$0xf]
  %v222 = vld [vmem:[%s1 + $0x2b0] sm:$0xf]
  %v223 = vld [vmem:[%s1 + $0x2b4] sm:$0xf]
  %v224 = vld [vmem:[%s1 + $0x2b8] sm:$0xf]
  %v225 = vld [vmem:[%s1 + $0x2bc] sm:$0xf]
  %v226 = vld [vmem:[%s1 + $0x2c0] sm:$0xf]
  %v227 = vld [vmem:[%s1 + $0x2c4] sm:$0xf]
  %v228 = vld [vmem:[%s1 + $0x2c8] sm:$0xf]
  %v229 = vld [vmem:[%s1 + $0x2cc] sm:$0xf]
  %v230 = vld [vmem:[%s1 + $0x2d0] sm:$0xf]
  %v231 = vld [vmem:[%s1 + $0x2d4] sm:$0xf]
  %v232 = vld [vmem:[%s1 + $0x2d8] sm:$0xf]
  %v233 = vld [vmem:[%s1 + $0x2dc] sm:$0xf]
  %v234 = vld [vmem:[%s1 + $0x2e0] sm:$0xf]
  %v235 = vld [vmem:[%s1 + $0x2e4] sm:$0xf]
  %v236 = vld [vmem:[%s1 + $0x2e8] sm:$0xf]
  %v237 = vld [vmem:[%s1 + $0x2ec] sm:$0xf]
  %v238 = vld [vmem:[%s1 + $0x2f0] sm:$0xf]
  %v239 = vld [vmem:[%s1 + $0x2f4] sm:$0xf]
  %v240 = vld [vmem:[%s1 + $0x2f8] sm:$0xf]
  %v241 = vld [vmem:[%s1 + $0x2fc] sm:$0xf]
  %v242 = vld [vmem:[%s1 + $0x300] sm:$0xf]
  %v243 = vld [vmem:[%s1 + $0x304] sm:$0xf]
  %v244 = vld [vmem:[%s1 + $0x308] sm:$0xf]
  %v245 = vld [vmem:[%s1 + $0x30c] sm:$0xf]
  %v246 = vld [vmem:[%s1 + $0x310] sm:$0xf]
  %v247 = vld [vmem:[%s1 + $0x314] sm:$0xf]
  %v248 = vld [vmem:[%s1 + $0x318] sm:$0xf]
  %v249 = vld [vmem:[%s1 + $0x31c] sm:$0xf]
  %v250 = vld [vmem:[%s1 + $0x320] sm:$0xf]
  %v251 = vld [vmem:[%s1 + $0x324] sm:$0xf]
  %v252 = vld [vmem:[%s1 + $0x328] sm:$0xf]
  %v253 = vld [vmem:[%s1 + $0x32c] sm:$0xf]
  %v254 = vld [vmem:[%s1 + $0x330] sm:$0xf]
  %v255 = vld [vmem:[%s1 + $0x334] sm:$0xf]
  %v256 = vld [vmem:[%s1 + $0x338] sm:$0xf]
  %v257 = vld [vmem:[%s1 + $0x33c] sm:$0xf]
  %v258 = vld [vmem:[%s1 + $0x340] sm:$0xf]
  %v259 = vld [vmem:[%s1 + $0x344] sm:$0xf]
  %v260 = vld [vmem:[%s1 + $0x348] sm:$0xf]
  %v261 = vld [vmem:[%s1 + $0x34c] sm:$0xf]
  %v262 = vld [vmem:[%s1 + $0x350] sm:$0xf]
  %v263 = vld [vmem:[%s1 + $0x354] sm:$0xf]
  %v264 = vld [vmem:[%s1 + $0x358] sm:$0xf]
  %v265 = vld [vmem:[%s1 + $0x35c] sm:$0xf]
  %v266 = vld [vmem:[%s1 + $0x360] sm:$0xf]
  %v267 = vld [vmem:[%s1 + $0x364] sm:$0xf]
  %v268 = vld [vmem:[%s1 + $0x368] sm:$0xf]
  %v269 = vld [vmem:[%s1 + $0x36c] sm:$0xf]
  %v270 = vld [vmem:[%s1 + $0x370] sm:$0xf]
  %v271 = vld [vmem:[%s1 + $0x374] sm:$0xf]
  %v272 = vld [vmem:[%s1 + $0x378] sm:$0xf]
  %v273 = vld [vmem:[%s1 + $0x37c] sm:$0xf]
  %v274 = vld [vmem:[%s1 + $0x380] sm:$0xf]
  %v275 = vld [vmem:[%s1 + $0x384] sm:$0xf]
  %v276 = vld [vmem:[%s1 + $0x388] sm:$0xf]
  %v277 = vld [vmem:[%s1 + $0x38c] sm:$0xf]
  %v278 = vld [vmem:[%s1 + $0x390] sm:$0xf]
  %v279 = vld [vmem:[%s1 + $0x394] sm:$0xf]
  %v280 = vld [vmem:[%s1 + $0x398] sm:$0xf]
  %v281 = vld [vmem:[%s1 + $0x39c] sm:$0xf]
  %v282 = vld [vmem:[%s1 + $0x3a0] sm:$0xf]
  %v283 = vld [vmem:[%s1 + $0x3a4] sm:$0xf]
  %v284 = vld [vmem:[%s1 + $0x3a8] sm:$0xf]
  %v285 = vld [vmem:[%s1 + $0x3ac] sm:$0xf]
  %v286 = vld [vmem:[%s1 + $0x3b0] sm:$0xf]
  %v287 = vld [vmem:[%s1 + $0x3b4] sm:$0xf]
  %v288 = vld [vmem:[%s1 + $0x3b8] sm:$0xf]
  %v289 = vld [vmem:[%s1 + $0x3bc] sm:$0xf]
  %v290 = vld [vmem:[%s1 + $0x3c0] sm:$0xf]
  %v291 = vld [vmem:[%s1 + $0x3c4] sm:$0xf]
  %v292 = vld [vmem:[%s1 + $0x3c8] sm:$0xf]
  %v293 = vld [vmem:[%s1 + $0x3cc] sm:$0xf]
  %v294 = vld [vmem:[%s1 + $0x3d0] sm:$0xf]
  %v295 = vld [vmem:[%s1 + $0x3d4] sm:$0xf]
  %v296 = vld [vmem:[%s1 + $0x3d8] sm:$0xf]
  %v297 = vld [vmem:[%s1 + $0x3dc] sm:$0xf]
  %v298 = vld [vmem:[%s1 + $0x3e0] sm:$0xf]
  %v299 = vld [vmem:[%s1 + $0x3e4] sm:$0xf]
  %v300 = vld [vmem:[%s1 + $0x3e8] sm:$0xf]
  %v301 = vld [vmem:[%s1 + $0x3ec] sm:$0xf]
  %v302 = vld [vmem:[%s1 + $0x3f0] sm:$0xf]
  %v303 = vld [vmem:[%s1 + $0x3f4] sm:$0xf]
  %v304 = vld [vmem:[%s1 + $0x3f8] sm:$0xf]
  %v305 = vld [vmem:[%s1 + $0x3fc] sm:$0xf]
  %v306 = vld [vmem:[%s1 + $0x400] sm:$0xf]
  %v307 = vld [vmem:[%s1 + $0x404] sm:$0xf]
  %v308 = vld [vmem:[%s1 + $0x408] sm:$0xf]
  %v309 = vld [vmem:[%s1 + $0x40c] sm:$0xf]
  %v310 = vld [vmem:[%s1 + $0x410] sm:$0xf]
  %v311 = vld [vmem:[%s1 + $0x414] sm:$0xf]
  %v312 = vld [vmem:[%s1 + $0x418] sm:$0xf]
  %v313 = vld [vmem:[%s1 + $0x41c] sm:$0xf]
  %v314 = vld [vmem:[%s1 + $0x420] sm:$0xf]
  %v315 = vld [vmem:[%s1 + $0x424] sm:$0xf]
  %v316 = vld [vmem:[%s1 + $0x428] sm:$0xf]
  %v317 = vld [vmem:[%s1 + $0x42c] sm:$0xf]
  %v318 = vld [vmem:[%s1 + $0x430] sm:$0xf]
  %v319 = vld [vmem:[%s1 + $0x434] sm:$0xf]
  %v320 = vld [vmem:[%s1 + $0x438] sm:$0xf]
  %v321 = vld [vmem:[%s1 + $0x43c] sm:$0xf]
  %v322 = vld [vmem:[%s1 + $0x440] sm:$0xf]
  %v323 = vld [vmem:[%s1 + $0x444] sm:$0xf]
  %v324 = vld [vmem:[%s1 + $0x448] sm:$0xf]
  %v325 = vld [vmem:[%s1 + $0x44c] sm:$0xf]
  %v326 = vld [vmem:[%s1 + $0x450] sm:$0xf]
  %v327 = vld [vmem:[%s1 + $0x454] sm:$0xf]
  %v328 = vld [vmem:[%s1 + $0x458] sm:$0xf]
  %v329 = vld [vmem:[%s1 + $0x45c] sm:$0xf]
  %v330 = vld [vmem:[%s1 + $0x460] sm:$0xf]
  %v331 = vld [vmem:[%s1 + $0x464] sm:$0xf]
  %v332 = vld [vmem:[%s1 + $0x468] sm:$0xf]
  %v333 = vld [vmem:[%s1 + $0x46c] sm:$0xf]
  %v334 = vld [vmem:[%s1 + $0x470] sm:$0xf]
  %v335 = vld [vmem:[%s1 + $0x474] sm:$0xf]
  %v336 = vld [vmem:[%s1 + $0x478] sm:$0xf]
  %v337 = vld [vmem:[%s1 + $0x47c] sm:$0xf]
  %v338 = vld [vmem:[%s1 + $0x480] sm:$0xf]
  %v339 = vld [vmem:[%s1 + $0x484] sm:$0xf]
  %v340 = vld [vmem:[%s1 + $0x488] sm:$0xf]
  %v341 = vld [vmem:[%s1 + $0x48c] sm:$0xf]
  %v342 = vld [vmem:[%s1 + $0x490] sm:$0xf]
  %v343 = vld [vmem:[%s1 + $0x494] sm:$0xf]
  %v344 = vld [vmem:[%s1 + $0x498] sm:$0xf]
  %v345 = vld [vmem:[%s1 + $0x49c] sm:$0xf]
  %v346 = vld [vmem:[%s1 + $0x4a0] sm:$0xf]
  %v347 = vld [vmem:[%s1 + $0x4a4] sm:$0xf]
  %v348 = vld [vmem:[%s1 + $0x4a8] sm:$0xf]
  %v349 = vld [vmem:[%s1 + $0x4ac] sm:$0xf]
  %v350 = vld [vmem:[%s1 + $0x4b0] sm:$0xf]
  %v351 = vld [vmem:[%s1 + $0x4b4] sm:$0xf]
  %v352 = vld [vmem:[%s1 + $0x4b8] sm:$0xf]
  %v353 = vld [vmem:[%s1 + $0x4bc] sm:$0xf]
  %v354 = vld [vmem:[%s1 + $0x4c0] sm:$0xf]
  %v355 = vld [vmem:[%s1 + $0x4c4] sm:$0xf]
  %v356 = vld [vmem:[%s1 + $0x4c8] sm:$0xf]
  %v357 = vld [vmem:[%s1 + $0x4cc] sm:$0xf]
  %v358 = vld [vmem:[%s1 + $0x4d0] sm:$0xf]
  %v359 = vld [vmem:[%s1 + $0x4d4] sm:$0xf]
  %v360 = vld [vmem:[%s1 + $0x4d8] sm:$0xf]
  %v361 = vld [vmem:[%s1 + $0x4dc] sm:$0xf]
  %v362 = vld [vmem:[%s1 + $0x4e0] sm:$0xf]
  %v363 = vld [vmem:[%s1 + $0x4e4] sm:$0xf]
  %v364 = vld [vmem:[%s1 + $0x4e8] sm:$0xf]
  %v365 = vld [vmem:[%s1 + $0x4ec] sm:$0xf]
  %v366 = vld [vmem:[%s1 + $0x4f0] sm:$0xf]
  %v367 = vld [vmem:[%s1 + $0x4f4] sm:$0xf]
  %v368 = vld [vmem:[%s1 + $0x4f8] sm:$0xf]
  %v369 = vld [vmem:[%s1 + $0x4fc] sm:$0xf]
  %v370 = vld [vmem:[%s2] sm:$0x1]
  %v372 = vperm.slane %v370, 0
  %v384 = vunpack.c.l.b16 %v40
  %v385 = vunpack.c.h.b16 %v40
  %v386 = vunpack.c.l.b16 %v41
  %v387 = vunpack.c.h.b16 %v41
  %v388 = vunpack.c.l.b16 %v42
  %v389 = vunpack.c.h.b16 %v42
  %v390 = vunpack.c.l.b16 %v43
  %v391 = vunpack.c.h.b16 %v43
  %v392 = vunpack.c.l.b16 %v44
  %v393 = vunpack.c.h.b16 %v44
  %v394 = vunpack.c.l.b16 %v45
  %v395 = vunpack.c.h.b16 %v45
  %v396 = vunpack.c.l.b16 %v46
  %v397 = vunpack.c.h.b16 %v46
  %v398 = vunpack.c.l.b16 %v47
  %v399 = vunpack.c.h.b16 %v47
  %v400 = vunpack.c.l.b16 %v48
  %v401 = vunpack.c.h.b16 %v48
  %v402 = vunpack.c.l.b16 %v49
  %v403 = vunpack.c.h.b16 %v49
  %v404 = vpack.c.b16 %v384, %v384
  %v405 = vpack.c.b16 %v385, %v385
  %v406 = vpack.c.b16 %v386, %v386
  %v407 = vpack.c.b16 %v387, %v387
  %v408 = vpack.c.b16 %v388, %v388
  %v409 = vpack.c.b16 %v389, %v389
  %v410 = vpack.c.b16 %v390, %v390
  %v411 = vpack.c.b16 %v391, %v391
  %v412 = vpack.c.b16 %v392, %v392
  %v413 = vpack.c.b16 %v393, %v393
  %v414 = vpack.c.b16 %v394, %v394
  %v415 = vpack.c.b16 %v395, %v395
  %v416 = vpack.c.b16 %v396, %v396
  %v417 = vpack.c.b16 %v397, %v397
  %v418 = vpack.c.b16 %v398, %v398
  %v419 = vpack.c.b16 %v399, %v399
  %v420 = vpack.c.b16 %v400, %v400
  %v421 = vpack.c.b16 %v401, %v401
  %v422 = vpack.c.b16 %v402, %v402
  %v423 = vpack.c.b16 %v403, %v403
  %v764 = vunpack.c.l.b16 %v50
  %v765 = vunpack.c.l.b16 %v51
  %v766 = vunpack.c.l.b16 %v52
  %v767 = vunpack.c.l.b16 %v53
  %v768 = vunpack.c.l.b16 %v54
  %v769 = vunpack.c.l.b16 %v55
  %v770 = vunpack.c.l.b16 %v56
  %v771 = vunpack.c.l.b16 %v57
  %v772 = vunpack.c.l.b16 %v58
  %v773 = vunpack.c.l.b16 %v59
  %v774 = vunpack.c.l.b16 %v60
  %v775 = vunpack.c.l.b16 %v61
  %v776 = vunpack.c.l.b16 %v62
  %v777 = vunpack.c.l.b16 %v63
  %v778 = vunpack.c.l.b16 %v64
  %v779 = vunpack.c.l.b16 %v65
  %v780 = vunpack.c.l.b16 %v66
  %v781 = vunpack.c.l.b16 %v67
  %v782 = vunpack.c.l.b16 %v68
  %v783 = vunpack.c.l.b16 %v69
  %v784 = vunpack.c.l.b16 %v70
  %v785 = vunpack.c.l.b16 %v71
  %v786 = vunpack.c.l.b16 %v72
  %v787 = vunpack.c.l.b16 %v73
  %v788 = vunpack.c.l.b16 %v74
  %v789 = vunpack.c.l.b16 %v75
  %v790 = vunpack.c.l.b16 %v76
  %v791 = vunpack.c.l.b16 %v77
  %v792 = vunpack.c.l.b16 %v78
  %v793 = vunpack.c.l.b16 %v79
  %v794 = vunpack.c.l.b16 %v80
  %v795 = vunpack.c.l.b16 %v81
  %v796 = vunpack.c.l.b16 %v82
  %v797 = vunpack.c.l.b16 %v83
  %v798 = vunpack.c.l.b16 %v84
  %v799 = vunpack.c.l.b16 %v85
  %v800 = vunpack.c.l.b16 %v86
  %v801 = vunpack.c.l.b16 %v87
  %v802 = vunpack.c.l.b16 %v88
  %v803 = vunpack.c.l.b16 %v89
  %v804 = vunpack.c.l.b16 %v90
  %v805 = vunpack.c.l.b16 %v91
  %v806 = vunpack.c.l.b16 %v92
  %v807 = vunpack.c.l.b16 %v93
  %v808 = vunpack.c.l.b16 %v94
  %v809 = vunpack.c.l.b16 %v95
  %v810 = vunpack.c.l.b16 %v96
  %v811 = vunpack.c.l.b16 %v97
  %v812 = vunpack.c.l.b16 %v98
  %v813 = vunpack.c.l.b16 %v99
  %v814 = vunpack.c.l.b16 %v100
  %v815 = vunpack.c.l.b16 %v101
  %v816 = vunpack.c.l.b16 %v102
  %v817 = vunpack.c.l.b16 %v103
  %v818 = vunpack.c.l.b16 %v104
  %v819 = vunpack.c.l.b16 %v105
  %v820 = vunpack.c.l.b16 %v106
  %v821 = vunpack.c.l.b16 %v107
  %v822 = vunpack.c.l.b16 %v108
  %v823 = vunpack.c.l.b16 %v109
  %v824 = vunpack.c.l.b16 %v110
  %v825 = vunpack.c.l.b16 %v111
  %v826 = vunpack.c.l.b16 %v112
  %v827 = vunpack.c.l.b16 %v113
  %v828 = vunpack.c.l.b16 %v114
  %v829 = vunpack.c.l.b16 %v115
  %v830 = vunpack.c.l.b16 %v116
  %v831 = vunpack.c.l.b16 %v117
  %v832 = vunpack.c.l.b16 %v118
  %v833 = vunpack.c.l.b16 %v119
  %v834 = vunpack.c.l.b16 %v120
  %v835 = vunpack.c.l.b16 %v121
  %v836 = vunpack.c.l.b16 %v122
  %v837 = vunpack.c.l.b16 %v123
  %v838 = vunpack.c.l.b16 %v124
  %v839 = vunpack.c.l.b16 %v125
  %v840 = vunpack.c.l.b16 %v126
  %v841 = vunpack.c.l.b16 %v127
  %v842 = vunpack.c.l.b16 %v128
  %v843 = vunpack.c.l.b16 %v129
  %v844 = vunpack.c.l.b16 %v130
  %v845 = vunpack.c.l.b16 %v131
  %v846 = vunpack.c.l.b16 %v132
  %v847 = vunpack.c.l.b16 %v133
  %v848 = vunpack.c.l.b16 %v134
  %v849 = vunpack.c.l.b16 %v135
  %v850 = vunpack.c.l.b16 %v136
  %v851 = vunpack.c.l.b16 %v137
  %v852 = vunpack.c.l.b16 %v138
  %v853 = vunpack.c.l.b16 %v139
  %v854 = vunpack.c.l.b16 %v140
  %v855 = vunpack.c.l.b16 %v141
  %v856 = vunpack.c.l.b16 %v142
  %v857 = vunpack.c.l.b16 %v143
  %v858 = vunpack.c.l.b16 %v144
  %v859 = vunpack.c.l.b16 %v145
  %v860 = vunpack.c.l.b16 %v146
  %v861 = vunpack.c.l.b16 %v147
  %v862 = vunpack.c.l.b16 %v148
  %v863 = vunpack.c.l.b16 %v149
  %v864 = vunpack.c.l.b16 %v150
  %v865 = vunpack.c.l.b16 %v151
  %v866 = vunpack.c.l.b16 %v152
  %v867 = vunpack.c.l.b16 %v153
  %v868 = vunpack.c.l.b16 %v154
  %v869 = vunpack.c.l.b16 %v155
  %v870 = vunpack.c.l.b16 %v156
  %v871 = vunpack.c.l.b16 %v157
  %v872 = vunpack.c.l.b16 %v158
  %v873 = vunpack.c.l.b16 %v159
  %v874 = vunpack.c.l.b16 %v160
  %v875 = vunpack.c.l.b16 %v161
  %v876 = vunpack.c.l.b16 %v162
  %v877 = vunpack.c.l.b16 %v163
  %v878 = vunpack.c.l.b16 %v164
  %v879 = vunpack.c.l.b16 %v165
  %v880 = vunpack.c.l.b16 %v166
  %v881 = vunpack.c.l.b16 %v167
  %v882 = vunpack.c.l.b16 %v168
  %v883 = vunpack.c.l.b16 %v169
  %v884 = vunpack.c.l.b16 %v170
  %v885 = vunpack.c.l.b16 %v171
  %v886 = vunpack.c.l.b16 %v172
  %v887 = vunpack.c.l.b16 %v173
  %v888 = vunpack.c.l.b16 %v174
  %v889 = vunpack.c.l.b16 %v175
  %v890 = vunpack.c.l.b16 %v176
  %v891 = vunpack.c.l.b16 %v177
  %v892 = vunpack.c.l.b16 %v178
  %v893 = vunpack.c.l.b16 %v179
  %v894 = vunpack.c.l.b16 %v180
  %v895 = vunpack.c.l.b16 %v181
  %v896 = vunpack.c.l.b16 %v182
  %v897 = vunpack.c.l.b16 %v183
  %v898 = vunpack.c.l.b16 %v184
  %v899 = vunpack.c.l.b16 %v185
  %v900 = vunpack.c.l.b16 %v186
  %v901 = vunpack.c.l.b16 %v187
  %v902 = vunpack.c.l.b16 %v188
  %v903 = vunpack.c.l.b16 %v189
  %v904 = vunpack.c.l.b16 %v190
  %v905 = vunpack.c.l.b16 %v191
  %v906 = vunpack.c.l.b16 %v192
  %v907 = vunpack.c.l.b16 %v193
  %v908 = vunpack.c.l.b16 %v194
  %v909 = vunpack.c.l.b16 %v195
  %v910 = vunpack.c.l.b16 %v196
  %v911 = vunpack.c.l.b16 %v197
  %v912 = vunpack.c.l.b16 %v198
  %v913 = vunpack.c.l.b16 %v199
  %v914 = vunpack.c.l.b16 %v200
  %v915 = vunpack.c.l.b16 %v201
  %v916 = vunpack.c.l.b16 %v202
  %v917 = vunpack.c.l.b16 %v203
  %v918 = vunpack.c.l.b16 %v204
  %v919 = vunpack.c.l.b16 %v205
  %v920 = vunpack.c.l.b16 %v206
  %v921 = vunpack.c.l.b16 %v207
  %v922 = vunpack.c.l.b16 %v208
  %v923 = vunpack.c.l.b16 %v209
  %v924 = vunpack.c.l.b16 %v210
  %v925 = vunpack.c.l.b16 %v211
  %v926 = vunpack.c.l.b16 %v212
  %v927 = vunpack.c.l.b16 %v213
  %v928 = vunpack.c.l.b16 %v214
  %v929 = vunpack.c.l.b16 %v215
  %v930 = vunpack.c.l.b16 %v216
  %v931 = vunpack.c.l.b16 %v217
  %v932 = vunpack.c.l.b16 %v218
  %v933 = vunpack.c.l.b16 %v219
  %v934 = vunpack.c.l.b16 %v220
  %v935 = vunpack.c.l.b16 %v221
  %v936 = vunpack.c.l.b16 %v222
  %v937 = vunpack.c.l.b16 %v223
  %v938 = vunpack.c.l.b16 %v224
  %v939 = vunpack.c.l.b16 %v225
  %v940 = vunpack.c.l.b16 %v226
  %v941 = vunpack.c.l.b16 %v227
  %v942 = vunpack.c.l.b16 %v228
  %v943 = vunpack.c.l.b16 %v229
  %v944 = vunpack.c.l.b16 %v230
  %v945 = vunpack.c.l.b16 %v231
  %v946 = vunpack.c.l.b16 %v232
  %v947 = vunpack.c.l.b16 %v233
  %v948 = vunpack.c.l.b16 %v234
  %v949 = vunpack.c.l.b16 %v235
  %v950 = vunpack.c.l.b16 %v236
  %v951 = vunpack.c.l.b16 %v237
  %v952 = vunpack.c.l.b16 %v238
  %v953 = vunpack.c.l.b16 %v239
  %v954 = vunpack.c.l.b16 %v240
  %v955 = vunpack.c.l.b16 %v241
  %v956 = vunpack.c.l.b16 %v242
  %v957 = vunpack.c.l.b16 %v243
  %v958 = vunpack.c.l.b16 %v244
  %v959 = vunpack.c.l.b16 %v245
  %v960 = vunpack.c.l.b16 %v246
  %v961 = vunpack.c.l.b16 %v247
  %v962 = vunpack.c.l.b16 %v248
  %v963 = vunpack.c.l.b16 %v249
  %v964 = vunpack.c.l.b16 %v250
  %v965 = vunpack.c.l.b16 %v251
  %v966 = vunpack.c.l.b16 %v252
  %v967 = vunpack.c.l.b16 %v253
  %v968 = vunpack.c.l.b16 %v254
  %v969 = vunpack.c.l.b16 %v255
  %v970 = vunpack.c.l.b16 %v256
  %v971 = vunpack.c.l.b16 %v257
  %v972 = vunpack.c.l.b16 %v258
  %v973 = vunpack.c.l.b16 %v259
  %v974 = vunpack.c.l.b16 %v260
  %v975 = vunpack.c.l.b16 %v261
  %v976 = vunpack.c.l.b16 %v262
  %v977 = vunpack.c.l.b16 %v263
  %v978 = vunpack.c.l.b16 %v264
  %v979 = vunpack.c.l.b16 %v265
  %v980 = vunpack.c.l.b16 %v266
  %v981 = vunpack.c.l.b16 %v267
  %v982 = vunpack.c.l.b16 %v268
  %v983 = vunpack.c.l.b16 %v269
  %v984 = vunpack.c.l.b16 %v270
  %v985 = vunpack.c.l.b16 %v271
  %v986 = vunpack.c.l.b16 %v272
  %v987 = vunpack.c.l.b16 %v273
  %v988 = vunpack.c.l.b16 %v274
  %v989 = vunpack.c.l.b16 %v275
  %v990 = vunpack.c.l.b16 %v276
  %v991 = vunpack.c.l.b16 %v277
  %v992 = vunpack.c.l.b16 %v278
  %v993 = vunpack.c.l.b16 %v279
  %v994 = vunpack.c.l.b16 %v280
  %v995 = vunpack.c.l.b16 %v281
  %v996 = vunpack.c.l.b16 %v282
  %v997 = vunpack.c.l.b16 %v283
  %v998 = vunpack.c.l.b16 %v284
  %v999 = vunpack.c.l.b16 %v285
  %v1000 = vunpack.c.l.b16 %v286
  %v1001 = vunpack.c.l.b16 %v287
  %v1002 = vunpack.c.l.b16 %v288
  %v1003 = vunpack.c.l.b16 %v289
  %v1004 = vunpack.c.l.b16 %v290
  %v1005 = vunpack.c.l.b16 %v291
  %v1006 = vunpack.c.l.b16 %v292
  %v1007 = vunpack.c.l.b16 %v293
  %v1008 = vunpack.c.l.b16 %v294
  %v1009 = vunpack.c.l.b16 %v295
  %v1010 = vunpack.c.l.b16 %v296
  %v1011 = vunpack.c.l.b16 %v297
  %v1012 = vunpack.c.l.b16 %v298
  %v1013 = vunpack.c.l.b16 %v299
  %v1014 = vunpack.c.l.b16 %v300
  %v1015 = vunpack.c.l.b16 %v301
  %v1016 = vunpack.c.l.b16 %v302
  %v1017 = vunpack.c.l.b16 %v303
  %v1018 = vunpack.c.l.b16 %v304
  %v1019 = vunpack.c.l.b16 %v305
  %v1020 = vunpack.c.l.b16 %v306
  %v1021 = vunpack.c.l.b16 %v307
  %v1022 = vunpack.c.l.b16 %v308
  %v1023 = vunpack.c.l.b16 %v309
  %v1024 = vunpack.c.l.b16 %v310
  %v1025 = vunpack.c.l.b16 %v311
  %v1026 = vunpack.c.l.b16 %v312
  %v1027 = vunpack.c.l.b16 %v313
  %v1028 = vunpack.c.l.b16 %v314
  %v1029 = vunpack.c.l.b16 %v315
  %v1030 = vunpack.c.l.b16 %v316
  %v1031 = vunpack.c.l.b16 %v317
  %v1032 = vunpack.c.l.b16 %v318
  %v1033 = vunpack.c.l.b16 %v319
  %v1034 = vunpack.c.l.b16 %v320
  %v1035 = vunpack.c.l.b16 %v321
  %v1036 = vunpack.c.l.b16 %v322
  %v1037 = vunpack.c.l.b16 %v323
  %v1038 = vunpack.c.l.b16 %v324
  %v1039 = vunpack.c.l.b16 %v325
  %v1040 = vunpack.c.l.b16 %v326
  %v1041 = vunpack.c.l.b16 %v327
  %v1042 = vunpack.c.l.b16 %v328
  %v1043 = vunpack.c.l.b16 %v329
  %v1044 = vunpack.c.l.b16 %v330
  %v1045 = vunpack.c.l.b16 %v331
  %v1046 = vunpack.c.l.b16 %v332
  %v1047 = vunpack.c.l.b16 %v333
  %v1048 = vunpack.c.l.b16 %v334
  %v1049 = vunpack.c.l.b16 %v335
  %v1050 = vunpack.c.l.b16 %v336
  %v1051 = vunpack.c.l.b16 %v337
  %v1052 = vunpack.c.l.b16 %v338
  %v1053 = vunpack.c.l.b16 %v339
  %v1054 = vunpack.c.l.b16 %v340
  %v1055 = vunpack.c.l.b16 %v341
  %v1056 = vunpack.c.l.b16 %v342
  %v1057 = vunpack.c.l.b16 %v343
  %v1058 = vunpack.c.l.b16 %v344
  %v1059 = vunpack.c.l.b16 %v345
  %v1060 = vunpack.c.l.b16 %v346
  %v1061 = vunpack.c.l.b16 %v347
  %v1062 = vunpack.c.l.b16 %v348
  %v1063 = vunpack.c.l.b16 %v349
  %v1064 = vunpack.c.l.b16 %v350
  %v1065 = vunpack.c.l.b16 %v351
  %v1066 = vunpack.c.l.b16 %v352
  %v1067 = vunpack.c.l.b16 %v353
  %v1068 = vunpack.c.l.b16 %v354
  %v1069 = vunpack.c.l.b16 %v355
  %v1070 = vunpack.c.l.b16 %v356
  %v1071 = vunpack.c.l.b16 %v357
  %v1072 = vunpack.c.l.b16 %v358
  %v1073 = vunpack.c.l.b16 %v359
  %v1074 = vunpack.c.l.b16 %v360
  %v1075 = vunpack.c.l.b16 %v361
  %v1076 = vunpack.c.l.b16 %v362
  %v1077 = vunpack.c.l.b16 %v363
  %v1078 = vunpack.c.l.b16 %v364
  %v1079 = vunpack.c.l.b16 %v365
  %v1080 = vunpack.c.l.b16 %v366
  %v1081 = vunpack.c.l.b16 %v367
  %v1082 = vunpack.c.l.b16 %v368
  %v1083 = vunpack.c.l.b16 %v369
  %v1084 = vpack.c.b16 %v765, %v764
  %v1085 = vpack.c.b16 %v767, %v766
  %v1086 = vpack.c.b16 %v769, %v768
  %v1087 = vpack.c.b16 %v771, %v770
  %v1088 = vpack.c.b16 %v773, %v772
  %v1089 = vpack.c.b16 %v775, %v774
  %v1090 = vpack.c.b16 %v777, %v776
  %v1091 = vpack.c.b16 %v779, %v778
  %v1092 = vpack.c.b16 %v781, %v780
  %v1093 = vpack.c.b16 %v783, %v782
  %v1094 = vpack.c.b16 %v785, %v784
  %v1095 = vpack.c.b16 %v787, %v786
  %v1096 = vpack.c.b16 %v789, %v788
  %v1097 = vpack.c.b16 %v791, %v790
  %v1098 = vpack.c.b16 %v793, %v792
  %v1099 = vpack.c.b16 %v795, %v794
  %v1100 = vpack.c.b16 %v797, %v796
  %v1101 = vpack.c.b16 %v799, %v798
  %v1102 = vpack.c.b16 %v801, %v800
  %v1103 = vpack.c.b16 %v803, %v802
  %v1104 = vpack.c.b16 %v805, %v804
  %v1105 = vpack.c.b16 %v807, %v806
  %v1106 = vpack.c.b16 %v809, %v808
  %v1107 = vpack.c.b16 %v811, %v810
  %v1108 = vpack.c.b16 %v813, %v812
  %v1109 = vpack.c.b16 %v815, %v814
  %v1110 = vpack.c.b16 %v817, %v816
  %v1111 = vpack.c.b16 %v819, %v818
  %v1112 = vpack.c.b16 %v821, %v820
  %v1113 = vpack.c.b16 %v823, %v822
  %v1114 = vpack.c.b16 %v825, %v824
  %v1115 = vpack.c.b16 %v827, %v826
  %v1116 = vpack.c.b16 %v829, %v828
  %v1117 = vpack.c.b16 %v831, %v830
  %v1118 = vpack.c.b16 %v833, %v832
  %v1119 = vpack.c.b16 %v835, %v834
  %v1120 = vpack.c.b16 %v837, %v836
  %v1121 = vpack.c.b16 %v839, %v838
  %v1122 = vpack.c.b16 %v841, %v840
  %v1123 = vpack.c.b16 %v843, %v842
  %v1124 = vpack.c.b16 %v845, %v844
  %v1125 = vpack.c.b16 %v847, %v846
  %v1126 = vpack.c.b16 %v849, %v848
  %v1127 = vpack.c.b16 %v851, %v850
  %v1128 = vpack.c.b16 %v853, %v852
  %v1129 = vpack.c.b16 %v855, %v854
  %v1130 = vpack.c.b16 %v857, %v856
  %v1131 = vpack.c.b16 %v859, %v858
  %v1132 = vpack.c.b16 %v861, %v860
  %v1133 = vpack.c.b16 %v863, %v862
  %v1134 = vpack.c.b16 %v865, %v864
  %v1135 = vpack.c.b16 %v867, %v866
  %v1136 = vpack.c.b16 %v869, %v868
  %v1137 = vpack.c.b16 %v871, %v870
  %v1138 = vpack.c.b16 %v873, %v872
  %v1139 = vpack.c.b16 %v875, %v874
  %v1140 = vpack.c.b16 %v877, %v876
  %v1141 = vpack.c.b16 %v879, %v878
  %v1142 = vpack.c.b16 %v881, %v880
  %v1143 = vpack.c.b16 %v883, %v882
  %v1144 = vpack.c.b16 %v885, %v884
  %v1145 = vpack.c.b16 %v887, %v886
  %v1146 = vpack.c.b16 %v889, %v888
  %v1147 = vpack.c.b16 %v891, %v890
  %v1148 = vpack.c.b16 %v893, %v892
  %v1149 = vpack.c.b16 %v895, %v894
  %v1150 = vpack.c.b16 %v897, %v896
  %v1151 = vpack.c.b16 %v899, %v898
  %v1152 = vpack.c.b16 %v901, %v900
  %v1153 = vpack.c.b16 %v903, %v902
  %v1154 = vpack.c.b16 %v905, %v904
  %v1155 = vpack.c.b16 %v907, %v906
  %v1156 = vpack.c.b16 %v909, %v908
  %v1157 = vpack.c.b16 %v911, %v910
  %v1158 = vpack.c.b16 %v913, %v912
  %v1159 = vpack.c.b16 %v915, %v914
  %v1160 = vpack.c.b16 %v917, %v916
  %v1161 = vpack.c.b16 %v919, %v918
  %v1162 = vpack.c.b16 %v921, %v920
  %v1163 = vpack.c.b16 %v923, %v922
  %v1164 = vpack.c.b16 %v925, %v924
  %v1165 = vpack.c.b16 %v927, %v926
  %v1166 = vpack.c.b16 %v929, %v928
  %v1167 = vpack.c.b16 %v931, %v930
  %v1168 = vpack.c.b16 %v933, %v932
  %v1169 = vpack.c.b16 %v935, %v934
  %v1170 = vpack.c.b16 %v937, %v936
  %v1171 = vpack.c.b16 %v939, %v938
  %v1172 = vpack.c.b16 %v941, %v940
  %v1173 = vpack.c.b16 %v943, %v942
  %v1174 = vpack.c.b16 %v945, %v944
  %v1175 = vpack.c.b16 %v947, %v946
  %v1176 = vpack.c.b16 %v949, %v948
  %v1177 = vpack.c.b16 %v951, %v950
  %v1178 = vpack.c.b16 %v953, %v952
  %v1179 = vpack.c.b16 %v955, %v954
  %v1180 = vpack.c.b16 %v957, %v956
  %v1181 = vpack.c.b16 %v959, %v958
  %v1182 = vpack.c.b16 %v961, %v960
  %v1183 = vpack.c.b16 %v963, %v962
  %v1184 = vpack.c.b16 %v965, %v964
  %v1185 = vpack.c.b16 %v967, %v966
  %v1186 = vpack.c.b16 %v969, %v968
  %v1187 = vpack.c.b16 %v971, %v970
  %v1188 = vpack.c.b16 %v973, %v972
  %v1189 = vpack.c.b16 %v975, %v974
  %v1190 = vpack.c.b16 %v977, %v976
  %v1191 = vpack.c.b16 %v979, %v978
  %v1192 = vpack.c.b16 %v981, %v980
  %v1193 = vpack.c.b16 %v983, %v982
  %v1194 = vpack.c.b16 %v985, %v984
  %v1195 = vpack.c.b16 %v987, %v986
  %v1196 = vpack.c.b16 %v989, %v988
  %v1197 = vpack.c.b16 %v991, %v990
  %v1198 = vpack.c.b16 %v993, %v992
  %v1199 = vpack.c.b16 %v995, %v994
  %v1200 = vpack.c.b16 %v997, %v996
  %v1201 = vpack.c.b16 %v999, %v998
  %v1202 = vpack.c.b16 %v1001, %v1000
  %v1203 = vpack.c.b16 %v1003, %v1002
  %v1204 = vpack.c.b16 %v1005, %v1004
  %v1205 = vpack.c.b16 %v1007, %v1006
  %v1206 = vpack.c.b16 %v1009, %v1008
  %v1207 = vpack.c.b16 %v1011, %v1010
  %v1208 = vpack.c.b16 %v1013, %v1012
  %v1209 = vpack.c.b16 %v1015, %v1014
  %v1210 = vpack.c.b16 %v1017, %v1016
  %v1211 = vpack.c.b16 %v1019, %v1018
  %v1212 = vpack.c.b16 %v1021, %v1020
  %v1213 = vpack.c.b16 %v1023, %v1022
  %v1214 = vpack.c.b16 %v1025, %v1024
  %v1215 = vpack.c.b16 %v1027, %v1026
  %v1216 = vpack.c.b16 %v1029, %v1028
  %v1217 = vpack.c.b16 %v1031, %v1030
  %v1218 = vpack.c.b16 %v1033, %v1032
  %v1219 = vpack.c.b16 %v1035, %v1034
  %v1220 = vpack.c.b16 %v1037, %v1036
  %v1221 = vpack.c.b16 %v1039, %v1038
  %v1222 = vpack.c.b16 %v1041, %v1040
  %v1223 = vpack.c.b16 %v1043, %v1042
  %v1224 = vpack.c.b16 %v1045, %v1044
  %v1225 = vpack.c.b16 %v1047, %v1046
  %v1226 = vpack.c.b16 %v1049, %v1048
  %v1227 = vpack.c.b16 %v1051, %v1050
  %v1228 = vpack.c.b16 %v1053, %v1052
  %v1229 = vpack.c.b16 %v1055, %v1054
  %v1230 = vpack.c.b16 %v1057, %v1056
  %v1231 = vpack.c.b16 %v1059, %v1058
  %v1232 = vpack.c.b16 %v1061, %v1060
  %v1233 = vpack.c.b16 %v1063, %v1062
  %v1234 = vpack.c.b16 %v1065, %v1064
  %v1235 = vpack.c.b16 %v1067, %v1066
  %v1236 = vpack.c.b16 %v1069, %v1068
  %v1237 = vpack.c.b16 %v1071, %v1070
  %v1238 = vpack.c.b16 %v1073, %v1072
  %v1239 = vpack.c.b16 %v1075, %v1074
  %v1240 = vpack.c.b16 %v1077, %v1076
  %v1241 = vpack.c.b16 %v1079, %v1078
  %v1242 = vpack.c.b16 %v1081, %v1080
  %v1243 = vpack.c.b16 %v1083, %v1082
  %1404 = vmatpush.bf16.msra.mxu0 %v1091
  %1405 = vmatpush.bf16.msra.mxu0 %v1090
  %1406 = vmatpush.bf16.msra.mxu0 %v1089
  %1407 = vmatpush.bf16.msra.mxu0 %v1088
  %1408 = vmatpush.bf16.msra.mxu0 %v1087
  %1409 = vmatpush.bf16.msra.mxu0 %v1086
  %1410 = vmatpush.bf16.msra.mxu0 %v1085
  %1411 = vmatpush.bf16.msra.mxu0 %v1084
  %1412 = vmatmul.bf16.gmra.mxu0 %v404
  %v1413 = vpop.f32.mrf.mxu0
  %v1414 = vadd.f32 %v372, %v1413
  %v1415 = vpop.f32.mrf.mxu0
  %1416 = vdwg.mxu0
  %1417 = vmatpush.bf16.msra.mxu0 %v1099
  %1418 = vmatpush.bf16.msra.mxu0 %v1098
  %1419 = vmatpush.bf16.msra.mxu0 %v1097
  %1420 = vmatpush.bf16.msra.mxu0 %v1096
  %1421 = vmatpush.bf16.msra.mxu0 %v1095
  %1422 = vmatpush.bf16.msra.mxu0 %v1094
  %1423 = vmatpush.bf16.msra.mxu0 %v1093
  %1424 = vmatpush.bf16.msra.mxu0 %v1092
  %1425 = vmatmul.bf16.gmra.mxu0 %v405
  %v1426 = vpop.f32.mrf.mxu0
  %v1427 = vadd.f32 %v1414, %v1426
  %v1428 = vpop.f32.mrf.mxu0
  %1429 = vdwg.mxu0
  %1430 = vmatpush.bf16.msra.mxu0 %v1107
  %1431 = vmatpush.bf16.msra.mxu0 %v1106
  %1432 = vmatpush.bf16.msra.mxu0 %v1105
  %1433 = vmatpush.bf16.msra.mxu0 %v1104
  %1434 = vmatpush.bf16.msra.mxu0 %v1103
  %1435 = vmatpush.bf16.msra.mxu0 %v1102
  %1436 = vmatpush.bf16.msra.mxu0 %v1101
  %1437 = vmatpush.bf16.msra.mxu0 %v1100
  %1438 = vmatmul.bf16.gmra.mxu0 %v406
  %v1439 = vpop.f32.mrf.mxu0
  %v1440 = vadd.f32 %v1427, %v1439
  %v1441 = vpop.f32.mrf.mxu0
  %1442 = vdwg.mxu0
  %1443 = vmatpush.bf16.msra.mxu0 %v1115
  %1444 = vmatpush.bf16.msra.mxu0 %v1114
  %1445 = vmatpush.bf16.msra.mxu0 %v1113
  %1446 = vmatpush.bf16.msra.mxu0 %v1112
  %1447 = vmatpush.bf16.msra.mxu0 %v1111
  %1448 = vmatpush.bf16.msra.mxu0 %v1110
  %1449 = vmatpush.bf16.msra.mxu0 %v1109
  %1450 = vmatpush.bf16.msra.mxu0 %v1108
  %1451 = vmatmul.bf16.gmra.mxu0 %v407
  %v1452 = vpop.f32.mrf.mxu0
  %v1453 = vadd.f32 %v1440, %v1452
  %v1454 = vpop.f32.mrf.mxu0
  %1455 = vdwg.mxu0
  %1456 = vmatpush.bf16.msra.mxu0 %v1123
  %1457 = vmatpush.bf16.msra.mxu0 %v1122
  %1458 = vmatpush.bf16.msra.mxu0 %v1121
  %1459 = vmatpush.bf16.msra.mxu0 %v1120
  %1460 = vmatpush.bf16.msra.mxu0 %v1119
  %1461 = vmatpush.bf16.msra.mxu0 %v1118
  %1462 = vmatpush.bf16.msra.mxu0 %v1117
  %1463 = vmatpush.bf16.msra.mxu0 %v1116
  %1464 = vmatmul.bf16.gmra.mxu0 %v408
  %v1465 = vpop.f32.mrf.mxu0
  %v1466 = vadd.f32 %v1453, %v1465
  %v1467 = vpop.f32.mrf.mxu0
  %1468 = vdwg.mxu0
  %1469 = vmatpush.bf16.msra.mxu0 %v1131
  %1470 = vmatpush.bf16.msra.mxu0 %v1130
  %1471 = vmatpush.bf16.msra.mxu0 %v1129
  %1472 = vmatpush.bf16.msra.mxu0 %v1128
  %1473 = vmatpush.bf16.msra.mxu0 %v1127
  %1474 = vmatpush.bf16.msra.mxu0 %v1126
  %1475 = vmatpush.bf16.msra.mxu0 %v1125
  %1476 = vmatpush.bf16.msra.mxu0 %v1124
  %1477 = vmatmul.bf16.gmra.mxu0 %v409
  %v1478 = vpop.f32.mrf.mxu0
  %v1479 = vadd.f32 %v1466, %v1478
  %v1480 = vpop.f32.mrf.mxu0
  %1481 = vdwg.mxu0
  %1482 = vmatpush.bf16.msra.mxu0 %v1139
  %1483 = vmatpush.bf16.msra.mxu0 %v1138
  %1484 = vmatpush.bf16.msra.mxu0 %v1137
  %1485 = vmatpush.bf16.msra.mxu0 %v1136
  %1486 = vmatpush.bf16.msra.mxu0 %v1135
  %1487 = vmatpush.bf16.msra.mxu0 %v1134
  %1488 = vmatpush.bf16.msra.mxu0 %v1133
  %1489 = vmatpush.bf16.msra.mxu0 %v1132
  %1490 = vmatmul.bf16.gmra.mxu0 %v410
  %v1491 = vpop.f32.mrf.mxu0
  %v1492 = vadd.f32 %v1479, %v1491
  %v1493 = vpop.f32.mrf.mxu0
  %1494 = vdwg.mxu0
  %1495 = vmatpush.bf16.msra.mxu0 %v1147
  %1496 = vmatpush.bf16.msra.mxu0 %v1146
  %1497 = vmatpush.bf16.msra.mxu0 %v1145
  %1498 = vmatpush.bf16.msra.mxu0 %v1144
  %1499 = vmatpush.bf16.msra.mxu0 %v1143
  %1500 = vmatpush.bf16.msra.mxu0 %v1142
  %1501 = vmatpush.bf16.msra.mxu0 %v1141
  %1502 = vmatpush.bf16.msra.mxu0 %v1140
  %1503 = vmatmul.bf16.gmra.mxu0 %v411
  %v1504 = vpop.f32.mrf.mxu0
  %v1505 = vadd.f32 %v1492, %v1504
  %v1506 = vpop.f32.mrf.mxu0
  %1507 = vdwg.mxu0
  %1508 = vmatpush.bf16.msra.mxu0 %v1155
  %1509 = vmatpush.bf16.msra.mxu0 %v1154
  %1510 = vmatpush.bf16.msra.mxu0 %v1153
  %1511 = vmatpush.bf16.msra.mxu0 %v1152
  %1512 = vmatpush.bf16.msra.mxu0 %v1151
  %1513 = vmatpush.bf16.msra.mxu0 %v1150
  %1514 = vmatpush.bf16.msra.mxu0 %v1149
  %1515 = vmatpush.bf16.msra.mxu0 %v1148
  %1516 = vmatmul.bf16.gmra.mxu0 %v412
  %v1517 = vpop.f32.mrf.mxu0
  %v1518 = vadd.f32 %v1505, %v1517
  %v1519 = vpop.f32.mrf.mxu0
  %1520 = vdwg.mxu0
  %1521 = vmatpush.bf16.msra.mxu0 %v1163
  %1522 = vmatpush.bf16.msra.mxu0 %v1162
  %1523 = vmatpush.bf16.msra.mxu0 %v1161
  %1524 = vmatpush.bf16.msra.mxu0 %v1160
  %1525 = vmatpush.bf16.msra.mxu0 %v1159
  %1526 = vmatpush.bf16.msra.mxu0 %v1158
  %1527 = vmatpush.bf16.msra.mxu0 %v1157
  %1528 = vmatpush.bf16.msra.mxu0 %v1156
  %1529 = vmatmul.bf16.gmra.mxu0 %v413
  %v1530 = vpop.f32.mrf.mxu0
  %v1531 = vadd.f32 %v1518, %v1530
  %v1532 = vpop.f32.mrf.mxu0
  %1533 = vdwg.mxu0
  %1534 = vmatpush.bf16.msra.mxu0 %v1171
  %1535 = vmatpush.bf16.msra.mxu0 %v1170
  %1536 = vmatpush.bf16.msra.mxu0 %v1169
  %1537 = vmatpush.bf16.msra.mxu0 %v1168
  %1538 = vmatpush.bf16.msra.mxu0 %v1167
  %1539 = vmatpush.bf16.msra.mxu0 %v1166
  %1540 = vmatpush.bf16.msra.mxu0 %v1165
  %1541 = vmatpush.bf16.msra.mxu0 %v1164
  %1542 = vmatmul.bf16.gmra.mxu0 %v414
  %v1543 = vpop.f32.mrf.mxu0
  %v1544 = vadd.f32 %v1531, %v1543
  %v1545 = vpop.f32.mrf.mxu0
  %1546 = vdwg.mxu0
  %1547 = vmatpush.bf16.msra.mxu0 %v1179
  %1548 = vmatpush.bf16.msra.mxu0 %v1178
  %1549 = vmatpush.bf16.msra.mxu0 %v1177
  %1550 = vmatpush.bf16.msra.mxu0 %v1176
  %1551 = vmatpush.bf16.msra.mxu0 %v1175
  %1552 = vmatpush.bf16.msra.mxu0 %v1174
  %1553 = vmatpush.bf16.msra.mxu0 %v1173
  %1554 = vmatpush.bf16.msra.mxu0 %v1172
  %1555 = vmatmul.bf16.gmra.mxu0 %v415
  %v1556 = vpop.f32.mrf.mxu0
  %v1557 = vadd.f32 %v1544, %v1556
  %v1558 = vpop.f32.mrf.mxu0
  %1559 = vdwg.mxu0
  %1560 = vmatpush.bf16.msra.mxu0 %v1187
  %1561 = vmatpush.bf16.msra.mxu0 %v1186
  %1562 = vmatpush.bf16.msra.mxu0 %v1185
  %1563 = vmatpush.bf16.msra.mxu0 %v1184
  %1564 = vmatpush.bf16.msra.mxu0 %v1183
  %1565 = vmatpush.bf16.msra.mxu0 %v1182
  %1566 = vmatpush.bf16.msra.mxu0 %v1181
  %1567 = vmatpush.bf16.msra.mxu0 %v1180
  %1568 = vmatmul.bf16.gmra.mxu0 %v416
  %v1569 = vpop.f32.mrf.mxu0
  %v1570 = vadd.f32 %v1557, %v1569
  %v1571 = vpop.f32.mrf.mxu0
  %1572 = vdwg.mxu0
  %1573 = vmatpush.bf16.msra.mxu0 %v1195
  %1574 = vmatpush.bf16.msra.mxu0 %v1194
  %1575 = vmatpush.bf16.msra.mxu0 %v1193
  %1576 = vmatpush.bf16.msra.mxu0 %v1192
  %1577 = vmatpush.bf16.msra.mxu0 %v1191
  %1578 = vmatpush.bf16.msra.mxu0 %v1190
  %1579 = vmatpush.bf16.msra.mxu0 %v1189
  %1580 = vmatpush.bf16.msra.mxu0 %v1188
  %1581 = vmatmul.bf16.gmra.mxu0 %v417
  %v1582 = vpop.f32.mrf.mxu0
  %v1583 = vadd.f32 %v1570, %v1582
  %v1584 = vpop.f32.mrf.mxu0
  %1585 = vdwg.mxu0
  %1586 = vmatpush.bf16.msra.mxu0 %v1203
  %1587 = vmatpush.bf16.msra.mxu0 %v1202
  %1588 = vmatpush.bf16.msra.mxu0 %v1201
  %1589 = vmatpush.bf16.msra.mxu0 %v1200
  %1590 = vmatpush.bf16.msra.mxu0 %v1199
  %1591 = vmatpush.bf16.msra.mxu0 %v1198
  %1592 = vmatpush.bf16.msra.mxu0 %v1197
  %1593 = vmatpush.bf16.msra.mxu0 %v1196
  %1594 = vmatmul.bf16.gmra.mxu0 %v418
  %v1595 = vpop.f32.mrf.mxu0
  %v1596 = vadd.f32 %v1583, %v1595
  %v1597 = vpop.f32.mrf.mxu0
  %1598 = vdwg.mxu0
  %1599 = vmatpush.bf16.msra.mxu0 %v1211
  %1600 = vmatpush.bf16.msra.mxu0 %v1210
  %1601 = vmatpush.bf16.msra.mxu0 %v1209
  %1602 = vmatpush.bf16.msra.mxu0 %v1208
  %1603 = vmatpush.bf16.msra.mxu0 %v1207
  %1604 = vmatpush.bf16.msra.mxu0 %v1206
  %1605 = vmatpush.bf16.msra.mxu0 %v1205
  %1606 = vmatpush.bf16.msra.mxu0 %v1204
  %1607 = vmatmul.bf16.gmra.mxu0 %v419
  %v1608 = vpop.f32.mrf.mxu0
  %v1609 = vadd.f32 %v1596, %v1608
  %v1610 = vpop.f32.mrf.mxu0
  %1611 = vdwg.mxu0
  %1612 = vmatpush.bf16.msra.mxu0 %v1219
  %1613 = vmatpush.bf16.msra.mxu0 %v1218
  %1614 = vmatpush.bf16.msra.mxu0 %v1217
  %1615 = vmatpush.bf16.msra.mxu0 %v1216
  %1616 = vmatpush.bf16.msra.mxu0 %v1215
  %1617 = vmatpush.bf16.msra.mxu0 %v1214
  %1618 = vmatpush.bf16.msra.mxu0 %v1213
  %1619 = vmatpush.bf16.msra.mxu0 %v1212
  %1620 = vmatmul.bf16.gmra.mxu0 %v420
  %v1621 = vpop.f32.mrf.mxu0
  %v1622 = vadd.f32 %v1609, %v1621
  %v1623 = vpop.f32.mrf.mxu0
  %1624 = vdwg.mxu0
  %1625 = vmatpush.bf16.msra.mxu0 %v1227
  %1626 = vmatpush.bf16.msra.mxu0 %v1226
  %1627 = vmatpush.bf16.msra.mxu0 %v1225
  %1628 = vmatpush.bf16.msra.mxu0 %v1224
  %1629 = vmatpush.bf16.msra.mxu0 %v1223
  %1630 = vmatpush.bf16.msra.mxu0 %v1222
  %1631 = vmatpush.bf16.msra.mxu0 %v1221
  %1632 = vmatpush.bf16.msra.mxu0 %v1220
  %1633 = vmatmul.bf16.gmra.mxu0 %v421
  %v1634 = vpop.f32.mrf.mxu0
  %v1635 = vadd.f32 %v1622, %v1634
  %v1636 = vpop.f32.mrf.mxu0
  %1637 = vdwg.mxu0
  %1638 = vmatpush.bf16.msra.mxu0 %v1235
  %1639 = vmatpush.bf16.msra.mxu0 %v1234
  %1640 = vmatpush.bf16.msra.mxu0 %v1233
  %1641 = vmatpush.bf16.msra.mxu0 %v1232
  %1642 = vmatpush.bf16.msra.mxu0 %v1231
  %1643 = vmatpush.bf16.msra.mxu0 %v1230
  %1644 = vmatpush.bf16.msra.mxu0 %v1229
  %1645 = vmatpush.bf16.msra.mxu0 %v1228
  %1646 = vmatmul.bf16.gmra.mxu0 %v422
  %v1647 = vpop.f32.mrf.mxu0
  %v1648 = vadd.f32 %v1635, %v1647
  %v1649 = vpop.f32.mrf.mxu0
  %1650 = vdwg.mxu0
  %1651 = vmatpush.bf16.msra.mxu0 %v1243
  %1652 = vmatpush.bf16.msra.mxu0 %v1242
  %1653 = vmatpush.bf16.msra.mxu0 %v1241
  %1654 = vmatpush.bf16.msra.mxu0 %v1240
  %1655 = vmatpush.bf16.msra.mxu0 %v1239
  %1656 = vmatpush.bf16.msra.mxu0 %v1238
  %1657 = vmatpush.bf16.msra.mxu0 %v1237
  %1658 = vmatpush.bf16.msra.mxu0 %v1236
  %1659 = vmatmul.bf16.gmra.mxu0 %v423
  %v1660 = vpop.f32.mrf.mxu0
  %v1661 = vadd.f32 %v1648, %v1660
  %v1662 = vpop.f32.mrf.mxu0
  %1663 = vdwg.mxu0
  %v1664 = vmax.f32 %v1661, 0.0
  %v1665 = vpack.c.bf16 %v1664, %v1664
  %v1666 = vld [vmem:[%s3] sm:$0xf]
  %v1667 = vld [vmem:[%s3 + $0x4] sm:$0xf]
  %v1668 = vld [vmem:[%s3 + $0x8] sm:$0xf]
  %v1669 = vld [vmem:[%s3 + $0xc] sm:$0xf]
  %v1670 = vld [vmem:[%s3 + $0x10] sm:$0xf]
  %v1671 = vld [vmem:[%s3 + $0x14] sm:$0xf]
  %v1672 = vld [vmem:[%s3 + $0x18] sm:$0xf]
  %v1673 = vld [vmem:[%s3 + $0x1c] sm:$0xf]
  %v1674 = vld [vmem:[%s3 + $0x20] sm:$0xf]
  %v1675 = vld [vmem:[%s3 + $0x24] sm:$0xf]
  %v1676 = vld [vmem:[%s3 + $0x28] sm:$0xf]
  %v1677 = vld [vmem:[%s3 + $0x2c] sm:$0xf]
  %v1678 = vld [vmem:[%s3 + $0x30] sm:$0xf]
  %v1679 = vld [vmem:[%s3 + $0x34] sm:$0xf]
  %v1680 = vld [vmem:[%s3 + $0x38] sm:$0xf]
  %v1681 = vld [vmem:[%s3 + $0x3c] sm:$0xf]
  %v1682 = vld [vmem:[%s4] sm:$0x1]
  %v1684 = vperm.slane %v1682, 0
  %v1702 = vunpack.c.l.b16 %v1666
  %v1703 = vunpack.c.l.b16 %v1667
  %v1704 = vunpack.c.l.b16 %v1668
  %v1705 = vunpack.c.l.b16 %v1669
  %v1706 = vunpack.c.l.b16 %v1670
  %v1707 = vunpack.c.l.b16 %v1671
  %v1708 = vunpack.c.l.b16 %v1672
  %v1709 = vunpack.c.l.b16 %v1673
  %v1710 = vunpack.c.l.b16 %v1674
  %v1711 = vunpack.c.l.b16 %v1675
  %v1712 = vunpack.c.l.b16 %v1676
  %v1713 = vunpack.c.l.b16 %v1677
  %v1714 = vunpack.c.l.b16 %v1678
  %v1715 = vunpack.c.l.b16 %v1679
  %v1716 = vunpack.c.l.b16 %v1680
  %v1717 = vunpack.c.l.b16 %v1681
  %v1718 = vpack.c.b16 %v1703, %v1702
  %v1719 = vpack.c.b16 %v1705, %v1704
  %v1720 = vpack.c.b16 %v1707, %v1706
  %v1721 = vpack.c.b16 %v1709, %v1708
  %v1722 = vpack.c.b16 %v1711, %v1710
  %v1723 = vpack.c.b16 %v1713, %v1712
  %v1724 = vpack.c.b16 %v1715, %v1714
  %v1725 = vpack.c.b16 %v1717, %v1716
  %1734 = vmatpush.bf16.msra.mxu0 %v1725
  %1735 = vmatpush.bf16.msra.mxu0 %v1724
  %1736 = vmatpush.bf16.msra.mxu0 %v1723
  %1737 = vmatpush.bf16.msra.mxu0 %v1722
  %1738 = vmatpush.bf16.msra.mxu0 %v1721
  %1739 = vmatpush.bf16.msra.mxu0 %v1720
  %1740 = vmatpush.bf16.msra.mxu0 %v1719
  %1741 = vmatpush.bf16.msra.mxu0 %v1718
  %1742 = vmatmul.bf16.gmra.mxu0 %v1665
  %v1743 = vpop.f32.mrf.mxu0
  %v1744 = vadd.f32 %v1684, %v1743
  %v1745 = vpop.f32.mrf.mxu0
  %1746 = vdwg.mxu0
  %v1747 = vmax.f32 %v1744, 0.0
  %v1748 = vpack.c.bf16 %v1747, %v1747
  %v1749 = vld [vmem:[%s5] sm:$0xf]
  %v1750 = vld [vmem:[%s5 + $0x4] sm:$0xf]
  %v1751 = vld [vmem:[%s5 + $0x8] sm:$0xf]
  %v1752 = vld [vmem:[%s5 + $0xc] sm:$0xf]
  %v1753 = vld [vmem:[%s5 + $0x10] sm:$0xf]
  %v1754 = vld [vmem:[%s5 + $0x14] sm:$0xf]
  %v1755 = vld [vmem:[%s5 + $0x18] sm:$0xf]
  %v1756 = vld [vmem:[%s5 + $0x1c] sm:$0xf]
  %v1757 = vld [vmem:[%s5 + $0x20] sm:$0xf]
  %v1758 = vld [vmem:[%s5 + $0x24] sm:$0xf]
  %v1759 = vld [vmem:[%s5 + $0x28] sm:$0xf]
  %v1760 = vld [vmem:[%s5 + $0x2c] sm:$0xf]
  %v1761 = vld [vmem:[%s5 + $0x30] sm:$0xf]
  %v1762 = vld [vmem:[%s5 + $0x34] sm:$0xf]
  %v1763 = vld [vmem:[%s5 + $0x38] sm:$0xf]
  %v1764 = vld [vmem:[%s5 + $0x3c] sm:$0xf]
  %v1765 = vld [vmem:[%s6] sm:$0x1]
  %v1767 = vperm.slane %v1765, 0
  %v1785 = vunpack.c.l.b16 %v1749
  %v1786 = vunpack.c.l.b16 %v1750
  %v1787 = vunpack.c.l.b16 %v1751
  %v1788 = vunpack.c.l.b16 %v1752
  %v1789 = vunpack.c.l.b16 %v1753
  %v1790 = vunpack.c.l.b16 %v1754
  %v1791 = vunpack.c.l.b16 %v1755
  %v1792 = vunpack.c.l.b16 %v1756
  %v1793 = vunpack.c.l.b16 %v1757
  %v1794 = vunpack.c.l.b16 %v1758
  %v1795 = vunpack.c.l.b16 %v1759
  %v1796 = vunpack.c.l.b16 %v1760
  %v1797 = vunpack.c.l.b16 %v1761
  %v1798 = vunpack.c.l.b16 %v1762
  %v1799 = vunpack.c.l.b16 %v1763
  %v1800 = vunpack.c.l.b16 %v1764
  %v1801 = vpack.c.b16 %v1786, %v1785
  %v1802 = vpack.c.b16 %v1788, %v1787
  %v1803 = vpack.c.b16 %v1790, %v1789
  %v1804 = vpack.c.b16 %v1792, %v1791
  %v1805 = vpack.c.b16 %v1794, %v1793
  %v1806 = vpack.c.b16 %v1796, %v1795
  %v1807 = vpack.c.b16 %v1798, %v1797
  %v1808 = vpack.c.b16 %v1800, %v1799
  %1817 = vmatpush.bf16.msra.mxu0 %v1808
  %1818 = vmatpush.bf16.msra.mxu0 %v1807
  %1819 = vmatpush.bf16.msra.mxu0 %v1806
  %1820 = vmatpush.bf16.msra.mxu0 %v1805
  %1821 = vmatpush.bf16.msra.mxu0 %v1804
  %1822 = vmatpush.bf16.msra.mxu0 %v1803
  %1823 = vmatpush.bf16.msra.mxu0 %v1802
  %1824 = vmatpush.bf16.msra.mxu0 %v1801
  %1825 = vmatmul.bf16.gmra.mxu0 %v1748
  %v1826 = vpop.f32.mrf.mxu0
  %v1827 = vadd.f32 %v1767, %v1826
  %v1828 = vpop.f32.mrf.mxu0
  %1829 = vdwg.mxu0
  %1830 = vst [vmem:[%s11] sm:$0xff] %v1827
  %v1831 = vld [vmem:[%s7] sm:$0xf]
  %v1832 = vld [vmem:[%s7 + $0x4] sm:$0xf]
  %v1833 = vld [vmem:[%s7 + $0x8] sm:$0xf]
  %v1834 = vld [vmem:[%s7 + $0xc] sm:$0xf]
  %v1835 = vld [vmem:[%s7 + $0x10] sm:$0xf]
  %v1836 = vld [vmem:[%s7 + $0x14] sm:$0xf]
  %v1837 = vld [vmem:[%s7 + $0x18] sm:$0xf]
  %v1838 = vld [vmem:[%s7 + $0x1c] sm:$0xf]
  %v1839 = vld [vmem:[%s7 + $0x20] sm:$0xf]
  %v1840 = vld [vmem:[%s7 + $0x24] sm:$0xf]
  %v1841 = vld [vmem:[%s7 + $0x28] sm:$0xf]
  %v1842 = vld [vmem:[%s7 + $0x2c] sm:$0xf]
  %v1843 = vld [vmem:[%s7 + $0x30] sm:$0xf]
  %v1844 = vld [vmem:[%s7 + $0x34] sm:$0xf]
  %v1845 = vld [vmem:[%s7 + $0x38] sm:$0xf]
  %v1846 = vld [vmem:[%s7 + $0x3c] sm:$0xf]
  %v1847 = vld [vmem:[%s7 + $0x40] sm:$0xf]
  %v1848 = vld [vmem:[%s7 + $0x44] sm:$0xf]
  %v1849 = vld [vmem:[%s7 + $0x48] sm:$0xf]
  %v1850 = vld [vmem:[%s7 + $0x4c] sm:$0xf]
  %v1851 = vld [vmem:[%s7 + $0x50] sm:$0xf]
  %v1852 = vld [vmem:[%s7 + $0x54] sm:$0xf]
  %v1853 = vld [vmem:[%s7 + $0x58] sm:$0xf]
  %v1854 = vld [vmem:[%s7 + $0x5c] sm:$0xf]
  %v1855 = vld [vmem:[%s7 + $0x60] sm:$0xf]
  %v1856 = vld [vmem:[%s7 + $0x64] sm:$0xf]
  %v1857 = vld [vmem:[%s7 + $0x68] sm:$0xf]
  %v1858 = vld [vmem:[%s7 + $0x6c] sm:$0xf]
  %v1859 = vld [vmem:[%s7 + $0x70] sm:$0xf]
  %v1860 = vld [vmem:[%s7 + $0x74] sm:$0xf]
  %v1861 = vld [vmem:[%s7 + $0x78] sm:$0xf]
  %v1862 = vld [vmem:[%s7 + $0x7c] sm:$0xf]
  %v1863 = vld [vmem:[%s7 + $0x80] sm:$0xf]
  %v1864 = vld [vmem:[%s7 + $0x84] sm:$0xf]
  %v1865 = vld [vmem:[%s7 + $0x88] sm:$0xf]
  %v1866 = vld [vmem:[%s7 + $0x8c] sm:$0xf]
  %v1867 = vld [vmem:[%s7 + $0x90] sm:$0xf]
  %v1868 = vld [vmem:[%s7 + $0x94] sm:$0xf]
  %v1869 = vld [vmem:[%s7 + $0x98] sm:$0xf]
  %v1870 = vld [vmem:[%s7 + $0x9c] sm:$0xf]
  %v1871 = vld [vmem:[%s7 + $0xa0] sm:$0xf]
  %v1872 = vld [vmem:[%s7 + $0xa4] sm:$0xf]
  %v1873 = vld [vmem:[%s7 + $0xa8] sm:$0xf]
  %v1874 = vld [vmem:[%s7 + $0xac] sm:$0xf]
  %v1875 = vld [vmem:[%s7 + $0xb0] sm:$0xf]
  %v1876 = vld [vmem:[%s7 + $0xb4] sm:$0xf]
  %v1877 = vld [vmem:[%s7 + $0xb8] sm:$0xf]
  %v1878 = vld [vmem:[%s7 + $0xbc] sm:$0xf]
  %v1879 = vld [vmem:[%s7 + $0xc0] sm:$0xf]
  %v1880 = vld [vmem:[%s7 + $0xc4] sm:$0xf]
  %v1881 = vld [vmem:[%s7 + $0xc8] sm:$0xf]
  %v1882 = vld [vmem:[%s7 + $0xcc] sm:$0xf]
  %v1883 = vld [vmem:[%s7 + $0xd0] sm:$0xf]
  %v1884 = vld [vmem:[%s7 + $0xd4] sm:$0xf]
  %v1885 = vld [vmem:[%s7 + $0xd8] sm:$0xf]
  %v1886 = vld [vmem:[%s7 + $0xdc] sm:$0xf]
  %v1887 = vld [vmem:[%s7 + $0xe0] sm:$0xf]
  %v1888 = vld [vmem:[%s7 + $0xe4] sm:$0xf]
  %v1889 = vld [vmem:[%s7 + $0xe8] sm:$0xf]
  %v1890 = vld [vmem:[%s7 + $0xec] sm:$0xf]
  %v1891 = vld [vmem:[%s7 + $0xf0] sm:$0xf]
  %v1892 = vld [vmem:[%s7 + $0xf4] sm:$0xf]
  %v1893 = vld [vmem:[%s7 + $0xf8] sm:$0xf]
  %v1894 = vld [vmem:[%s7 + $0xfc] sm:$0xf]
  %v1895 = vld [vmem:[%s7 + $0x100] sm:$0xf]
  %v1896 = vld [vmem:[%s7 + $0x104] sm:$0xf]
  %v1897 = vld [vmem:[%s7 + $0x108] sm:$0xf]
  %v1898 = vld [vmem:[%s7 + $0x10c] sm:$0xf]
  %v1899 = vld [vmem:[%s7 + $0x110] sm:$0xf]
  %v1900 = vld [vmem:[%s7 + $0x114] sm:$0xf]
  %v1901 = vld [vmem:[%s7 + $0x118] sm:$0xf]
  %v1902 = vld [vmem:[%s7 + $0x11c] sm:$0xf]
  %v1903 = vld [vmem:[%s7 + $0x120] sm:$0xf]
  %v1904 = vld [vmem:[%s7 + $0x124] sm:$0xf]
  %v1905 = vld [vmem:[%s7 + $0x128] sm:$0xf]
  %v1906 = vld [vmem:[%s7 + $0x12c] sm:$0xf]
  %v1907 = vld [vmem:[%s7 + $0x130] sm:$0xf]
  %v1908 = vld [vmem:[%s7 + $0x134] sm:$0xf]
  %v1909 = vld [vmem:[%s7 + $0x138] sm:$0xf]
  %v1910 = vld [vmem:[%s7 + $0x13c] sm:$0xf]
  %v1911 = vld [vmem:[%s7 + $0x140] sm:$0xf]
  %v1912 = vld [vmem:[%s7 + $0x144] sm:$0xf]
  %v1913 = vld [vmem:[%s7 + $0x148] sm:$0xf]
  %v1914 = vld [vmem:[%s7 + $0x14c] sm:$0xf]
  %v1915 = vld [vmem:[%s7 + $0x150] sm:$0xf]
  %v1916 = vld [vmem:[%s7 + $0x154] sm:$0xf]
  %v1917 = vld [vmem:[%s7 + $0x158] sm:$0xf]
  %v1918 = vld [vmem:[%s7 + $0x15c] sm:$0xf]
  %v1919 = vld [vmem:[%s7 + $0x160] sm:$0xf]
  %v1920 = vld [vmem:[%s7 + $0x164] sm:$0xf]
  %v1921 = vld [vmem:[%s7 + $0x168] sm:$0xf]
  %v1922 = vld [vmem:[%s7 + $0x16c] sm:$0xf]
  %v1923 = vld [vmem:[%s7 + $0x170] sm:$0xf]
  %v1924 = vld [vmem:[%s7 + $0x174] sm:$0xf]
  %v1925 = vld [vmem:[%s7 + $0x178] sm:$0xf]
  %v1926 = vld [vmem:[%s7 + $0x17c] sm:$0xf]
  %v1927 = vld [vmem:[%s7 + $0x180] sm:$0xf]
  %v1928 = vld [vmem:[%s7 + $0x184] sm:$0xf]
  %v1929 = vld [vmem:[%s7 + $0x188] sm:$0xf]
  %v1930 = vld [vmem:[%s7 + $0x18c] sm:$0xf]
  %v1931 = vld [vmem:[%s7 + $0x190] sm:$0xf]
  %v1932 = vld [vmem:[%s7 + $0x194] sm:$0xf]
  %v1933 = vld [vmem:[%s7 + $0x198] sm:$0xf]
  %v1934 = vld [vmem:[%s7 + $0x19c] sm:$0xf]
  %v1935 = vld [vmem:[%s7 + $0x1a0] sm:$0xf]
  %v1936 = vld [vmem:[%s7 + $0x1a4] sm:$0xf]
  %v1937 = vld [vmem:[%s7 + $0x1a8] sm:$0xf]
  %v1938 = vld [vmem:[%s7 + $0x1ac] sm:$0xf]
  %v1939 = vld [vmem:[%s7 + $0x1b0] sm:$0xf]
  %v1940 = vld [vmem:[%s7 + $0x1b4] sm:$0xf]
  %v1941 = vld [vmem:[%s7 + $0x1b8] sm:$0xf]
  %v1942 = vld [vmem:[%s7 + $0x1bc] sm:$0xf]
  %v1943 = vld [vmem:[%s7 + $0x1c0] sm:$0xf]
  %v1944 = vld [vmem:[%s7 + $0x1c4] sm:$0xf]
  %v1945 = vld [vmem:[%s7 + $0x1c8] sm:$0xf]
  %v1946 = vld [vmem:[%s7 + $0x1cc] sm:$0xf]
  %v1947 = vld [vmem:[%s7 + $0x1d0] sm:$0xf]
  %v1948 = vld [vmem:[%s7 + $0x1d4] sm:$0xf]
  %v1949 = vld [vmem:[%s7 + $0x1d8] sm:$0xf]
  %v1950 = vld [vmem:[%s7 + $0x1dc] sm:$0xf]
  %v1951 = vld [vmem:[%s7 + $0x1e0] sm:$0xf]
  %v1952 = vld [vmem:[%s7 + $0x1e4] sm:$0xf]
  %v1953 = vld [vmem:[%s7 + $0x1e8] sm:$0xf]
  %v1954 = vld [vmem:[%s7 + $0x1ec] sm:$0xf]
  %v1955 = vld [vmem:[%s7 + $0x1f0] sm:$0xf]
  %v1956 = vld [vmem:[%s7 + $0x1f4] sm:$0xf]
  %v1957 = vld [vmem:[%s7 + $0x1f8] sm:$0xf]
  %v1958 = vld [vmem:[%s7 + $0x1fc] sm:$0xf]
  %v1959 = vld [vmem:[%s7 + $0x200] sm:$0xf]
  %v1960 = vld [vmem:[%s7 + $0x204] sm:$0xf]
  %v1961 = vld [vmem:[%s7 + $0x208] sm:$0xf]
  %v1962 = vld [vmem:[%s7 + $0x20c] sm:$0xf]
  %v1963 = vld [vmem:[%s7 + $0x210] sm:$0xf]
  %v1964 = vld [vmem:[%s7 + $0x214] sm:$0xf]
  %v1965 = vld [vmem:[%s7 + $0x218] sm:$0xf]
  %v1966 = vld [vmem:[%s7 + $0x21c] sm:$0xf]
  %v1967 = vld [vmem:[%s7 + $0x220] sm:$0xf]
  %v1968 = vld [vmem:[%s7 + $0x224] sm:$0xf]
  %v1969 = vld [vmem:[%s7 + $0x228] sm:$0xf]
  %v1970 = vld [vmem:[%s7 + $0x22c] sm:$0xf]
  %v1971 = vld [vmem:[%s7 + $0x230] sm:$0xf]
  %v1972 = vld [vmem:[%s7 + $0x234] sm:$0xf]
  %v1973 = vld [vmem:[%s7 + $0x238] sm:$0xf]
  %v1974 = vld [vmem:[%s7 + $0x23c] sm:$0xf]
  %v1975 = vld [vmem:[%s7 + $0x240] sm:$0xf]
  %v1976 = vld [vmem:[%s7 + $0x244] sm:$0xf]
  %v1977 = vld [vmem:[%s7 + $0x248] sm:$0xf]
  %v1978 = vld [vmem:[%s7 + $0x24c] sm:$0xf]
  %v1979 = vld [vmem:[%s7 + $0x250] sm:$0xf]
  %v1980 = vld [vmem:[%s7 + $0x254] sm:$0xf]
  %v1981 = vld [vmem:[%s7 + $0x258] sm:$0xf]
  %v1982 = vld [vmem:[%s7 + $0x25c] sm:$0xf]
  %v1983 = vld [vmem:[%s7 + $0x260] sm:$0xf]
  %v1984 = vld [vmem:[%s7 + $0x264] sm:$0xf]
  %v1985 = vld [vmem:[%s7 + $0x268] sm:$0xf]
  %v1986 = vld [vmem:[%s7 + $0x26c] sm:$0xf]
  %v1987 = vld [vmem:[%s7 + $0x270] sm:$0xf]
  %v1988 = vld [vmem:[%s7 + $0x274] sm:$0xf]
  %v1989 = vld [vmem:[%s7 + $0x278] sm:$0xf]
  %v1990 = vld [vmem:[%s7 + $0x27c] sm:$0xf]
  %v1991 = vld [vmem:[%s7 + $0x280] sm:$0xf]
  %v1992 = vld [vmem:[%s7 + $0x284] sm:$0xf]
  %v1993 = vld [vmem:[%s7 + $0x288] sm:$0xf]
  %v1994 = vld [vmem:[%s7 + $0x28c] sm:$0xf]
  %v1995 = vld [vmem:[%s7 + $0x290] sm:$0xf]
  %v1996 = vld [vmem:[%s7 + $0x294] sm:$0xf]
  %v1997 = vld [vmem:[%s7 + $0x298] sm:$0xf]
  %v1998 = vld [vmem:[%s7 + $0x29c] sm:$0xf]
  %v1999 = vld [vmem:[%s7 + $0x2a0] sm:$0xf]
  %v2000 = vld [vmem:[%s7 + $0x2a4] sm:$0xf]
  %v2001 = vld [vmem:[%s7 + $0x2a8] sm:$0xf]
  %v2002 = vld [vmem:[%s7 + $0x2ac] sm:$0xf]
  %v2003 = vld [vmem:[%s7 + $0x2b0] sm:$0xf]
  %v2004 = vld [vmem:[%s7 + $0x2b4] sm:$0xf]
  %v2005 = vld [vmem:[%s7 + $0x2b8] sm:$0xf]
  %v2006 = vld [vmem:[%s7 + $0x2bc] sm:$0xf]
  %v2007 = vld [vmem:[%s7 + $0x2c0] sm:$0xf]
  %v2008 = vld [vmem:[%s7 + $0x2c4] sm:$0xf]
  %v2009 = vld [vmem:[%s7 + $0x2c8] sm:$0xf]
  %v2010 = vld [vmem:[%s7 + $0x2cc] sm:$0xf]
  %v2011 = vld [vmem:[%s7 + $0x2d0] sm:$0xf]
  %v2012 = vld [vmem:[%s7 + $0x2d4] sm:$0xf]
  %v2013 = vld [vmem:[%s7 + $0x2d8] sm:$0xf]
  %v2014 = vld [vmem:[%s7 + $0x2dc] sm:$0xf]
  %v2015 = vld [vmem:[%s7 + $0x2e0] sm:$0xf]
  %v2016 = vld [vmem:[%s7 + $0x2e4] sm:$0xf]
  %v2017 = vld [vmem:[%s7 + $0x2e8] sm:$0xf]
  %v2018 = vld [vmem:[%s7 + $0x2ec] sm:$0xf]
  %v2019 = vld [vmem:[%s7 + $0x2f0] sm:$0xf]
  %v2020 = vld [vmem:[%s7 + $0x2f4] sm:$0xf]
  %v2021 = vld [vmem:[%s7 + $0x2f8] sm:$0xf]
  %v2022 = vld [vmem:[%s7 + $0x2fc] sm:$0xf]
  %v2023 = vld [vmem:[%s7 + $0x300] sm:$0xf]
  %v2024 = vld [vmem:[%s7 + $0x304] sm:$0xf]
  %v2025 = vld [vmem:[%s7 + $0x308] sm:$0xf]
  %v2026 = vld [vmem:[%s7 + $0x30c] sm:$0xf]
  %v2027 = vld [vmem:[%s7 + $0x310] sm:$0xf]
  %v2028 = vld [vmem:[%s7 + $0x314] sm:$0xf]
  %v2029 = vld [vmem:[%s7 + $0x318] sm:$0xf]
  %v2030 = vld [vmem:[%s7 + $0x31c] sm:$0xf]
  %v2031 = vld [vmem:[%s7 + $0x320] sm:$0xf]
  %v2032 = vld [vmem:[%s7 + $0x324] sm:$0xf]
  %v2033 = vld [vmem:[%s7 + $0x328] sm:$0xf]
  %v2034 = vld [vmem:[%s7 + $0x32c] sm:$0xf]
  %v2035 = vld [vmem:[%s7 + $0x330] sm:$0xf]
  %v2036 = vld [vmem:[%s7 + $0x334] sm:$0xf]
  %v2037 = vld [vmem:[%s7 + $0x338] sm:$0xf]
  %v2038 = vld [vmem:[%s7 + $0x33c] sm:$0xf]
  %v2039 = vld [vmem:[%s7 + $0x340] sm:$0xf]
  %v2040 = vld [vmem:[%s7 + $0x344] sm:$0xf]
  %v2041 = vld [vmem:[%s7 + $0x348] sm:$0xf]
  %v2042 = vld [vmem:[%s7 + $0x34c] sm:$0xf]
  %v2043 = vld [vmem:[%s7 + $0x350] sm:$0xf]
  %v2044 = vld [vmem:[%s7 + $0x354] sm:$0xf]
  %v2045 = vld [vmem:[%s7 + $0x358] sm:$0xf]
  %v2046 = vld [vmem:[%s7 + $0x35c] sm:$0xf]
  %v2047 = vld [vmem:[%s7 + $0x360] sm:$0xf]
  %v2048 = vld [vmem:[%s7 + $0x364] sm:$0xf]
  %v2049 = vld [vmem:[%s7 + $0x368] sm:$0xf]
  %v2050 = vld [vmem:[%s7 + $0x36c] sm:$0xf]
  %v2051 = vld [vmem:[%s7 + $0x370] sm:$0xf]
  %v2052 = vld [vmem:[%s7 + $0x374] sm:$0xf]
  %v2053 = vld [vmem:[%s7 + $0x378] sm:$0xf]
  %v2054 = vld [vmem:[%s7 + $0x37c] sm:$0xf]
  %v2055 = vld [vmem:[%s7 + $0x380] sm:$0xf]
  %v2056 = vld [vmem:[%s7 + $0x384] sm:$0xf]
  %v2057 = vld [vmem:[%s7 + $0x388] sm:$0xf]
  %v2058 = vld [vmem:[%s7 + $0x38c] sm:$0xf]
  %v2059 = vld [vmem:[%s7 + $0x390] sm:$0xf]
  %v2060 = vld [vmem:[%s7 + $0x394] sm:$0xf]
  %v2061 = vld [vmem:[%s7 + $0x398] sm:$0xf]
  %v2062 = vld [vmem:[%s7 + $0x39c] sm:$0xf]
  %v2063 = vld [vmem:[%s7 + $0x3a0] sm:$0xf]
  %v2064 = vld [vmem:[%s7 + $0x3a4] sm:$0xf]
  %v2065 = vld [vmem:[%s7 + $0x3a8] sm:$0xf]
  %v2066 = vld [vmem:[%s7 + $0x3ac] sm:$0xf]
  %v2067 = vld [vmem:[%s7 + $0x3b0] sm:$0xf]
  %v2068 = vld [vmem:[%s7 + $0x3b4] sm:$0xf]
  %v2069 = vld [vmem:[%s7 + $0x3b8] sm:$0xf]
  %v2070 = vld [vmem:[%s7 + $0x3bc] sm:$0xf]
  %v2071 = vld [vmem:[%s7 + $0x3c0] sm:$0xf]
  %v2072 = vld [vmem:[%s7 + $0x3c4] sm:$0xf]
  %v2073 = vld [vmem:[%s7 + $0x3c8] sm:$0xf]
  %v2074 = vld [vmem:[%s7 + $0x3cc] sm:$0xf]
  %v2075 = vld [vmem:[%s7 + $0x3d0] sm:$0xf]
  %v2076 = vld [vmem:[%s7 + $0x3d4] sm:$0xf]
  %v2077 = vld [vmem:[%s7 + $0x3d8] sm:$0xf]
  %v2078 = vld [vmem:[%s7 + $0x3dc] sm:$0xf]
  %v2079 = vld [vmem:[%s7 + $0x3e0] sm:$0xf]
  %v2080 = vld [vmem:[%s7 + $0x3e4] sm:$0xf]
  %v2081 = vld [vmem:[%s7 + $0x3e8] sm:$0xf]
  %v2082 = vld [vmem:[%s7 + $0x3ec] sm:$0xf]
  %v2083 = vld [vmem:[%s7 + $0x3f0] sm:$0xf]
  %v2084 = vld [vmem:[%s7 + $0x3f4] sm:$0xf]
  %v2085 = vld [vmem:[%s7 + $0x3f8] sm:$0xf]
  %v2086 = vld [vmem:[%s7 + $0x3fc] sm:$0xf]
  %v2087 = vld [vmem:[%s7 + $0x400] sm:$0xf]
  %v2088 = vld [vmem:[%s7 + $0x404] sm:$0xf]
  %v2089 = vld [vmem:[%s7 + $0x408] sm:$0xf]
  %v2090 = vld [vmem:[%s7 + $0x40c] sm:$0xf]
  %v2091 = vld [vmem:[%s7 + $0x410] sm:$0xf]
  %v2092 = vld [vmem:[%s7 + $0x414] sm:$0xf]
  %v2093 = vld [vmem:[%s7 + $0x418] sm:$0xf]
  %v2094 = vld [vmem:[%s7 + $0x41c] sm:$0xf]
  %v2095 = vld [vmem:[%s7 + $0x420] sm:$0xf]
  %v2096 = vld [vmem:[%s7 + $0x424] sm:$0xf]
  %v2097 = vld [vmem:[%s7 + $0x428] sm:$0xf]
  %v2098 = vld [vmem:[%s7 + $0x42c] sm:$0xf]
  %v2099 = vld [vmem:[%s7 + $0x430] sm:$0xf]
  %v2100 = vld [vmem:[%s7 + $0x434] sm:$0xf]
  %v2101 = vld [vmem:[%s7 + $0x438] sm:$0xf]
  %v2102 = vld [vmem:[%s7 + $0x43c] sm:$0xf]
  %v2103 = vld [vmem:[%s7 + $0x440] sm:$0xf]
  %v2104 = vld [vmem:[%s7 + $0x444] sm:$0xf]
  %v2105 = vld [vmem:[%s7 + $0x448] sm:$0xf]
  %v2106 = vld [vmem:[%s7 + $0x44c] sm:$0xf]
  %v2107 = vld [vmem:[%s7 + $0x450] sm:$0xf]
  %v2108 = vld [vmem:[%s7 + $0x454] sm:$0xf]
  %v2109 = vld [vmem:[%s7 + $0x458] sm:$0xf]
  %v2110 = vld [vmem:[%s7 + $0x45c] sm:$0xf]
  %v2111 = vld [vmem:[%s7 + $0x460] sm:$0xf]
  %v2112 = vld [vmem:[%s7 + $0x464] sm:$0xf]
  %v2113 = vld [vmem:[%s7 + $0x468] sm:$0xf]
  %v2114 = vld [vmem:[%s7 + $0x46c] sm:$0xf]
  %v2115 = vld [vmem:[%s7 + $0x470] sm:$0xf]
  %v2116 = vld [vmem:[%s7 + $0x474] sm:$0xf]
  %v2117 = vld [vmem:[%s7 + $0x478] sm:$0xf]
  %v2118 = vld [vmem:[%s7 + $0x47c] sm:$0xf]
  %v2119 = vld [vmem:[%s7 + $0x480] sm:$0xf]
  %v2120 = vld [vmem:[%s7 + $0x484] sm:$0xf]
  %v2121 = vld [vmem:[%s7 + $0x488] sm:$0xf]
  %v2122 = vld [vmem:[%s7 + $0x48c] sm:$0xf]
  %v2123 = vld [vmem:[%s7 + $0x490] sm:$0xf]
  %v2124 = vld [vmem:[%s7 + $0x494] sm:$0xf]
  %v2125 = vld [vmem:[%s7 + $0x498] sm:$0xf]
  %v2126 = vld [vmem:[%s7 + $0x49c] sm:$0xf]
  %v2127 = vld [vmem:[%s7 + $0x4a0] sm:$0xf]
  %v2128 = vld [vmem:[%s7 + $0x4a4] sm:$0xf]
  %v2129 = vld [vmem:[%s7 + $0x4a8] sm:$0xf]
  %v2130 = vld [vmem:[%s7 + $0x4ac] sm:$0xf]
  %v2131 = vld [vmem:[%s7 + $0x4b0] sm:$0xf]
  %v2132 = vld [vmem:[%s7 + $0x4b4] sm:$0xf]
  %v2133 = vld [vmem:[%s7 + $0x4b8] sm:$0xf]
  %v2134 = vld [vmem:[%s7 + $0x4bc] sm:$0xf]
  %v2135 = vld [vmem:[%s7 + $0x4c0] sm:$0xf]
  %v2136 = vld [vmem:[%s7 + $0x4c4] sm:$0xf]
  %v2137 = vld [vmem:[%s7 + $0x4c8] sm:$0xf]
  %v2138 = vld [vmem:[%s7 + $0x4cc] sm:$0xf]
  %v2139 = vld [vmem:[%s7 + $0x4d0] sm:$0xf]
  %v2140 = vld [vmem:[%s7 + $0x4d4] sm:$0xf]
  %v2141 = vld [vmem:[%s7 + $0x4d8] sm:$0xf]
  %v2142 = vld [vmem:[%s7 + $0x4dc] sm:$0xf]
  %v2143 = vld [vmem:[%s7 + $0x4e0] sm:$0xf]
  %v2144 = vld [vmem:[%s7 + $0x4e4] sm:$0xf]
  %v2145 = vld [vmem:[%s7 + $0x4e8] sm:$0xf]
  %v2146 = vld [vmem:[%s7 + $0x4ec] sm:$0xf]
  %v2147 = vld [vmem:[%s7 + $0x4f0] sm:$0xf]
  %v2148 = vld [vmem:[%s7 + $0x4f4] sm:$0xf]
  %v2149 = vld [vmem:[%s7 + $0x4f8] sm:$0xf]
  %v2150 = vld [vmem:[%s7 + $0x4fc] sm:$0xf]
  %v2151 = vld [vmem:[%s8] sm:$0x1]
  %v2153 = vperm.slane %v2151, 0
  %v2475 = vunpack.c.l.b16 %v1831
  %v2476 = vunpack.c.l.b16 %v1832
  %v2477 = vunpack.c.l.b16 %v1833
  %v2478 = vunpack.c.l.b16 %v1834
  %v2479 = vunpack.c.l.b16 %v1835
  %v2480 = vunpack.c.l.b16 %v1836
  %v2481 = vunpack.c.l.b16 %v1837
  %v2482 = vunpack.c.l.b16 %v1838
  %v2483 = vunpack.c.l.b16 %v1839
  %v2484 = vunpack.c.l.b16 %v1840
  %v2485 = vunpack.c.l.b16 %v1841
  %v2486 = vunpack.c.l.b16 %v1842
  %v2487 = vunpack.c.l.b16 %v1843
  %v2488 = vunpack.c.l.b16 %v1844
  %v2489 = vunpack.c.l.b16 %v1845
  %v2490 = vunpack.c.l.b16 %v1846
  %v2491 = vunpack.c.l.b16 %v1847
  %v2492 = vunpack.c.l.b16 %v1848
  %v2493 = vunpack.c.l.b16 %v1849
  %v2494 = vunpack.c.l.b16 %v1850
  %v2495 = vunpack.c.l.b16 %v1851
  %v2496 = vunpack.c.l.b16 %v1852
  %v2497 = vunpack.c.l.b16 %v1853
  %v2498 = vunpack.c.l.b16 %v1854
  %v2499 = vunpack.c.l.b16 %v1855
  %v2500 = vunpack.c.l.b16 %v1856
  %v2501 = vunpack.c.l.b16 %v1857
  %v2502 = vunpack.c.l.b16 %v1858
  %v2503 = vunpack.c.l.b16 %v1859
  %v2504 = vunpack.c.l.b16 %v1860
  %v2505 = vunpack.c.l.b16 %v1861
  %v2506 = vunpack.c.l.b16 %v1862
  %v2507 = vunpack.c.l.b16 %v1863
  %v2508 = vunpack.c.l.b16 %v1864
  %v2509 = vunpack.c.l.b16 %v1865
  %v2510 = vunpack.c.l.b16 %v1866
  %v2511 = vunpack.c.l.b16 %v1867
  %v2512 = vunpack.c.l.b16 %v1868
  %v2513 = vunpack.c.l.b16 %v1869
  %v2514 = vunpack.c.l.b16 %v1870
  %v2515 = vunpack.c.l.b16 %v1871
  %v2516 = vunpack.c.l.b16 %v1872
  %v2517 = vunpack.c.l.b16 %v1873
  %v2518 = vunpack.c.l.b16 %v1874
  %v2519 = vunpack.c.l.b16 %v1875
  %v2520 = vunpack.c.l.b16 %v1876
  %v2521 = vunpack.c.l.b16 %v1877
  %v2522 = vunpack.c.l.b16 %v1878
  %v2523 = vunpack.c.l.b16 %v1879
  %v2524 = vunpack.c.l.b16 %v1880
  %v2525 = vunpack.c.l.b16 %v1881
  %v2526 = vunpack.c.l.b16 %v1882
  %v2527 = vunpack.c.l.b16 %v1883
  %v2528 = vunpack.c.l.b16 %v1884
  %v2529 = vunpack.c.l.b16 %v1885
  %v2530 = vunpack.c.l.b16 %v1886
  %v2531 = vunpack.c.l.b16 %v1887
  %v2532 = vunpack.c.l.b16 %v1888
  %v2533 = vunpack.c.l.b16 %v1889
  %v2534 = vunpack.c.l.b16 %v1890
  %v2535 = vunpack.c.l.b16 %v1891
  %v2536 = vunpack.c.l.b16 %v1892
  %v2537 = vunpack.c.l.b16 %v1893
  %v2538 = vunpack.c.l.b16 %v1894
  %v2539 = vunpack.c.l.b16 %v1895
  %v2540 = vunpack.c.l.b16 %v1896
  %v2541 = vunpack.c.l.b16 %v1897
  %v2542 = vunpack.c.l.b16 %v1898
  %v2543 = vunpack.c.l.b16 %v1899
  %v2544 = vunpack.c.l.b16 %v1900
  %v2545 = vunpack.c.l.b16 %v1901
  %v2546 = vunpack.c.l.b16 %v1902
  %v2547 = vunpack.c.l.b16 %v1903
  %v2548 = vunpack.c.l.b16 %v1904
  %v2549 = vunpack.c.l.b16 %v1905
  %v2550 = vunpack.c.l.b16 %v1906
  %v2551 = vunpack.c.l.b16 %v1907
  %v2552 = vunpack.c.l.b16 %v1908
  %v2553 = vunpack.c.l.b16 %v1909
  %v2554 = vunpack.c.l.b16 %v1910
  %v2555 = vunpack.c.l.b16 %v1911
  %v2556 = vunpack.c.l.b16 %v1912
  %v2557 = vunpack.c.l.b16 %v1913
  %v2558 = vunpack.c.l.b16 %v1914
  %v2559 = vunpack.c.l.b16 %v1915
  %v2560 = vunpack.c.l.b16 %v1916
  %v2561 = vunpack.c.l.b16 %v1917
  %v2562 = vunpack.c.l.b16 %v1918
  %v2563 = vunpack.c.l.b16 %v1919
  %v2564 = vunpack.c.l.b16 %v1920
  %v2565 = vunpack.c.l.b16 %v1921
  %v2566 = vunpack.c.l.b16 %v1922
  %v2567 = vunpack.c.l.b16 %v1923
  %v2568 = vunpack.c.l.b16 %v1924
  %v2569 = vunpack.c.l.b16 %v1925
  %v2570 = vunpack.c.l.b16 %v1926
  %v2571 = vunpack.c.l.b16 %v1927
  %v2572 = vunpack.c.l.b16 %v1928
  %v2573 = vunpack.c.l.b16 %v1929
  %v2574 = vunpack.c.l.b16 %v1930
  %v2575 = vunpack.c.l.b16 %v1931
  %v2576 = vunpack.c.l.b16 %v1932
  %v2577 = vunpack.c.l.b16 %v1933
  %v2578 = vunpack.c.l.b16 %v1934
  %v2579 = vunpack.c.l.b16 %v1935
  %v2580 = vunpack.c.l.b16 %v1936
  %v2581 = vunpack.c.l.b16 %v1937
  %v2582 = vunpack.c.l.b16 %v1938
  %v2583 = vunpack.c.l.b16 %v1939
  %v2584 = vunpack.c.l.b16 %v1940
  %v2585 = vunpack.c.l.b16 %v1941
  %v2586 = vunpack.c.l.b16 %v1942
  %v2587 = vunpack.c.l.b16 %v1943
  %v2588 = vunpack.c.l.b16 %v1944
  %v2589 = vunpack.c.l.b16 %v1945
  %v2590 = vunpack.c.l.b16 %v1946
  %v2591 = vunpack.c.l.b16 %v1947
  %v2592 = vunpack.c.l.b16 %v1948
  %v2593 = vunpack.c.l.b16 %v1949
  %v2594 = vunpack.c.l.b16 %v1950
  %v2595 = vunpack.c.l.b16 %v1951
  %v2596 = vunpack.c.l.b16 %v1952
  %v2597 = vunpack.c.l.b16 %v1953
  %v2598 = vunpack.c.l.b16 %v1954
  %v2599 = vunpack.c.l.b16 %v1955
  %v2600 = vunpack.c.l.b16 %v1956
  %v2601 = vunpack.c.l.b16 %v1957
  %v2602 = vunpack.c.l.b16 %v1958
  %v2603 = vunpack.c.l.b16 %v1959
  %v2604 = vunpack.c.l.b16 %v1960
  %v2605 = vunpack.c.l.b16 %v1961
  %v2606 = vunpack.c.l.b16 %v1962
  %v2607 = vunpack.c.l.b16 %v1963
  %v2608 = vunpack.c.l.b16 %v1964
  %v2609 = vunpack.c.l.b16 %v1965
  %v2610 = vunpack.c.l.b16 %v1966
  %v2611 = vunpack.c.l.b16 %v1967
  %v2612 = vunpack.c.l.b16 %v1968
  %v2613 = vunpack.c.l.b16 %v1969
  %v2614 = vunpack.c.l.b16 %v1970
  %v2615 = vunpack.c.l.b16 %v1971
  %v2616 = vunpack.c.l.b16 %v1972
  %v2617 = vunpack.c.l.b16 %v1973
  %v2618 = vunpack.c.l.b16 %v1974
  %v2619 = vunpack.c.l.b16 %v1975
  %v2620 = vunpack.c.l.b16 %v1976
  %v2621 = vunpack.c.l.b16 %v1977
  %v2622 = vunpack.c.l.b16 %v1978
  %v2623 = vunpack.c.l.b16 %v1979
  %v2624 = vunpack.c.l.b16 %v1980
  %v2625 = vunpack.c.l.b16 %v1981
  %v2626 = vunpack.c.l.b16 %v1982
  %v2627 = vunpack.c.l.b16 %v1983
  %v2628 = vunpack.c.l.b16 %v1984
  %v2629 = vunpack.c.l.b16 %v1985
  %v2630 = vunpack.c.l.b16 %v1986
  %v2631 = vunpack.c.l.b16 %v1987
  %v2632 = vunpack.c.l.b16 %v1988
  %v2633 = vunpack.c.l.b16 %v1989
  %v2634 = vunpack.c.l.b16 %v1990
  %v2635 = vunpack.c.l.b16 %v1991
  %v2636 = vunpack.c.l.b16 %v1992
  %v2637 = vunpack.c.l.b16 %v1993
  %v2638 = vunpack.c.l.b16 %v1994
  %v2639 = vunpack.c.l.b16 %v1995
  %v2640 = vunpack.c.l.b16 %v1996
  %v2641 = vunpack.c.l.b16 %v1997
  %v2642 = vunpack.c.l.b16 %v1998
  %v2643 = vunpack.c.l.b16 %v1999
  %v2644 = vunpack.c.l.b16 %v2000
  %v2645 = vunpack.c.l.b16 %v2001
  %v2646 = vunpack.c.l.b16 %v2002
  %v2647 = vunpack.c.l.b16 %v2003
  %v2648 = vunpack.c.l.b16 %v2004
  %v2649 = vunpack.c.l.b16 %v2005
  %v2650 = vunpack.c.l.b16 %v2006
  %v2651 = vunpack.c.l.b16 %v2007
  %v2652 = vunpack.c.l.b16 %v2008
  %v2653 = vunpack.c.l.b16 %v2009
  %v2654 = vunpack.c.l.b16 %v2010
  %v2655 = vunpack.c.l.b16 %v2011
  %v2656 = vunpack.c.l.b16 %v2012
  %v2657 = vunpack.c.l.b16 %v2013
  %v2658 = vunpack.c.l.b16 %v2014
  %v2659 = vunpack.c.l.b16 %v2015
  %v2660 = vunpack.c.l.b16 %v2016
  %v2661 = vunpack.c.l.b16 %v2017
  %v2662 = vunpack.c.l.b16 %v2018
  %v2663 = vunpack.c.l.b16 %v2019
  %v2664 = vunpack.c.l.b16 %v2020
  %v2665 = vunpack.c.l.b16 %v2021
  %v2666 = vunpack.c.l.b16 %v2022
  %v2667 = vunpack.c.l.b16 %v2023
  %v2668 = vunpack.c.l.b16 %v2024
  %v2669 = vunpack.c.l.b16 %v2025
  %v2670 = vunpack.c.l.b16 %v2026
  %v2671 = vunpack.c.l.b16 %v2027
  %v2672 = vunpack.c.l.b16 %v2028
  %v2673 = vunpack.c.l.b16 %v2029
  %v2674 = vunpack.c.l.b16 %v2030
  %v2675 = vunpack.c.l.b16 %v2031
  %v2676 = vunpack.c.l.b16 %v2032
  %v2677 = vunpack.c.l.b16 %v2033
  %v2678 = vunpack.c.l.b16 %v2034
  %v2679 = vunpack.c.l.b16 %v2035
  %v2680 = vunpack.c.l.b16 %v2036
  %v2681 = vunpack.c.l.b16 %v2037
  %v2682 = vunpack.c.l.b16 %v2038
  %v2683 = vunpack.c.l.b16 %v2039
  %v2684 = vunpack.c.l.b16 %v2040
  %v2685 = vunpack.c.l.b16 %v2041
  %v2686 = vunpack.c.l.b16 %v2042
  %v2687 = vunpack.c.l.b16 %v2043
  %v2688 = vunpack.c.l.b16 %v2044
  %v2689 = vunpack.c.l.b16 %v2045
  %v2690 = vunpack.c.l.b16 %v2046
  %v2691 = vunpack.c.l.b16 %v2047
  %v2692 = vunpack.c.l.b16 %v2048
  %v2693 = vunpack.c.l.b16 %v2049
  %v2694 = vunpack.c.l.b16 %v2050
  %v2695 = vunpack.c.l.b16 %v2051
  %v2696 = vunpack.c.l.b16 %v2052
  %v2697 = vunpack.c.l.b16 %v2053
  %v2698 = vunpack.c.l.b16 %v2054
  %v2699 = vunpack.c.l.b16 %v2055
  %v2700 = vunpack.c.l.b16 %v2056
  %v2701 = vunpack.c.l.b16 %v2057
  %v2702 = vunpack.c.l.b16 %v2058
  %v2703 = vunpack.c.l.b16 %v2059
  %v2704 = vunpack.c.l.b16 %v2060
  %v2705 = vunpack.c.l.b16 %v2061
  %v2706 = vunpack.c.l.b16 %v2062
  %v2707 = vunpack.c.l.b16 %v2063
  %v2708 = vunpack.c.l.b16 %v2064
  %v2709 = vunpack.c.l.b16 %v2065
  %v2710 = vunpack.c.l.b16 %v2066
  %v2711 = vunpack.c.l.b16 %v2067
  %v2712 = vunpack.c.l.b16 %v2068
  %v2713 = vunpack.c.l.b16 %v2069
  %v2714 = vunpack.c.l.b16 %v2070
  %v2715 = vunpack.c.l.b16 %v2071
  %v2716 = vunpack.c.l.b16 %v2072
  %v2717 = vunpack.c.l.b16 %v2073
  %v2718 = vunpack.c.l.b16 %v2074
  %v2719 = vunpack.c.l.b16 %v2075
  %v2720 = vunpack.c.l.b16 %v2076
  %v2721 = vunpack.c.l.b16 %v2077
  %v2722 = vunpack.c.l.b16 %v2078
  %v2723 = vunpack.c.l.b16 %v2079
  %v2724 = vunpack.c.l.b16 %v2080
  %v2725 = vunpack.c.l.b16 %v2081
  %v2726 = vunpack.c.l.b16 %v2082
  %v2727 = vunpack.c.l.b16 %v2083
  %v2728 = vunpack.c.l.b16 %v2084
  %v2729 = vunpack.c.l.b16 %v2085
  %v2730 = vunpack.c.l.b16 %v2086
  %v2731 = vunpack.c.l.b16 %v2087
  %v2732 = vunpack.c.l.b16 %v2088
  %v2733 = vunpack.c.l.b16 %v2089
  %v2734 = vunpack.c.l.b16 %v2090
  %v2735 = vunpack.c.l.b16 %v2091
  %v2736 = vunpack.c.l.b16 %v2092
  %v2737 = vunpack.c.l.b16 %v2093
  %v2738 = vunpack.c.l.b16 %v2094
  %v2739 = vunpack.c.l.b16 %v2095
  %v2740 = vunpack.c.l.b16 %v2096
  %v2741 = vunpack.c.l.b16 %v2097
  %v2742 = vunpack.c.l.b16 %v2098
  %v2743 = vunpack.c.l.b16 %v2099
  %v2744 = vunpack.c.l.b16 %v2100
  %v2745 = vunpack.c.l.b16 %v2101
  %v2746 = vunpack.c.l.b16 %v2102
  %v2747 = vunpack.c.l.b16 %v2103
  %v2748 = vunpack.c.l.b16 %v2104
  %v2749 = vunpack.c.l.b16 %v2105
  %v2750 = vunpack.c.l.b16 %v2106
  %v2751 = vunpack.c.l.b16 %v2107
  %v2752 = vunpack.c.l.b16 %v2108
  %v2753 = vunpack.c.l.b16 %v2109
  %v2754 = vunpack.c.l.b16 %v2110
  %v2755 = vunpack.c.l.b16 %v2111
  %v2756 = vunpack.c.l.b16 %v2112
  %v2757 = vunpack.c.l.b16 %v2113
  %v2758 = vunpack.c.l.b16 %v2114
  %v2759 = vunpack.c.l.b16 %v2115
  %v2760 = vunpack.c.l.b16 %v2116
  %v2761 = vunpack.c.l.b16 %v2117
  %v2762 = vunpack.c.l.b16 %v2118
  %v2763 = vunpack.c.l.b16 %v2119
  %v2764 = vunpack.c.l.b16 %v2120
  %v2765 = vunpack.c.l.b16 %v2121
  %v2766 = vunpack.c.l.b16 %v2122
  %v2767 = vunpack.c.l.b16 %v2123
  %v2768 = vunpack.c.l.b16 %v2124
  %v2769 = vunpack.c.l.b16 %v2125
  %v2770 = vunpack.c.l.b16 %v2126
  %v2771 = vunpack.c.l.b16 %v2127
  %v2772 = vunpack.c.l.b16 %v2128
  %v2773 = vunpack.c.l.b16 %v2129
  %v2774 = vunpack.c.l.b16 %v2130
  %v2775 = vunpack.c.l.b16 %v2131
  %v2776 = vunpack.c.l.b16 %v2132
  %v2777 = vunpack.c.l.b16 %v2133
  %v2778 = vunpack.c.l.b16 %v2134
  %v2779 = vunpack.c.l.b16 %v2135
  %v2780 = vunpack.c.l.b16 %v2136
  %v2781 = vunpack.c.l.b16 %v2137
  %v2782 = vunpack.c.l.b16 %v2138
  %v2783 = vunpack.c.l.b16 %v2139
  %v2784 = vunpack.c.l.b16 %v2140
  %v2785 = vunpack.c.l.b16 %v2141
  %v2786 = vunpack.c.l.b16 %v2142
  %v2787 = vunpack.c.l.b16 %v2143
  %v2788 = vunpack.c.l.b16 %v2144
  %v2789 = vunpack.c.l.b16 %v2145
  %v2790 = vunpack.c.l.b16 %v2146
  %v2791 = vunpack.c.l.b16 %v2147
  %v2792 = vunpack.c.l.b16 %v2148
  %v2793 = vunpack.c.l.b16 %v2149
  %v2794 = vunpack.c.l.b16 %v2150
  %v2795 = vpack.c.b16 %v2476, %v2475
  %v2796 = vpack.c.b16 %v2478, %v2477
  %v2797 = vpack.c.b16 %v2480, %v2479
  %v2798 = vpack.c.b16 %v2482, %v2481
  %v2799 = vpack.c.b16 %v2484, %v2483
  %v2800 = vpack.c.b16 %v2486, %v2485
  %v2801 = vpack.c.b16 %v2488, %v2487
  %v2802 = vpack.c.b16 %v2490, %v2489
  %v2803 = vpack.c.b16 %v2492, %v2491
  %v2804 = vpack.c.b16 %v2494, %v2493
  %v2805 = vpack.c.b16 %v2496, %v2495
  %v2806 = vpack.c.b16 %v2498, %v2497
  %v2807 = vpack.c.b16 %v2500, %v2499
  %v2808 = vpack.c.b16 %v2502, %v2501
  %v2809 = vpack.c.b16 %v2504, %v2503
  %v2810 = vpack.c.b16 %v2506, %v2505
  %v2811 = vpack.c.b16 %v2508, %v2507
  %v2812 = vpack.c.b16 %v2510, %v2509
  %v2813 = vpack.c.b16 %v2512, %v2511
  %v2814 = vpack.c.b16 %v2514, %v2513
  %v2815 = vpack.c.b16 %v2516, %v2515
  %v2816 = vpack.c.b16 %v2518, %v2517
  %v2817 = vpack.c.b16 %v2520, %v2519
  %v2818 = vpack.c.b16 %v2522, %v2521
  %v2819 = vpack.c.b16 %v2524, %v2523
  %v2820 = vpack.c.b16 %v2526, %v2525
  %v2821 = vpack.c.b16 %v2528, %v2527
  %v2822 = vpack.c.b16 %v2530, %v2529
  %v2823 = vpack.c.b16 %v2532, %v2531
  %v2824 = vpack.c.b16 %v2534, %v2533
  %v2825 = vpack.c.b16 %v2536, %v2535
  %v2826 = vpack.c.b16 %v2538, %v2537
  %v2827 = vpack.c.b16 %v2540, %v2539
  %v2828 = vpack.c.b16 %v2542, %v2541
  %v2829 = vpack.c.b16 %v2544, %v2543
  %v2830 = vpack.c.b16 %v2546, %v2545
  %v2831 = vpack.c.b16 %v2548, %v2547
  %v2832 = vpack.c.b16 %v2550, %v2549
  %v2833 = vpack.c.b16 %v2552, %v2551
  %v2834 = vpack.c.b16 %v2554, %v2553
  %v2835 = vpack.c.b16 %v2556, %v2555
  %v2836 = vpack.c.b16 %v2558, %v2557
  %v2837 = vpack.c.b16 %v2560, %v2559
  %v2838 = vpack.c.b16 %v2562, %v2561
  %v2839 = vpack.c.b16 %v2564, %v2563
  %v2840 = vpack.c.b16 %v2566, %v2565
  %v2841 = vpack.c.b16 %v2568, %v2567
  %v2842 = vpack.c.b16 %v2570, %v2569
  %v2843 = vpack.c.b16 %v2572, %v2571
  %v2844 = vpack.c.b16 %v2574, %v2573
  %v2845 = vpack.c.b16 %v2576, %v2575
  %v2846 = vpack.c.b16 %v2578, %v2577
  %v2847 = vpack.c.b16 %v2580, %v2579
  %v2848 = vpack.c.b16 %v2582, %v2581
  %v2849 = vpack.c.b16 %v2584, %v2583
  %v2850 = vpack.c.b16 %v2586, %v2585
  %v2851 = vpack.c.b16 %v2588, %v2587
  %v2852 = vpack.c.b16 %v2590, %v2589
  %v2853 = vpack.c.b16 %v2592, %v2591
  %v2854 = vpack.c.b16 %v2594, %v2593
  %v2855 = vpack.c.b16 %v2596, %v2595
  %v2856 = vpack.c.b16 %v2598, %v2597
  %v2857 = vpack.c.b16 %v2600, %v2599
  %v2858 = vpack.c.b16 %v2602, %v2601
  %v2859 = vpack.c.b16 %v2604, %v2603
  %v2860 = vpack.c.b16 %v2606, %v2605
  %v2861 = vpack.c.b16 %v2608, %v2607
  %v2862 = vpack.c.b16 %v2610, %v2609
  %v2863 = vpack.c.b16 %v2612, %v2611
  %v2864 = vpack.c.b16 %v2614, %v2613
  %v2865 = vpack.c.b16 %v2616, %v2615
  %v2866 = vpack.c.b16 %v2618, %v2617
  %v2867 = vpack.c.b16 %v2620, %v2619
  %v2868 = vpack.c.b16 %v2622, %v2621
  %v2869 = vpack.c.b16 %v2624, %v2623
  %v2870 = vpack.c.b16 %v2626, %v2625
  %v2871 = vpack.c.b16 %v2628, %v2627
  %v2872 = vpack.c.b16 %v2630, %v2629
  %v2873 = vpack.c.b16 %v2632, %v2631
  %v2874 = vpack.c.b16 %v2634, %v2633
  %v2875 = vpack.c.b16 %v2636, %v2635
  %v2876 = vpack.c.b16 %v2638, %v2637
  %v2877 = vpack.c.b16 %v2640, %v2639
  %v2878 = vpack.c.b16 %v2642, %v2641
  %v2879 = vpack.c.b16 %v2644, %v2643
  %v2880 = vpack.c.b16 %v2646, %v2645
  %v2881 = vpack.c.b16 %v2648, %v2647
  %v2882 = vpack.c.b16 %v2650, %v2649
  %v2883 = vpack.c.b16 %v2652, %v2651
  %v2884 = vpack.c.b16 %v2654, %v2653
  %v2885 = vpack.c.b16 %v2656, %v2655
  %v2886 = vpack.c.b16 %v2658, %v2657
  %v2887 = vpack.c.b16 %v2660, %v2659
  %v2888 = vpack.c.b16 %v2662, %v2661
  %v2889 = vpack.c.b16 %v2664, %v2663
  %v2890 = vpack.c.b16 %v2666, %v2665
  %v2891 = vpack.c.b16 %v2668, %v2667
  %v2892 = vpack.c.b16 %v2670, %v2669
  %v2893 = vpack.c.b16 %v2672, %v2671
  %v2894 = vpack.c.b16 %v2674, %v2673
  %v2895 = vpack.c.b16 %v2676, %v2675
  %v2896 = vpack.c.b16 %v2678, %v2677
  %v2897 = vpack.c.b16 %v2680, %v2679
  %v2898 = vpack.c.b16 %v2682, %v2681
  %v2899 = vpack.c.b16 %v2684, %v2683
  %v2900 = vpack.c.b16 %v2686, %v2685
  %v2901 = vpack.c.b16 %v2688, %v2687
  %v2902 = vpack.c.b16 %v2690, %v2689
  %v2903 = vpack.c.b16 %v2692, %v2691
  %v2904 = vpack.c.b16 %v2694, %v2693
  %v2905 = vpack.c.b16 %v2696, %v2695
  %v2906 = vpack.c.b16 %v2698, %v2697
  %v2907 = vpack.c.b16 %v2700, %v2699
  %v2908 = vpack.c.b16 %v2702, %v2701
  %v2909 = vpack.c.b16 %v2704, %v2703
  %v2910 = vpack.c.b16 %v2706, %v2705
  %v2911 = vpack.c.b16 %v2708, %v2707
  %v2912 = vpack.c.b16 %v2710, %v2709
  %v2913 = vpack.c.b16 %v2712, %v2711
  %v2914 = vpack.c.b16 %v2714, %v2713
  %v2915 = vpack.c.b16 %v2716, %v2715
  %v2916 = vpack.c.b16 %v2718, %v2717
  %v2917 = vpack.c.b16 %v2720, %v2719
  %v2918 = vpack.c.b16 %v2722, %v2721
  %v2919 = vpack.c.b16 %v2724, %v2723
  %v2920 = vpack.c.b16 %v2726, %v2725
  %v2921 = vpack.c.b16 %v2728, %v2727
  %v2922 = vpack.c.b16 %v2730, %v2729
  %v2923 = vpack.c.b16 %v2732, %v2731
  %v2924 = vpack.c.b16 %v2734, %v2733
  %v2925 = vpack.c.b16 %v2736, %v2735
  %v2926 = vpack.c.b16 %v2738, %v2737
  %v2927 = vpack.c.b16 %v2740, %v2739
  %v2928 = vpack.c.b16 %v2742, %v2741
  %v2929 = vpack.c.b16 %v2744, %v2743
  %v2930 = vpack.c.b16 %v2746, %v2745
  %v2931 = vpack.c.b16 %v2748, %v2747
  %v2932 = vpack.c.b16 %v2750, %v2749
  %v2933 = vpack.c.b16 %v2752, %v2751
  %v2934 = vpack.c.b16 %v2754, %v2753
  %v2935 = vpack.c.b16 %v2756, %v2755
  %v2936 = vpack.c.b16 %v2758, %v2757
  %v2937 = vpack.c.b16 %v2760, %v2759
  %v2938 = vpack.c.b16 %v2762, %v2761
  %v2939 = vpack.c.b16 %v2764, %v2763
  %v2940 = vpack.c.b16 %v2766, %v2765
  %v2941 = vpack.c.b16 %v2768, %v2767
  %v2942 = vpack.c.b16 %v2770, %v2769
  %v2943 = vpack.c.b16 %v2772, %v2771
  %v2944 = vpack.c.b16 %v2774, %v2773
  %v2945 = vpack.c.b16 %v2776, %v2775
  %v2946 = vpack.c.b16 %v2778, %v2777
  %v2947 = vpack.c.b16 %v2780, %v2779
  %v2948 = vpack.c.b16 %v2782, %v2781
  %v2949 = vpack.c.b16 %v2784, %v2783
  %v2950 = vpack.c.b16 %v2786, %v2785
  %v2951 = vpack.c.b16 %v2788, %v2787
  %v2952 = vpack.c.b16 %v2790, %v2789
  %v2953 = vpack.c.b16 %v2792, %v2791
  %v2954 = vpack.c.b16 %v2794, %v2793
  %3115 = vmatpush.bf16.msra.mxu0 %v2802
  %3116 = vmatpush.bf16.msra.mxu0 %v2801
  %3117 = vmatpush.bf16.msra.mxu0 %v2800
  %3118 = vmatpush.bf16.msra.mxu0 %v2799
  %3119 = vmatpush.bf16.msra.mxu0 %v2798
  %3120 = vmatpush.bf16.msra.mxu0 %v2797
  %3121 = vmatpush.bf16.msra.mxu0 %v2796
  %3122 = vmatpush.bf16.msra.mxu0 %v2795
  %3123 = vmatmul.bf16.gmra.mxu0 %v404
  %v3124 = vpop.f32.mrf.mxu0
  %v3125 = vadd.f32 %v2153, %v3124
  %v3126 = vpop.f32.mrf.mxu0
  %3127 = vdwg.mxu0
  %3128 = vmatpush.bf16.msra.mxu0 %v2810
  %3129 = vmatpush.bf16.msra.mxu0 %v2809
  %3130 = vmatpush.bf16.msra.mxu0 %v2808
  %3131 = vmatpush.bf16.msra.mxu0 %v2807
  %3132 = vmatpush.bf16.msra.mxu0 %v2806
  %3133 = vmatpush.bf16.msra.mxu0 %v2805
  %3134 = vmatpush.bf16.msra.mxu0 %v2804
  %3135 = vmatpush.bf16.msra.mxu0 %v2803
  %3136 = vmatmul.bf16.gmra.mxu0 %v405
  %v3137 = vpop.f32.mrf.mxu0
  %v3138 = vadd.f32 %v3125, %v3137
  %v3139 = vpop.f32.mrf.mxu0
  %3140 = vdwg.mxu0
  %3141 = vmatpush.bf16.msra.mxu0 %v2818
  %3142 = vmatpush.bf16.msra.mxu0 %v2817
  %3143 = vmatpush.bf16.msra.mxu0 %v2816
  %3144 = vmatpush.bf16.msra.mxu0 %v2815
  %3145 = vmatpush.bf16.msra.mxu0 %v2814
  %3146 = vmatpush.bf16.msra.mxu0 %v2813
  %3147 = vmatpush.bf16.msra.mxu0 %v2812
  %3148 = vmatpush.bf16.msra.mxu0 %v2811
  %3149 = vmatmul.bf16.gmra.mxu0 %v406
  %v3150 = vpop.f32.mrf.mxu0
  %v3151 = vadd.f32 %v3138, %v3150
  %v3152 = vpop.f32.mrf.mxu0
  %3153 = vdwg.mxu0
  %3154 = vmatpush.bf16.msra.mxu0 %v2826
  %3155 = vmatpush.bf16.msra.mxu0 %v2825
  %3156 = vmatpush.bf16.msra.mxu0 %v2824
  %3157 = vmatpush.bf16.msra.mxu0 %v2823
  %3158 = vmatpush.bf16.msra.mxu0 %v2822
  %3159 = vmatpush.bf16.msra.mxu0 %v2821
  %3160 = vmatpush.bf16.msra.mxu0 %v2820
  %3161 = vmatpush.bf16.msra.mxu0 %v2819
  %3162 = vmatmul.bf16.gmra.mxu0 %v407
  %v3163 = vpop.f32.mrf.mxu0
  %v3164 = vadd.f32 %v3151, %v3163
  %v3165 = vpop.f32.mrf.mxu0
  %3166 = vdwg.mxu0
  %3167 = vmatpush.bf16.msra.mxu0 %v2834
  %3168 = vmatpush.bf16.msra.mxu0 %v2833
  %3169 = vmatpush.bf16.msra.mxu0 %v2832
  %3170 = vmatpush.bf16.msra.mxu0 %v2831
  %3171 = vmatpush.bf16.msra.mxu0 %v2830
  %3172 = vmatpush.bf16.msra.mxu0 %v2829
  %3173 = vmatpush.bf16.msra.mxu0 %v2828
  %3174 = vmatpush.bf16.msra.mxu0 %v2827
  %3175 = vmatmul.bf16.gmra.mxu0 %v408
  %v3176 = vpop.f32.mrf.mxu0
  %v3177 = vadd.f32 %v3164, %v3176
  %v3178 = vpop.f32.mrf.mxu0
  %3179 = vdwg.mxu0
  %3180 = vmatpush.bf16.msra.mxu0 %v2842
  %3181 = vmatpush.bf16.msra.mxu0 %v2841
  %3182 = vmatpush.bf16.msra.mxu0 %v2840
  %3183 = vmatpush.bf16.msra.mxu0 %v2839
  %3184 = vmatpush.bf16.msra.mxu0 %v2838
  %3185 = vmatpush.bf16.msra.mxu0 %v2837
  %3186 = vmatpush.bf16.msra.mxu0 %v2836
  %3187 = vmatpush.bf16.msra.mxu0 %v2835
  %3188 = vmatmul.bf16.gmra.mxu0 %v409
  %v3189 = vpop.f32.mrf.mxu0
  %v3190 = vadd.f32 %v3177, %v3189
  %v3191 = vpop.f32.mrf.mxu0
  %3192 = vdwg.mxu0
  %3193 = vmatpush.bf16.msra.mxu0 %v2850
  %3194 = vmatpush.bf16.msra.mxu0 %v2849
  %3195 = vmatpush.bf16.msra.mxu0 %v2848
  %3196 = vmatpush.bf16.msra.mxu0 %v2847
  %3197 = vmatpush.bf16.msra.mxu0 %v2846
  %3198 = vmatpush.bf16.msra.mxu0 %v2845
  %3199 = vmatpush.bf16.msra.mxu0 %v2844
  %3200 = vmatpush.bf16.msra.mxu0 %v2843
  %3201 = vmatmul.bf16.gmra.mxu0 %v410
  %v3202 = vpop.f32.mrf.mxu0
  %v3203 = vadd.f32 %v3190, %v3202
  %v3204 = vpop.f32.mrf.mxu0
  %3205 = vdwg.mxu0
  %3206 = vmatpush.bf16.msra.mxu0 %v2858
  %3207 = vmatpush.bf16.msra.mxu0 %v2857
  %3208 = vmatpush.bf16.msra.mxu0 %v2856
  %3209 = vmatpush.bf16.msra.mxu0 %v2855
  %3210 = vmatpush.bf16.msra.mxu0 %v2854
  %3211 = vmatpush.bf16.msra.mxu0 %v2853
  %3212 = vmatpush.bf16.msra.mxu0 %v2852
  %3213 = vmatpush.bf16.msra.mxu0 %v2851
  %3214 = vmatmul.bf16.gmra.mxu0 %v411
  %v3215 = vpop.f32.mrf.mxu0
  %v3216 = vadd.f32 %v3203, %v3215
  %v3217 = vpop.f32.mrf.mxu0
  %3218 = vdwg.mxu0
  %3219 = vmatpush.bf16.msra.mxu0 %v2866
  %3220 = vmatpush.bf16.msra.mxu0 %v2865
  %3221 = vmatpush.bf16.msra.mxu0 %v2864
  %3222 = vmatpush.bf16.msra.mxu0 %v2863
  %3223 = vmatpush.bf16.msra.mxu0 %v2862
  %3224 = vmatpush.bf16.msra.mxu0 %v2861
  %3225 = vmatpush.bf16.msra.mxu0 %v2860
  %3226 = vmatpush.bf16.msra.mxu0 %v2859
  %3227 = vmatmul.bf16.gmra.mxu0 %v412
  %v3228 = vpop.f32.mrf.mxu0
  %v3229 = vadd.f32 %v3216, %v3228
  %v3230 = vpop.f32.mrf.mxu0
  %3231 = vdwg.mxu0
  %3232 = vmatpush.bf16.msra.mxu0 %v2874
  %3233 = vmatpush.bf16.msra.mxu0 %v2873
  %3234 = vmatpush.bf16.msra.mxu0 %v2872
  %3235 = vmatpush.bf16.msra.mxu0 %v2871
  %3236 = vmatpush.bf16.msra.mxu0 %v2870
  %3237 = vmatpush.bf16.msra.mxu0 %v2869
  %3238 = vmatpush.bf16.msra.mxu0 %v2868
  %3239 = vmatpush.bf16.msra.mxu0 %v2867
  %3240 = vmatmul.bf16.gmra.mxu0 %v413
  %v3241 = vpop.f32.mrf.mxu0
  %v3242 = vadd.f32 %v3229, %v3241
  %v3243 = vpop.f32.mrf.mxu0
  %3244 = vdwg.mxu0
  %3245 = vmatpush.bf16.msra.mxu0 %v2882
  %3246 = vmatpush.bf16.msra.mxu0 %v2881
  %3247 = vmatpush.bf16.msra.mxu0 %v2880
  %3248 = vmatpush.bf16.msra.mxu0 %v2879
  %3249 = vmatpush.bf16.msra.mxu0 %v2878
  %3250 = vmatpush.bf16.msra.mxu0 %v2877
  %3251 = vmatpush.bf16.msra.mxu0 %v2876
  %3252 = vmatpush.bf16.msra.mxu0 %v2875
  %3253 = vmatmul.bf16.gmra.mxu0 %v414
  %v3254 = vpop.f32.mrf.mxu0
  %v3255 = vadd.f32 %v3242, %v3254
  %v3256 = vpop.f32.mrf.mxu0
  %3257 = vdwg.mxu0
  %3258 = vmatpush.bf16.msra.mxu0 %v2890
  %3259 = vmatpush.bf16.msra.mxu0 %v2889
  %3260 = vmatpush.bf16.msra.mxu0 %v2888
  %3261 = vmatpush.bf16.msra.mxu0 %v2887
  %3262 = vmatpush.bf16.msra.mxu0 %v2886
  %3263 = vmatpush.bf16.msra.mxu0 %v2885
  %3264 = vmatpush.bf16.msra.mxu0 %v2884
  %3265 = vmatpush.bf16.msra.mxu0 %v2883
  %3266 = vmatmul.bf16.gmra.mxu0 %v415
  %v3267 = vpop.f32.mrf.mxu0
  %v3268 = vadd.f32 %v3255, %v3267
  %v3269 = vpop.f32.mrf.mxu0
  %3270 = vdwg.mxu0
  %3271 = vmatpush.bf16.msra.mxu0 %v2898
  %3272 = vmatpush.bf16.msra.mxu0 %v2897
  %3273 = vmatpush.bf16.msra.mxu0 %v2896
  %3274 = vmatpush.bf16.msra.mxu0 %v2895
  %3275 = vmatpush.bf16.msra.mxu0 %v2894
  %3276 = vmatpush.bf16.msra.mxu0 %v2893
  %3277 = vmatpush.bf16.msra.mxu0 %v2892
  %3278 = vmatpush.bf16.msra.mxu0 %v2891
  %3279 = vmatmul.bf16.gmra.mxu0 %v416
  %v3280 = vpop.f32.mrf.mxu0
  %v3281 = vadd.f32 %v3268, %v3280
  %v3282 = vpop.f32.mrf.mxu0
  %3283 = vdwg.mxu0
  %3284 = vmatpush.bf16.msra.mxu0 %v2906
  %3285 = vmatpush.bf16.msra.mxu0 %v2905
  %3286 = vmatpush.bf16.msra.mxu0 %v2904
  %3287 = vmatpush.bf16.msra.mxu0 %v2903
  %3288 = vmatpush.bf16.msra.mxu0 %v2902
  %3289 = vmatpush.bf16.msra.mxu0 %v2901
  %3290 = vmatpush.bf16.msra.mxu0 %v2900
  %3291 = vmatpush.bf16.msra.mxu0 %v2899
  %3292 = vmatmul.bf16.gmra.mxu0 %v417
  %v3293 = vpop.f32.mrf.mxu0
  %v3294 = vadd.f32 %v3281, %v3293
  %v3295 = vpop.f32.mrf.mxu0
  %3296 = vdwg.mxu0
  %3297 = vmatpush.bf16.msra.mxu0 %v2914
  %3298 = vmatpush.bf16.msra.mxu0 %v2913
  %3299 = vmatpush.bf16.msra.mxu0 %v2912
  %3300 = vmatpush.bf16.msra.mxu0 %v2911
  %3301 = vmatpush.bf16.msra.mxu0 %v2910
  %3302 = vmatpush.bf16.msra.mxu0 %v2909
  %3303 = vmatpush.bf16.msra.mxu0 %v2908
  %3304 = vmatpush.bf16.msra.mxu0 %v2907
  %3305 = vmatmul.bf16.gmra.mxu0 %v418
  %v3306 = vpop.f32.mrf.mxu0
  %v3307 = vadd.f32 %v3294, %v3306
  %v3308 = vpop.f32.mrf.mxu0
  %3309 = vdwg.mxu0
  %3310 = vmatpush.bf16.msra.mxu0 %v2922
  %3311 = vmatpush.bf16.msra.mxu0 %v2921
  %3312 = vmatpush.bf16.msra.mxu0 %v2920
  %3313 = vmatpush.bf16.msra.mxu0 %v2919
  %3314 = vmatpush.bf16.msra.mxu0 %v2918
  %3315 = vmatpush.bf16.msra.mxu0 %v2917
  %3316 = vmatpush.bf16.msra.mxu0 %v2916
  %3317 = vmatpush.bf16.msra.mxu0 %v2915
  %3318 = vmatmul.bf16.gmra.mxu0 %v419
  %v3319 = vpop.f32.mrf.mxu0
  %v3320 = vadd.f32 %v3307, %v3319
  %v3321 = vpop.f32.mrf.mxu0
  %3322 = vdwg.mxu0
  %3323 = vmatpush.bf16.msra.mxu0 %v2930
  %3324 = vmatpush.bf16.msra.mxu0 %v2929
  %3325 = vmatpush.bf16.msra.mxu0 %v2928
  %3326 = vmatpush.bf16.msra.mxu0 %v2927
  %3327 = vmatpush.bf16.msra.mxu0 %v2926
  %3328 = vmatpush.bf16.msra.mxu0 %v2925
  %3329 = vmatpush.bf16.msra.mxu0 %v2924
  %3330 = vmatpush.bf16.msra.mxu0 %v2923
  %3331 = vmatmul.bf16.gmra.mxu0 %v420
  %v3332 = vpop.f32.mrf.mxu0
  %v3333 = vadd.f32 %v3320, %v3332
  %v3334 = vpop.f32.mrf.mxu0
  %3335 = vdwg.mxu0
  %3336 = vmatpush.bf16.msra.mxu0 %v2938
  %3337 = vmatpush.bf16.msra.mxu0 %v2937
  %3338 = vmatpush.bf16.msra.mxu0 %v2936
  %3339 = vmatpush.bf16.msra.mxu0 %v2935
  %3340 = vmatpush.bf16.msra.mxu0 %v2934
  %3341 = vmatpush.bf16.msra.mxu0 %v2933
  %3342 = vmatpush.bf16.msra.mxu0 %v2932
  %3343 = vmatpush.bf16.msra.mxu0 %v2931
  %3344 = vmatmul.bf16.gmra.mxu0 %v421
  %v3345 = vpop.f32.mrf.mxu0
  %v3346 = vadd.f32 %v3333, %v3345
  %v3347 = vpop.f32.mrf.mxu0
  %3348 = vdwg.mxu0
  %3349 = vmatpush.bf16.msra.mxu0 %v2946
  %3350 = vmatpush.bf16.msra.mxu0 %v2945
  %3351 = vmatpush.bf16.msra.mxu0 %v2944
  %3352 = vmatpush.bf16.msra.mxu0 %v2943
  %3353 = vmatpush.bf16.msra.mxu0 %v2942
  %3354 = vmatpush.bf16.msra.mxu0 %v2941
  %3355 = vmatpush.bf16.msra.mxu0 %v2940
  %3356 = vmatpush.bf16.msra.mxu0 %v2939
  %3357 = vmatmul.bf16.gmra.mxu0 %v422
  %v3358 = vpop.f32.mrf.mxu0
  %v3359 = vadd.f32 %v3346, %v3358
  %v3360 = vpop.f32.mrf.mxu0
  %3361 = vdwg.mxu0
  %3362 = vmatpush.bf16.msra.mxu0 %v2954
  %3363 = vmatpush.bf16.msra.mxu0 %v2953
  %3364 = vmatpush.bf16.msra.mxu0 %v2952
  %3365 = vmatpush.bf16.msra.mxu0 %v2951
  %3366 = vmatpush.bf16.msra.mxu0 %v2950
  %3367 = vmatpush.bf16.msra.mxu0 %v2949
  %3368 = vmatpush.bf16.msra.mxu0 %v2948
  %3369 = vmatpush.bf16.msra.mxu0 %v2947
  %3370 = vmatmul.bf16.gmra.mxu0 %v423
  %v3371 = vpop.f32.mrf.mxu0
  %v3372 = vadd.f32 %v3359, %v3371
  %v3373 = vpop.f32.mrf.mxu0
  %3374 = vdwg.mxu0
  %v3375 = vmax.f32 %v3372, 0.0
  %v3376 = vpack.c.bf16 %v3375, %v3375
  %v3377 = vld [vmem:[%s9] sm:$0xf]
  %v3378 = vld [vmem:[%s9 + $0x4] sm:$0xf]
  %v3379 = vld [vmem:[%s9 + $0x8] sm:$0xf]
  %v3380 = vld [vmem:[%s9 + $0xc] sm:$0xf]
  %v3381 = vld [vmem:[%s9 + $0x10] sm:$0xf]
  %v3382 = vld [vmem:[%s9 + $0x14] sm:$0xf]
  %v3383 = vld [vmem:[%s9 + $0x18] sm:$0xf]
  %v3384 = vld [vmem:[%s9 + $0x1c] sm:$0xf]
  %v3385 = vld [vmem:[%s9 + $0x20] sm:$0xf]
  %v3386 = vld [vmem:[%s9 + $0x24] sm:$0xf]
  %v3387 = vld [vmem:[%s9 + $0x28] sm:$0xf]
  %v3388 = vld [vmem:[%s9 + $0x2c] sm:$0xf]
  %v3389 = vld [vmem:[%s9 + $0x30] sm:$0xf]
  %v3390 = vld [vmem:[%s9 + $0x34] sm:$0xf]
  %v3391 = vld [vmem:[%s9 + $0x38] sm:$0xf]
  %v3392 = vld [vmem:[%s9 + $0x3c] sm:$0xf]
  %v3393 = vld [vmem:[%s10] sm:$0x1]
  %v3395 = vperm.slane %v3393, 0
  %v3413 = vunpack.c.l.b16 %v3377
  %v3414 = vunpack.c.l.b16 %v3378
  %v3415 = vunpack.c.l.b16 %v3379
  %v3416 = vunpack.c.l.b16 %v3380
  %v3417 = vunpack.c.l.b16 %v3381
  %v3418 = vunpack.c.l.b16 %v3382
  %v3419 = vunpack.c.l.b16 %v3383
  %v3420 = vunpack.c.l.b16 %v3384
  %v3421 = vunpack.c.l.b16 %v3385
  %v3422 = vunpack.c.l.b16 %v3386
  %v3423 = vunpack.c.l.b16 %v3387
  %v3424 = vunpack.c.l.b16 %v3388
  %v3425 = vunpack.c.l.b16 %v3389
  %v3426 = vunpack.c.l.b16 %v3390
  %v3427 = vunpack.c.l.b16 %v3391
  %v3428 = vunpack.c.l.b16 %v3392
  %v3429 = vpack.c.b16 %v3414, %v3413
  %v3430 = vpack.c.b16 %v3416, %v3415
  %v3431 = vpack.c.b16 %v3418, %v3417
  %v3432 = vpack.c.b16 %v3420, %v3419
  %v3433 = vpack.c.b16 %v3422, %v3421
  %v3434 = vpack.c.b16 %v3424, %v3423
  %v3435 = vpack.c.b16 %v3426, %v3425
  %v3436 = vpack.c.b16 %v3428, %v3427
  %3445 = vmatpush.bf16.msra.mxu0 %v3436
  %3446 = vmatpush.bf16.msra.mxu0 %v3435
  %3447 = vmatpush.bf16.msra.mxu0 %v3434
  %3448 = vmatpush.bf16.msra.mxu0 %v3433
  %3449 = vmatpush.bf16.msra.mxu0 %v3432
  %3450 = vmatpush.bf16.msra.mxu0 %v3431
  %3451 = vmatpush.bf16.msra.mxu0 %v3430
  %3452 = vmatpush.bf16.msra.mxu0 %v3429
  %3453 = vmatmul.bf16.gmra.mxu0 %v3376
  %v3454 = vpop.f32.mrf.mxu0
  %v3455 = vadd.f32 %v3395, %v3454
  %v3456 = vpop.f32.mrf.mxu0
  %3457 = vdwg.mxu0
  %3458 = vst [vmem:[%s12] sm:$0xff] %v3455
  // Predicated region
  $region46: #{cnn_model_forward.5} parent=0 // pred_check
    _
  $region47: #{cnn_model_forward.5} parent=0 // pred_check_branch
    %3460 = sbr.rel (0) target = $region49
  $region48: #{cnn_model_forward.5} parent=0 // pred_region
    _
  $region49: #{cnn_model_forward.5} parent=0 // pred_fallthru
    _
  // Predicated region
  $region50: #{cnn_model_forward.5} parent=0 // pred_check
    _
  $region51: #{cnn_model_forward.5} parent=0 // pred_check_branch
    %3462 = sbr.rel (0) target = $region53
  $region52: #{cnn_model_forward.5} parent=0 // pred_region
    _
  $region53: #{cnn_model_forward.5} parent=0 // pred_fallthru
    _
  // Predicated region
  $region54: #{cnn_model_forward.5} parent=0 // pred_check
    _
  $region55: #{cnn_model_forward.5} parent=0 // pred_check_branch
    %3464 = sbr.rel (0) target = $region57
  $region56: #{cnn_model_forward.5} parent=0 // pred_region
    _
  $region57: #{cnn_model_forward.5} parent=0 // pred_fallthru
    _
  // Predicated region
  $region58: #{cnn_model_forward.5} parent=0 // pred_check
    _
  $region59: #{cnn_model_forward.5} parent=0 // pred_check_branch
    %3466 = sbr.rel (0) target = $region61
  $region60: #{cnn_model_forward.5} parent=0 // pred_region
    _
  $region61: #{cnn_model_forward.5} parent=0 // pred_fallthru
    _

// kernel: cnn_model_forward.4
$region0: #{cnn_model_forward.4}
  #allocation0 [shape = 'u32[]', space=smem, size = 0x4, offset = 0x4, fixed_abs, tag = 'smem constant byte address 0x4 - core index']
  #allocation1 [shape = 'u32[72,128]{1,0:T(1,128)}', space=vmem, size = 0x9000, scoped, tag = 'internal scratch']
  %s0 = inlined_call_operand.vmem [shape: bf16[80,64], index: 0, kind: input, shape index: {}]
  %s1 = inlined_call_operand.vmem [shape: bf16[80,64], index: 1, kind: input, shape index: {}]
  %s2 = inlined_call_operand.vmem [shape: bf16[80,64], index: 2, kind: input, shape index: {}]
  %s3 = inlined_call_operand.vmem [shape: bf16[80,64], index: 3, kind: input, shape index: {}]
  %s4 = inlined_call_operand.vmem [shape: bf16[1600,64], index: 4, kind: input, shape index: {}]
  %s5 = inlined_call_operand.vmem [shape: f32[1,64], index: 5, kind: input, shape index: {}]
  %s6 = inlined_call_operand.vmem [shape: bf16[80,64], index: 6, kind: output, shape index: {}]
  %s7 = sld [smem:[#allocation0]]
  $region34: #{cnn_model_forward.4} parent=0
    _
  %s9 = ssub.s32 1, %s7
  %s10 = scalar_select 0, %s9, %s7
  // Predicated region
  $region2: #{cnn_model_forward.4} parent=0 // pred_check
    _
  $region3: #{cnn_model_forward.4} parent=0 // pred_check_branch
    %12 = sbr.rel (0) target = $region5
  $region4: #{cnn_model_forward.4} parent=0 // pred_region
    _
  $region5: #{cnn_model_forward.4} parent=0 // pred_fallthru
    _
  // Predicated region
  $region6: #{cnn_model_forward.4} parent=0 // pred_check
    _
  $region7: #{cnn_model_forward.4} parent=0 // pred_check_branch
    %14 = sbr.rel (0) target = $region9
  $region8: #{cnn_model_forward.4} parent=0 // pred_region
    _
  $region9: #{cnn_model_forward.4} parent=0 // pred_fallthru
    _
  // Predicated region
  $region10: #{cnn_model_forward.4} parent=0 // pred_check
    _
  $region11: #{cnn_model_forward.4} parent=0 // pred_check_branch
    %16 = sbr.rel (0) target = $region13
  $region12: #{cnn_model_forward.4} parent=0 // pred_region
    _
  $region13: #{cnn_model_forward.4} parent=0 // pred_fallthru
    _
  // Predicated region
  $region14: #{cnn_model_forward.4} parent=0 // pred_check
    _
  $region15: #{cnn_model_forward.4} parent=0 // pred_check_branch
    %18 = sbr.rel (0) target = $region17
  $region16: #{cnn_model_forward.4} parent=0 // pred_region
    _
  $region17: #{cnn_model_forward.4} parent=0 // pred_fallthru
    _
  // Predicated region
  $region18: #{cnn_model_forward.4} parent=0 // pred_check
    _
  $region19: #{cnn_model_forward.4} parent=0 // pred_check_branch
    %20 = sbr.rel (0) target = $region21
  $region20: #{cnn_model_forward.4} parent=0 // pred_region
    _
  $region21: #{cnn_model_forward.4} parent=0 // pred_fallthru
    _
  // Predicated region
  $region22: #{cnn_model_forward.4} parent=0 // pred_check
    _
  $region23: #{cnn_model_forward.4} parent=0 // pred_check_branch
    %22 = sbr.rel (0) target = $region25
  $region24: #{cnn_model_forward.4} parent=0 // pred_region
    _
  $region25: #{cnn_model_forward.4} parent=0 // pred_fallthru
    _
  %v24 = vld [vmem:[%s0] sm:$0xf]
  %v25 = vld [vmem:[%s0 + $0x4] sm:$0xf]
  %v26 = vld [vmem:[%s0 + $0x8] sm:$0xf]
  %v27 = vld [vmem:[%s0 + $0xc] sm:$0xf]
  %v28 = vld [vmem:[%s0 + $0x10] sm:$0xf]
  %v29 = vld [vmem:[%s0 + $0x14] sm:$0xf]
  %v30 = vld [vmem:[%s0 + $0x18] sm:$0xf]
  %v31 = vld [vmem:[%s0 + $0x1c] sm:$0xf]
  %v32 = vld [vmem:[%s0 + $0x20] sm:$0xf]
  %v33 = vld [vmem:[%s0 + $0x24] sm:$0xf]
  %v34 = vld [vmem:[%s1] sm:$0xf]
  %v35 = vld [vmem:[%s1 + $0x4] sm:$0xf]
  %v36 = vld [vmem:[%s1 + $0x8] sm:$0xf]
  %v37 = vld [vmem:[%s1 + $0xc] sm:$0xf]
  %v38 = vld [vmem:[%s1 + $0x10] sm:$0xf]
  %v39 = vld [vmem:[%s1 + $0x14] sm:$0xf]
  %v40 = vld [vmem:[%s1 + $0x18] sm:$0xf]
  %v41 = vld [vmem:[%s1 + $0x1c] sm:$0xf]
  %v42 = vld [vmem:[%s1 + $0x20] sm:$0xf]
  %v43 = vld [vmem:[%s1 + $0x24] sm:$0xf]
  %v44 = vld [vmem:[%s2] sm:$0xf]
  %v45 = vld [vmem:[%s2 + $0x4] sm:$0xf]
  %v46 = vld [vmem:[%s2 + $0x8] sm:$0xf]
  %v47 = vld [vmem:[%s2 + $0xc] sm:$0xf]
  %v48 = vld [vmem:[%s2 + $0x10] sm:$0xf]
  %v49 = vld [vmem:[%s2 + $0x14] sm:$0xf]
  %v50 = vld [vmem:[%s2 + $0x18] sm:$0xf]
  %v51 = vld [vmem:[%s2 + $0x1c] sm:$0xf]
  %v52 = vld [vmem:[%s2 + $0x20] sm:$0xf]
  %v53 = vld [vmem:[%s2 + $0x24] sm:$0xf]
  %v54 = vld [vmem:[%s3] sm:$0xf]
  %v55 = vld [vmem:[%s3 + $0x4] sm:$0xf]
  %v56 = vld [vmem:[%s3 + $0x8] sm:$0xf]
  %v57 = vld [vmem:[%s3 + $0xc] sm:$0xf]
  %v58 = vld [vmem:[%s3 + $0x10] sm:$0xf]
  %v59 = vld [vmem:[%s3 + $0x14] sm:$0xf]
  %v60 = vld [vmem:[%s3 + $0x18] sm:$0xf]
  %v61 = vld [vmem:[%s3 + $0x1c] sm:$0xf]
  %v62 = vld [vmem:[%s3 + $0x20] sm:$0xf]
  %v63 = vld [vmem:[%s3 + $0x24] sm:$0xf]
  %v64 = vld [vmem:[%s4] sm:$0xf]
  %v65 = vld [vmem:[%s4 + $0x4] sm:$0xf]
  %v66 = vld [vmem:[%s4 + $0x8] sm:$0xf]
  %v67 = vld [vmem:[%s4 + $0xc] sm:$0xf]
  %v68 = vld [vmem:[%s4 + $0x10] sm:$0xf]
  %v69 = vld [vmem:[%s4 + $0x14] sm:$0xf]
  %v70 = vld [vmem:[%s4 + $0x18] sm:$0xf]
  %v71 = vld [vmem:[%s4 + $0x1c] sm:$0xf]
  %v72 = vld [vmem:[%s4 + $0x20] sm:$0xf]
  %v73 = vld [vmem:[%s4 + $0x24] sm:$0xf]
  %v74 = vld [vmem:[%s4 + $0x28] sm:$0xf]
  %v75 = vld [vmem:[%s4 + $0x2c] sm:$0xf]
  %v76 = vld [vmem:[%s4 + $0x30] sm:$0xf]
  %v77 = vld [vmem:[%s4 + $0x34] sm:$0xf]
  %v78 = vld [vmem:[%s4 + $0x38] sm:$0xf]
  %v79 = vld [vmem:[%s4 + $0x3c] sm:$0xf]
  %v80 = vld [vmem:[%s4 + $0x40] sm:$0xf]
  %v81 = vld [vmem:[%s4 + $0x44] sm:$0xf]
  %v82 = vld [vmem:[%s4 + $0x48] sm:$0xf]
  %v83 = vld [vmem:[%s4 + $0x4c] sm:$0xf]
  %v84 = vld [vmem:[%s4 + $0x50] sm:$0xf]
  %v85 = vld [vmem:[%s4 + $0x54] sm:$0xf]
  %v86 = vld [vmem:[%s4 + $0x58] sm:$0xf]
  %v87 = vld [vmem:[%s4 + $0x5c] sm:$0xf]
  %v88 = vld [vmem:[%s4 + $0x60] sm:$0xf]
  %v89 = vld [vmem:[%s4 + $0x64] sm:$0xf]
  %v90 = vld [vmem:[%s4 + $0x68] sm:$0xf]
  %v91 = vld [vmem:[%s4 + $0x6c] sm:$0xf]
  %v92 = vld [vmem:[%s4 + $0x70] sm:$0xf]
  %v93 = vld [vmem:[%s4 + $0x74] sm:$0xf]
  %v94 = vld [vmem:[%s4 + $0x78] sm:$0xf]
  %v95 = vld [vmem:[%s4 + $0x7c] sm:$0xf]
  %v96 = vld [vmem:[%s4 + $0x80] sm:$0xf]
  %v97 = vld [vmem:[%s4 + $0x84] sm:$0xf]
  %v98 = vld [vmem:[%s4 + $0x88] sm:$0xf]
  %v99 = vld [vmem:[%s4 + $0x8c] sm:$0xf]
  %v100 = vld [vmem:[%s4 + $0x90] sm:$0xf]
  %v101 = vld [vmem:[%s4 + $0x94] sm:$0xf]
  %v102 = vld [vmem:[%s4 + $0x98] sm:$0xf]
  %v103 = vld [vmem:[%s4 + $0x9c] sm:$0xf]
  %v104 = vld [vmem:[%s4 + $0xa0] sm:$0xf]
  %v105 = vld [vmem:[%s4 + $0xa4] sm:$0xf]
  %v106 = vld [vmem:[%s4 + $0xa8] sm:$0xf]
  %v107 = vld [vmem:[%s4 + $0xac] sm:$0xf]
  %v108 = vld [vmem:[%s4 + $0xb0] sm:$0xf]
  %v109 = vld [vmem:[%s4 + $0xb4] sm:$0xf]
  %v110 = vld [vmem:[%s4 + $0xb8] sm:$0xf]
  %v111 = vld [vmem:[%s4 + $0xbc] sm:$0xf]
  %v112 = vld [vmem:[%s4 + $0xc0] sm:$0xf]
  %v113 = vld [vmem:[%s4 + $0xc4] sm:$0xf]
  %v114 = vld [vmem:[%s4 + $0xc8] sm:$0xf]
  %v115 = vld [vmem:[%s4 + $0xcc] sm:$0xf]
  %v116 = vld [vmem:[%s4 + $0xd0] sm:$0xf]
  %v117 = vld [vmem:[%s4 + $0xd4] sm:$0xf]
  %v118 = vld [vmem:[%s4 + $0xd8] sm:$0xf]
  %v119 = vld [vmem:[%s4 + $0xdc] sm:$0xf]
  %v120 = vld [vmem:[%s4 + $0xe0] sm:$0xf]
  %v121 = vld [vmem:[%s4 + $0xe4] sm:$0xf]
  %v122 = vld [vmem:[%s4 + $0xe8] sm:$0xf]
  %v123 = vld [vmem:[%s4 + $0xec] sm:$0xf]
  %v124 = vld [vmem:[%s4 + $0xf0] sm:$0xf]
  %v125 = vld [vmem:[%s4 + $0xf4] sm:$0xf]
  %v126 = vld [vmem:[%s4 + $0xf8] sm:$0xf]
  %v127 = vld [vmem:[%s4 + $0xfc] sm:$0xf]
  %v128 = vld [vmem:[%s4 + $0x100] sm:$0xf]
  %v129 = vld [vmem:[%s4 + $0x104] sm:$0xf]
  %v130 = vld [vmem:[%s4 + $0x108] sm:$0xf]
  %v131 = vld [vmem:[%s4 + $0x10c] sm:$0xf]
  %v132 = vld [vmem:[%s4 + $0x110] sm:$0xf]
  %v133 = vld [vmem:[%s4 + $0x114] sm:$0xf]
  %v134 = vld [vmem:[%s4 + $0x118] sm:$0xf]
  %v135 = vld [vmem:[%s4 + $0x11c] sm:$0xf]
  %v136 = vld [vmem:[%s4 + $0x120] sm:$0xf]
  %v137 = vld [vmem:[%s4 + $0x124] sm:$0xf]
  %v138 = vld [vmem:[%s4 + $0x128] sm:$0xf]
  %v139 = vld [vmem:[%s4 + $0x12c] sm:$0xf]
  %v140 = vld [vmem:[%s4 + $0x130] sm:$0xf]
  %v141 = vld [vmem:[%s4 + $0x134] sm:$0xf]
  %v142 = vld [vmem:[%s4 + $0x138] sm:$0xf]
  %v143 = vld [vmem:[%s4 + $0x13c] sm:$0xf]
  %v144 = vld [vmem:[%s4 + $0x140] sm:$0xf]
  %v145 = vld [vmem:[%s4 + $0x144] sm:$0xf]
  %v146 = vld [vmem:[%s4 + $0x148] sm:$0xf]
  %v147 = vld [vmem:[%s4 + $0x14c] sm:$0xf]
  %v148 = vld [vmem:[%s4 + $0x150] sm:$0xf]
  %v149 = vld [vmem:[%s4 + $0x154] sm:$0xf]
  %v150 = vld [vmem:[%s4 + $0x158] sm:$0xf]
  %v151 = vld [vmem:[%s4 + $0x15c] sm:$0xf]
  %v152 = vld [vmem:[%s4 + $0x160] sm:$0xf]
  %v153 = vld [vmem:[%s4 + $0x164] sm:$0xf]
  %v154 = vld [vmem:[%s4 + $0x168] sm:$0xf]
  %v155 = vld [vmem:[%s4 + $0x16c] sm:$0xf]
  %v156 = vld [vmem:[%s4 + $0x170] sm:$0xf]
  %v157 = vld [vmem:[%s4 + $0x174] sm:$0xf]
  %v158 = vld [vmem:[%s4 + $0x178] sm:$0xf]
  %v159 = vld [vmem:[%s4 + $0x17c] sm:$0xf]
  %v160 = vld [vmem:[%s4 + $0x180] sm:$0xf]
  %v161 = vld [vmem:[%s4 + $0x184] sm:$0xf]
  %v162 = vld [vmem:[%s4 + $0x188] sm:$0xf]
  %v163 = vld [vmem:[%s4 + $0x18c] sm:$0xf]
  %v164 = vld [vmem:[%s4 + $0x190] sm:$0xf]
  %v165 = vld [vmem:[%s4 + $0x194] sm:$0xf]
  %v166 = vld [vmem:[%s4 + $0x198] sm:$0xf]
  %v167 = vld [vmem:[%s4 + $0x19c] sm:$0xf]
  %v168 = vld [vmem:[%s4 + $0x1a0] sm:$0xf]
  %v169 = vld [vmem:[%s4 + $0x1a4] sm:$0xf]
  %v170 = vld [vmem:[%s4 + $0x1a8] sm:$0xf]
  %v171 = vld [vmem:[%s4 + $0x1ac] sm:$0xf]
  %v172 = vld [vmem:[%s4 + $0x1b0] sm:$0xf]
  %v173 = vld [vmem:[%s4 + $0x1b4] sm:$0xf]
  %v174 = vld [vmem:[%s4 + $0x1b8] sm:$0xf]
  %v175 = vld [vmem:[%s4 + $0x1bc] sm:$0xf]
  %v176 = vld [vmem:[%s4 + $0x1c0] sm:$0xf]
  %v177 = vld [vmem:[%s4 + $0x1c4] sm:$0xf]
  %v178 = vld [vmem:[%s4 + $0x1c8] sm:$0xf]
  %v179 = vld [vmem:[%s4 + $0x1cc] sm:$0xf]
  %v180 = vld [vmem:[%s4 + $0x1d0] sm:$0xf]
  %v181 = vld [vmem:[%s4 + $0x1d4] sm:$0xf]
  %v182 = vld [vmem:[%s4 + $0x1d8] sm:$0xf]
  %v183 = vld [vmem:[%s4 + $0x1dc] sm:$0xf]
  %v184 = vld [vmem:[%s4 + $0x1e0] sm:$0xf]
  %v185 = vld [vmem:[%s4 + $0x1e4] sm:$0xf]
  %v186 = vld [vmem:[%s4 + $0x1e8] sm:$0xf]
  %v187 = vld [vmem:[%s4 + $0x1ec] sm:$0xf]
  %v188 = vld [vmem:[%s4 + $0x1f0] sm:$0xf]
  %v189 = vld [vmem:[%s4 + $0x1f4] sm:$0xf]
  %v190 = vld [vmem:[%s4 + $0x1f8] sm:$0xf]
  %v191 = vld [vmem:[%s4 + $0x1fc] sm:$0xf]
  %v192 = vld [vmem:[%s4 + $0x200] sm:$0xf]
  %v193 = vld [vmem:[%s4 + $0x204] sm:$0xf]
  %v194 = vld [vmem:[%s4 + $0x208] sm:$0xf]
  %v195 = vld [vmem:[%s4 + $0x20c] sm:$0xf]
  %v196 = vld [vmem:[%s4 + $0x210] sm:$0xf]
  %v197 = vld [vmem:[%s4 + $0x214] sm:$0xf]
  %v198 = vld [vmem:[%s4 + $0x218] sm:$0xf]
  %v199 = vld [vmem:[%s4 + $0x21c] sm:$0xf]
  %v200 = vld [vmem:[%s4 + $0x220] sm:$0xf]
  %v201 = vld [vmem:[%s4 + $0x224] sm:$0xf]
  %v202 = vld [vmem:[%s4 + $0x228] sm:$0xf]
  %v203 = vld [vmem:[%s4 + $0x22c] sm:$0xf]
  %v204 = vld [vmem:[%s4 + $0x230] sm:$0xf]
  %v205 = vld [vmem:[%s4 + $0x234] sm:$0xf]
  %v206 = vld [vmem:[%s4 + $0x238] sm:$0xf]
  %v207 = vld [vmem:[%s4 + $0x23c] sm:$0xf]
  %v208 = vld [vmem:[%s4 + $0x240] sm:$0xf]
  %v209 = vld [vmem:[%s4 + $0x244] sm:$0xf]
  %v210 = vld [vmem:[%s4 + $0x248] sm:$0xf]
  %v211 = vld [vmem:[%s4 + $0x24c] sm:$0xf]
  %v212 = vld [vmem:[%s4 + $0x250] sm:$0xf]
  %v213 = vld [vmem:[%s4 + $0x254] sm:$0xf]
  %v214 = vld [vmem:[%s4 + $0x258] sm:$0xf]
  %v215 = vld [vmem:[%s4 + $0x25c] sm:$0xf]
  %v216 = vld [vmem:[%s4 + $0x260] sm:$0xf]
  %v217 = vld [vmem:[%s4 + $0x264] sm:$0xf]
  %v218 = vld [vmem:[%s4 + $0x268] sm:$0xf]
  %v219 = vld [vmem:[%s4 + $0x26c] sm:$0xf]
  %v220 = vld [vmem:[%s4 + $0x270] sm:$0xf]
  %v221 = vld [vmem:[%s4 + $0x274] sm:$0xf]
  %v222 = vld [vmem:[%s4 + $0x278] sm:$0xf]
  %v223 = vld [vmem:[%s4 + $0x27c] sm:$0xf]
  %v224 = vld [vmem:[%s4 + $0x280] sm:$0xf]
  %v225 = vld [vmem:[%s4 + $0x284] sm:$0xf]
  %v226 = vld [vmem:[%s4 + $0x288] sm:$0xf]
  %v227 = vld [vmem:[%s4 + $0x28c] sm:$0xf]
  %v228 = vld [vmem:[%s4 + $0x290] sm:$0xf]
  %v229 = vld [vmem:[%s4 + $0x294] sm:$0xf]
  %v230 = vld [vmem:[%s4 + $0x298] sm:$0xf]
  %v231 = vld [vmem:[%s4 + $0x29c] sm:$0xf]
  %v232 = vld [vmem:[%s4 + $0x2a0] sm:$0xf]
  %v233 = vld [vmem:[%s4 + $0x2a4] sm:$0xf]
  %v234 = vld [vmem:[%s4 + $0x2a8] sm:$0xf]
  %v235 = vld [vmem:[%s4 + $0x2ac] sm:$0xf]
  %v236 = vld [vmem:[%s4 + $0x2b0] sm:$0xf]
  %v237 = vld [vmem:[%s4 + $0x2b4] sm:$0xf]
  %v238 = vld [vmem:[%s4 + $0x2b8] sm:$0xf]
  %v239 = vld [vmem:[%s4 + $0x2bc] sm:$0xf]
  %v240 = vld [vmem:[%s4 + $0x2c0] sm:$0xf]
  %v241 = vld [vmem:[%s4 + $0x2c4] sm:$0xf]
  %v242 = vld [vmem:[%s4 + $0x2c8] sm:$0xf]
  %v243 = vld [vmem:[%s4 + $0x2cc] sm:$0xf]
  %v244 = vld [vmem:[%s4 + $0x2d0] sm:$0xf]
  %v245 = vld [vmem:[%s4 + $0x2d4] sm:$0xf]
  %v246 = vld [vmem:[%s4 + $0x2d8] sm:$0xf]
  %v247 = vld [vmem:[%s4 + $0x2dc] sm:$0xf]
  %v248 = vld [vmem:[%s4 + $0x2e0] sm:$0xf]
  %v249 = vld [vmem:[%s4 + $0x2e4] sm:$0xf]
  %v250 = vld [vmem:[%s4 + $0x2e8] sm:$0xf]
  %v251 = vld [vmem:[%s4 + $0x2ec] sm:$0xf]
  %v252 = vld [vmem:[%s4 + $0x2f0] sm:$0xf]
  %v253 = vld [vmem:[%s4 + $0x2f4] sm:$0xf]
  %v254 = vld [vmem:[%s4 + $0x2f8] sm:$0xf]
  %v255 = vld [vmem:[%s4 + $0x2fc] sm:$0xf]
  %v256 = vld [vmem:[%s4 + $0x300] sm:$0xf]
  %v257 = vld [vmem:[%s4 + $0x304] sm:$0xf]
  %v258 = vld [vmem:[%s4 + $0x308] sm:$0xf]
  %v259 = vld [vmem:[%s4 + $0x30c] sm:$0xf]
  %v260 = vld [vmem:[%s4 + $0x310] sm:$0xf]
  %v261 = vld [vmem:[%s4 + $0x314] sm:$0xf]
  %v262 = vld [vmem:[%s4 + $0x318] sm:$0xf]
  %v263 = vld [vmem:[%s4 + $0x31c] sm:$0xf]
  %v274 = vunpack.c.l.b16 %v24
  %v275 = vunpack.c.l.b16 %v25
  %v276 = vunpack.c.l.b16 %v26
  %v277 = vunpack.c.l.b16 %v27
  %v278 = vunpack.c.l.b16 %v28
  %v279 = vunpack.c.l.b16 %v29
  %v280 = vunpack.c.l.b16 %v30
  %v281 = vunpack.c.l.b16 %v31
  %v282 = vunpack.c.l.b16 %v32
  %v283 = vunpack.c.l.b16 %v33
  %v284 = vpack.c.b16 %v275, %v274
  %v285 = vpack.c.b16 %v277, %v276
  %v286 = vpack.c.b16 %v279, %v278
  %v287 = vpack.c.b16 %v281, %v280
  %v288 = vpack.c.b16 %v283, %v282
  %vm289 = vsmask.f32 7424
  %v291 = vshrl.u32 %v284, 16
  %v293 = vshll.u32 %v284, 16
  %v295 = vrot.slane %v293, 1
  %v296 = vor.u32 %v291, %v295
  %v298 = vshll.u32 %v285, 16
  %v300 = vrot.slane %v298, 1
  %v301 = vsel %vm289, %v296, %v300
  %v302 = vshrl.u32 %v285, 16
  %v304 = vor.u32 %v302, %v300
  %v306 = vshll.u32 %v286, 16
  %v308 = vrot.slane %v306, 1
  %v309 = vsel %vm289, %v304, %v308
  %v310 = vshrl.u32 %v286, 16
  %v312 = vor.u32 %v310, %v308
  %v314 = vshll.u32 %v287, 16
  %v316 = vrot.slane %v314, 1
  %v317 = vsel %vm289, %v312, %v316
  %v318 = vshrl.u32 %v287, 16
  %v320 = vor.u32 %v318, %v316
  %v322 = vshll.u32 %v288, 16
  %v324 = vrot.slane %v322, 1
  %v325 = vsel %vm289, %v320, %v324
  %v326 = vshrl.u32 %v288, 16
  %v328 = vor.u32 %v326, %v324
  %v330 = vpack.c.b16 %v274, %v274
  %v332 = vshll.u32 %v330, 16
  %v334 = vrot.slane %v332, 1
  %vm336 = vcmask 1047552
  %vm337 = vmand %vm336, %vm289
  %v338 = vsel %vm337, %v328, %v334
  %v349 = vunpack.c.l.b16 %v34
  %v350 = vunpack.c.l.b16 %v35
  %v351 = vunpack.c.l.b16 %v36
  %v352 = vunpack.c.l.b16 %v37
  %v353 = vunpack.c.l.b16 %v38
  %v354 = vunpack.c.l.b16 %v39
  %v355 = vunpack.c.l.b16 %v40
  %v356 = vunpack.c.l.b16 %v41
  %v357 = vunpack.c.l.b16 %v42
  %v358 = vunpack.c.l.b16 %v43
  %v359 = vpack.c.b16 %v350, %v349
  %v360 = vpack.c.b16 %v352, %v351
  %v361 = vpack.c.b16 %v354, %v353
  %v362 = vpack.c.b16 %v356, %v355
  %v363 = vpack.c.b16 %v358, %v357
  %v365 = vshrl.u32 %v359, 16
  %v367 = vshll.u32 %v359, 16
  %v369 = vrot.slane %v367, 1
  %v370 = vor.u32 %v365, %v369
  %v372 = vshll.u32 %v360, 16
  %v374 = vrot.slane %v372, 1
  %v375 = vsel %vm289, %v370, %v374
  %v376 = vshrl.u32 %v360, 16
  %v378 = vor.u32 %v376, %v374
  %v380 = vshll.u32 %v361, 16
  %v382 = vrot.slane %v380, 1
  %v383 = vsel %vm289, %v378, %v382
  %v384 = vshrl.u32 %v361, 16
  %v386 = vor.u32 %v384, %v382
  %v388 = vshll.u32 %v362, 16
  %v390 = vrot.slane %v388, 1
  %v391 = vsel %vm289, %v386, %v390
  %v392 = vshrl.u32 %v362, 16
  %v394 = vor.u32 %v392, %v390
  %v396 = vshll.u32 %v363, 16
  %v398 = vrot.slane %v396, 1
  %v399 = vsel %vm289, %v394, %v398
  %v400 = vshrl.u32 %v363, 16
  %v402 = vor.u32 %v400, %v398
  %v404 = vpack.c.b16 %v349, %v349
  %v406 = vshll.u32 %v404, 16
  %v408 = vrot.slane %v406, 1
  %v410 = vsel %vm337, %v402, %v408
  %vm411 = vcmask 1046528
  %v412 = vrot.slane %v284, 1
  %v413 = vrot.slane %v285, 1
  %v414 = vsel %vm411, %v412, %v413
  %v415 = vrot.slane %v286, 1
  %v416 = vsel %vm411, %v413, %v415
  %v417 = vrot.slane %v287, 1
  %v418 = vsel %vm411, %v415, %v417
  %v419 = vrot.slane %v288, 1
  %v420 = vsel %vm411, %v417, %v419
  %v421 = vrot.slane %v330, 1
  %vm422 = vcmask 1046528
  %v425 = vsel %vm422, %v419, %v421
  %v436 = vunpack.c.l.b16 %v44
  %v437 = vunpack.c.l.b16 %v45
  %v438 = vunpack.c.l.b16 %v46
  %v439 = vunpack.c.l.b16 %v47
  %v440 = vunpack.c.l.b16 %v48
  %v441 = vunpack.c.l.b16 %v49
  %v442 = vunpack.c.l.b16 %v50
  %v443 = vunpack.c.l.b16 %v51
  %v444 = vunpack.c.l.b16 %v52
  %v445 = vunpack.c.l.b16 %v53
  %v446 = vpack.c.b16 %v437, %v436
  %v447 = vpack.c.b16 %v439, %v438
  %v448 = vpack.c.b16 %v441, %v440
  %v449 = vpack.c.b16 %v443, %v442
  %v450 = vpack.c.b16 %v445, %v444
  %v452 = vshrl.u32 %v446, 16
  %v454 = vshll.u32 %v446, 16
  %v456 = vrot.slane %v454, 1
  %v457 = vor.u32 %v452, %v456
  %v459 = vshll.u32 %v447, 16
  %v461 = vrot.slane %v459, 1
  %v462 = vsel %vm289, %v457, %v461
  %v463 = vshrl.u32 %v447, 16
  %v465 = vor.u32 %v463, %v461
  %v467 = vshll.u32 %v448, 16
  %v469 = vrot.slane %v467, 1
  %v470 = vsel %vm289, %v465, %v469
  %v471 = vshrl.u32 %v448, 16
  %v473 = vor.u32 %v471, %v469
  %v475 = vshll.u32 %v449, 16
  %v477 = vrot.slane %v475, 1
  %v478 = vsel %vm289, %v473, %v477
  %v479 = vshrl.u32 %v449, 16
  %v481 = vor.u32 %v479, %v477
  %v483 = vshll.u32 %v450, 16
  %v485 = vrot.slane %v483, 1
  %v486 = vsel %vm289, %v481, %v485
  %v487 = vshrl.u32 %v450, 16
  %v489 = vor.u32 %v487, %v485
  %v491 = vpack.c.b16 %v436, %v436
  %v493 = vshll.u32 %v491, 16
  %v495 = vrot.slane %v493, 1
  %v497 = vsel %vm337, %v489, %v495
  %v508 = vunpack.c.l.b16 %v54
  %v509 = vunpack.c.l.b16 %v55
  %v510 = vunpack.c.l.b16 %v56
  %v511 = vunpack.c.l.b16 %v57
  %v512 = vunpack.c.l.b16 %v58
  %v513 = vunpack.c.l.b16 %v59
  %v514 = vunpack.c.l.b16 %v60
  %v515 = vunpack.c.l.b16 %v61
  %v516 = vunpack.c.l.b16 %v62
  %v517 = vunpack.c.l.b16 %v63
  %v518 = vpack.c.b16 %v509, %v508
  %v519 = vpack.c.b16 %v511, %v510
  %v520 = vpack.c.b16 %v513, %v512
  %v521 = vpack.c.b16 %v515, %v514
  %v522 = vpack.c.b16 %v517, %v516
  %v524 = vshrl.u32 %v518, 16
  %v526 = vshll.u32 %v518, 16
  %v528 = vrot.slane %v526, 1
  %v529 = vor.u32 %v524, %v528
  %v531 = vshll.u32 %v519, 16
  %v533 = vrot.slane %v531, 1
  %v534 = vsel %vm289, %v529, %v533
  %v535 = vshrl.u32 %v519, 16
  %v537 = vor.u32 %v535, %v533
  %v539 = vshll.u32 %v520, 16
  %v541 = vrot.slane %v539, 1
  %v542 = vsel %vm289, %v537, %v541
  %v543 = vshrl.u32 %v520, 16
  %v545 = vor.u32 %v543, %v541
  %v547 = vshll.u32 %v521, 16
  %v549 = vrot.slane %v547, 1
  %v550 = vsel %vm289, %v545, %v549
  %v551 = vshrl.u32 %v521, 16
  %v553 = vor.u32 %v551, %v549
  %v555 = vshll.u32 %v522, 16
  %v557 = vrot.slane %v555, 1
  %v558 = vsel %vm289, %v553, %v557
  %v559 = vshrl.u32 %v522, 16
  %v561 = vor.u32 %v559, %v557
  %v563 = vpack.c.b16 %v508, %v508
  %v565 = vshll.u32 %v563, 16
  %v567 = vrot.slane %v565, 1
  %v569 = vsel %vm337, %v561, %v567
  %v570 = vrot.slane %v446, 1
  %v571 = vrot.slane %v447, 1
  %v572 = vsel %vm411, %v570, %v571
  %v573 = vrot.slane %v448, 1
  %v574 = vsel %vm411, %v571, %v573
  %v575 = vrot.slane %v449, 1
  %v576 = vsel %vm411, %v573, %v575
  %v577 = vrot.slane %v450, 1
  %v578 = vsel %vm411, %v575, %v577
  %v579 = vrot.slane %v491, 1
  %v582 = vsel %vm422, %v577, %v579
  %vm583 = vcmask 1044480
  %v584 = vrot.slane %v284, 3
  %v585 = vrot.slane %v285, 3
  %v586 = vsel %vm583, %v584, %v585
  %v587 = vrot.slane %v286, 3
  %v588 = vsel %vm583, %v585, %v587
  %v589 = vrot.slane %v287, 3
  %v590 = vsel %vm583, %v587, %v589
  %v591 = vrot.slane %v288, 3
  %v592 = vsel %vm583, %v589, %v591
  %v593 = vrot.slane %v330, 3
  %vm594 = vcmask 1044480
  %v597 = vsel %vm594, %v591, %v593
  %v598 = vrot.slane %v359, 3
  %v599 = vrot.slane %v360, 3
  %v600 = vsel %vm583, %v598, %v599
  %v601 = vrot.slane %v361, 3
  %v602 = vsel %vm583, %v599, %v601
  %v603 = vrot.slane %v362, 3
  %v604 = vsel %vm583, %v601, %v603
  %v605 = vrot.slane %v363, 3
  %v606 = vsel %vm583, %v603, %v605
  %v607 = vrot.slane %v404, 3
  %v610 = vsel %vm594, %v605, %v607
  %vm611 = vsmask.f32 4352
  %v612 = vrot.slane %v291, 3
  %v613 = vrot.slane %v293, 4
  %v614 = vor.u32 %v612, %v613
  %v615 = vrot.slane %v302, 3
  %v616 = vrot.slane %v298, 4
  %v617 = vor.u32 %v615, %v616
  %v618 = vsel %vm611, %v614, %v617
  %v619 = vrot.slane %v310, 3
  %v620 = vrot.slane %v306, 4
  %v621 = vor.u32 %v619, %v620
  %v622 = vsel %vm611, %v617, %v621
  %v623 = vrot.slane %v318, 3
  %v624 = vrot.slane %v314, 4
  %v625 = vor.u32 %v623, %v624
  %v626 = vsel %vm611, %v621, %v625
  %v627 = vrot.slane %v326, 3
  %v628 = vrot.slane %v322, 4
  %v629 = vor.u32 %v627, %v628
  %v630 = vsel %vm611, %v625, %v629
  %v632 = vshrl.u32 %v330, 16
  %v634 = vrot.slane %v632, 3
  %v635 = vrot.slane %v332, 4
  %v636 = vor.u32 %v634, %v635
  %vm638 = vmand %vm583, %vm611
  %v639 = vsel %vm638, %v629, %v636
  %v640 = vrot.slane %v365, 3
  %v641 = vrot.slane %v367, 4
  %v642 = vor.u32 %v640, %v641
  %v643 = vrot.slane %v376, 3
  %v644 = vrot.slane %v372, 4
  %v645 = vor.u32 %v643, %v644
  %v646 = vsel %vm611, %v642, %v645
  %v647 = vrot.slane %v384, 3
  %v648 = vrot.slane %v380, 4
  %v649 = vor.u32 %v647, %v648
  %v650 = vsel %vm611, %v645, %v649
  %v651 = vrot.slane %v392, 3
  %v652 = vrot.slane %v388, 4
  %v653 = vor.u32 %v651, %v652
  %v654 = vsel %vm611, %v649, %v653
  %v655 = vrot.slane %v400, 3
  %v656 = vrot.slane %v396, 4
  %v657 = vor.u32 %v655, %v656
  %v658 = vsel %vm611, %v653, %v657
  %v660 = vshrl.u32 %v404, 16
  %v662 = vrot.slane %v660, 3
  %v663 = vrot.slane %v406, 4
  %v664 = vor.u32 %v662, %v663
  %v666 = vsel %vm638, %v657, %v664
  %v667 = vpack.c.b16 %v276, %v275
  %v668 = vpack.c.b16 %v278, %v277
  %v669 = vpack.c.b16 %v280, %v279
  %v670 = vpack.c.b16 %v282, %v281
  %v671 = vpack.c.b16 %v283, %v283
  %vm672 = vcmask 1043456
  %v674 = vsel %vm672, %v671, %v330
  %v675 = vrot.slane %v446, 3
  %v676 = vrot.slane %v447, 3
  %v677 = vsel %vm583, %v675, %v676
  %v678 = vrot.slane %v448, 3
  %v679 = vsel %vm583, %v676, %v678
  %v680 = vrot.slane %v449, 3
  %v681 = vsel %vm583, %v678, %v680
  %v682 = vrot.slane %v450, 3
  %v683 = vsel %vm583, %v680, %v682
  %v684 = vrot.slane %v491, 3
  %v687 = vsel %vm594, %v682, %v684
  %v688 = vrot.slane %v518, 3
  %v689 = vrot.slane %v519, 3
  %v690 = vsel %vm583, %v688, %v689
  %v691 = vrot.slane %v520, 3
  %v692 = vsel %vm583, %v689, %v691
  %v693 = vrot.slane %v521, 3
  %v694 = vsel %vm583, %v691, %v693
  %v695 = vrot.slane %v522, 3
  %v696 = vsel %vm583, %v693, %v695
  %v697 = vrot.slane %v563, 3
  %v700 = vsel %vm594, %v695, %v697
  %v701 = vrot.slane %v452, 3
  %v702 = vrot.slane %v454, 4
  %v703 = vor.u32 %v701, %v702
  %v704 = vrot.slane %v463, 3
  %v705 = vrot.slane %v459, 4
  %v706 = vor.u32 %v704, %v705
  %v707 = vsel %vm611, %v703, %v706
  %v708 = vrot.slane %v471, 3
  %v709 = vrot.slane %v467, 4
  %v710 = vor.u32 %v708, %v709
  %v711 = vsel %vm611, %v706, %v710
  %v712 = vrot.slane %v479, 3
  %v713 = vrot.slane %v475, 4
  %v714 = vor.u32 %v712, %v713
  %v715 = vsel %vm611, %v710, %v714
  %v716 = vrot.slane %v487, 3
  %v717 = vrot.slane %v483, 4
  %v718 = vor.u32 %v716, %v717
  %v719 = vsel %vm611, %v714, %v718
  %v721 = vshrl.u32 %v491, 16
  %v723 = vrot.slane %v721, 3
  %v724 = vrot.slane %v493, 4
  %v725 = vor.u32 %v723, %v724
  %v727 = vsel %vm638, %v718, %v725
  %v728 = vrot.slane %v524, 3
  %v729 = vrot.slane %v526, 4
  %v730 = vor.u32 %v728, %v729
  %v731 = vrot.slane %v535, 3
  %v732 = vrot.slane %v531, 4
  %v733 = vor.u32 %v731, %v732
  %v734 = vsel %vm611, %v730, %v733
  %v735 = vrot.slane %v543, 3
  %v736 = vrot.slane %v539, 4
  %v737 = vor.u32 %v735, %v736
  %v738 = vsel %vm611, %v733, %v737
  %v739 = vrot.slane %v551, 3
  %v740 = vrot.slane %v547, 4
  %v741 = vor.u32 %v739, %v740
  %v742 = vsel %vm611, %v737, %v741
  %v743 = vrot.slane %v559, 3
  %v744 = vrot.slane %v555, 4
  %v745 = vor.u32 %v743, %v744
  %v746 = vsel %vm611, %v741, %v745
  %v748 = vshrl.u32 %v563, 16
  %v750 = vrot.slane %v748, 3
  %v751 = vrot.slane %v565, 4
  %v752 = vor.u32 %v750, %v751
  %v754 = vsel %vm638, %v745, %v752
  %v755 = vpack.c.b16 %v438, %v437
  %v756 = vpack.c.b16 %v440, %v439
  %v757 = vpack.c.b16 %v442, %v441
  %v758 = vpack.c.b16 %v444, %v443
  %v759 = vpack.c.b16 %v445, %v445
  %v761 = vsel %vm672, %v759, %v491
  %vm762 = vcmask 1045504
  %v763 = vrot.slane %v667, 2
  %v764 = vrot.slane %v668, 2
  %v765 = vsel %vm762, %v763, %v764
  %v766 = vrot.slane %v669, 2
  %v767 = vsel %vm762, %v764, %v766
  %v768 = vrot.slane %v670, 2
  %v769 = vsel %vm762, %v766, %v768
  %v770 = vrot.slane %v671, 2
  %v771 = vsel %vm762, %v768, %v770
  %v772 = vrot.slane %v284, 6
  %vm773 = vcmask 1041408
  %v776 = vsel %vm773, %v770, %v772
  %v777 = vpack.c.b16 %v351, %v350
  %v778 = vpack.c.b16 %v353, %v352
  %v779 = vpack.c.b16 %v355, %v354
  %v780 = vpack.c.b16 %v357, %v356
  %v781 = vpack.c.b16 %v358, %v358
  %v782 = vrot.slane %v777, 2
  %v783 = vrot.slane %v778, 2
  %v784 = vsel %vm762, %v782, %v783
  %v785 = vrot.slane %v779, 2
  %v786 = vsel %vm762, %v783, %v785
  %v787 = vrot.slane %v780, 2
  %v788 = vsel %vm762, %v785, %v787
  %v789 = vrot.slane %v781, 2
  %v790 = vsel %vm762, %v787, %v789
  %v791 = vrot.slane %v359, 6
  %v794 = vsel %vm773, %v789, %v791
  %vm795 = vsmask.f32 5376
  %v797 = vshrl.u32 %v667, 16
  %v799 = vrot.slane %v797, 2
  %v800 = vshll.u32 %v667, 16
  %v802 = vrot.slane %v800, 3
  %v803 = vor.u32 %v799, %v802
  %v805 = vshrl.u32 %v668, 16
  %v807 = vrot.slane %v805, 2
  %v808 = vshll.u32 %v668, 16
  %v810 = vrot.slane %v808, 3
  %v811 = vor.u32 %v807, %v810
  %v812 = vsel %vm795, %v803, %v811
  %v814 = vshrl.u32 %v669, 16
  %v816 = vrot.slane %v814, 2
  %v817 = vshll.u32 %v669, 16
  %v819 = vrot.slane %v817, 3
  %v820 = vor.u32 %v816, %v819
  %v821 = vsel %vm795, %v811, %v820
  %v823 = vshrl.u32 %v670, 16
  %v825 = vrot.slane %v823, 2
  %v826 = vshll.u32 %v670, 16
  %v828 = vrot.slane %v826, 3
  %v829 = vor.u32 %v825, %v828
  %v830 = vsel %vm795, %v820, %v829
  %v831 = vshrl.u32 %v671, 16
  %v833 = vrot.slane %v831, 2
  %v834 = vshll.u32 %v671, 16
  %v836 = vrot.slane %v834, 3
  %v837 = vor.u32 %v833, %v836
  %v838 = vsel %vm795, %v829, %v837
  %v840 = vrot.slane %v291, 6
  %v841 = vrot.slane %v293, 7
  %v842 = vor.u32 %v840, %v841
  %vm844 = vcmask 1041408
  %vm845 = vsmask.f32 1280
  %vm846 = vmand %vm844, %vm845
  %v847 = vsel %vm846, %v837, %v842
  %v849 = vshrl.u32 %v777, 16
  %v851 = vrot.slane %v849, 2
  %v852 = vshll.u32 %v777, 16
  %v854 = vrot.slane %v852, 3
  %v855 = vor.u32 %v851, %v854
  %v857 = vshrl.u32 %v778, 16
  %v859 = vrot.slane %v857, 2
  %v860 = vshll.u32 %v778, 16
  %v862 = vrot.slane %v860, 3
  %v863 = vor.u32 %v859, %v862
  %v864 = vsel %vm795, %v855, %v863
  %v866 = vshrl.u32 %v779, 16
  %v868 = vrot.slane %v866, 2
  %v869 = vshll.u32 %v779, 16
  %v871 = vrot.slane %v869, 3
  %v872 = vor.u32 %v868, %v871
  %v873 = vsel %vm795, %v863, %v872
  %v875 = vshrl.u32 %v780, 16
  %v877 = vrot.slane %v875, 2
  %v878 = vshll.u32 %v780, 16
  %v880 = vrot.slane %v878, 3
  %v881 = vor.u32 %v877, %v880
  %v882 = vsel %vm795, %v872, %v881
  %v884 = vshrl.u32 %v781, 16
  %v886 = vrot.slane %v884, 2
  %v887 = vshll.u32 %v781, 16
  %v889 = vrot.slane %v887, 3
  %v890 = vor.u32 %v886, %v889
  %v891 = vsel %vm795, %v881, %v890
  %v893 = vrot.slane %v365, 6
  %v894 = vrot.slane %v367, 7
  %v895 = vor.u32 %v893, %v894
  %v897 = vsel %vm846, %v890, %v895
  %v898 = vrot.slane %v667, 3
  %v899 = vrot.slane %v668, 3
  %v900 = vsel %vm583, %v898, %v899
  %v901 = vrot.slane %v669, 3
  %v902 = vsel %vm583, %v899, %v901
  %v903 = vrot.slane %v670, 3
  %v904 = vsel %vm583, %v901, %v903
  %v905 = vrot.slane %v671, 3
  %v906 = vsel %vm583, %v903, %v905
  %v907 = vrot.slane %v284, 7
  %vm908 = vcmask 1040384
  %v911 = vsel %vm908, %v905, %v907
  %912 = vrot.lane.b32.xlu0 %v359, 64
  %v913 = vpop.permute.xlu0 %912
  %914 = vrot.lane.b32.xlu0 %v360, 64
  %v915 = vpop.permute.xlu0 %914
  %916 = vrot.lane.b32.xlu0 %v361, 64
  %v917 = vpop.permute.xlu0 %916
  %918 = vrot.lane.b32.xlu0 %v362, 64
  %v919 = vpop.permute.xlu0 %918
  %920 = vrot.lane.b32.xlu0 %v363, 64
  %v921 = vpop.permute.xlu0 %920
  %923 = vrot.lane.b32.xlu0 %v375, 64
  %v924 = vpop.permute.xlu0 %923
  %925 = vrot.lane.b32.xlu0 %v383, 64
  %v926 = vpop.permute.xlu0 %925
  %927 = vrot.lane.b32.xlu0 %v391, 64
  %v928 = vpop.permute.xlu0 %927
  %929 = vrot.lane.b32.xlu0 %v399, 64
  %v930 = vpop.permute.xlu0 %929
  %931 = vrot.lane.b32.xlu0 %v410, 64
  %v932 = vpop.permute.xlu0 %931
  %933 = vrot.lane.b32.xlu0 %v446, 64
  %v934 = vpop.permute.xlu0 %933
  %935 = vrot.lane.b32.xlu0 %v447, 64
  %v936 = vpop.permute.xlu0 %935
  %937 = vrot.lane.b32.xlu0 %v448, 64
  %v938 = vpop.permute.xlu0 %937
  %939 = vrot.lane.b32.xlu0 %v449, 64
  %v940 = vpop.permute.xlu0 %939
  %941 = vrot.lane.b32.xlu0 %v450, 64
  %v942 = vpop.permute.xlu0 %941
  %944 = vrot.lane.b32.xlu0 %v462, 64
  %v945 = vpop.permute.xlu0 %944
  %946 = vrot.lane.b32.xlu0 %v470, 64
  %v947 = vpop.permute.xlu0 %946
  %948 = vrot.lane.b32.xlu0 %v478, 64
  %v949 = vpop.permute.xlu0 %948
  %950 = vrot.lane.b32.xlu0 %v486, 64
  %v951 = vpop.permute.xlu0 %950
  %952 = vrot.lane.b32.xlu0 %v497, 64
  %v953 = vpop.permute.xlu0 %952
  %955 = vrot.lane.b32.xlu0 %v572, 64
  %v956 = vpop.permute.xlu0 %955
  %957 = vrot.lane.b32.xlu0 %v574, 64
  %v958 = vpop.permute.xlu0 %957
  %959 = vrot.lane.b32.xlu0 %v576, 64
  %v960 = vpop.permute.xlu0 %959
  %961 = vrot.lane.b32.xlu0 %v578, 64
  %v962 = vpop.permute.xlu0 %961
  %963 = vrot.lane.b32.xlu0 %v582, 64
  %v964 = vpop.permute.xlu0 %963
  %966 = vrot.lane.b32.xlu0 %v600, 64
  %v967 = vpop.permute.xlu0 %966
  %968 = vrot.lane.b32.xlu0 %v602, 64
  %v969 = vpop.permute.xlu0 %968
  %970 = vrot.lane.b32.xlu0 %v604, 64
  %v971 = vpop.permute.xlu0 %970
  %972 = vrot.lane.b32.xlu0 %v606, 64
  %v973 = vpop.permute.xlu0 %972
  %974 = vrot.lane.b32.xlu0 %v610, 64
  %v975 = vpop.permute.xlu0 %974
  %977 = vrot.lane.b32.xlu0 %v646, 64
  %v978 = vpop.permute.xlu0 %977
  %979 = vrot.lane.b32.xlu0 %v650, 64
  %v980 = vpop.permute.xlu0 %979
  %981 = vrot.lane.b32.xlu0 %v654, 64
  %v982 = vpop.permute.xlu0 %981
  %983 = vrot.lane.b32.xlu0 %v658, 64
  %v984 = vpop.permute.xlu0 %983
  %985 = vrot.lane.b32.xlu0 %v666, 64
  %v986 = vpop.permute.xlu0 %985
  %988 = vrot.lane.b32.xlu0 %v677, 64
  %v989 = vpop.permute.xlu0 %988
  %990 = vrot.lane.b32.xlu0 %v679, 64
  %v991 = vpop.permute.xlu0 %990
  %992 = vrot.lane.b32.xlu0 %v681, 64
  %v993 = vpop.permute.xlu0 %992
  %994 = vrot.lane.b32.xlu0 %v683, 64
  %v995 = vpop.permute.xlu0 %994
  %996 = vrot.lane.b32.xlu0 %v687, 64
  %v997 = vpop.permute.xlu0 %996
  %vm998 = vcmask 523264
  %v1000 = vsel %vm998, %v284, %v913
  %v1003 = vsel %vm998, %v285, %v915
  %v1006 = vsel %vm998, %v286, %v917
  %v1009 = vsel %vm998, %v287, %v919
  %v1012 = vsel %vm998, %v288, %v921
  %v1016 = vsel %vm998, %v301, %v924
  %v1020 = vsel %vm998, %v309, %v926
  %v1024 = vsel %vm998, %v317, %v928
  %v1028 = vsel %vm998, %v325, %v930
  %v1032 = vsel %vm998, %v338, %v932
  %v1036 = vsel %vm998, %v414, %v934
  %v1040 = vsel %vm998, %v416, %v936
  %v1044 = vsel %vm998, %v418, %v938
  %v1048 = vsel %vm998, %v420, %v940
  %v1051 = vsel %vm998, %v425, %v942
  %v1054 = vsel %vm998, %v518, %v945
  %v1057 = vsel %vm998, %v519, %v947
  %v1060 = vsel %vm998, %v520, %v949
  %v1063 = vsel %vm998, %v521, %v951
  %v1066 = vsel %vm998, %v522, %v953
  %v1070 = vsel %vm998, %v534, %v956
  %v1074 = vsel %vm998, %v542, %v958
  %v1078 = vsel %vm998, %v550, %v960
  %v1082 = vsel %vm998, %v558, %v962
  %v1086 = vsel %vm998, %v569, %v964
  %v1090 = vsel %vm998, %v586, %v967
  %v1094 = vsel %vm998, %v588, %v969
  %v1098 = vsel %vm998, %v590, %v971
  %v1102 = vsel %vm998, %v592, %v973
  %v1105 = vsel %vm998, %v597, %v975
  %v1109 = vsel %vm998, %v618, %v978
  %v1113 = vsel %vm998, %v622, %v980
  %v1117 = vsel %vm998, %v626, %v982
  %v1121 = vsel %vm998, %v630, %v984
  %v1125 = vsel %vm998, %v639, %v986
  %v1128 = vsel %vm998, %v667, %v989
  %v1131 = vsel %vm998, %v668, %v991
  %v1134 = vsel %vm998, %v669, %v993
  %v1137 = vsel %vm998, %v670, %v995
  %v1140 = vsel %vm998, %v674, %v997
  %1143 = vrot.lane.b32.xlu0 %v707, 64
  %v1144 = vpop.permute.xlu0 %1143
  %1145 = vrot.lane.b32.xlu0 %v711, 64
  %v1146 = vpop.permute.xlu0 %1145
  %1147 = vrot.lane.b32.xlu0 %v715, 64
  %v1148 = vpop.permute.xlu0 %1147
  %1149 = vrot.lane.b32.xlu0 %v719, 64
  %v1150 = vpop.permute.xlu0 %1149
  %1151 = vrot.lane.b32.xlu0 %v727, 64
  %v1152 = vpop.permute.xlu0 %1151
  %1154 = vrot.lane.b32.xlu0 %v755, 64
  %v1155 = vpop.permute.xlu0 %1154
  %1156 = vrot.lane.b32.xlu0 %v756, 64
  %v1157 = vpop.permute.xlu0 %1156
  %1158 = vrot.lane.b32.xlu0 %v757, 64
  %v1159 = vpop.permute.xlu0 %1158
  %1160 = vrot.lane.b32.xlu0 %v758, 64
  %v1161 = vpop.permute.xlu0 %1160
  %1162 = vrot.lane.b32.xlu0 %v761, 64
  %v1163 = vpop.permute.xlu0 %1162
  %1165 = vrot.lane.b32.xlu0 %v784, 64
  %v1166 = vpop.permute.xlu0 %1165
  %1167 = vrot.lane.b32.xlu0 %v786, 64
  %v1168 = vpop.permute.xlu0 %1167
  %1169 = vrot.lane.b32.xlu0 %v788, 64
  %v1170 = vpop.permute.xlu0 %1169
  %1171 = vrot.lane.b32.xlu0 %v790, 64
  %v1172 = vpop.permute.xlu0 %1171
  %1173 = vrot.lane.b32.xlu0 %v794, 64
  %v1174 = vpop.permute.xlu0 %1173
  %1176 = vrot.lane.b32.xlu0 %v864, 64
  %v1177 = vpop.permute.xlu0 %1176
  %1178 = vrot.lane.b32.xlu0 %v873, 64
  %v1179 = vpop.permute.xlu0 %1178
  %1180 = vrot.lane.b32.xlu0 %v882, 64
  %v1181 = vpop.permute.xlu0 %1180
  %1182 = vrot.lane.b32.xlu0 %v891, 64
  %v1183 = vpop.permute.xlu0 %1182
  %1184 = vrot.lane.b32.xlu0 %v897, 64
  %v1185 = vpop.permute.xlu0 %1184
  %v1188 = vsel %vm998, %v690, %v1144
  %v1192 = vsel %vm998, %v692, %v1146
  %v1196 = vsel %vm998, %v694, %v1148
  %v1200 = vsel %vm998, %v696, %v1150
  %v1203 = vsel %vm998, %v700, %v1152
  %v1207 = vsel %vm998, %v734, %v1155
  %v1211 = vsel %vm998, %v738, %v1157
  %v1215 = vsel %vm998, %v742, %v1159
  %v1219 = vsel %vm998, %v746, %v1161
  %v1223 = vsel %vm998, %v754, %v1163
  %v1227 = vsel %vm998, %v765, %v1166
  %v1231 = vsel %vm998, %v767, %v1168
  %v1235 = vsel %vm998, %v769, %v1170
  %v1239 = vsel %vm998, %v771, %v1172
  %v1242 = vsel %vm998, %v776, %v1174
  %v1246 = vsel %vm998, %v812, %v1177
  %v1250 = vsel %vm998, %v821, %v1179
  %v1254 = vsel %vm998, %v830, %v1181
  %v1258 = vsel %vm998, %v838, %v1183
  %v1262 = vsel %vm998, %v847, %v1185
  %v1464 = vunpack.c.l.b16 %v64
  %v1465 = vunpack.c.l.b16 %v65
  %v1466 = vunpack.c.l.b16 %v66
  %v1467 = vunpack.c.l.b16 %v67
  %v1468 = vunpack.c.l.b16 %v68
  %v1469 = vunpack.c.l.b16 %v69
  %v1470 = vunpack.c.l.b16 %v70
  %v1471 = vunpack.c.l.b16 %v71
  %v1472 = vunpack.c.l.b16 %v72
  %v1473 = vunpack.c.l.b16 %v73
  %v1474 = vunpack.c.l.b16 %v74
  %v1475 = vunpack.c.l.b16 %v75
  %v1476 = vunpack.c.l.b16 %v76
  %v1477 = vunpack.c.l.b16 %v77
  %v1478 = vunpack.c.l.b16 %v78
  %v1479 = vunpack.c.l.b16 %v79
  %v1480 = vunpack.c.l.b16 %v80
  %v1481 = vunpack.c.l.b16 %v81
  %v1482 = vunpack.c.l.b16 %v82
  %v1483 = vunpack.c.l.b16 %v83
  %v1484 = vunpack.c.l.b16 %v84
  %v1485 = vunpack.c.l.b16 %v85
  %v1486 = vunpack.c.l.b16 %v86
  %v1487 = vunpack.c.l.b16 %v87
  %v1488 = vunpack.c.l.b16 %v88
  %v1489 = vunpack.c.l.b16 %v89
  %v1490 = vunpack.c.l.b16 %v90
  %v1491 = vunpack.c.l.b16 %v91
  %v1492 = vunpack.c.l.b16 %v92
  %v1493 = vunpack.c.l.b16 %v93
  %v1494 = vunpack.c.l.b16 %v94
  %v1495 = vunpack.c.l.b16 %v95
  %v1496 = vunpack.c.l.b16 %v96
  %v1497 = vunpack.c.l.b16 %v97
  %v1498 = vunpack.c.l.b16 %v98
  %v1499 = vunpack.c.l.b16 %v99
  %v1500 = vunpack.c.l.b16 %v100
  %v1501 = vunpack.c.l.b16 %v101
  %v1502 = vunpack.c.l.b16 %v102
  %v1503 = vunpack.c.l.b16 %v103
  %v1504 = vunpack.c.l.b16 %v104
  %v1505 = vunpack.c.l.b16 %v105
  %v1506 = vunpack.c.l.b16 %v106
  %v1507 = vunpack.c.l.b16 %v107
  %v1508 = vunpack.c.l.b16 %v108
  %v1509 = vunpack.c.l.b16 %v109
  %v1510 = vunpack.c.l.b16 %v110
  %v1511 = vunpack.c.l.b16 %v111
  %v1512 = vunpack.c.l.b16 %v112
  %v1513 = vunpack.c.l.b16 %v113
  %v1514 = vunpack.c.l.b16 %v114
  %v1515 = vunpack.c.l.b16 %v115
  %v1516 = vunpack.c.l.b16 %v116
  %v1517 = vunpack.c.l.b16 %v117
  %v1518 = vunpack.c.l.b16 %v118
  %v1519 = vunpack.c.l.b16 %v119
  %v1520 = vunpack.c.l.b16 %v120
  %v1521 = vunpack.c.l.b16 %v121
  %v1522 = vunpack.c.l.b16 %v122
  %v1523 = vunpack.c.l.b16 %v123
  %v1524 = vunpack.c.l.b16 %v124
  %v1525 = vunpack.c.l.b16 %v125
  %v1526 = vunpack.c.l.b16 %v126
  %v1527 = vunpack.c.l.b16 %v127
  %v1528 = vunpack.c.l.b16 %v128
  %v1529 = vunpack.c.l.b16 %v129
  %v1530 = vunpack.c.l.b16 %v130
  %v1531 = vunpack.c.l.b16 %v131
  %v1532 = vunpack.c.l.b16 %v132
  %v1533 = vunpack.c.l.b16 %v133
  %v1534 = vunpack.c.l.b16 %v134
  %v1535 = vunpack.c.l.b16 %v135
  %v1536 = vunpack.c.l.b16 %v136
  %v1537 = vunpack.c.l.b16 %v137
  %v1538 = vunpack.c.l.b16 %v138
  %v1539 = vunpack.c.l.b16 %v139
  %v1540 = vunpack.c.l.b16 %v140
  %v1541 = vunpack.c.l.b16 %v141
  %v1542 = vunpack.c.l.b16 %v142
  %v1543 = vunpack.c.l.b16 %v143
  %v1544 = vunpack.c.l.b16 %v144
  %v1545 = vunpack.c.l.b16 %v145
  %v1546 = vunpack.c.l.b16 %v146
  %v1547 = vunpack.c.l.b16 %v147
  %v1548 = vunpack.c.l.b16 %v148
  %v1549 = vunpack.c.l.b16 %v149
  %v1550 = vunpack.c.l.b16 %v150
  %v1551 = vunpack.c.l.b16 %v151
  %v1552 = vunpack.c.l.b16 %v152
  %v1553 = vunpack.c.l.b16 %v153
  %v1554 = vunpack.c.l.b16 %v154
  %v1555 = vunpack.c.l.b16 %v155
  %v1556 = vunpack.c.l.b16 %v156
  %v1557 = vunpack.c.l.b16 %v157
  %v1558 = vunpack.c.l.b16 %v158
  %v1559 = vunpack.c.l.b16 %v159
  %v1560 = vunpack.c.l.b16 %v160
  %v1561 = vunpack.c.l.b16 %v161
  %v1562 = vunpack.c.l.b16 %v162
  %v1563 = vunpack.c.l.b16 %v163
  %v1564 = vunpack.c.l.b16 %v164
  %v1565 = vunpack.c.l.b16 %v165
  %v1566 = vunpack.c.l.b16 %v166
  %v1567 = vunpack.c.l.b16 %v167
  %v1568 = vunpack.c.l.b16 %v168
  %v1569 = vunpack.c.l.b16 %v169
  %v1570 = vunpack.c.l.b16 %v170
  %v1571 = vunpack.c.l.b16 %v171
  %v1572 = vunpack.c.l.b16 %v172
  %v1573 = vunpack.c.l.b16 %v173
  %v1574 = vunpack.c.l.b16 %v174
  %v1575 = vunpack.c.l.b16 %v175
  %v1576 = vunpack.c.l.b16 %v176
  %v1577 = vunpack.c.l.b16 %v177
  %v1578 = vunpack.c.l.b16 %v178
  %v1579 = vunpack.c.l.b16 %v179
  %v1580 = vunpack.c.l.b16 %v180
  %v1581 = vunpack.c.l.b16 %v181
  %v1582 = vunpack.c.l.b16 %v182
  %v1583 = vunpack.c.l.b16 %v183
  %v1584 = vunpack.c.l.b16 %v184
  %v1585 = vunpack.c.l.b16 %v185
  %v1586 = vunpack.c.l.b16 %v186
  %v1587 = vunpack.c.l.b16 %v187
  %v1588 = vunpack.c.l.b16 %v188
  %v1589 = vunpack.c.l.b16 %v189
  %v1590 = vunpack.c.l.b16 %v190
  %v1591 = vunpack.c.l.b16 %v191
  %v1592 = vunpack.c.l.b16 %v192
  %v1593 = vunpack.c.l.b16 %v193
  %v1594 = vunpack.c.l.b16 %v194
  %v1595 = vunpack.c.l.b16 %v195
  %v1596 = vunpack.c.l.b16 %v196
  %v1597 = vunpack.c.l.b16 %v197
  %v1598 = vunpack.c.l.b16 %v198
  %v1599 = vunpack.c.l.b16 %v199
  %v1600 = vunpack.c.l.b16 %v200
  %v1601 = vunpack.c.l.b16 %v201
  %v1602 = vunpack.c.l.b16 %v202
  %v1603 = vunpack.c.l.b16 %v203
  %v1604 = vunpack.c.l.b16 %v204
  %v1605 = vunpack.c.l.b16 %v205
  %v1606 = vunpack.c.l.b16 %v206
  %v1607 = vunpack.c.l.b16 %v207
  %v1608 = vunpack.c.l.b16 %v208
  %v1609 = vunpack.c.l.b16 %v209
  %v1610 = vunpack.c.l.b16 %v210
  %v1611 = vunpack.c.l.b16 %v211
  %v1612 = vunpack.c.l.b16 %v212
  %v1613 = vunpack.c.l.b16 %v213
  %v1614 = vunpack.c.l.b16 %v214
  %v1615 = vunpack.c.l.b16 %v215
  %v1616 = vunpack.c.l.b16 %v216
  %v1617 = vunpack.c.l.b16 %v217
  %v1618 = vunpack.c.l.b16 %v218
  %v1619 = vunpack.c.l.b16 %v219
  %v1620 = vunpack.c.l.b16 %v220
  %v1621 = vunpack.c.l.b16 %v221
  %v1622 = vunpack.c.l.b16 %v222
  %v1623 = vunpack.c.l.b16 %v223
  %v1624 = vunpack.c.l.b16 %v224
  %v1625 = vunpack.c.l.b16 %v225
  %v1626 = vunpack.c.l.b16 %v226
  %v1627 = vunpack.c.l.b16 %v227
  %v1628 = vunpack.c.l.b16 %v228
  %v1629 = vunpack.c.l.b16 %v229
  %v1630 = vunpack.c.l.b16 %v230
  %v1631 = vunpack.c.l.b16 %v231
  %v1632 = vunpack.c.l.b16 %v232
  %v1633 = vunpack.c.l.b16 %v233
  %v1634 = vunpack.c.l.b16 %v234
  %v1635 = vunpack.c.l.b16 %v235
  %v1636 = vunpack.c.l.b16 %v236
  %v1637 = vunpack.c.l.b16 %v237
  %v1638 = vunpack.c.l.b16 %v238
  %v1639 = vunpack.c.l.b16 %v239
  %v1640 = vunpack.c.l.b16 %v240
  %v1641 = vunpack.c.l.b16 %v241
  %v1642 = vunpack.c.l.b16 %v242
  %v1643 = vunpack.c.l.b16 %v243
  %v1644 = vunpack.c.l.b16 %v244
  %v1645 = vunpack.c.l.b16 %v245
  %v1646 = vunpack.c.l.b16 %v246
  %v1647 = vunpack.c.l.b16 %v247
  %v1648 = vunpack.c.l.b16 %v248
  %v1649 = vunpack.c.l.b16 %v249
  %v1650 = vunpack.c.l.b16 %v250
  %v1651 = vunpack.c.l.b16 %v251
  %v1652 = vunpack.c.l.b16 %v252
  %v1653 = vunpack.c.l.b16 %v253
  %v1654 = vunpack.c.l.b16 %v254
  %v1655 = vunpack.c.l.b16 %v255
  %v1656 = vunpack.c.l.b16 %v256
  %v1657 = vunpack.c.l.b16 %v257
  %v1658 = vunpack.c.l.b16 %v258
  %v1659 = vunpack.c.l.b16 %v259
  %v1660 = vunpack.c.l.b16 %v260
  %v1661 = vunpack.c.l.b16 %v261
  %v1662 = vunpack.c.l.b16 %v262
  %v1663 = vunpack.c.l.b16 %v263
  %v1664 = vpack.c.b16 %v1465, %v1464
  %v1665 = vpack.c.b16 %v1467, %v1466
  %v1666 = vpack.c.b16 %v1469, %v1468
  %v1667 = vpack.c.b16 %v1471, %v1470
  %v1668 = vpack.c.b16 %v1473, %v1472
  %v1669 = vpack.c.b16 %v1475, %v1474
  %v1670 = vpack.c.b16 %v1477, %v1476
  %v1671 = vpack.c.b16 %v1479, %v1478
  %v1672 = vpack.c.b16 %v1481, %v1480
  %v1673 = vpack.c.b16 %v1483, %v1482
  %v1674 = vpack.c.b16 %v1485, %v1484
  %v1675 = vpack.c.b16 %v1487, %v1486
  %v1676 = vpack.c.b16 %v1489, %v1488
  %v1677 = vpack.c.b16 %v1491, %v1490
  %v1678 = vpack.c.b16 %v1493, %v1492
  %v1679 = vpack.c.b16 %v1495, %v1494
  %v1680 = vpack.c.b16 %v1497, %v1496
  %v1681 = vpack.c.b16 %v1499, %v1498
  %v1682 = vpack.c.b16 %v1501, %v1500
  %v1683 = vpack.c.b16 %v1503, %v1502
  %v1684 = vpack.c.b16 %v1505, %v1504
  %v1685 = vpack.c.b16 %v1507, %v1506
  %v1686 = vpack.c.b16 %v1509, %v1508
  %v1687 = vpack.c.b16 %v1511, %v1510
  %v1688 = vpack.c.b16 %v1513, %v1512
  %v1689 = vpack.c.b16 %v1515, %v1514
  %v1690 = vpack.c.b16 %v1517, %v1516
  %v1691 = vpack.c.b16 %v1519, %v1518
  %v1692 = vpack.c.b16 %v1521, %v1520
  %v1693 = vpack.c.b16 %v1523, %v1522
  %v1694 = vpack.c.b16 %v1525, %v1524
  %v1695 = vpack.c.b16 %v1527, %v1526
  %v1696 = vpack.c.b16 %v1529, %v1528
  %v1697 = vpack.c.b16 %v1531, %v1530
  %v1698 = vpack.c.b16 %v1533, %v1532
  %v1699 = vpack.c.b16 %v1535, %v1534
  %v1700 = vpack.c.b16 %v1537, %v1536
  %v1701 = vpack.c.b16 %v1539, %v1538
  %v1702 = vpack.c.b16 %v1541, %v1540
  %v1703 = vpack.c.b16 %v1543, %v1542
  %v1704 = vpack.c.b16 %v1545, %v1544
  %v1705 = vpack.c.b16 %v1547, %v1546
  %v1706 = vpack.c.b16 %v1549, %v1548
  %v1707 = vpack.c.b16 %v1551, %v1550
  %v1708 = vpack.c.b16 %v1553, %v1552
  %v1709 = vpack.c.b16 %v1555, %v1554
  %v1710 = vpack.c.b16 %v1557, %v1556
  %v1711 = vpack.c.b16 %v1559, %v1558
  %v1712 = vpack.c.b16 %v1561, %v1560
  %v1713 = vpack.c.b16 %v1563, %v1562
  %v1714 = vpack.c.b16 %v1565, %v1564
  %v1715 = vpack.c.b16 %v1567, %v1566
  %v1716 = vpack.c.b16 %v1569, %v1568
  %v1717 = vpack.c.b16 %v1571, %v1570
  %v1718 = vpack.c.b16 %v1573, %v1572
  %v1719 = vpack.c.b16 %v1575, %v1574
  %v1720 = vpack.c.b16 %v1577, %v1576
  %v1721 = vpack.c.b16 %v1579, %v1578
  %v1722 = vpack.c.b16 %v1581, %v1580
  %v1723 = vpack.c.b16 %v1583, %v1582
  %v1724 = vpack.c.b16 %v1585, %v1584
  %v1725 = vpack.c.b16 %v1587, %v1586
  %v1726 = vpack.c.b16 %v1589, %v1588
  %v1727 = vpack.c.b16 %v1591, %v1590
  %v1728 = vpack.c.b16 %v1593, %v1592
  %v1729 = vpack.c.b16 %v1595, %v1594
  %v1730 = vpack.c.b16 %v1597, %v1596
  %v1731 = vpack.c.b16 %v1599, %v1598
  %v1732 = vpack.c.b16 %v1601, %v1600
  %v1733 = vpack.c.b16 %v1603, %v1602
  %v1734 = vpack.c.b16 %v1605, %v1604
  %v1735 = vpack.c.b16 %v1607, %v1606
  %v1736 = vpack.c.b16 %v1609, %v1608
  %v1737 = vpack.c.b16 %v1611, %v1610
  %v1738 = vpack.c.b16 %v1613, %v1612
  %v1739 = vpack.c.b16 %v1615, %v1614
  %v1740 = vpack.c.b16 %v1617, %v1616
  %v1741 = vpack.c.b16 %v1619, %v1618
  %v1742 = vpack.c.b16 %v1621, %v1620
  %v1743 = vpack.c.b16 %v1623, %v1622
  %v1744 = vpack.c.b16 %v1625, %v1624
  %v1745 = vpack.c.b16 %v1627, %v1626
  %v1746 = vpack.c.b16 %v1629, %v1628
  %v1747 = vpack.c.b16 %v1631, %v1630
  %v1748 = vpack.c.b16 %v1633, %v1632
  %v1749 = vpack.c.b16 %v1635, %v1634
  %v1750 = vpack.c.b16 %v1637, %v1636
  %v1751 = vpack.c.b16 %v1639, %v1638
  %v1752 = vpack.c.b16 %v1641, %v1640
  %v1753 = vpack.c.b16 %v1643, %v1642
  %v1754 = vpack.c.b16 %v1645, %v1644
  %v1755 = vpack.c.b16 %v1647, %v1646
  %v1756 = vpack.c.b16 %v1649, %v1648
  %v1757 = vpack.c.b16 %v1651, %v1650
  %v1758 = vpack.c.b16 %v1653, %v1652
  %v1759 = vpack.c.b16 %v1655, %v1654
  %v1760 = vpack.c.b16 %v1657, %v1656
  %v1761 = vpack.c.b16 %v1659, %v1658
  %v1762 = vpack.c.b16 %v1661, %v1660
  %v1763 = vpack.c.b16 %v1663, %v1662
  %v1865 = vsel %vm998, %v900, 0
  %v1868 = vsel %vm998, %v902, 0
  %v1871 = vsel %vm998, %v904, 0
  %v1874 = vsel %vm998, %v906, 0
  %v1876 = vsel %vm998, %v911, 0
  %1878 = vmatpush.bf16.msra.mxu0 %v1671
  %1879 = vmatpush.bf16.msra.mxu0 %v1670
  %1880 = vmatpush.bf16.msra.mxu0 %v1669
  %1881 = vmatpush.bf16.msra.mxu0 %v1668
  %1882 = vmatpush.bf16.msra.mxu0 %v1667
  %1883 = vmatpush.bf16.msra.mxu0 %v1666
  %1884 = vmatpush.bf16.msra.mxu0 %v1665
  %1885 = vmatpush.bf16.msra.mxu0 %v1664
  %1886 = vmatmul.bf16.gmra.mxu0 %v1000
  %v1887 = vpop.f32.mrf.mxu0
  %v1888 = vadd.f32 0.0, %v1887
  %v1889 = vpop.f32.mrf.mxu0
  %v1890 = vadd.f32 0.0, %v1889
  %1891 = vmatmul.bf16.gmra.mxu0 %v1003
  %v1892 = vpop.f32.mrf.mxu0
  %v1893 = vadd.f32 0.0, %v1892
  %v1894 = vpop.f32.mrf.mxu0
  %v1895 = vadd.f32 0.0, %v1894
  %1896 = vmatmul.bf16.gmra.mxu0 %v1006
  %v1897 = vpop.f32.mrf.mxu0
  %v1898 = vadd.f32 0.0, %v1897
  %v1899 = vpop.f32.mrf.mxu0
  %v1900 = vadd.f32 0.0, %v1899
  %1901 = vmatmul.bf16.gmra.mxu0 %v1009
  %v1902 = vpop.f32.mrf.mxu0
  %v1903 = vadd.f32 0.0, %v1902
  %v1904 = vpop.f32.mrf.mxu0
  %v1905 = vadd.f32 0.0, %v1904
  %1906 = vmatmul.bf16.gmra.mxu0 %v1012
  %v1907 = vpop.f32.mrf.mxu0
  %v1908 = vadd.f32 0.0, %v1907
  %v1909 = vpop.f32.mrf.mxu0
  %v1910 = vadd.f32 0.0, %v1909
  %1911 = vdwg.mxu0
  %1912 = vmatpush.bf16.msra.mxu0 %v1679
  %1913 = vmatpush.bf16.msra.mxu0 %v1678
  %1914 = vmatpush.bf16.msra.mxu0 %v1677
  %1915 = vmatpush.bf16.msra.mxu0 %v1676
  %1916 = vmatpush.bf16.msra.mxu0 %v1675
  %1917 = vmatpush.bf16.msra.mxu0 %v1674
  %1918 = vmatpush.bf16.msra.mxu0 %v1673
  %1919 = vmatpush.bf16.msra.mxu0 %v1672
  %1920 = vmatmul.bf16.gmra.mxu0 %v1016
  %v1921 = vpop.f32.mrf.mxu0
  %v1922 = vadd.f32 %v1888, %v1921
  %v1923 = vpop.f32.mrf.mxu0
  %v1924 = vadd.f32 %v1890, %v1923
  %1925 = vmatmul.bf16.gmra.mxu0 %v1020
  %v1926 = vpop.f32.mrf.mxu0
  %v1927 = vadd.f32 %v1893, %v1926
  %v1928 = vpop.f32.mrf.mxu0
  %v1929 = vadd.f32 %v1895, %v1928
  %1930 = vmatmul.bf16.gmra.mxu0 %v1024
  %v1931 = vpop.f32.mrf.mxu0
  %v1932 = vadd.f32 %v1898, %v1931
  %v1933 = vpop.f32.mrf.mxu0
  %v1934 = vadd.f32 %v1900, %v1933
  %1935 = vmatmul.bf16.gmra.mxu0 %v1028
  %v1936 = vpop.f32.mrf.mxu0
  %v1937 = vadd.f32 %v1903, %v1936
  %v1938 = vpop.f32.mrf.mxu0
  %v1939 = vadd.f32 %v1905, %v1938
  %1940 = vmatmul.bf16.gmra.mxu0 %v1032
  %v1941 = vpop.f32.mrf.mxu0
  %v1942 = vadd.f32 %v1908, %v1941
  %v1943 = vpop.f32.mrf.mxu0
  %v1944 = vadd.f32 %v1910, %v1943
  %1945 = vdwg.mxu0
  %1946 = vmatpush.bf16.msra.mxu0 %v1687
  %1947 = vmatpush.bf16.msra.mxu0 %v1686
  %1948 = vmatpush.bf16.msra.mxu0 %v1685
  %1949 = vmatpush.bf16.msra.mxu0 %v1684
  %1950 = vmatpush.bf16.msra.mxu0 %v1683
  %1951 = vmatpush.bf16.msra.mxu0 %v1682
  %1952 = vmatpush.bf16.msra.mxu0 %v1681
  %1953 = vmatpush.bf16.msra.mxu0 %v1680
  %1954 = vmatmul.bf16.gmra.mxu0 %v1036
  %v1955 = vpop.f32.mrf.mxu0
  %v1956 = vadd.f32 %v1922, %v1955
  %v1957 = vpop.f32.mrf.mxu0
  %v1958 = vadd.f32 %v1924, %v1957
  %1959 = vmatmul.bf16.gmra.mxu0 %v1040
  %v1960 = vpop.f32.mrf.mxu0
  %v1961 = vadd.f32 %v1927, %v1960
  %v1962 = vpop.f32.mrf.mxu0
  %v1963 = vadd.f32 %v1929, %v1962
  %1964 = vmatmul.bf16.gmra.mxu0 %v1044
  %v1965 = vpop.f32.mrf.mxu0
  %v1966 = vadd.f32 %v1932, %v1965
  %v1967 = vpop.f32.mrf.mxu0
  %v1968 = vadd.f32 %v1934, %v1967
  %1969 = vmatmul.bf16.gmra.mxu0 %v1048
  %v1970 = vpop.f32.mrf.mxu0
  %v1971 = vadd.f32 %v1937, %v1970
  %v1972 = vpop.f32.mrf.mxu0
  %v1973 = vadd.f32 %v1939, %v1972
  %1974 = vmatmul.bf16.gmra.mxu0 %v1051
  %v1975 = vpop.f32.mrf.mxu0
  %v1976 = vadd.f32 %v1942, %v1975
  %v1977 = vpop.f32.mrf.mxu0
  %v1978 = vadd.f32 %v1944, %v1977
  %1979 = vdwg.mxu0
  %1980 = vmatpush.bf16.msra.mxu0 %v1695
  %1981 = vmatpush.bf16.msra.mxu0 %v1694
  %1982 = vmatpush.bf16.msra.mxu0 %v1693
  %1983 = vmatpush.bf16.msra.mxu0 %v1692
  %1984 = vmatpush.bf16.msra.mxu0 %v1691
  %1985 = vmatpush.bf16.msra.mxu0 %v1690
  %1986 = vmatpush.bf16.msra.mxu0 %v1689
  %1987 = vmatpush.bf16.msra.mxu0 %v1688
  %1988 = vmatmul.bf16.gmra.mxu0 %v1054
  %v1989 = vpop.f32.mrf.mxu0
  %v1990 = vadd.f32 %v1956, %v1989
  %v1991 = vpop.f32.mrf.mxu0
  %v1992 = vadd.f32 %v1958, %v1991
  %1993 = vmatmul.bf16.gmra.mxu0 %v1057
  %v1994 = vpop.f32.mrf.mxu0
  %v1995 = vadd.f32 %v1961, %v1994
  %v1996 = vpop.f32.mrf.mxu0
  %v1997 = vadd.f32 %v1963, %v1996
  %1998 = vmatmul.bf16.gmra.mxu0 %v1060
  %v1999 = vpop.f32.mrf.mxu0
  %v2000 = vadd.f32 %v1966, %v1999
  %v2001 = vpop.f32.mrf.mxu0
  %v2002 = vadd.f32 %v1968, %v2001
  %2003 = vmatmul.bf16.gmra.mxu0 %v1063
  %v2004 = vpop.f32.mrf.mxu0
  %v2005 = vadd.f32 %v1971, %v2004
  %v2006 = vpop.f32.mrf.mxu0
  %v2007 = vadd.f32 %v1973, %v2006
  %2008 = vmatmul.bf16.gmra.mxu0 %v1066
  %v2009 = vpop.f32.mrf.mxu0
  %v2010 = vadd.f32 %v1976, %v2009
  %v2011 = vpop.f32.mrf.mxu0
  %v2012 = vadd.f32 %v1978, %v2011
  %2013 = vdwg.mxu0
  %2014 = vmatpush.bf16.msra.mxu0 %v1703
  %2015 = vmatpush.bf16.msra.mxu0 %v1702
  %2016 = vmatpush.bf16.msra.mxu0 %v1701
  %2017 = vmatpush.bf16.msra.mxu0 %v1700
  %2018 = vmatpush.bf16.msra.mxu0 %v1699
  %2019 = vmatpush.bf16.msra.mxu0 %v1698
  %2020 = vmatpush.bf16.msra.mxu0 %v1697
  %2021 = vmatpush.bf16.msra.mxu0 %v1696
  %2022 = vmatmul.bf16.gmra.mxu0 %v1070
  %v2023 = vpop.f32.mrf.mxu0
  %v2024 = vadd.f32 %v1990, %v2023
  %v2025 = vpop.f32.mrf.mxu0
  %v2026 = vadd.f32 %v1992, %v2025
  %2027 = vmatmul.bf16.gmra.mxu0 %v1074
  %v2028 = vpop.f32.mrf.mxu0
  %v2029 = vadd.f32 %v1995, %v2028
  %v2030 = vpop.f32.mrf.mxu0
  %v2031 = vadd.f32 %v1997, %v2030
  %2032 = vmatmul.bf16.gmra.mxu0 %v1078
  %v2033 = vpop.f32.mrf.mxu0
  %v2034 = vadd.f32 %v2000, %v2033
  %v2035 = vpop.f32.mrf.mxu0
  %v2036 = vadd.f32 %v2002, %v2035
  %2037 = vmatmul.bf16.gmra.mxu0 %v1082
  %v2038 = vpop.f32.mrf.mxu0
  %v2039 = vadd.f32 %v2005, %v2038
  %v2040 = vpop.f32.mrf.mxu0
  %v2041 = vadd.f32 %v2007, %v2040
  %2042 = vmatmul.bf16.gmra.mxu0 %v1086
  %v2043 = vpop.f32.mrf.mxu0
  %v2044 = vadd.f32 %v2010, %v2043
  %v2045 = vpop.f32.mrf.mxu0
  %v2046 = vadd.f32 %v2012, %v2045
  %2047 = vdwg.mxu0
  %2048 = vmatpush.bf16.msra.mxu0 %v1711
  %2049 = vmatpush.bf16.msra.mxu0 %v1710
  %2050 = vmatpush.bf16.msra.mxu0 %v1709
  %2051 = vmatpush.bf16.msra.mxu0 %v1708
  %2052 = vmatpush.bf16.msra.mxu0 %v1707
  %2053 = vmatpush.bf16.msra.mxu0 %v1706
  %2054 = vmatpush.bf16.msra.mxu0 %v1705
  %2055 = vmatpush.bf16.msra.mxu0 %v1704
  %2056 = vmatmul.bf16.gmra.mxu0 %v1090
  %v2057 = vpop.f32.mrf.mxu0
  %v2058 = vadd.f32 %v2024, %v2057
  %v2059 = vpop.f32.mrf.mxu0
  %v2060 = vadd.f32 %v2026, %v2059
  %2061 = vmatmul.bf16.gmra.mxu0 %v1094
  %v2062 = vpop.f32.mrf.mxu0
  %v2063 = vadd.f32 %v2029, %v2062
  %v2064 = vpop.f32.mrf.mxu0
  %v2065 = vadd.f32 %v2031, %v2064
  %2066 = vmatmul.bf16.gmra.mxu0 %v1098
  %v2067 = vpop.f32.mrf.mxu0
  %v2068 = vadd.f32 %v2034, %v2067
  %v2069 = vpop.f32.mrf.mxu0
  %v2070 = vadd.f32 %v2036, %v2069
  %2071 = vmatmul.bf16.gmra.mxu0 %v1102
  %v2072 = vpop.f32.mrf.mxu0
  %v2073 = vadd.f32 %v2039, %v2072
  %v2074 = vpop.f32.mrf.mxu0
  %v2075 = vadd.f32 %v2041, %v2074
  %2076 = vmatmul.bf16.gmra.mxu0 %v1105
  %v2077 = vpop.f32.mrf.mxu0
  %v2078 = vadd.f32 %v2044, %v2077
  %v2079 = vpop.f32.mrf.mxu0
  %v2080 = vadd.f32 %v2046, %v2079
  %2081 = vdwg.mxu0
  %2082 = vmatpush.bf16.msra.mxu0 %v1719
  %2083 = vmatpush.bf16.msra.mxu0 %v1718
  %2084 = vmatpush.bf16.msra.mxu0 %v1717
  %2085 = vmatpush.bf16.msra.mxu0 %v1716
  %2086 = vmatpush.bf16.msra.mxu0 %v1715
  %2087 = vmatpush.bf16.msra.mxu0 %v1714
  %2088 = vmatpush.bf16.msra.mxu0 %v1713
  %2089 = vmatpush.bf16.msra.mxu0 %v1712
  %2090 = vmatmul.bf16.gmra.mxu0 %v1109
  %v2091 = vpop.f32.mrf.mxu0
  %v2092 = vadd.f32 %v2058, %v2091
  %v2093 = vpop.f32.mrf.mxu0
  %v2094 = vadd.f32 %v2060, %v2093
  %2095 = vmatmul.bf16.gmra.mxu0 %v1113
  %v2096 = vpop.f32.mrf.mxu0
  %v2097 = vadd.f32 %v2063, %v2096
  %v2098 = vpop.f32.mrf.mxu0
  %v2099 = vadd.f32 %v2065, %v2098
  %2100 = vmatmul.bf16.gmra.mxu0 %v1117
  %v2101 = vpop.f32.mrf.mxu0
  %v2102 = vadd.f32 %v2068, %v2101
  %v2103 = vpop.f32.mrf.mxu0
  %v2104 = vadd.f32 %v2070, %v2103
  %2105 = vmatmul.bf16.gmra.mxu0 %v1121
  %v2106 = vpop.f32.mrf.mxu0
  %v2107 = vadd.f32 %v2073, %v2106
  %v2108 = vpop.f32.mrf.mxu0
  %v2109 = vadd.f32 %v2075, %v2108
  %2110 = vmatmul.bf16.gmra.mxu0 %v1125
  %v2111 = vpop.f32.mrf.mxu0
  %v2112 = vadd.f32 %v2078, %v2111
  %v2113 = vpop.f32.mrf.mxu0
  %v2114 = vadd.f32 %v2080, %v2113
  %2115 = vdwg.mxu0
  %2116 = vmatpush.bf16.msra.mxu0 %v1727
  %2117 = vmatpush.bf16.msra.mxu0 %v1726
  %2118 = vmatpush.bf16.msra.mxu0 %v1725
  %2119 = vmatpush.bf16.msra.mxu0 %v1724
  %2120 = vmatpush.bf16.msra.mxu0 %v1723
  %2121 = vmatpush.bf16.msra.mxu0 %v1722
  %2122 = vmatpush.bf16.msra.mxu0 %v1721
  %2123 = vmatpush.bf16.msra.mxu0 %v1720
  %2124 = vmatmul.bf16.gmra.mxu0 %v1128
  %v2125 = vpop.f32.mrf.mxu0
  %v2126 = vadd.f32 %v2092, %v2125
  %v2127 = vpop.f32.mrf.mxu0
  %v2128 = vadd.f32 %v2094, %v2127
  %2129 = vmatmul.bf16.gmra.mxu0 %v1131
  %v2130 = vpop.f32.mrf.mxu0
  %v2131 = vadd.f32 %v2097, %v2130
  %v2132 = vpop.f32.mrf.mxu0
  %v2133 = vadd.f32 %v2099, %v2132
  %2134 = vmatmul.bf16.gmra.mxu0 %v1134
  %v2135 = vpop.f32.mrf.mxu0
  %v2136 = vadd.f32 %v2102, %v2135
  %v2137 = vpop.f32.mrf.mxu0
  %v2138 = vadd.f32 %v2104, %v2137
  %2139 = vmatmul.bf16.gmra.mxu0 %v1137
  %v2140 = vpop.f32.mrf.mxu0
  %v2141 = vadd.f32 %v2107, %v2140
  %v2142 = vpop.f32.mrf.mxu0
  %v2143 = vadd.f32 %v2109, %v2142
  %2144 = vmatmul.bf16.gmra.mxu0 %v1140
  %v2145 = vpop.f32.mrf.mxu0
  %v2146 = vadd.f32 %v2112, %v2145
  %v2147 = vpop.f32.mrf.mxu0
  %v2148 = vadd.f32 %v2114, %v2147
  %2149 = vdwg.mxu0
  %2150 = vmatpush.bf16.msra.mxu0 %v1735
  %2151 = vmatpush.bf16.msra.mxu0 %v1734
  %2152 = vmatpush.bf16.msra.mxu0 %v1733
  %2153 = vmatpush.bf16.msra.mxu0 %v1732
  %2154 = vmatpush.bf16.msra.mxu0 %v1731
  %2155 = vmatpush.bf16.msra.mxu0 %v1730
  %2156 = vmatpush.bf16.msra.mxu0 %v1729
  %2157 = vmatpush.bf16.msra.mxu0 %v1728
  %2158 = vmatmul.bf16.gmra.mxu0 %v1188
  %v2159 = vpop.f32.mrf.mxu0
  %v2160 = vadd.f32 %v2126, %v2159
  %v2161 = vpop.f32.mrf.mxu0
  %v2162 = vadd.f32 %v2128, %v2161
  %2163 = vmatmul.bf16.gmra.mxu0 %v1192
  %v2164 = vpop.f32.mrf.mxu0
  %v2165 = vadd.f32 %v2131, %v2164
  %v2166 = vpop.f32.mrf.mxu0
  %v2167 = vadd.f32 %v2133, %v2166
  %2168 = vmatmul.bf16.gmra.mxu0 %v1196
  %v2169 = vpop.f32.mrf.mxu0
  %v2170 = vadd.f32 %v2136, %v2169
  %v2171 = vpop.f32.mrf.mxu0
  %v2172 = vadd.f32 %v2138, %v2171
  %2173 = vmatmul.bf16.gmra.mxu0 %v1200
  %v2174 = vpop.f32.mrf.mxu0
  %v2175 = vadd.f32 %v2141, %v2174
  %v2176 = vpop.f32.mrf.mxu0
  %v2177 = vadd.f32 %v2143, %v2176
  %2178 = vmatmul.bf16.gmra.mxu0 %v1203
  %v2179 = vpop.f32.mrf.mxu0
  %v2180 = vadd.f32 %v2146, %v2179
  %v2181 = vpop.f32.mrf.mxu0
  %v2182 = vadd.f32 %v2148, %v2181
  %2183 = vdwg.mxu0
  %2184 = vmatpush.bf16.msra.mxu0 %v1743
  %2185 = vmatpush.bf16.msra.mxu0 %v1742
  %2186 = vmatpush.bf16.msra.mxu0 %v1741
  %2187 = vmatpush.bf16.msra.mxu0 %v1740
  %2188 = vmatpush.bf16.msra.mxu0 %v1739
  %2189 = vmatpush.bf16.msra.mxu0 %v1738
  %2190 = vmatpush.bf16.msra.mxu0 %v1737
  %2191 = vmatpush.bf16.msra.mxu0 %v1736
  %2192 = vmatmul.bf16.gmra.mxu0 %v1207
  %v2193 = vpop.f32.mrf.mxu0
  %v2194 = vadd.f32 %v2160, %v2193
  %v2195 = vpop.f32.mrf.mxu0
  %v2196 = vadd.f32 %v2162, %v2195
  %2197 = vmatmul.bf16.gmra.mxu0 %v1211
  %v2198 = vpop.f32.mrf.mxu0
  %v2199 = vadd.f32 %v2165, %v2198
  %v2200 = vpop.f32.mrf.mxu0
  %v2201 = vadd.f32 %v2167, %v2200
  %2202 = vmatmul.bf16.gmra.mxu0 %v1215
  %v2203 = vpop.f32.mrf.mxu0
  %v2204 = vadd.f32 %v2170, %v2203
  %v2205 = vpop.f32.mrf.mxu0
  %v2206 = vadd.f32 %v2172, %v2205
  %2207 = vmatmul.bf16.gmra.mxu0 %v1219
  %v2208 = vpop.f32.mrf.mxu0
  %v2209 = vadd.f32 %v2175, %v2208
  %v2210 = vpop.f32.mrf.mxu0
  %v2211 = vadd.f32 %v2177, %v2210
  %2212 = vmatmul.bf16.gmra.mxu0 %v1223
  %v2213 = vpop.f32.mrf.mxu0
  %v2214 = vadd.f32 %v2180, %v2213
  %v2215 = vpop.f32.mrf.mxu0
  %v2216 = vadd.f32 %v2182, %v2215
  %2217 = vdwg.mxu0
  %2218 = vmatpush.bf16.msra.mxu0 %v1751
  %2219 = vmatpush.bf16.msra.mxu0 %v1750
  %2220 = vmatpush.bf16.msra.mxu0 %v1749
  %2221 = vmatpush.bf16.msra.mxu0 %v1748
  %2222 = vmatpush.bf16.msra.mxu0 %v1747
  %2223 = vmatpush.bf16.msra.mxu0 %v1746
  %2224 = vmatpush.bf16.msra.mxu0 %v1745
  %2225 = vmatpush.bf16.msra.mxu0 %v1744
  %2226 = vmatmul.bf16.gmra.mxu0 %v1227
  %v2227 = vpop.f32.mrf.mxu0
  %v2228 = vadd.f32 %v2194, %v2227
  %v2229 = vpop.f32.mrf.mxu0
  %v2230 = vadd.f32 %v2196, %v2229
  %2231 = vmatmul.bf16.gmra.mxu0 %v1231
  %v2232 = vpop.f32.mrf.mxu0
  %v2233 = vadd.f32 %v2199, %v2232
  %v2234 = vpop.f32.mrf.mxu0
  %v2235 = vadd.f32 %v2201, %v2234
  %2236 = vmatmul.bf16.gmra.mxu0 %v1235
  %v2237 = vpop.f32.mrf.mxu0
  %v2238 = vadd.f32 %v2204, %v2237
  %v2239 = vpop.f32.mrf.mxu0
  %v2240 = vadd.f32 %v2206, %v2239
  %2241 = vmatmul.bf16.gmra.mxu0 %v1239
  %v2242 = vpop.f32.mrf.mxu0
  %v2243 = vadd.f32 %v2209, %v2242
  %v2244 = vpop.f32.mrf.mxu0
  %v2245 = vadd.f32 %v2211, %v2244
  %2246 = vmatmul.bf16.gmra.mxu0 %v1242
  %v2247 = vpop.f32.mrf.mxu0
  %v2248 = vadd.f32 %v2214, %v2247
  %v2249 = vpop.f32.mrf.mxu0
  %v2250 = vadd.f32 %v2216, %v2249
  %2251 = vdwg.mxu0
  %2252 = vmatpush.bf16.msra.mxu0 %v1759
  %2253 = vmatpush.bf16.msra.mxu0 %v1758
  %2254 = vmatpush.bf16.msra.mxu0 %v1757
  %2255 = vmatpush.bf16.msra.mxu0 %v1756
  %2256 = vmatpush.bf16.msra.mxu0 %v1755
  %2257 = vmatpush.bf16.msra.mxu0 %v1754
  %2258 = vmatpush.bf16.msra.mxu0 %v1753
  %2259 = vmatpush.bf16.msra.mxu0 %v1752
  %2260 = vmatmul.bf16.gmra.mxu0 %v1246
  %v2261 = vpop.f32.mrf.mxu0
  %v2262 = vadd.f32 %v2228, %v2261
  %v2263 = vpop.f32.mrf.mxu0
  %v2264 = vadd.f32 %v2230, %v2263
  %2265 = vmatmul.bf16.gmra.mxu0 %v1250
  %v2266 = vpop.f32.mrf.mxu0
  %v2267 = vadd.f32 %v2233, %v2266
  %v2268 = vpop.f32.mrf.mxu0
  %v2269 = vadd.f32 %v2235, %v2268
  %2270 = vmatmul.bf16.gmra.mxu0 %v1254
  %v2271 = vpop.f32.mrf.mxu0
  %v2272 = vadd.f32 %v2238, %v2271
  %v2273 = vpop.f32.mrf.mxu0
  %v2274 = vadd.f32 %v2240, %v2273
  %2275 = vmatmul.bf16.gmra.mxu0 %v1258
  %v2276 = vpop.f32.mrf.mxu0
  %v2277 = vadd.f32 %v2243, %v2276
  %v2278 = vpop.f32.mrf.mxu0
  %v2279 = vadd.f32 %v2245, %v2278
  %2280 = vmatmul.bf16.gmra.mxu0 %v1262
  %v2281 = vpop.f32.mrf.mxu0
  %v2282 = vadd.f32 %v2248, %v2281
  %v2283 = vpop.f32.mrf.mxu0
  %v2284 = vadd.f32 %v2250, %v2283
  %2285 = vdwg.mxu0
  %2286 = vmatpush.bf16.msra.mxu0 0
  %2287 = vmatpush.bf16.msra.mxu0 0
  %2288 = vmatpush.bf16.msra.mxu0 0
  %2289 = vmatpush.bf16.msra.mxu0 0
  %2290 = vmatpush.bf16.msra.mxu0 %v1763
  %2291 = vmatpush.bf16.msra.mxu0 %v1762
  %2292 = vmatpush.bf16.msra.mxu0 %v1761
  %2293 = vmatpush.bf16.msra.mxu0 %v1760
  %2294 = vmatmul.bf16.gmra.mxu0 %v1865
  %v2295 = vpop.f32.mrf.mxu0
  %v2296 = vadd.f32 %v2262, %v2295
  %v2297 = vpop.f32.mrf.mxu0
  %v2298 = vadd.f32 %v2264, %v2297
  %2299 = vmatmul.bf16.gmra.mxu0 %v1868
  %v2300 = vpop.f32.mrf.mxu0
  %v2301 = vadd.f32 %v2267, %v2300
  %v2302 = vpop.f32.mrf.mxu0
  %v2303 = vadd.f32 %v2269, %v2302
  %2304 = vmatmul.bf16.gmra.mxu0 %v1871
  %v2305 = vpop.f32.mrf.mxu0
  %v2306 = vadd.f32 %v2272, %v2305
  %v2307 = vpop.f32.mrf.mxu0
  %v2308 = vadd.f32 %v2274, %v2307
  %2309 = vmatmul.bf16.gmra.mxu0 %v1874
  %v2310 = vpop.f32.mrf.mxu0
  %v2311 = vadd.f32 %v2277, %v2310
  %v2312 = vpop.f32.mrf.mxu0
  %v2313 = vadd.f32 %v2279, %v2312
  %2314 = vmatmul.bf16.gmra.mxu0 %v1876
  %v2315 = vpop.f32.mrf.mxu0
  %v2316 = vadd.f32 %v2282, %v2315
  %v2317 = vpop.f32.mrf.mxu0
  %v2318 = vadd.f32 %v2284, %v2317
  %2319 = vdwg.mxu0
  %v2320 = vrot.slane %v359, 1
  %v2321 = vrot.slane %v360, 1
  %v2322 = vsel %vm411, %v2320, %v2321
  %v2323 = vrot.slane %v361, 1
  %v2324 = vsel %vm411, %v2321, %v2323
  %v2325 = vrot.slane %v362, 1
  %v2326 = vsel %vm411, %v2323, %v2325
  %v2327 = vrot.slane %v363, 1
  %v2328 = vsel %vm411, %v2325, %v2327
  %v2329 = vrot.slane %v404, 1
  %v2332 = vsel %vm422, %v2327, %v2329
  %v2333 = vrot.slane %v518, 1
  %v2334 = vrot.slane %v519, 1
  %v2335 = vsel %vm411, %v2333, %v2334
  %v2336 = vrot.slane %v520, 1
  %v2337 = vsel %vm411, %v2334, %v2336
  %v2338 = vrot.slane %v521, 1
  %v2339 = vsel %vm411, %v2336, %v2338
  %v2340 = vrot.slane %v522, 1
  %v2341 = vsel %vm411, %v2338, %v2340
  %v2342 = vrot.slane %v563, 1
  %v2345 = vsel %vm422, %v2340, %v2342
  %v2346 = vsel %vm672, %v781, %v404
  %v2347 = vpack.c.b16 %v510, %v509
  %v2348 = vpack.c.b16 %v512, %v511
  %v2349 = vpack.c.b16 %v514, %v513
  %v2350 = vpack.c.b16 %v516, %v515
  %v2351 = vpack.c.b16 %v517, %v517
  %v2353 = vsel %vm672, %v2351, %v563
  %v2354 = vrot.slane %v777, 3
  %v2355 = vrot.slane %v778, 3
  %v2356 = vsel %vm583, %v2354, %v2355
  %v2357 = vrot.slane %v779, 3
  %v2358 = vsel %vm583, %v2355, %v2357
  %v2359 = vrot.slane %v780, 3
  %v2360 = vsel %vm583, %v2357, %v2359
  %v2361 = vrot.slane %v781, 3
  %v2362 = vsel %vm583, %v2359, %v2361
  %v2363 = vrot.slane %v359, 7
  %v2366 = vsel %vm908, %v2361, %v2363
  %2368 = vrot.lane.b32.xlu0 %v301, 64
  %v2369 = vpop.permute.xlu0 %2368
  %2370 = vrot.lane.b32.xlu0 %v309, 64
  %v2371 = vpop.permute.xlu0 %2370
  %2372 = vrot.lane.b32.xlu0 %v317, 64
  %v2373 = vpop.permute.xlu0 %2372
  %2374 = vrot.lane.b32.xlu0 %v325, 64
  %v2375 = vpop.permute.xlu0 %2374
  %2376 = vrot.lane.b32.xlu0 %v338, 64
  %v2377 = vpop.permute.xlu0 %2376
  %2379 = vrot.lane.b32.xlu0 %v414, 64
  %v2380 = vpop.permute.xlu0 %2379
  %2381 = vrot.lane.b32.xlu0 %v416, 64
  %v2382 = vpop.permute.xlu0 %2381
  %2383 = vrot.lane.b32.xlu0 %v418, 64
  %v2384 = vpop.permute.xlu0 %2383
  %2385 = vrot.lane.b32.xlu0 %v420, 64
  %v2386 = vpop.permute.xlu0 %2385
  %2387 = vrot.lane.b32.xlu0 %v425, 64
  %v2388 = vpop.permute.xlu0 %2387
  %2389 = vrot.lane.b32.xlu0 %v518, 64
  %v2390 = vpop.permute.xlu0 %2389
  %2391 = vrot.lane.b32.xlu0 %v519, 64
  %v2392 = vpop.permute.xlu0 %2391
  %2393 = vrot.lane.b32.xlu0 %v520, 64
  %v2394 = vpop.permute.xlu0 %2393
  %2395 = vrot.lane.b32.xlu0 %v521, 64
  %v2396 = vpop.permute.xlu0 %2395
  %2397 = vrot.lane.b32.xlu0 %v522, 64
  %v2398 = vpop.permute.xlu0 %2397
  %2400 = vrot.lane.b32.xlu0 %v534, 64
  %v2401 = vpop.permute.xlu0 %2400
  %2402 = vrot.lane.b32.xlu0 %v542, 64
  %v2403 = vpop.permute.xlu0 %2402
  %2404 = vrot.lane.b32.xlu0 %v550, 64
  %v2405 = vpop.permute.xlu0 %2404
  %2406 = vrot.lane.b32.xlu0 %v558, 64
  %v2407 = vpop.permute.xlu0 %2406
  %2408 = vrot.lane.b32.xlu0 %v569, 64
  %v2409 = vpop.permute.xlu0 %2408
  %2411 = vrot.lane.b32.xlu0 %v2335, 64
  %v2412 = vpop.permute.xlu0 %2411
  %2413 = vrot.lane.b32.xlu0 %v2337, 64
  %v2414 = vpop.permute.xlu0 %2413
  %2415 = vrot.lane.b32.xlu0 %v2339, 64
  %v2416 = vpop.permute.xlu0 %2415
  %2417 = vrot.lane.b32.xlu0 %v2341, 64
  %v2418 = vpop.permute.xlu0 %2417
  %2419 = vrot.lane.b32.xlu0 %v2345, 64
  %v2420 = vpop.permute.xlu0 %2419
  %2422 = vrot.lane.b32.xlu0 %v618, 64
  %v2423 = vpop.permute.xlu0 %2422
  %2424 = vrot.lane.b32.xlu0 %v622, 64
  %v2425 = vpop.permute.xlu0 %2424
  %2426 = vrot.lane.b32.xlu0 %v626, 64
  %v2427 = vpop.permute.xlu0 %2426
  %2428 = vrot.lane.b32.xlu0 %v630, 64
  %v2429 = vpop.permute.xlu0 %2428
  %2430 = vrot.lane.b32.xlu0 %v639, 64
  %v2431 = vpop.permute.xlu0 %2430
  %2433 = vrot.lane.b32.xlu0 %v667, 64
  %v2434 = vpop.permute.xlu0 %2433
  %2435 = vrot.lane.b32.xlu0 %v668, 64
  %v2436 = vpop.permute.xlu0 %2435
  %2437 = vrot.lane.b32.xlu0 %v669, 64
  %v2438 = vpop.permute.xlu0 %2437
  %2439 = vrot.lane.b32.xlu0 %v670, 64
  %v2440 = vpop.permute.xlu0 %2439
  %2441 = vrot.lane.b32.xlu0 %v674, 64
  %v2442 = vpop.permute.xlu0 %2441
  %2444 = vrot.lane.b32.xlu0 %v690, 64
  %v2445 = vpop.permute.xlu0 %2444
  %2446 = vrot.lane.b32.xlu0 %v692, 64
  %v2447 = vpop.permute.xlu0 %2446
  %2448 = vrot.lane.b32.xlu0 %v694, 64
  %v2449 = vpop.permute.xlu0 %2448
  %2450 = vrot.lane.b32.xlu0 %v696, 64
  %v2451 = vpop.permute.xlu0 %2450
  %2452 = vrot.lane.b32.xlu0 %v700, 64
  %v2453 = vpop.permute.xlu0 %2452
  %v2455 = vsel %vm998, %v359, %v2369
  %v2458 = vsel %vm998, %v360, %v2371
  %v2461 = vsel %vm998, %v361, %v2373
  %v2464 = vsel %vm998, %v362, %v2375
  %v2467 = vsel %vm998, %v363, %v2377
  %v2471 = vsel %vm998, %v375, %v2380
  %v2475 = vsel %vm998, %v383, %v2382
  %v2479 = vsel %vm998, %v391, %v2384
  %v2483 = vsel %vm998, %v399, %v2386
  %v2487 = vsel %vm998, %v410, %v2388
  %v2491 = vsel %vm998, %v2322, %v2390
  %v2495 = vsel %vm998, %v2324, %v2392
  %v2499 = vsel %vm998, %v2326, %v2394
  %v2503 = vsel %vm998, %v2328, %v2396
  %v2506 = vsel %vm998, %v2332, %v2398
  %v2510 = vsel %vm998, %v462, %v2401
  %v2514 = vsel %vm998, %v470, %v2403
  %v2518 = vsel %vm998, %v478, %v2405
  %v2522 = vsel %vm998, %v486, %v2407
  %v2526 = vsel %vm998, %v497, %v2409
  %v2530 = vsel %vm998, %v572, %v2412
  %v2534 = vsel %vm998, %v574, %v2414
  %v2538 = vsel %vm998, %v576, %v2416
  %v2542 = vsel %vm998, %v578, %v2418
  %v2545 = vsel %vm998, %v582, %v2420
  %v2549 = vsel %vm998, %v600, %v2423
  %v2553 = vsel %vm998, %v602, %v2425
  %v2557 = vsel %vm998, %v604, %v2427
  %v2561 = vsel %vm998, %v606, %v2429
  %v2564 = vsel %vm998, %v610, %v2431
  %v2568 = vsel %vm998, %v646, %v2434
  %v2572 = vsel %vm998, %v650, %v2436
  %v2576 = vsel %vm998, %v654, %v2438
  %v2580 = vsel %vm998, %v658, %v2440
  %v2584 = vsel %vm998, %v666, %v2442
  %v2587 = vsel %vm998, %v777, %v2445
  %v2590 = vsel %vm998, %v778, %v2447
  %v2593 = vsel %vm998, %v779, %v2449
  %v2596 = vsel %vm998, %v780, %v2451
  %v2599 = vsel %vm998, %v2346, %v2453
  %2602 = vrot.lane.b32.xlu0 %v734, 64
  %v2603 = vpop.permute.xlu0 %2602
  %2604 = vrot.lane.b32.xlu0 %v738, 64
  %v2605 = vpop.permute.xlu0 %2604
  %2606 = vrot.lane.b32.xlu0 %v742, 64
  %v2607 = vpop.permute.xlu0 %2606
  %2608 = vrot.lane.b32.xlu0 %v746, 64
  %v2609 = vpop.permute.xlu0 %2608
  %2610 = vrot.lane.b32.xlu0 %v754, 64
  %v2611 = vpop.permute.xlu0 %2610
  %2613 = vrot.lane.b32.xlu0 %v2347, 64
  %v2614 = vpop.permute.xlu0 %2613
  %2615 = vrot.lane.b32.xlu0 %v2348, 64
  %v2616 = vpop.permute.xlu0 %2615
  %2617 = vrot.lane.b32.xlu0 %v2349, 64
  %v2618 = vpop.permute.xlu0 %2617
  %2619 = vrot.lane.b32.xlu0 %v2350, 64
  %v2620 = vpop.permute.xlu0 %2619
  %2621 = vrot.lane.b32.xlu0 %v2353, 64
  %v2622 = vpop.permute.xlu0 %2621
  %2624 = vrot.lane.b32.xlu0 %v812, 64
  %v2625 = vpop.permute.xlu0 %2624
  %2626 = vrot.lane.b32.xlu0 %v821, 64
  %v2627 = vpop.permute.xlu0 %2626
  %2628 = vrot.lane.b32.xlu0 %v830, 64
  %v2629 = vpop.permute.xlu0 %2628
  %2630 = vrot.lane.b32.xlu0 %v838, 64
  %v2631 = vpop.permute.xlu0 %2630
  %2632 = vrot.lane.b32.xlu0 %v847, 64
  %v2633 = vpop.permute.xlu0 %2632
  %2635 = vrot.lane.b32.xlu0 %v900, 64
  %v2636 = vpop.permute.xlu0 %2635
  %2637 = vrot.lane.b32.xlu0 %v902, 64
  %v2638 = vpop.permute.xlu0 %2637
  %2639 = vrot.lane.b32.xlu0 %v904, 64
  %v2640 = vpop.permute.xlu0 %2639
  %2641 = vrot.lane.b32.xlu0 %v906, 64
  %v2642 = vpop.permute.xlu0 %2641
  %2643 = vrot.lane.b32.xlu0 %v911, 64
  %v2644 = vpop.permute.xlu0 %2643
  %v2647 = vsel %vm998, %v707, %v2603
  %v2651 = vsel %vm998, %v711, %v2605
  %v2655 = vsel %vm998, %v715, %v2607
  %v2659 = vsel %vm998, %v719, %v2609
  %v2663 = vsel %vm998, %v727, %v2611
  %v2667 = vsel %vm998, %v755, %v2614
  %v2671 = vsel %vm998, %v756, %v2616
  %v2675 = vsel %vm998, %v757, %v2618
  %v2679 = vsel %vm998, %v758, %v2620
  %v2682 = vsel %vm998, %v761, %v2622
  %v2686 = vsel %vm998, %v784, %v2625
  %v2690 = vsel %vm998, %v786, %v2627
  %v2694 = vsel %vm998, %v788, %v2629
  %v2698 = vsel %vm998, %v790, %v2631
  %v2701 = vsel %vm998, %v794, %v2633
  %v2705 = vsel %vm998, %v864, %v2636
  %v2709 = vsel %vm998, %v873, %v2638
  %v2713 = vsel %vm998, %v882, %v2640
  %v2717 = vsel %vm998, %v891, %v2642
  %v2721 = vsel %vm998, %v897, %v2644
  %v2724 = vsel %vm998, %v2356, 0
  %v2727 = vsel %vm998, %v2358, 0
  %v2730 = vsel %vm998, %v2360, 0
  %v2733 = vsel %vm998, %v2362, 0
  %v2735 = vsel %vm998, %v2366, 0
  %2737 = vmatpush.bf16.msra.mxu0 %v1671
  %2738 = vmatpush.bf16.msra.mxu0 %v1670
  %2739 = vmatpush.bf16.msra.mxu0 %v1669
  %2740 = vmatpush.bf16.msra.mxu0 %v1668
  %2741 = vmatpush.bf16.msra.mxu0 %v1667
  %2742 = vmatpush.bf16.msra.mxu0 %v1666
  %2743 = vmatpush.bf16.msra.mxu0 %v1665
  %2744 = vmatpush.bf16.msra.mxu0 %v1664
  %2745 = vmatmul.bf16.gmra.mxu0 %v2455
  %v2746 = vpop.f32.mrf.mxu0
  %v2747 = vadd.f32 0.0, %v2746
  %v2748 = vpop.f32.mrf.mxu0
  %v2749 = vadd.f32 0.0, %v2748
  %2750 = vmatmul.bf16.gmra.mxu0 %v2458
  %v2751 = vpop.f32.mrf.mxu0
  %v2752 = vadd.f32 0.0, %v2751
  %v2753 = vpop.f32.mrf.mxu0
  %v2754 = vadd.f32 0.0, %v2753
  %2755 = vmatmul.bf16.gmra.mxu0 %v2461
  %v2756 = vpop.f32.mrf.mxu0
  %v2757 = vadd.f32 0.0, %v2756
  %v2758 = vpop.f32.mrf.mxu0
  %v2759 = vadd.f32 0.0, %v2758
  %2760 = vmatmul.bf16.gmra.mxu0 %v2464
  %v2761 = vpop.f32.mrf.mxu0
  %v2762 = vadd.f32 0.0, %v2761
  %v2763 = vpop.f32.mrf.mxu0
  %v2764 = vadd.f32 0.0, %v2763
  %2765 = vmatmul.bf16.gmra.mxu0 %v2467
  %v2766 = vpop.f32.mrf.mxu0
  %v2767 = vadd.f32 0.0, %v2766
  %v2768 = vpop.f32.mrf.mxu0
  %v2769 = vadd.f32 0.0, %v2768
  %2770 = vdwg.mxu0
  %2771 = vmatpush.bf16.msra.mxu0 %v1679
  %2772 = vmatpush.bf16.msra.mxu0 %v1678
  %2773 = vmatpush.bf16.msra.mxu0 %v1677
  %2774 = vmatpush.bf16.msra.mxu0 %v1676
  %2775 = vmatpush.bf16.msra.mxu0 %v1675
  %2776 = vmatpush.bf16.msra.mxu0 %v1674
  %2777 = vmatpush.bf16.msra.mxu0 %v1673
  %2778 = vmatpush.bf16.msra.mxu0 %v1672
  %2779 = vmatmul.bf16.gmra.mxu0 %v2471
  %v2780 = vpop.f32.mrf.mxu0
  %v2781 = vadd.f32 %v2747, %v2780
  %v2782 = vpop.f32.mrf.mxu0
  %v2783 = vadd.f32 %v2749, %v2782
  %2784 = vmatmul.bf16.gmra.mxu0 %v2475
  %v2785 = vpop.f32.mrf.mxu0
  %v2786 = vadd.f32 %v2752, %v2785
  %v2787 = vpop.f32.mrf.mxu0
  %v2788 = vadd.f32 %v2754, %v2787
  %2789 = vmatmul.bf16.gmra.mxu0 %v2479
  %v2790 = vpop.f32.mrf.mxu0
  %v2791 = vadd.f32 %v2757, %v2790
  %v2792 = vpop.f32.mrf.mxu0
  %v2793 = vadd.f32 %v2759, %v2792
  %2794 = vmatmul.bf16.gmra.mxu0 %v2483
  %v2795 = vpop.f32.mrf.mxu0
  %v2796 = vadd.f32 %v2762, %v2795
  %v2797 = vpop.f32.mrf.mxu0
  %v2798 = vadd.f32 %v2764, %v2797
  %2799 = vmatmul.bf16.gmra.mxu0 %v2487
  %v2800 = vpop.f32.mrf.mxu0
  %v2801 = vadd.f32 %v2767, %v2800
  %v2802 = vpop.f32.mrf.mxu0
  %v2803 = vadd.f32 %v2769, %v2802
  %2804 = vdwg.mxu0
  %2805 = vmatpush.bf16.msra.mxu0 %v1687
  %2806 = vmatpush.bf16.msra.mxu0 %v1686
  %2807 = vmatpush.bf16.msra.mxu0 %v1685
  %2808 = vmatpush.bf16.msra.mxu0 %v1684
  %2809 = vmatpush.bf16.msra.mxu0 %v1683
  %2810 = vmatpush.bf16.msra.mxu0 %v1682
  %2811 = vmatpush.bf16.msra.mxu0 %v1681
  %2812 = vmatpush.bf16.msra.mxu0 %v1680
  %2813 = vmatmul.bf16.gmra.mxu0 %v2491
  %v2814 = vpop.f32.mrf.mxu0
  %v2815 = vadd.f32 %v2781, %v2814
  %v2816 = vpop.f32.mrf.mxu0
  %v2817 = vadd.f32 %v2783, %v2816
  %2818 = vmatmul.bf16.gmra.mxu0 %v2495
  %v2819 = vpop.f32.mrf.mxu0
  %v2820 = vadd.f32 %v2786, %v2819
  %v2821 = vpop.f32.mrf.mxu0
  %v2822 = vadd.f32 %v2788, %v2821
  %2823 = vmatmul.bf16.gmra.mxu0 %v2499
  %v2824 = vpop.f32.mrf.mxu0
  %v2825 = vadd.f32 %v2791, %v2824
  %v2826 = vpop.f32.mrf.mxu0
  %v2827 = vadd.f32 %v2793, %v2826
  %2828 = vmatmul.bf16.gmra.mxu0 %v2503
  %v2829 = vpop.f32.mrf.mxu0
  %v2830 = vadd.f32 %v2796, %v2829
  %v2831 = vpop.f32.mrf.mxu0
  %v2832 = vadd.f32 %v2798, %v2831
  %2833 = vmatmul.bf16.gmra.mxu0 %v2506
  %v2834 = vpop.f32.mrf.mxu0
  %v2835 = vadd.f32 %v2801, %v2834
  %v2836 = vpop.f32.mrf.mxu0
  %v2837 = vadd.f32 %v2803, %v2836
  %2838 = vdwg.mxu0
  %2839 = vmatpush.bf16.msra.mxu0 %v1695
  %2840 = vmatpush.bf16.msra.mxu0 %v1694
  %2841 = vmatpush.bf16.msra.mxu0 %v1693
  %2842 = vmatpush.bf16.msra.mxu0 %v1692
  %2843 = vmatpush.bf16.msra.mxu0 %v1691
  %2844 = vmatpush.bf16.msra.mxu0 %v1690
  %2845 = vmatpush.bf16.msra.mxu0 %v1689
  %2846 = vmatpush.bf16.msra.mxu0 %v1688
  %2847 = vmatmul.bf16.gmra.mxu0 %v2510
  %v2848 = vpop.f32.mrf.mxu0
  %v2849 = vadd.f32 %v2815, %v2848
  %v2850 = vpop.f32.mrf.mxu0
  %v2851 = vadd.f32 %v2817, %v2850
  %2852 = vmatmul.bf16.gmra.mxu0 %v2514
  %v2853 = vpop.f32.mrf.mxu0
  %v2854 = vadd.f32 %v2820, %v2853
  %v2855 = vpop.f32.mrf.mxu0
  %v2856 = vadd.f32 %v2822, %v2855
  %2857 = vmatmul.bf16.gmra.mxu0 %v2518
  %v2858 = vpop.f32.mrf.mxu0
  %v2859 = vadd.f32 %v2825, %v2858
  %v2860 = vpop.f32.mrf.mxu0
  %v2861 = vadd.f32 %v2827, %v2860
  %2862 = vmatmul.bf16.gmra.mxu0 %v2522
  %v2863 = vpop.f32.mrf.mxu0
  %v2864 = vadd.f32 %v2830, %v2863
  %v2865 = vpop.f32.mrf.mxu0
  %v2866 = vadd.f32 %v2832, %v2865
  %2867 = vmatmul.bf16.gmra.mxu0 %v2526
  %v2868 = vpop.f32.mrf.mxu0
  %v2869 = vadd.f32 %v2835, %v2868
  %v2870 = vpop.f32.mrf.mxu0
  %v2871 = vadd.f32 %v2837, %v2870
  %2872 = vdwg.mxu0
  %2873 = vmatpush.bf16.msra.mxu0 %v1703
  %2874 = vmatpush.bf16.msra.mxu0 %v1702
  %2875 = vmatpush.bf16.msra.mxu0 %v1701
  %2876 = vmatpush.bf16.msra.mxu0 %v1700
  %2877 = vmatpush.bf16.msra.mxu0 %v1699
  %2878 = vmatpush.bf16.msra.mxu0 %v1698
  %2879 = vmatpush.bf16.msra.mxu0 %v1697
  %2880 = vmatpush.bf16.msra.mxu0 %v1696
  %2881 = vmatmul.bf16.gmra.mxu0 %v2530
  %v2882 = vpop.f32.mrf.mxu0
  %v2883 = vadd.f32 %v2849, %v2882
  %v2884 = vpop.f32.mrf.mxu0
  %v2885 = vadd.f32 %v2851, %v2884
  %2886 = vmatmul.bf16.gmra.mxu0 %v2534
  %v2887 = vpop.f32.mrf.mxu0
  %v2888 = vadd.f32 %v2854, %v2887
  %v2889 = vpop.f32.mrf.mxu0
  %v2890 = vadd.f32 %v2856, %v2889
  %2891 = vmatmul.bf16.gmra.mxu0 %v2538
  %v2892 = vpop.f32.mrf.mxu0
  %v2893 = vadd.f32 %v2859, %v2892
  %v2894 = vpop.f32.mrf.mxu0
  %v2895 = vadd.f32 %v2861, %v2894
  %2896 = vmatmul.bf16.gmra.mxu0 %v2542
  %v2897 = vpop.f32.mrf.mxu0
  %v2898 = vadd.f32 %v2864, %v2897
  %v2899 = vpop.f32.mrf.mxu0
  %v2900 = vadd.f32 %v2866, %v2899
  %2901 = vmatmul.bf16.gmra.mxu0 %v2545
  %v2902 = vpop.f32.mrf.mxu0
  %v2903 = vadd.f32 %v2869, %v2902
  %v2904 = vpop.f32.mrf.mxu0
  %v2905 = vadd.f32 %v2871, %v2904
  %2906 = vdwg.mxu0
  %2907 = vmatpush.bf16.msra.mxu0 %v1711
  %2908 = vmatpush.bf16.msra.mxu0 %v1710
  %2909 = vmatpush.bf16.msra.mxu0 %v1709
  %2910 = vmatpush.bf16.msra.mxu0 %v1708
  %2911 = vmatpush.bf16.msra.mxu0 %v1707
  %2912 = vmatpush.bf16.msra.mxu0 %v1706
  %2913 = vmatpush.bf16.msra.mxu0 %v1705
  %2914 = vmatpush.bf16.msra.mxu0 %v1704
  %2915 = vmatmul.bf16.gmra.mxu0 %v2549
  %v2916 = vpop.f32.mrf.mxu0
  %v2917 = vadd.f32 %v2883, %v2916
  %v2918 = vpop.f32.mrf.mxu0
  %v2919 = vadd.f32 %v2885, %v2918
  %2920 = vmatmul.bf16.gmra.mxu0 %v2553
  %v2921 = vpop.f32.mrf.mxu0
  %v2922 = vadd.f32 %v2888, %v2921
  %v2923 = vpop.f32.mrf.mxu0
  %v2924 = vadd.f32 %v2890, %v2923
  %2925 = vmatmul.bf16.gmra.mxu0 %v2557
  %v2926 = vpop.f32.mrf.mxu0
  %v2927 = vadd.f32 %v2893, %v2926
  %v2928 = vpop.f32.mrf.mxu0
  %v2929 = vadd.f32 %v2895, %v2928
  %2930 = vmatmul.bf16.gmra.mxu0 %v2561
  %v2931 = vpop.f32.mrf.mxu0
  %v2932 = vadd.f32 %v2898, %v2931
  %v2933 = vpop.f32.mrf.mxu0
  %v2934 = vadd.f32 %v2900, %v2933
  %2935 = vmatmul.bf16.gmra.mxu0 %v2564
  %v2936 = vpop.f32.mrf.mxu0
  %v2937 = vadd.f32 %v2903, %v2936
  %v2938 = vpop.f32.mrf.mxu0
  %v2939 = vadd.f32 %v2905, %v2938
  %2940 = vdwg.mxu0
  %2941 = vmatpush.bf16.msra.mxu0 %v1719
  %2942 = vmatpush.bf16.msra.mxu0 %v1718
  %2943 = vmatpush.bf16.msra.mxu0 %v1717
  %2944 = vmatpush.bf16.msra.mxu0 %v1716
  %2945 = vmatpush.bf16.msra.mxu0 %v1715
  %2946 = vmatpush.bf16.msra.mxu0 %v1714
  %2947 = vmatpush.bf16.msra.mxu0 %v1713
  %2948 = vmatpush.bf16.msra.mxu0 %v1712
  %2949 = vmatmul.bf16.gmra.mxu0 %v2568
  %v2950 = vpop.f32.mrf.mxu0
  %v2951 = vadd.f32 %v2917, %v2950
  %v2952 = vpop.f32.mrf.mxu0
  %v2953 = vadd.f32 %v2919, %v2952
  %2954 = vmatmul.bf16.gmra.mxu0 %v2572
  %v2955 = vpop.f32.mrf.mxu0
  %v2956 = vadd.f32 %v2922, %v2955
  %v2957 = vpop.f32.mrf.mxu0
  %v2958 = vadd.f32 %v2924, %v2957
  %2959 = vmatmul.bf16.gmra.mxu0 %v2576
  %v2960 = vpop.f32.mrf.mxu0
  %v2961 = vadd.f32 %v2927, %v2960
  %v2962 = vpop.f32.mrf.mxu0
  %v2963 = vadd.f32 %v2929, %v2962
  %2964 = vmatmul.bf16.gmra.mxu0 %v2580
  %v2965 = vpop.f32.mrf.mxu0
  %v2966 = vadd.f32 %v2932, %v2965
  %v2967 = vpop.f32.mrf.mxu0
  %v2968 = vadd.f32 %v2934, %v2967
  %2969 = vmatmul.bf16.gmra.mxu0 %v2584
  %v2970 = vpop.f32.mrf.mxu0
  %v2971 = vadd.f32 %v2937, %v2970
  %v2972 = vpop.f32.mrf.mxu0
  %v2973 = vadd.f32 %v2939, %v2972
  %2974 = vdwg.mxu0
  %2975 = vmatpush.bf16.msra.mxu0 %v1727
  %2976 = vmatpush.bf16.msra.mxu0 %v1726
  %2977 = vmatpush.bf16.msra.mxu0 %v1725
  %2978 = vmatpush.bf16.msra.mxu0 %v1724
  %2979 = vmatpush.bf16.msra.mxu0 %v1723
  %2980 = vmatpush.bf16.msra.mxu0 %v1722
  %2981 = vmatpush.bf16.msra.mxu0 %v1721
  %2982 = vmatpush.bf16.msra.mxu0 %v1720
  %2983 = vmatmul.bf16.gmra.mxu0 %v2587
  %v2984 = vpop.f32.mrf.mxu0
  %v2985 = vadd.f32 %v2951, %v2984
  %v2986 = vpop.f32.mrf.mxu0
  %v2987 = vadd.f32 %v2953, %v2986
  %2988 = vmatmul.bf16.gmra.mxu0 %v2590
  %v2989 = vpop.f32.mrf.mxu0
  %v2990 = vadd.f32 %v2956, %v2989
  %v2991 = vpop.f32.mrf.mxu0
  %v2992 = vadd.f32 %v2958, %v2991
  %2993 = vmatmul.bf16.gmra.mxu0 %v2593
  %v2994 = vpop.f32.mrf.mxu0
  %v2995 = vadd.f32 %v2961, %v2994
  %v2996 = vpop.f32.mrf.mxu0
  %v2997 = vadd.f32 %v2963, %v2996
  %2998 = vmatmul.bf16.gmra.mxu0 %v2596
  %v2999 = vpop.f32.mrf.mxu0
  %v3000 = vadd.f32 %v2966, %v2999
  %v3001 = vpop.f32.mrf.mxu0
  %v3002 = vadd.f32 %v2968, %v3001
  %3003 = vmatmul.bf16.gmra.mxu0 %v2599
  %v3004 = vpop.f32.mrf.mxu0
  %v3005 = vadd.f32 %v2971, %v3004
  %v3006 = vpop.f32.mrf.mxu0
  %v3007 = vadd.f32 %v2973, %v3006
  %3008 = vdwg.mxu0
  %3009 = vmatpush.bf16.msra.mxu0 %v1735
  %3010 = vmatpush.bf16.msra.mxu0 %v1734
  %3011 = vmatpush.bf16.msra.mxu0 %v1733
  %3012 = vmatpush.bf16.msra.mxu0 %v1732
  %3013 = vmatpush.bf16.msra.mxu0 %v1731
  %3014 = vmatpush.bf16.msra.mxu0 %v1730
  %3015 = vmatpush.bf16.msra.mxu0 %v1729
  %3016 = vmatpush.bf16.msra.mxu0 %v1728
  %3017 = vmatmul.bf16.gmra.mxu0 %v2647
  %v3018 = vpop.f32.mrf.mxu0
  %v3019 = vadd.f32 %v2985, %v3018
  %v3020 = vpop.f32.mrf.mxu0
  %v3021 = vadd.f32 %v2987, %v3020
  %3022 = vmatmul.bf16.gmra.mxu0 %v2651
  %v3023 = vpop.f32.mrf.mxu0
  %v3024 = vadd.f32 %v2990, %v3023
  %v3025 = vpop.f32.mrf.mxu0
  %v3026 = vadd.f32 %v2992, %v3025
  %3027 = vmatmul.bf16.gmra.mxu0 %v2655
  %v3028 = vpop.f32.mrf.mxu0
  %v3029 = vadd.f32 %v2995, %v3028
  %v3030 = vpop.f32.mrf.mxu0
  %v3031 = vadd.f32 %v2997, %v3030
  %3032 = vmatmul.bf16.gmra.mxu0 %v2659
  %v3033 = vpop.f32.mrf.mxu0
  %v3034 = vadd.f32 %v3000, %v3033
  %v3035 = vpop.f32.mrf.mxu0
  %v3036 = vadd.f32 %v3002, %v3035
  %3037 = vmatmul.bf16.gmra.mxu0 %v2663
  %v3038 = vpop.f32.mrf.mxu0
  %v3039 = vadd.f32 %v3005, %v3038
  %v3040 = vpop.f32.mrf.mxu0
  %v3041 = vadd.f32 %v3007, %v3040
  %3042 = vdwg.mxu0
  %3043 = vmatpush.bf16.msra.mxu0 %v1743
  %3044 = vmatpush.bf16.msra.mxu0 %v1742
  %3045 = vmatpush.bf16.msra.mxu0 %v1741
  %3046 = vmatpush.bf16.msra.mxu0 %v1740
  %3047 = vmatpush.bf16.msra.mxu0 %v1739
  %3048 = vmatpush.bf16.msra.mxu0 %v1738
  %3049 = vmatpush.bf16.msra.mxu0 %v1737
  %3050 = vmatpush.bf16.msra.mxu0 %v1736
  %3051 = vmatmul.bf16.gmra.mxu0 %v2667
  %v3052 = vpop.f32.mrf.mxu0
  %v3053 = vadd.f32 %v3019, %v3052
  %v3054 = vpop.f32.mrf.mxu0
  %v3055 = vadd.f32 %v3021, %v3054
  %3056 = vmatmul.bf16.gmra.mxu0 %v2671
  %v3057 = vpop.f32.mrf.mxu0
  %v3058 = vadd.f32 %v3024, %v3057
  %v3059 = vpop.f32.mrf.mxu0
  %v3060 = vadd.f32 %v3026, %v3059
  %3061 = vmatmul.bf16.gmra.mxu0 %v2675
  %v3062 = vpop.f32.mrf.mxu0
  %v3063 = vadd.f32 %v3029, %v3062
  %v3064 = vpop.f32.mrf.mxu0
  %v3065 = vadd.f32 %v3031, %v3064
  %3066 = vmatmul.bf16.gmra.mxu0 %v2679
  %v3067 = vpop.f32.mrf.mxu0
  %v3068 = vadd.f32 %v3034, %v3067
  %v3069 = vpop.f32.mrf.mxu0
  %v3070 = vadd.f32 %v3036, %v3069
  %3071 = vmatmul.bf16.gmra.mxu0 %v2682
  %v3072 = vpop.f32.mrf.mxu0
  %v3073 = vadd.f32 %v3039, %v3072
  %v3074 = vpop.f32.mrf.mxu0
  %v3075 = vadd.f32 %v3041, %v3074
  %3076 = vdwg.mxu0
  %3077 = vmatpush.bf16.msra.mxu0 %v1751
  %3078 = vmatpush.bf16.msra.mxu0 %v1750
  %3079 = vmatpush.bf16.msra.mxu0 %v1749
  %3080 = vmatpush.bf16.msra.mxu0 %v1748
  %3081 = vmatpush.bf16.msra.mxu0 %v1747
  %3082 = vmatpush.bf16.msra.mxu0 %v1746
  %3083 = vmatpush.bf16.msra.mxu0 %v1745
  %3084 = vmatpush.bf16.msra.mxu0 %v1744
  %3085 = vmatmul.bf16.gmra.mxu0 %v2686
  %v3086 = vpop.f32.mrf.mxu0
  %v3087 = vadd.f32 %v3053, %v3086
  %v3088 = vpop.f32.mrf.mxu0
  %v3089 = vadd.f32 %v3055, %v3088
  %3090 = vmatmul.bf16.gmra.mxu0 %v2690
  %v3091 = vpop.f32.mrf.mxu0
  %v3092 = vadd.f32 %v3058, %v3091
  %v3093 = vpop.f32.mrf.mxu0
  %v3094 = vadd.f32 %v3060, %v3093
  %3095 = vmatmul.bf16.gmra.mxu0 %v2694
  %v3096 = vpop.f32.mrf.mxu0
  %v3097 = vadd.f32 %v3063, %v3096
  %v3098 = vpop.f32.mrf.mxu0
  %v3099 = vadd.f32 %v3065, %v3098
  %3100 = vmatmul.bf16.gmra.mxu0 %v2698
  %v3101 = vpop.f32.mrf.mxu0
  %v3102 = vadd.f32 %v3068, %v3101
  %v3103 = vpop.f32.mrf.mxu0
  %v3104 = vadd.f32 %v3070, %v3103
  %3105 = vmatmul.bf16.gmra.mxu0 %v2701
  %v3106 = vpop.f32.mrf.mxu0
  %v3107 = vadd.f32 %v3073, %v3106
  %v3108 = vpop.f32.mrf.mxu0
  %v3109 = vadd.f32 %v3075, %v3108
  %3110 = vdwg.mxu0
  %3111 = vmatpush.bf16.msra.mxu0 %v1759
  %3112 = vmatpush.bf16.msra.mxu0 %v1758
  %3113 = vmatpush.bf16.msra.mxu0 %v1757
  %3114 = vmatpush.bf16.msra.mxu0 %v1756
  %3115 = vmatpush.bf16.msra.mxu0 %v1755
  %3116 = vmatpush.bf16.msra.mxu0 %v1754
  %3117 = vmatpush.bf16.msra.mxu0 %v1753
  %3118 = vmatpush.bf16.msra.mxu0 %v1752
  %3119 = vmatmul.bf16.gmra.mxu0 %v2705
  %v3120 = vpop.f32.mrf.mxu0
  %v3121 = vadd.f32 %v3087, %v3120
  %v3122 = vpop.f32.mrf.mxu0
  %v3123 = vadd.f32 %v3089, %v3122
  %3124 = vmatmul.bf16.gmra.mxu0 %v2709
  %v3125 = vpop.f32.mrf.mxu0
  %v3126 = vadd.f32 %v3092, %v3125
  %v3127 = vpop.f32.mrf.mxu0
  %v3128 = vadd.f32 %v3094, %v3127
  %3129 = vmatmul.bf16.gmra.mxu0 %v2713
  %v3130 = vpop.f32.mrf.mxu0
  %v3131 = vadd.f32 %v3097, %v3130
  %v3132 = vpop.f32.mrf.mxu0
  %v3133 = vadd.f32 %v3099, %v3132
  %3134 = vmatmul.bf16.gmra.mxu0 %v2717
  %v3135 = vpop.f32.mrf.mxu0
  %v3136 = vadd.f32 %v3102, %v3135
  %v3137 = vpop.f32.mrf.mxu0
  %v3138 = vadd.f32 %v3104, %v3137
  %3139 = vmatmul.bf16.gmra.mxu0 %v2721
  %v3140 = vpop.f32.mrf.mxu0
  %v3141 = vadd.f32 %v3107, %v3140
  %v3142 = vpop.f32.mrf.mxu0
  %v3143 = vadd.f32 %v3109, %v3142
  %3144 = vdwg.mxu0
  %3145 = vmatpush.bf16.msra.mxu0 0
  %3146 = vmatpush.bf16.msra.mxu0 0
  %3147 = vmatpush.bf16.msra.mxu0 0
  %3148 = vmatpush.bf16.msra.mxu0 0
  %3149 = vmatpush.bf16.msra.mxu0 %v1763
  %3150 = vmatpush.bf16.msra.mxu0 %v1762
  %3151 = vmatpush.bf16.msra.mxu0 %v1761
  %3152 = vmatpush.bf16.msra.mxu0 %v1760
  %3153 = vmatmul.bf16.gmra.mxu0 %v2724
  %v3154 = vpop.f32.mrf.mxu0
  %v3155 = vadd.f32 %v3121, %v3154
  %v3156 = vpop.f32.mrf.mxu0
  %v3157 = vadd.f32 %v3123, %v3156
  %3158 = vmatmul.bf16.gmra.mxu0 %v2727
  %v3159 = vpop.f32.mrf.mxu0
  %v3160 = vadd.f32 %v3126, %v3159
  %v3161 = vpop.f32.mrf.mxu0
  %v3162 = vadd.f32 %v3128, %v3161
  %3163 = vmatmul.bf16.gmra.mxu0 %v2730
  %v3164 = vpop.f32.mrf.mxu0
  %v3165 = vadd.f32 %v3131, %v3164
  %v3166 = vpop.f32.mrf.mxu0
  %v3167 = vadd.f32 %v3133, %v3166
  %3168 = vmatmul.bf16.gmra.mxu0 %v2733
  %v3169 = vpop.f32.mrf.mxu0
  %v3170 = vadd.f32 %v3136, %v3169
  %v3171 = vpop.f32.mrf.mxu0
  %v3172 = vadd.f32 %v3138, %v3171
  %3173 = vmatmul.bf16.gmra.mxu0 %v2735
  %v3174 = vpop.f32.mrf.mxu0
  %v3175 = vadd.f32 %v3141, %v3174
  %v3176 = vpop.f32.mrf.mxu0
  %v3177 = vadd.f32 %v3143, %v3176
  %3178 = vdwg.mxu0
  %v3179 = vmax.f32 %v2296, %v3155
  %v3180 = vmax.f32 %v2298, %v3157
  %v3181 = vmax.f32 %v2301, %v3160
  %v3182 = vmax.f32 %v2303, %v3162
  %v3183 = vmax.f32 %v2306, %v3165
  %v3184 = vmax.f32 %v2308, %v3167
  %v3185 = vmax.f32 %v2311, %v3170
  %v3186 = vmax.f32 %v2313, %v3172
  %v3187 = vmax.f32 %v2316, %v3175
  %v3188 = vmax.f32 %v2318, %v3177
  %v3189 = vrot.slane %v755, 2
  %v3190 = vrot.slane %v756, 2
  %v3191 = vsel %vm762, %v3189, %v3190
  %v3192 = vrot.slane %v757, 2
  %v3193 = vsel %vm762, %v3190, %v3192
  %v3194 = vrot.slane %v758, 2
  %v3195 = vsel %vm762, %v3192, %v3194
  %v3196 = vrot.slane %v759, 2
  %v3197 = vsel %vm762, %v3194, %v3196
  %v3198 = vrot.slane %v446, 6
  %v3201 = vsel %vm773, %v3196, %v3198
  %v3202 = vrot.slane %v2347, 2
  %v3203 = vrot.slane %v2348, 2
  %v3204 = vsel %vm762, %v3202, %v3203
  %v3205 = vrot.slane %v2349, 2
  %v3206 = vsel %vm762, %v3203, %v3205
  %v3207 = vrot.slane %v2350, 2
  %v3208 = vsel %vm762, %v3205, %v3207
  %v3209 = vrot.slane %v2351, 2
  %v3210 = vsel %vm762, %v3207, %v3209
  %v3211 = vrot.slane %v518, 6
  %v3214 = vsel %vm773, %v3209, %v3211
  %v3215 = vshrl.u32 %v755, 16
  %v3217 = vrot.slane %v3215, 2
  %v3218 = vshll.u32 %v755, 16
  %v3220 = vrot.slane %v3218, 3
  %v3221 = vor.u32 %v3217, %v3220
  %v3222 = vshrl.u32 %v756, 16
  %v3224 = vrot.slane %v3222, 2
  %v3225 = vshll.u32 %v756, 16
  %v3227 = vrot.slane %v3225, 3
  %v3228 = vor.u32 %v3224, %v3227
  %v3229 = vsel %vm795, %v3221, %v3228
  %v3230 = vshrl.u32 %v757, 16
  %v3232 = vrot.slane %v3230, 2
  %v3233 = vshll.u32 %v757, 16
  %v3235 = vrot.slane %v3233, 3
  %v3236 = vor.u32 %v3232, %v3235
  %v3237 = vsel %vm795, %v3228, %v3236
  %v3238 = vshrl.u32 %v758, 16
  %v3240 = vrot.slane %v3238, 2
  %v3241 = vshll.u32 %v758, 16
  %v3243 = vrot.slane %v3241, 3
  %v3244 = vor.u32 %v3240, %v3243
  %v3245 = vsel %vm795, %v3236, %v3244
  %v3246 = vshrl.u32 %v759, 16
  %v3248 = vrot.slane %v3246, 2
  %v3249 = vshll.u32 %v759, 16
  %v3251 = vrot.slane %v3249, 3
  %v3252 = vor.u32 %v3248, %v3251
  %v3253 = vsel %vm795, %v3244, %v3252
  %v3255 = vrot.slane %v452, 6
  %v3256 = vrot.slane %v454, 7
  %v3257 = vor.u32 %v3255, %v3256
  %v3259 = vsel %vm846, %v3252, %v3257
  %v3261 = vshrl.u32 %v2347, 16
  %v3263 = vrot.slane %v3261, 2
  %v3264 = vshll.u32 %v2347, 16
  %v3266 = vrot.slane %v3264, 3
  %v3267 = vor.u32 %v3263, %v3266
  %v3269 = vshrl.u32 %v2348, 16
  %v3271 = vrot.slane %v3269, 2
  %v3272 = vshll.u32 %v2348, 16
  %v3274 = vrot.slane %v3272, 3
  %v3275 = vor.u32 %v3271, %v3274
  %v3276 = vsel %vm795, %v3267, %v3275
  %v3278 = vshrl.u32 %v2349, 16
  %v3280 = vrot.slane %v3278, 2
  %v3281 = vshll.u32 %v2349, 16
  %v3283 = vrot.slane %v3281, 3
  %v3284 = vor.u32 %v3280, %v3283
  %v3285 = vsel %vm795, %v3275, %v3284
  %v3287 = vshrl.u32 %v2350, 16
  %v3289 = vrot.slane %v3287, 2
  %v3290 = vshll.u32 %v2350, 16
  %v3292 = vrot.slane %v3290, 3
  %v3293 = vor.u32 %v3289, %v3292
  %v3294 = vsel %vm795, %v3284, %v3293
  %v3295 = vshrl.u32 %v2351, 16
  %v3297 = vrot.slane %v3295, 2
  %v3298 = vshll.u32 %v2351, 16
  %v3300 = vrot.slane %v3298, 3
  %v3301 = vor.u32 %v3297, %v3300
  %v3302 = vsel %vm795, %v3293, %v3301
  %v3304 = vrot.slane %v524, 6
  %v3305 = vrot.slane %v526, 7
  %v3306 = vor.u32 %v3304, %v3305
  %v3308 = vsel %vm846, %v3301, %v3306
  %v3309 = vrot.slane %v755, 3
  %v3310 = vrot.slane %v756, 3
  %v3311 = vsel %vm583, %v3309, %v3310
  %v3312 = vrot.slane %v757, 3
  %v3313 = vsel %vm583, %v3310, %v3312
  %v3314 = vrot.slane %v758, 3
  %v3315 = vsel %vm583, %v3312, %v3314
  %v3316 = vrot.slane %v759, 3
  %v3317 = vsel %vm583, %v3314, %v3316
  %v3318 = vrot.slane %v446, 7
  %v3321 = vsel %vm908, %v3316, %v3318
  %3323 = vrot.lane.b32.xlu0 %v586, 64
  %v3324 = vpop.permute.xlu0 %3323
  %3325 = vrot.lane.b32.xlu0 %v588, 64
  %v3326 = vpop.permute.xlu0 %3325
  %3327 = vrot.lane.b32.xlu0 %v590, 64
  %v3328 = vpop.permute.xlu0 %3327
  %3329 = vrot.lane.b32.xlu0 %v592, 64
  %v3330 = vpop.permute.xlu0 %3329
  %3331 = vrot.lane.b32.xlu0 %v597, 64
  %v3332 = vpop.permute.xlu0 %3331
  %3334 = vrot.lane.b32.xlu0 %v765, 64
  %v3335 = vpop.permute.xlu0 %3334
  %3336 = vrot.lane.b32.xlu0 %v767, 64
  %v3337 = vpop.permute.xlu0 %3336
  %3338 = vrot.lane.b32.xlu0 %v769, 64
  %v3339 = vpop.permute.xlu0 %3338
  %3340 = vrot.lane.b32.xlu0 %v771, 64
  %v3341 = vpop.permute.xlu0 %3340
  %3342 = vrot.lane.b32.xlu0 %v776, 64
  %v3343 = vpop.permute.xlu0 %3342
  %v3344 = vsel %vm998, %v446, %v2390
  %v3346 = vsel %vm998, %v447, %v2392
  %v3348 = vsel %vm998, %v448, %v2394
  %v3350 = vsel %vm998, %v449, %v2396
  %v3352 = vsel %vm998, %v450, %v2398
  %v3355 = vsel %vm998, %v572, %v3324
  %v3358 = vsel %vm998, %v574, %v3326
  %v3361 = vsel %vm998, %v576, %v3328
  %v3364 = vsel %vm998, %v578, %v3330
  %v3367 = vsel %vm998, %v582, %v3332
  %v3370 = vsel %vm998, %v677, %v2445
  %v3373 = vsel %vm998, %v679, %v2447
  %v3376 = vsel %vm998, %v681, %v2449
  %v3379 = vsel %vm998, %v683, %v2451
  %v3381 = vsel %vm998, %v687, %v2453
  %v3384 = vsel %vm998, %v755, %v3335
  %v3387 = vsel %vm998, %v756, %v3337
  %v3390 = vsel %vm998, %v757, %v3339
  %v3393 = vsel %vm998, %v758, %v3341
  %v3396 = vsel %vm998, %v761, %v3343
  %3399 = vrot.lane.b32.xlu0 %v3204, 64
  %v3400 = vpop.permute.xlu0 %3399
  %3401 = vrot.lane.b32.xlu0 %v3206, 64
  %v3402 = vpop.permute.xlu0 %3401
  %3403 = vrot.lane.b32.xlu0 %v3208, 64
  %v3404 = vpop.permute.xlu0 %3403
  %3405 = vrot.lane.b32.xlu0 %v3210, 64
  %v3406 = vpop.permute.xlu0 %3405
  %3407 = vrot.lane.b32.xlu0 %v3214, 64
  %v3408 = vpop.permute.xlu0 %3407
  %3410 = vrot.lane.b32.xlu0 %v3276, 64
  %v3411 = vpop.permute.xlu0 %3410
  %3412 = vrot.lane.b32.xlu0 %v3285, 64
  %v3413 = vpop.permute.xlu0 %3412
  %3414 = vrot.lane.b32.xlu0 %v3294, 64
  %v3415 = vpop.permute.xlu0 %3414
  %3416 = vrot.lane.b32.xlu0 %v3302, 64
  %v3417 = vpop.permute.xlu0 %3416
  %3418 = vrot.lane.b32.xlu0 %v3308, 64
  %v3419 = vpop.permute.xlu0 %3418
  %v3422 = vsel %vm998, %v3191, %v3400
  %v3426 = vsel %vm998, %v3193, %v3402
  %v3430 = vsel %vm998, %v3195, %v3404
  %v3434 = vsel %vm998, %v3197, %v3406
  %v3437 = vsel %vm998, %v3201, %v3408
  %v3441 = vsel %vm998, %v3229, %v3411
  %v3445 = vsel %vm998, %v3237, %v3413
  %v3449 = vsel %vm998, %v3245, %v3415
  %v3453 = vsel %vm998, %v3253, %v3417
  %v3457 = vsel %vm998, %v3259, %v3419
  %v3460 = vsel %vm998, %v3311, 0
  %v3463 = vsel %vm998, %v3313, 0
  %v3466 = vsel %vm998, %v3315, 0
  %v3469 = vsel %vm998, %v3317, 0
  %v3471 = vsel %vm998, %v3321, 0
  %3473 = vmatpush.bf16.msra.mxu0 %v1671
  %3474 = vmatpush.bf16.msra.mxu0 %v1670
  %3475 = vmatpush.bf16.msra.mxu0 %v1669
  %3476 = vmatpush.bf16.msra.mxu0 %v1668
  %3477 = vmatpush.bf16.msra.mxu0 %v1667
  %3478 = vmatpush.bf16.msra.mxu0 %v1666
  %3479 = vmatpush.bf16.msra.mxu0 %v1665
  %3480 = vmatpush.bf16.msra.mxu0 %v1664
  %3481 = vmatmul.bf16.gmra.mxu0 %v3344
  %v3482 = vpop.f32.mrf.mxu0
  %v3483 = vadd.f32 0.0, %v3482
  %v3484 = vpop.f32.mrf.mxu0
  %v3485 = vadd.f32 0.0, %v3484
  %3486 = vmatmul.bf16.gmra.mxu0 %v3346
  %v3487 = vpop.f32.mrf.mxu0
  %v3488 = vadd.f32 0.0, %v3487
  %v3489 = vpop.f32.mrf.mxu0
  %v3490 = vadd.f32 0.0, %v3489
  %3491 = vmatmul.bf16.gmra.mxu0 %v3348
  %v3492 = vpop.f32.mrf.mxu0
  %v3493 = vadd.f32 0.0, %v3492
  %v3494 = vpop.f32.mrf.mxu0
  %v3495 = vadd.f32 0.0, %v3494
  %3496 = vmatmul.bf16.gmra.mxu0 %v3350
  %v3497 = vpop.f32.mrf.mxu0
  %v3498 = vadd.f32 0.0, %v3497
  %v3499 = vpop.f32.mrf.mxu0
  %v3500 = vadd.f32 0.0, %v3499
  %3501 = vmatmul.bf16.gmra.mxu0 %v3352
  %v3502 = vpop.f32.mrf.mxu0
  %v3503 = vadd.f32 0.0, %v3502
  %v3504 = vpop.f32.mrf.mxu0
  %v3505 = vadd.f32 0.0, %v3504
  %3506 = vdwg.mxu0
  %3507 = vmatpush.bf16.msra.mxu0 %v1679
  %3508 = vmatpush.bf16.msra.mxu0 %v1678
  %3509 = vmatpush.bf16.msra.mxu0 %v1677
  %3510 = vmatpush.bf16.msra.mxu0 %v1676
  %3511 = vmatpush.bf16.msra.mxu0 %v1675
  %3512 = vmatpush.bf16.msra.mxu0 %v1674
  %3513 = vmatpush.bf16.msra.mxu0 %v1673
  %3514 = vmatpush.bf16.msra.mxu0 %v1672
  %3515 = vmatmul.bf16.gmra.mxu0 %v2510
  %v3516 = vpop.f32.mrf.mxu0
  %v3517 = vadd.f32 %v3483, %v3516
  %v3518 = vpop.f32.mrf.mxu0
  %v3519 = vadd.f32 %v3485, %v3518
  %3520 = vmatmul.bf16.gmra.mxu0 %v2514
  %v3521 = vpop.f32.mrf.mxu0
  %v3522 = vadd.f32 %v3488, %v3521
  %v3523 = vpop.f32.mrf.mxu0
  %v3524 = vadd.f32 %v3490, %v3523
  %3525 = vmatmul.bf16.gmra.mxu0 %v2518
  %v3526 = vpop.f32.mrf.mxu0
  %v3527 = vadd.f32 %v3493, %v3526
  %v3528 = vpop.f32.mrf.mxu0
  %v3529 = vadd.f32 %v3495, %v3528
  %3530 = vmatmul.bf16.gmra.mxu0 %v2522
  %v3531 = vpop.f32.mrf.mxu0
  %v3532 = vadd.f32 %v3498, %v3531
  %v3533 = vpop.f32.mrf.mxu0
  %v3534 = vadd.f32 %v3500, %v3533
  %3535 = vmatmul.bf16.gmra.mxu0 %v2526
  %v3536 = vpop.f32.mrf.mxu0
  %v3537 = vadd.f32 %v3503, %v3536
  %v3538 = vpop.f32.mrf.mxu0
  %v3539 = vadd.f32 %v3505, %v3538
  %3540 = vdwg.mxu0
  %3541 = vmatpush.bf16.msra.mxu0 %v1687
  %3542 = vmatpush.bf16.msra.mxu0 %v1686
  %3543 = vmatpush.bf16.msra.mxu0 %v1685
  %3544 = vmatpush.bf16.msra.mxu0 %v1684
  %3545 = vmatpush.bf16.msra.mxu0 %v1683
  %3546 = vmatpush.bf16.msra.mxu0 %v1682
  %3547 = vmatpush.bf16.msra.mxu0 %v1681
  %3548 = vmatpush.bf16.msra.mxu0 %v1680
  %3549 = vmatmul.bf16.gmra.mxu0 %v3355
  %v3550 = vpop.f32.mrf.mxu0
  %v3551 = vadd.f32 %v3517, %v3550
  %v3552 = vpop.f32.mrf.mxu0
  %v3553 = vadd.f32 %v3519, %v3552
  %3554 = vmatmul.bf16.gmra.mxu0 %v3358
  %v3555 = vpop.f32.mrf.mxu0
  %v3556 = vadd.f32 %v3522, %v3555
  %v3557 = vpop.f32.mrf.mxu0
  %v3558 = vadd.f32 %v3524, %v3557
  %3559 = vmatmul.bf16.gmra.mxu0 %v3361
  %v3560 = vpop.f32.mrf.mxu0
  %v3561 = vadd.f32 %v3527, %v3560
  %v3562 = vpop.f32.mrf.mxu0
  %v3563 = vadd.f32 %v3529, %v3562
  %3564 = vmatmul.bf16.gmra.mxu0 %v3364
  %v3565 = vpop.f32.mrf.mxu0
  %v3566 = vadd.f32 %v3532, %v3565
  %v3567 = vpop.f32.mrf.mxu0
  %v3568 = vadd.f32 %v3534, %v3567
  %3569 = vmatmul.bf16.gmra.mxu0 %v3367
  %v3570 = vpop.f32.mrf.mxu0
  %v3571 = vadd.f32 %v3537, %v3570
  %v3572 = vpop.f32.mrf.mxu0
  %v3573 = vadd.f32 %v3539, %v3572
  %3574 = vdwg.mxu0
  %3575 = vmatpush.bf16.msra.mxu0 %v1695
  %3576 = vmatpush.bf16.msra.mxu0 %v1694
  %3577 = vmatpush.bf16.msra.mxu0 %v1693
  %3578 = vmatpush.bf16.msra.mxu0 %v1692
  %3579 = vmatpush.bf16.msra.mxu0 %v1691
  %3580 = vmatpush.bf16.msra.mxu0 %v1690
  %3581 = vmatpush.bf16.msra.mxu0 %v1689
  %3582 = vmatpush.bf16.msra.mxu0 %v1688
  %3583 = vmatmul.bf16.gmra.mxu0 %v2549
  %v3584 = vpop.f32.mrf.mxu0
  %v3585 = vadd.f32 %v3551, %v3584
  %v3586 = vpop.f32.mrf.mxu0
  %v3587 = vadd.f32 %v3553, %v3586
  %3588 = vmatmul.bf16.gmra.mxu0 %v2553
  %v3589 = vpop.f32.mrf.mxu0
  %v3590 = vadd.f32 %v3556, %v3589
  %v3591 = vpop.f32.mrf.mxu0
  %v3592 = vadd.f32 %v3558, %v3591
  %3593 = vmatmul.bf16.gmra.mxu0 %v2557
  %v3594 = vpop.f32.mrf.mxu0
  %v3595 = vadd.f32 %v3561, %v3594
  %v3596 = vpop.f32.mrf.mxu0
  %v3597 = vadd.f32 %v3563, %v3596
  %3598 = vmatmul.bf16.gmra.mxu0 %v2561
  %v3599 = vpop.f32.mrf.mxu0
  %v3600 = vadd.f32 %v3566, %v3599
  %v3601 = vpop.f32.mrf.mxu0
  %v3602 = vadd.f32 %v3568, %v3601
  %3603 = vmatmul.bf16.gmra.mxu0 %v2564
  %v3604 = vpop.f32.mrf.mxu0
  %v3605 = vadd.f32 %v3571, %v3604
  %v3606 = vpop.f32.mrf.mxu0
  %v3607 = vadd.f32 %v3573, %v3606
  %3608 = vdwg.mxu0
  %3609 = vmatpush.bf16.msra.mxu0 %v1703
  %3610 = vmatpush.bf16.msra.mxu0 %v1702
  %3611 = vmatpush.bf16.msra.mxu0 %v1701
  %3612 = vmatpush.bf16.msra.mxu0 %v1700
  %3613 = vmatpush.bf16.msra.mxu0 %v1699
  %3614 = vmatpush.bf16.msra.mxu0 %v1698
  %3615 = vmatpush.bf16.msra.mxu0 %v1697
  %3616 = vmatpush.bf16.msra.mxu0 %v1696
  %3617 = vmatmul.bf16.gmra.mxu0 %v2568
  %v3618 = vpop.f32.mrf.mxu0
  %v3619 = vadd.f32 %v3585, %v3618
  %v3620 = vpop.f32.mrf.mxu0
  %v3621 = vadd.f32 %v3587, %v3620
  %3622 = vmatmul.bf16.gmra.mxu0 %v2572
  %v3623 = vpop.f32.mrf.mxu0
  %v3624 = vadd.f32 %v3590, %v3623
  %v3625 = vpop.f32.mrf.mxu0
  %v3626 = vadd.f32 %v3592, %v3625
  %3627 = vmatmul.bf16.gmra.mxu0 %v2576
  %v3628 = vpop.f32.mrf.mxu0
  %v3629 = vadd.f32 %v3595, %v3628
  %v3630 = vpop.f32.mrf.mxu0
  %v3631 = vadd.f32 %v3597, %v3630
  %3632 = vmatmul.bf16.gmra.mxu0 %v2580
  %v3633 = vpop.f32.mrf.mxu0
  %v3634 = vadd.f32 %v3600, %v3633
  %v3635 = vpop.f32.mrf.mxu0
  %v3636 = vadd.f32 %v3602, %v3635
  %3637 = vmatmul.bf16.gmra.mxu0 %v2584
  %v3638 = vpop.f32.mrf.mxu0
  %v3639 = vadd.f32 %v3605, %v3638
  %v3640 = vpop.f32.mrf.mxu0
  %v3641 = vadd.f32 %v3607, %v3640
  %3642 = vdwg.mxu0
  %3643 = vmatpush.bf16.msra.mxu0 %v1711
  %3644 = vmatpush.bf16.msra.mxu0 %v1710
  %3645 = vmatpush.bf16.msra.mxu0 %v1709
  %3646 = vmatpush.bf16.msra.mxu0 %v1708
  %3647 = vmatpush.bf16.msra.mxu0 %v1707
  %3648 = vmatpush.bf16.msra.mxu0 %v1706
  %3649 = vmatpush.bf16.msra.mxu0 %v1705
  %3650 = vmatpush.bf16.msra.mxu0 %v1704
  %3651 = vmatmul.bf16.gmra.mxu0 %v3370
  %v3652 = vpop.f32.mrf.mxu0
  %v3653 = vadd.f32 %v3619, %v3652
  %v3654 = vpop.f32.mrf.mxu0
  %v3655 = vadd.f32 %v3621, %v3654
  %3656 = vmatmul.bf16.gmra.mxu0 %v3373
  %v3657 = vpop.f32.mrf.mxu0
  %v3658 = vadd.f32 %v3624, %v3657
  %v3659 = vpop.f32.mrf.mxu0
  %v3660 = vadd.f32 %v3626, %v3659
  %3661 = vmatmul.bf16.gmra.mxu0 %v3376
  %v3662 = vpop.f32.mrf.mxu0
  %v3663 = vadd.f32 %v3629, %v3662
  %v3664 = vpop.f32.mrf.mxu0
  %v3665 = vadd.f32 %v3631, %v3664
  %3666 = vmatmul.bf16.gmra.mxu0 %v3379
  %v3667 = vpop.f32.mrf.mxu0
  %v3668 = vadd.f32 %v3634, %v3667
  %v3669 = vpop.f32.mrf.mxu0
  %v3670 = vadd.f32 %v3636, %v3669
  %3671 = vmatmul.bf16.gmra.mxu0 %v3381
  %v3672 = vpop.f32.mrf.mxu0
  %v3673 = vadd.f32 %v3639, %v3672
  %v3674 = vpop.f32.mrf.mxu0
  %v3675 = vadd.f32 %v3641, %v3674
  %3676 = vdwg.mxu0
  %3677 = vmatpush.bf16.msra.mxu0 %v1719
  %3678 = vmatpush.bf16.msra.mxu0 %v1718
  %3679 = vmatpush.bf16.msra.mxu0 %v1717
  %3680 = vmatpush.bf16.msra.mxu0 %v1716
  %3681 = vmatpush.bf16.msra.mxu0 %v1715
  %3682 = vmatpush.bf16.msra.mxu0 %v1714
  %3683 = vmatpush.bf16.msra.mxu0 %v1713
  %3684 = vmatpush.bf16.msra.mxu0 %v1712
  %3685 = vmatmul.bf16.gmra.mxu0 %v2647
  %v3686 = vpop.f32.mrf.mxu0
  %v3687 = vadd.f32 %v3653, %v3686
  %v3688 = vpop.f32.mrf.mxu0
  %v3689 = vadd.f32 %v3655, %v3688
  %3690 = vmatmul.bf16.gmra.mxu0 %v2651
  %v3691 = vpop.f32.mrf.mxu0
  %v3692 = vadd.f32 %v3658, %v3691
  %v3693 = vpop.f32.mrf.mxu0
  %v3694 = vadd.f32 %v3660, %v3693
  %3695 = vmatmul.bf16.gmra.mxu0 %v2655
  %v3696 = vpop.f32.mrf.mxu0
  %v3697 = vadd.f32 %v3663, %v3696
  %v3698 = vpop.f32.mrf.mxu0
  %v3699 = vadd.f32 %v3665, %v3698
  %3700 = vmatmul.bf16.gmra.mxu0 %v2659
  %v3701 = vpop.f32.mrf.mxu0
  %v3702 = vadd.f32 %v3668, %v3701
  %v3703 = vpop.f32.mrf.mxu0
  %v3704 = vadd.f32 %v3670, %v3703
  %3705 = vmatmul.bf16.gmra.mxu0 %v2663
  %v3706 = vpop.f32.mrf.mxu0
  %v3707 = vadd.f32 %v3673, %v3706
  %v3708 = vpop.f32.mrf.mxu0
  %v3709 = vadd.f32 %v3675, %v3708
  %3710 = vdwg.mxu0
  %3711 = vmatpush.bf16.msra.mxu0 %v1727
  %3712 = vmatpush.bf16.msra.mxu0 %v1726
  %3713 = vmatpush.bf16.msra.mxu0 %v1725
  %3714 = vmatpush.bf16.msra.mxu0 %v1724
  %3715 = vmatpush.bf16.msra.mxu0 %v1723
  %3716 = vmatpush.bf16.msra.mxu0 %v1722
  %3717 = vmatpush.bf16.msra.mxu0 %v1721
  %3718 = vmatpush.bf16.msra.mxu0 %v1720
  %3719 = vmatmul.bf16.gmra.mxu0 %v3384
  %v3720 = vpop.f32.mrf.mxu0
  %v3721 = vadd.f32 %v3687, %v3720
  %v3722 = vpop.f32.mrf.mxu0
  %v3723 = vadd.f32 %v3689, %v3722
  %3724 = vmatmul.bf16.gmra.mxu0 %v3387
  %v3725 = vpop.f32.mrf.mxu0
  %v3726 = vadd.f32 %v3692, %v3725
  %v3727 = vpop.f32.mrf.mxu0
  %v3728 = vadd.f32 %v3694, %v3727
  %3729 = vmatmul.bf16.gmra.mxu0 %v3390
  %v3730 = vpop.f32.mrf.mxu0
  %v3731 = vadd.f32 %v3697, %v3730
  %v3732 = vpop.f32.mrf.mxu0
  %v3733 = vadd.f32 %v3699, %v3732
  %3734 = vmatmul.bf16.gmra.mxu0 %v3393
  %v3735 = vpop.f32.mrf.mxu0
  %v3736 = vadd.f32 %v3702, %v3735
  %v3737 = vpop.f32.mrf.mxu0
  %v3738 = vadd.f32 %v3704, %v3737
  %3739 = vmatmul.bf16.gmra.mxu0 %v3396
  %v3740 = vpop.f32.mrf.mxu0
  %v3741 = vadd.f32 %v3707, %v3740
  %v3742 = vpop.f32.mrf.mxu0
  %v3743 = vadd.f32 %v3709, %v3742
  %3744 = vdwg.mxu0
  %3745 = vmatpush.bf16.msra.mxu0 %v1735
  %3746 = vmatpush.bf16.msra.mxu0 %v1734
  %3747 = vmatpush.bf16.msra.mxu0 %v1733
  %3748 = vmatpush.bf16.msra.mxu0 %v1732
  %3749 = vmatpush.bf16.msra.mxu0 %v1731
  %3750 = vmatpush.bf16.msra.mxu0 %v1730
  %3751 = vmatpush.bf16.msra.mxu0 %v1729
  %3752 = vmatpush.bf16.msra.mxu0 %v1728
  %3753 = vmatmul.bf16.gmra.mxu0 %v2686
  %v3754 = vpop.f32.mrf.mxu0
  %v3755 = vadd.f32 %v3721, %v3754
  %v3756 = vpop.f32.mrf.mxu0
  %v3757 = vadd.f32 %v3723, %v3756
  %3758 = vmatmul.bf16.gmra.mxu0 %v2690
  %v3759 = vpop.f32.mrf.mxu0
  %v3760 = vadd.f32 %v3726, %v3759
  %v3761 = vpop.f32.mrf.mxu0
  %v3762 = vadd.f32 %v3728, %v3761
  %3763 = vmatmul.bf16.gmra.mxu0 %v2694
  %v3764 = vpop.f32.mrf.mxu0
  %v3765 = vadd.f32 %v3731, %v3764
  %v3766 = vpop.f32.mrf.mxu0
  %v3767 = vadd.f32 %v3733, %v3766
  %3768 = vmatmul.bf16.gmra.mxu0 %v2698
  %v3769 = vpop.f32.mrf.mxu0
  %v3770 = vadd.f32 %v3736, %v3769
  %v3771 = vpop.f32.mrf.mxu0
  %v3772 = vadd.f32 %v3738, %v3771
  %3773 = vmatmul.bf16.gmra.mxu0 %v2701
  %v3774 = vpop.f32.mrf.mxu0
  %v3775 = vadd.f32 %v3741, %v3774
  %v3776 = vpop.f32.mrf.mxu0
  %v3777 = vadd.f32 %v3743, %v3776
  %3778 = vdwg.mxu0
  %3779 = vmatpush.bf16.msra.mxu0 %v1743
  %3780 = vmatpush.bf16.msra.mxu0 %v1742
  %3781 = vmatpush.bf16.msra.mxu0 %v1741
  %3782 = vmatpush.bf16.msra.mxu0 %v1740
  %3783 = vmatpush.bf16.msra.mxu0 %v1739
  %3784 = vmatpush.bf16.msra.mxu0 %v1738
  %3785 = vmatpush.bf16.msra.mxu0 %v1737
  %3786 = vmatpush.bf16.msra.mxu0 %v1736
  %3787 = vmatmul.bf16.gmra.mxu0 %v2705
  %v3788 = vpop.f32.mrf.mxu0
  %v3789 = vadd.f32 %v3755, %v3788
  %v3790 = vpop.f32.mrf.mxu0
  %v3791 = vadd.f32 %v3757, %v3790
  %3792 = vmatmul.bf16.gmra.mxu0 %v2709
  %v3793 = vpop.f32.mrf.mxu0
  %v3794 = vadd.f32 %v3760, %v3793
  %v3795 = vpop.f32.mrf.mxu0
  %v3796 = vadd.f32 %v3762, %v3795
  %3797 = vmatmul.bf16.gmra.mxu0 %v2713
  %v3798 = vpop.f32.mrf.mxu0
  %v3799 = vadd.f32 %v3765, %v3798
  %v3800 = vpop.f32.mrf.mxu0
  %v3801 = vadd.f32 %v3767, %v3800
  %3802 = vmatmul.bf16.gmra.mxu0 %v2717
  %v3803 = vpop.f32.mrf.mxu0
  %v3804 = vadd.f32 %v3770, %v3803
  %v3805 = vpop.f32.mrf.mxu0
  %v3806 = vadd.f32 %v3772, %v3805
  %3807 = vmatmul.bf16.gmra.mxu0 %v2721
  %v3808 = vpop.f32.mrf.mxu0
  %v3809 = vadd.f32 %v3775, %v3808
  %v3810 = vpop.f32.mrf.mxu0
  %v3811 = vadd.f32 %v3777, %v3810
  %3812 = vdwg.mxu0
  %3813 = vmatpush.bf16.msra.mxu0 %v1751
  %3814 = vmatpush.bf16.msra.mxu0 %v1750
  %3815 = vmatpush.bf16.msra.mxu0 %v1749
  %3816 = vmatpush.bf16.msra.mxu0 %v1748
  %3817 = vmatpush.bf16.msra.mxu0 %v1747
  %3818 = vmatpush.bf16.msra.mxu0 %v1746
  %3819 = vmatpush.bf16.msra.mxu0 %v1745
  %3820 = vmatpush.bf16.msra.mxu0 %v1744
  %3821 = vmatmul.bf16.gmra.mxu0 %v3422
  %v3822 = vpop.f32.mrf.mxu0
  %v3823 = vadd.f32 %v3789, %v3822
  %v3824 = vpop.f32.mrf.mxu0
  %v3825 = vadd.f32 %v3791, %v3824
  %3826 = vmatmul.bf16.gmra.mxu0 %v3426
  %v3827 = vpop.f32.mrf.mxu0
  %v3828 = vadd.f32 %v3794, %v3827
  %v3829 = vpop.f32.mrf.mxu0
  %v3830 = vadd.f32 %v3796, %v3829
  %3831 = vmatmul.bf16.gmra.mxu0 %v3430
  %v3832 = vpop.f32.mrf.mxu0
  %v3833 = vadd.f32 %v3799, %v3832
  %v3834 = vpop.f32.mrf.mxu0
  %v3835 = vadd.f32 %v3801, %v3834
  %3836 = vmatmul.bf16.gmra.mxu0 %v3434
  %v3837 = vpop.f32.mrf.mxu0
  %v3838 = vadd.f32 %v3804, %v3837
  %v3839 = vpop.f32.mrf.mxu0
  %v3840 = vadd.f32 %v3806, %v3839
  %3841 = vmatmul.bf16.gmra.mxu0 %v3437
  %v3842 = vpop.f32.mrf.mxu0
  %v3843 = vadd.f32 %v3809, %v3842
  %v3844 = vpop.f32.mrf.mxu0
  %v3845 = vadd.f32 %v3811, %v3844
  %3846 = vdwg.mxu0
  %3847 = vmatpush.bf16.msra.mxu0 %v1759
  %3848 = vmatpush.bf16.msra.mxu0 %v1758
  %3849 = vmatpush.bf16.msra.mxu0 %v1757
  %3850 = vmatpush.bf16.msra.mxu0 %v1756
  %3851 = vmatpush.bf16.msra.mxu0 %v1755
  %3852 = vmatpush.bf16.msra.mxu0 %v1754
  %3853 = vmatpush.bf16.msra.mxu0 %v1753
  %3854 = vmatpush.bf16.msra.mxu0 %v1752
  %3855 = vmatmul.bf16.gmra.mxu0 %v3441
  %v3856 = vpop.f32.mrf.mxu0
  %v3857 = vadd.f32 %v3823, %v3856
  %v3858 = vpop.f32.mrf.mxu0
  %v3859 = vadd.f32 %v3825, %v3858
  %3860 = vmatmul.bf16.gmra.mxu0 %v3445
  %v3861 = vpop.f32.mrf.mxu0
  %v3862 = vadd.f32 %v3828, %v3861
  %v3863 = vpop.f32.mrf.mxu0
  %v3864 = vadd.f32 %v3830, %v3863
  %3865 = vmatmul.bf16.gmra.mxu0 %v3449
  %v3866 = vpop.f32.mrf.mxu0
  %v3867 = vadd.f32 %v3833, %v3866
  %v3868 = vpop.f32.mrf.mxu0
  %v3869 = vadd.f32 %v3835, %v3868
  %3870 = vmatmul.bf16.gmra.mxu0 %v3453
  %v3871 = vpop.f32.mrf.mxu0
  %v3872 = vadd.f32 %v3838, %v3871
  %v3873 = vpop.f32.mrf.mxu0
  %v3874 = vadd.f32 %v3840, %v3873
  %3875 = vmatmul.bf16.gmra.mxu0 %v3457
  %v3876 = vpop.f32.mrf.mxu0
  %v3877 = vadd.f32 %v3843, %v3876
  %v3878 = vpop.f32.mrf.mxu0
  %v3879 = vadd.f32 %v3845, %v3878
  %3880 = vdwg.mxu0
  %3881 = vmatpush.bf16.msra.mxu0 0
  %3882 = vmatpush.bf16.msra.mxu0 0
  %3883 = vmatpush.bf16.msra.mxu0 0
  %3884 = vmatpush.bf16.msra.mxu0 0
  %3885 = vmatpush.bf16.msra.mxu0 %v1763
  %3886 = vmatpush.bf16.msra.mxu0 %v1762
  %3887 = vmatpush.bf16.msra.mxu0 %v1761
  %3888 = vmatpush.bf16.msra.mxu0 %v1760
  %3889 = vmatmul.bf16.gmra.mxu0 %v3460
  %v3890 = vpop.f32.mrf.mxu0
  %v3891 = vadd.f32 %v3857, %v3890
  %v3892 = vpop.f32.mrf.mxu0
  %v3893 = vadd.f32 %v3859, %v3892
  %3894 = vmatmul.bf16.gmra.mxu0 %v3463
  %v3895 = vpop.f32.mrf.mxu0
  %v3896 = vadd.f32 %v3862, %v3895
  %v3897 = vpop.f32.mrf.mxu0
  %v3898 = vadd.f32 %v3864, %v3897
  %3899 = vmatmul.bf16.gmra.mxu0 %v3466
  %v3900 = vpop.f32.mrf.mxu0
  %v3901 = vadd.f32 %v3867, %v3900
  %v3902 = vpop.f32.mrf.mxu0
  %v3903 = vadd.f32 %v3869, %v3902
  %3904 = vmatmul.bf16.gmra.mxu0 %v3469
  %v3905 = vpop.f32.mrf.mxu0
  %v3906 = vadd.f32 %v3872, %v3905
  %v3907 = vpop.f32.mrf.mxu0
  %v3908 = vadd.f32 %v3874, %v3907
  %3909 = vmatmul.bf16.gmra.mxu0 %v3471
  %v3910 = vpop.f32.mrf.mxu0
  %v3911 = vadd.f32 %v3877, %v3910
  %v3912 = vpop.f32.mrf.mxu0
  %v3913 = vadd.f32 %v3879, %v3912
  %3914 = vdwg.mxu0
  %v3915 = vmax.f32 %v3179, %v3891
  %v3916 = vmax.f32 %v3180, %v3893
  %v3917 = vmax.f32 %v3181, %v3896
  %v3918 = vmax.f32 %v3182, %v3898
  %v3919 = vmax.f32 %v3183, %v3901
  %v3920 = vmax.f32 %v3184, %v3903
  %v3921 = vmax.f32 %v3185, %v3906
  %v3922 = vmax.f32 %v3186, %v3908
  %v3923 = vmax.f32 %v3187, %v3911
  %v3924 = vmax.f32 %v3188, %v3913
  %v3925 = vrot.slane %v2347, 3
  %v3926 = vrot.slane %v2348, 3
  %v3927 = vsel %vm583, %v3925, %v3926
  %v3928 = vrot.slane %v2349, 3
  %v3929 = vsel %vm583, %v3926, %v3928
  %v3930 = vrot.slane %v2350, 3
  %v3931 = vsel %vm583, %v3928, %v3930
  %v3932 = vrot.slane %v2351, 3
  %v3933 = vsel %vm583, %v3930, %v3932
  %v3934 = vrot.slane %v518, 7
  %v3937 = vsel %vm908, %v3932, %v3934
  %3939 = vrot.lane.b32.xlu0 %v777, 64
  %v3940 = vpop.permute.xlu0 %3939
  %3941 = vrot.lane.b32.xlu0 %v778, 64
  %v3942 = vpop.permute.xlu0 %3941
  %3943 = vrot.lane.b32.xlu0 %v779, 64
  %v3944 = vpop.permute.xlu0 %3943
  %3945 = vrot.lane.b32.xlu0 %v780, 64
  %v3946 = vpop.permute.xlu0 %3945
  %3947 = vrot.lane.b32.xlu0 %v2346, 64
  %v3948 = vpop.permute.xlu0 %3947
  %v3950 = vsel %vm998, %v2335, %v967
  %v3953 = vsel %vm998, %v2337, %v969
  %v3956 = vsel %vm998, %v2339, %v971
  %v3959 = vsel %vm998, %v2341, %v973
  %v3961 = vsel %vm998, %v2345, %v975
  %v3964 = vsel %vm998, %v667, %v3940
  %v3967 = vsel %vm998, %v668, %v3942
  %v3970 = vsel %vm998, %v669, %v3944
  %v3973 = vsel %vm998, %v670, %v3946
  %v3976 = vsel %vm998, %v674, %v3948
  %v3978 = vsel %vm998, %v2347, %v1166
  %v3980 = vsel %vm998, %v2348, %v1168
  %v3982 = vsel %vm998, %v2349, %v1170
  %v3984 = vsel %vm998, %v2350, %v1172
  %v3986 = vsel %vm998, %v2353, %v1174
  %3989 = vrot.lane.b32.xlu0 %v2356, 64
  %v3990 = vpop.permute.xlu0 %3989
  %3991 = vrot.lane.b32.xlu0 %v2358, 64
  %v3992 = vpop.permute.xlu0 %3991
  %3993 = vrot.lane.b32.xlu0 %v2360, 64
  %v3994 = vpop.permute.xlu0 %3993
  %3995 = vrot.lane.b32.xlu0 %v2362, 64
  %v3996 = vpop.permute.xlu0 %3995
  %3997 = vrot.lane.b32.xlu0 %v2366, 64
  %v3998 = vpop.permute.xlu0 %3997
  %4000 = vrot.lane.b32.xlu0 %v3229, 64
  %v4001 = vpop.permute.xlu0 %4000
  %4002 = vrot.lane.b32.xlu0 %v3237, 64
  %v4003 = vpop.permute.xlu0 %4002
  %4004 = vrot.lane.b32.xlu0 %v3245, 64
  %v4005 = vpop.permute.xlu0 %4004
  %4006 = vrot.lane.b32.xlu0 %v3253, 64
  %v4007 = vpop.permute.xlu0 %4006
  %4008 = vrot.lane.b32.xlu0 %v3259, 64
  %v4009 = vpop.permute.xlu0 %4008
  %4011 = vrot.lane.b32.xlu0 %v3311, 64
  %v4012 = vpop.permute.xlu0 %4011
  %4013 = vrot.lane.b32.xlu0 %v3313, 64
  %v4014 = vpop.permute.xlu0 %4013
  %4015 = vrot.lane.b32.xlu0 %v3315, 64
  %v4016 = vpop.permute.xlu0 %4015
  %4017 = vrot.lane.b32.xlu0 %v3317, 64
  %v4018 = vpop.permute.xlu0 %4017
  %4019 = vrot.lane.b32.xlu0 %v3321, 64
  %v4020 = vpop.permute.xlu0 %4019
  %v4022 = vsel %vm998, %v900, %v3990
  %v4025 = vsel %vm998, %v902, %v3992
  %v4028 = vsel %vm998, %v904, %v3994
  %v4031 = vsel %vm998, %v906, %v3996
  %v4034 = vsel %vm998, %v911, %v3998
  %v4038 = vsel %vm998, %v3204, %v4001
  %v4042 = vsel %vm998, %v3206, %v4003
  %v4046 = vsel %vm998, %v3208, %v4005
  %v4050 = vsel %vm998, %v3210, %v4007
  %v4053 = vsel %vm998, %v3214, %v4009
  %v4057 = vsel %vm998, %v3276, %v4012
  %v4061 = vsel %vm998, %v3285, %v4014
  %v4065 = vsel %vm998, %v3294, %v4016
  %v4069 = vsel %vm998, %v3302, %v4018
  %v4073 = vsel %vm998, %v3308, %v4020
  %v4076 = vsel %vm998, %v3927, 0
  %v4079 = vsel %vm998, %v3929, 0
  %v4082 = vsel %vm998, %v3931, 0
  %v4085 = vsel %vm998, %v3933, 0
  %v4087 = vsel %vm998, %v3937, 0
  %4089 = vmatpush.bf16.msra.mxu0 %v1671
  %4090 = vmatpush.bf16.msra.mxu0 %v1670
  %4091 = vmatpush.bf16.msra.mxu0 %v1669
  %4092 = vmatpush.bf16.msra.mxu0 %v1668
  %4093 = vmatpush.bf16.msra.mxu0 %v1667
  %4094 = vmatpush.bf16.msra.mxu0 %v1666
  %4095 = vmatpush.bf16.msra.mxu0 %v1665
  %4096 = vmatpush.bf16.msra.mxu0 %v1664
  %4097 = vmatmul.bf16.gmra.mxu0 %v1054
  %v4098 = vpop.f32.mrf.mxu0
  %v4099 = vadd.f32 0.0, %v4098
  %v4100 = vpop.f32.mrf.mxu0
  %v4101 = vadd.f32 0.0, %v4100
  %4102 = vmatmul.bf16.gmra.mxu0 %v1057
  %v4103 = vpop.f32.mrf.mxu0
  %v4104 = vadd.f32 0.0, %v4103
  %v4105 = vpop.f32.mrf.mxu0
  %v4106 = vadd.f32 0.0, %v4105
  %4107 = vmatmul.bf16.gmra.mxu0 %v1060
  %v4108 = vpop.f32.mrf.mxu0
  %v4109 = vadd.f32 0.0, %v4108
  %v4110 = vpop.f32.mrf.mxu0
  %v4111 = vadd.f32 0.0, %v4110
  %4112 = vmatmul.bf16.gmra.mxu0 %v1063
  %v4113 = vpop.f32.mrf.mxu0
  %v4114 = vadd.f32 0.0, %v4113
  %v4115 = vpop.f32.mrf.mxu0
  %v4116 = vadd.f32 0.0, %v4115
  %4117 = vmatmul.bf16.gmra.mxu0 %v1066
  %v4118 = vpop.f32.mrf.mxu0
  %v4119 = vadd.f32 0.0, %v4118
  %v4120 = vpop.f32.mrf.mxu0
  %v4121 = vadd.f32 0.0, %v4120
  %4122 = vdwg.mxu0
  %4123 = vmatpush.bf16.msra.mxu0 %v1679
  %4124 = vmatpush.bf16.msra.mxu0 %v1678
  %4125 = vmatpush.bf16.msra.mxu0 %v1677
  %4126 = vmatpush.bf16.msra.mxu0 %v1676
  %4127 = vmatpush.bf16.msra.mxu0 %v1675
  %4128 = vmatpush.bf16.msra.mxu0 %v1674
  %4129 = vmatpush.bf16.msra.mxu0 %v1673
  %4130 = vmatpush.bf16.msra.mxu0 %v1672
  %4131 = vmatmul.bf16.gmra.mxu0 %v1070
  %v4132 = vpop.f32.mrf.mxu0
  %v4133 = vadd.f32 %v4099, %v4132
  %v4134 = vpop.f32.mrf.mxu0
  %v4135 = vadd.f32 %v4101, %v4134
  %4136 = vmatmul.bf16.gmra.mxu0 %v1074
  %v4137 = vpop.f32.mrf.mxu0
  %v4138 = vadd.f32 %v4104, %v4137
  %v4139 = vpop.f32.mrf.mxu0
  %v4140 = vadd.f32 %v4106, %v4139
  %4141 = vmatmul.bf16.gmra.mxu0 %v1078
  %v4142 = vpop.f32.mrf.mxu0
  %v4143 = vadd.f32 %v4109, %v4142
  %v4144 = vpop.f32.mrf.mxu0
  %v4145 = vadd.f32 %v4111, %v4144
  %4146 = vmatmul.bf16.gmra.mxu0 %v1082
  %v4147 = vpop.f32.mrf.mxu0
  %v4148 = vadd.f32 %v4114, %v4147
  %v4149 = vpop.f32.mrf.mxu0
  %v4150 = vadd.f32 %v4116, %v4149
  %4151 = vmatmul.bf16.gmra.mxu0 %v1086
  %v4152 = vpop.f32.mrf.mxu0
  %v4153 = vadd.f32 %v4119, %v4152
  %v4154 = vpop.f32.mrf.mxu0
  %v4155 = vadd.f32 %v4121, %v4154
  %4156 = vdwg.mxu0
  %4157 = vmatpush.bf16.msra.mxu0 %v1687
  %4158 = vmatpush.bf16.msra.mxu0 %v1686
  %4159 = vmatpush.bf16.msra.mxu0 %v1685
  %4160 = vmatpush.bf16.msra.mxu0 %v1684
  %4161 = vmatpush.bf16.msra.mxu0 %v1683
  %4162 = vmatpush.bf16.msra.mxu0 %v1682
  %4163 = vmatpush.bf16.msra.mxu0 %v1681
  %4164 = vmatpush.bf16.msra.mxu0 %v1680
  %4165 = vmatmul.bf16.gmra.mxu0 %v3950
  %v4166 = vpop.f32.mrf.mxu0
  %v4167 = vadd.f32 %v4133, %v4166
  %v4168 = vpop.f32.mrf.mxu0
  %v4169 = vadd.f32 %v4135, %v4168
  %4170 = vmatmul.bf16.gmra.mxu0 %v3953
  %v4171 = vpop.f32.mrf.mxu0
  %v4172 = vadd.f32 %v4138, %v4171
  %v4173 = vpop.f32.mrf.mxu0
  %v4174 = vadd.f32 %v4140, %v4173
  %4175 = vmatmul.bf16.gmra.mxu0 %v3956
  %v4176 = vpop.f32.mrf.mxu0
  %v4177 = vadd.f32 %v4143, %v4176
  %v4178 = vpop.f32.mrf.mxu0
  %v4179 = vadd.f32 %v4145, %v4178
  %4180 = vmatmul.bf16.gmra.mxu0 %v3959
  %v4181 = vpop.f32.mrf.mxu0
  %v4182 = vadd.f32 %v4148, %v4181
  %v4183 = vpop.f32.mrf.mxu0
  %v4184 = vadd.f32 %v4150, %v4183
  %4185 = vmatmul.bf16.gmra.mxu0 %v3961
  %v4186 = vpop.f32.mrf.mxu0
  %v4187 = vadd.f32 %v4153, %v4186
  %v4188 = vpop.f32.mrf.mxu0
  %v4189 = vadd.f32 %v4155, %v4188
  %4190 = vdwg.mxu0
  %4191 = vmatpush.bf16.msra.mxu0 %v1695
  %4192 = vmatpush.bf16.msra.mxu0 %v1694
  %4193 = vmatpush.bf16.msra.mxu0 %v1693
  %4194 = vmatpush.bf16.msra.mxu0 %v1692
  %4195 = vmatpush.bf16.msra.mxu0 %v1691
  %4196 = vmatpush.bf16.msra.mxu0 %v1690
  %4197 = vmatpush.bf16.msra.mxu0 %v1689
  %4198 = vmatpush.bf16.msra.mxu0 %v1688
  %4199 = vmatmul.bf16.gmra.mxu0 %v1109
  %v4200 = vpop.f32.mrf.mxu0
  %v4201 = vadd.f32 %v4167, %v4200
  %v4202 = vpop.f32.mrf.mxu0
  %v4203 = vadd.f32 %v4169, %v4202
  %4204 = vmatmul.bf16.gmra.mxu0 %v1113
  %v4205 = vpop.f32.mrf.mxu0
  %v4206 = vadd.f32 %v4172, %v4205
  %v4207 = vpop.f32.mrf.mxu0
  %v4208 = vadd.f32 %v4174, %v4207
  %4209 = vmatmul.bf16.gmra.mxu0 %v1117
  %v4210 = vpop.f32.mrf.mxu0
  %v4211 = vadd.f32 %v4177, %v4210
  %v4212 = vpop.f32.mrf.mxu0
  %v4213 = vadd.f32 %v4179, %v4212
  %4214 = vmatmul.bf16.gmra.mxu0 %v1121
  %v4215 = vpop.f32.mrf.mxu0
  %v4216 = vadd.f32 %v4182, %v4215
  %v4217 = vpop.f32.mrf.mxu0
  %v4218 = vadd.f32 %v4184, %v4217
  %4219 = vmatmul.bf16.gmra.mxu0 %v1125
  %v4220 = vpop.f32.mrf.mxu0
  %v4221 = vadd.f32 %v4187, %v4220
  %v4222 = vpop.f32.mrf.mxu0
  %v4223 = vadd.f32 %v4189, %v4222
  %4224 = vdwg.mxu0
  %4225 = vmatpush.bf16.msra.mxu0 %v1703
  %4226 = vmatpush.bf16.msra.mxu0 %v1702
  %4227 = vmatpush.bf16.msra.mxu0 %v1701
  %4228 = vmatpush.bf16.msra.mxu0 %v1700
  %4229 = vmatpush.bf16.msra.mxu0 %v1699
  %4230 = vmatpush.bf16.msra.mxu0 %v1698
  %4231 = vmatpush.bf16.msra.mxu0 %v1697
  %4232 = vmatpush.bf16.msra.mxu0 %v1696
  %4233 = vmatmul.bf16.gmra.mxu0 %v3964
  %v4234 = vpop.f32.mrf.mxu0
  %v4235 = vadd.f32 %v4201, %v4234
  %v4236 = vpop.f32.mrf.mxu0
  %v4237 = vadd.f32 %v4203, %v4236
  %4238 = vmatmul.bf16.gmra.mxu0 %v3967
  %v4239 = vpop.f32.mrf.mxu0
  %v4240 = vadd.f32 %v4206, %v4239
  %v4241 = vpop.f32.mrf.mxu0
  %v4242 = vadd.f32 %v4208, %v4241
  %4243 = vmatmul.bf16.gmra.mxu0 %v3970
  %v4244 = vpop.f32.mrf.mxu0
  %v4245 = vadd.f32 %v4211, %v4244
  %v4246 = vpop.f32.mrf.mxu0
  %v4247 = vadd.f32 %v4213, %v4246
  %4248 = vmatmul.bf16.gmra.mxu0 %v3973
  %v4249 = vpop.f32.mrf.mxu0
  %v4250 = vadd.f32 %v4216, %v4249
  %v4251 = vpop.f32.mrf.mxu0
  %v4252 = vadd.f32 %v4218, %v4251
  %4253 = vmatmul.bf16.gmra.mxu0 %v3976
  %v4254 = vpop.f32.mrf.mxu0
  %v4255 = vadd.f32 %v4221, %v4254
  %v4256 = vpop.f32.mrf.mxu0
  %v4257 = vadd.f32 %v4223, %v4256
  %4258 = vdwg.mxu0
  %4259 = vmatpush.bf16.msra.mxu0 %v1711
  %4260 = vmatpush.bf16.msra.mxu0 %v1710
  %4261 = vmatpush.bf16.msra.mxu0 %v1709
  %4262 = vmatpush.bf16.msra.mxu0 %v1708
  %4263 = vmatpush.bf16.msra.mxu0 %v1707
  %4264 = vmatpush.bf16.msra.mxu0 %v1706
  %4265 = vmatpush.bf16.msra.mxu0 %v1705
  %4266 = vmatpush.bf16.msra.mxu0 %v1704
  %4267 = vmatmul.bf16.gmra.mxu0 %v1188
  %v4268 = vpop.f32.mrf.mxu0
  %v4269 = vadd.f32 %v4235, %v4268
  %v4270 = vpop.f32.mrf.mxu0
  %v4271 = vadd.f32 %v4237, %v4270
  %4272 = vmatmul.bf16.gmra.mxu0 %v1192
  %v4273 = vpop.f32.mrf.mxu0
  %v4274 = vadd.f32 %v4240, %v4273
  %v4275 = vpop.f32.mrf.mxu0
  %v4276 = vadd.f32 %v4242, %v4275
  %4277 = vmatmul.bf16.gmra.mxu0 %v1196
  %v4278 = vpop.f32.mrf.mxu0
  %v4279 = vadd.f32 %v4245, %v4278
  %v4280 = vpop.f32.mrf.mxu0
  %v4281 = vadd.f32 %v4247, %v4280
  %4282 = vmatmul.bf16.gmra.mxu0 %v1200
  %v4283 = vpop.f32.mrf.mxu0
  %v4284 = vadd.f32 %v4250, %v4283
  %v4285 = vpop.f32.mrf.mxu0
  %v4286 = vadd.f32 %v4252, %v4285
  %4287 = vmatmul.bf16.gmra.mxu0 %v1203
  %v4288 = vpop.f32.mrf.mxu0
  %v4289 = vadd.f32 %v4255, %v4288
  %v4290 = vpop.f32.mrf.mxu0
  %v4291 = vadd.f32 %v4257, %v4290
  %4292 = vdwg.mxu0
  %4293 = vmatpush.bf16.msra.mxu0 %v1719
  %4294 = vmatpush.bf16.msra.mxu0 %v1718
  %4295 = vmatpush.bf16.msra.mxu0 %v1717
  %4296 = vmatpush.bf16.msra.mxu0 %v1716
  %4297 = vmatpush.bf16.msra.mxu0 %v1715
  %4298 = vmatpush.bf16.msra.mxu0 %v1714
  %4299 = vmatpush.bf16.msra.mxu0 %v1713
  %4300 = vmatpush.bf16.msra.mxu0 %v1712
  %4301 = vmatmul.bf16.gmra.mxu0 %v1207
  %v4302 = vpop.f32.mrf.mxu0
  %v4303 = vadd.f32 %v4269, %v4302
  %v4304 = vpop.f32.mrf.mxu0
  %v4305 = vadd.f32 %v4271, %v4304
  %4306 = vmatmul.bf16.gmra.mxu0 %v1211
  %v4307 = vpop.f32.mrf.mxu0
  %v4308 = vadd.f32 %v4274, %v4307
  %v4309 = vpop.f32.mrf.mxu0
  %v4310 = vadd.f32 %v4276, %v4309
  %4311 = vmatmul.bf16.gmra.mxu0 %v1215
  %v4312 = vpop.f32.mrf.mxu0
  %v4313 = vadd.f32 %v4279, %v4312
  %v4314 = vpop.f32.mrf.mxu0
  %v4315 = vadd.f32 %v4281, %v4314
  %4316 = vmatmul.bf16.gmra.mxu0 %v1219
  %v4317 = vpop.f32.mrf.mxu0
  %v4318 = vadd.f32 %v4284, %v4317
  %v4319 = vpop.f32.mrf.mxu0
  %v4320 = vadd.f32 %v4286, %v4319
  %4321 = vmatmul.bf16.gmra.mxu0 %v1223
  %v4322 = vpop.f32.mrf.mxu0
  %v4323 = vadd.f32 %v4289, %v4322
  %v4324 = vpop.f32.mrf.mxu0
  %v4325 = vadd.f32 %v4291, %v4324
  %4326 = vdwg.mxu0
  %4327 = vmatpush.bf16.msra.mxu0 %v1727
  %4328 = vmatpush.bf16.msra.mxu0 %v1726
  %4329 = vmatpush.bf16.msra.mxu0 %v1725
  %4330 = vmatpush.bf16.msra.mxu0 %v1724
  %4331 = vmatpush.bf16.msra.mxu0 %v1723
  %4332 = vmatpush.bf16.msra.mxu0 %v1722
  %4333 = vmatpush.bf16.msra.mxu0 %v1721
  %4334 = vmatpush.bf16.msra.mxu0 %v1720
  %4335 = vmatmul.bf16.gmra.mxu0 %v3978
  %v4336 = vpop.f32.mrf.mxu0
  %v4337 = vadd.f32 %v4303, %v4336
  %v4338 = vpop.f32.mrf.mxu0
  %v4339 = vadd.f32 %v4305, %v4338
  %4340 = vmatmul.bf16.gmra.mxu0 %v3980
  %v4341 = vpop.f32.mrf.mxu0
  %v4342 = vadd.f32 %v4308, %v4341
  %v4343 = vpop.f32.mrf.mxu0
  %v4344 = vadd.f32 %v4310, %v4343
  %4345 = vmatmul.bf16.gmra.mxu0 %v3982
  %v4346 = vpop.f32.mrf.mxu0
  %v4347 = vadd.f32 %v4313, %v4346
  %v4348 = vpop.f32.mrf.mxu0
  %v4349 = vadd.f32 %v4315, %v4348
  %4350 = vmatmul.bf16.gmra.mxu0 %v3984
  %v4351 = vpop.f32.mrf.mxu0
  %v4352 = vadd.f32 %v4318, %v4351
  %v4353 = vpop.f32.mrf.mxu0
  %v4354 = vadd.f32 %v4320, %v4353
  %4355 = vmatmul.bf16.gmra.mxu0 %v3986
  %v4356 = vpop.f32.mrf.mxu0
  %v4357 = vadd.f32 %v4323, %v4356
  %v4358 = vpop.f32.mrf.mxu0
  %v4359 = vadd.f32 %v4325, %v4358
  %4360 = vdwg.mxu0
  %4361 = vmatpush.bf16.msra.mxu0 %v1735
  %4362 = vmatpush.bf16.msra.mxu0 %v1734
  %4363 = vmatpush.bf16.msra.mxu0 %v1733
  %4364 = vmatpush.bf16.msra.mxu0 %v1732
  %4365 = vmatpush.bf16.msra.mxu0 %v1731
  %4366 = vmatpush.bf16.msra.mxu0 %v1730
  %4367 = vmatpush.bf16.msra.mxu0 %v1729
  %4368 = vmatpush.bf16.msra.mxu0 %v1728
  %4369 = vmatmul.bf16.gmra.mxu0 %v1246
  %v4370 = vpop.f32.mrf.mxu0
  %v4371 = vadd.f32 %v4337, %v4370
  %v4372 = vpop.f32.mrf.mxu0
  %v4373 = vadd.f32 %v4339, %v4372
  %4374 = vmatmul.bf16.gmra.mxu0 %v1250
  %v4375 = vpop.f32.mrf.mxu0
  %v4376 = vadd.f32 %v4342, %v4375
  %v4377 = vpop.f32.mrf.mxu0
  %v4378 = vadd.f32 %v4344, %v4377
  %4379 = vmatmul.bf16.gmra.mxu0 %v1254
  %v4380 = vpop.f32.mrf.mxu0
  %v4381 = vadd.f32 %v4347, %v4380
  %v4382 = vpop.f32.mrf.mxu0
  %v4383 = vadd.f32 %v4349, %v4382
  %4384 = vmatmul.bf16.gmra.mxu0 %v1258
  %v4385 = vpop.f32.mrf.mxu0
  %v4386 = vadd.f32 %v4352, %v4385
  %v4387 = vpop.f32.mrf.mxu0
  %v4388 = vadd.f32 %v4354, %v4387
  %4389 = vmatmul.bf16.gmra.mxu0 %v1262
  %v4390 = vpop.f32.mrf.mxu0
  %v4391 = vadd.f32 %v4357, %v4390
  %v4392 = vpop.f32.mrf.mxu0
  %v4393 = vadd.f32 %v4359, %v4392
  %4394 = vdwg.mxu0
  %4395 = vmatpush.bf16.msra.mxu0 %v1743
  %4396 = vmatpush.bf16.msra.mxu0 %v1742
  %4397 = vmatpush.bf16.msra.mxu0 %v1741
  %4398 = vmatpush.bf16.msra.mxu0 %v1740
  %4399 = vmatpush.bf16.msra.mxu0 %v1739
  %4400 = vmatpush.bf16.msra.mxu0 %v1738
  %4401 = vmatpush.bf16.msra.mxu0 %v1737
  %4402 = vmatpush.bf16.msra.mxu0 %v1736
  %4403 = vmatmul.bf16.gmra.mxu0 %v4022
  %v4404 = vpop.f32.mrf.mxu0
  %v4405 = vadd.f32 %v4371, %v4404
  %v4406 = vpop.f32.mrf.mxu0
  %v4407 = vadd.f32 %v4373, %v4406
  %4408 = vmatmul.bf16.gmra.mxu0 %v4025
  %v4409 = vpop.f32.mrf.mxu0
  %v4410 = vadd.f32 %v4376, %v4409
  %v4411 = vpop.f32.mrf.mxu0
  %v4412 = vadd.f32 %v4378, %v4411
  %4413 = vmatmul.bf16.gmra.mxu0 %v4028
  %v4414 = vpop.f32.mrf.mxu0
  %v4415 = vadd.f32 %v4381, %v4414
  %v4416 = vpop.f32.mrf.mxu0
  %v4417 = vadd.f32 %v4383, %v4416
  %4418 = vmatmul.bf16.gmra.mxu0 %v4031
  %v4419 = vpop.f32.mrf.mxu0
  %v4420 = vadd.f32 %v4386, %v4419
  %v4421 = vpop.f32.mrf.mxu0
  %v4422 = vadd.f32 %v4388, %v4421
  %4423 = vmatmul.bf16.gmra.mxu0 %v4034
  %v4424 = vpop.f32.mrf.mxu0
  %v4425 = vadd.f32 %v4391, %v4424
  %v4426 = vpop.f32.mrf.mxu0
  %v4427 = vadd.f32 %v4393, %v4426
  %4428 = vdwg.mxu0
  %4429 = vmatpush.bf16.msra.mxu0 %v1751
  %4430 = vmatpush.bf16.msra.mxu0 %v1750
  %4431 = vmatpush.bf16.msra.mxu0 %v1749
  %4432 = vmatpush.bf16.msra.mxu0 %v1748
  %4433 = vmatpush.bf16.msra.mxu0 %v1747
  %4434 = vmatpush.bf16.msra.mxu0 %v1746
  %4435 = vmatpush.bf16.msra.mxu0 %v1745
  %4436 = vmatpush.bf16.msra.mxu0 %v1744
  %4437 = vmatmul.bf16.gmra.mxu0 %v4038
  %v4438 = vpop.f32.mrf.mxu0
  %v4439 = vadd.f32 %v4405, %v4438
  %v4440 = vpop.f32.mrf.mxu0
  %v4441 = vadd.f32 %v4407, %v4440
  %4442 = vmatmul.bf16.gmra.mxu0 %v4042
  %v4443 = vpop.f32.mrf.mxu0
  %v4444 = vadd.f32 %v4410, %v4443
  %v4445 = vpop.f32.mrf.mxu0
  %v4446 = vadd.f32 %v4412, %v4445
  %4447 = vmatmul.bf16.gmra.mxu0 %v4046
  %v4448 = vpop.f32.mrf.mxu0
  %v4449 = vadd.f32 %v4415, %v4448
  %v4450 = vpop.f32.mrf.mxu0
  %v4451 = vadd.f32 %v4417, %v4450
  %4452 = vmatmul.bf16.gmra.mxu0 %v4050
  %v4453 = vpop.f32.mrf.mxu0
  %v4454 = vadd.f32 %v4420, %v4453
  %v4455 = vpop.f32.mrf.mxu0
  %v4456 = vadd.f32 %v4422, %v4455
  %4457 = vmatmul.bf16.gmra.mxu0 %v4053
  %v4458 = vpop.f32.mrf.mxu0
  %v4459 = vadd.f32 %v4425, %v4458
  %v4460 = vpop.f32.mrf.mxu0
  %v4461 = vadd.f32 %v4427, %v4460
  %4462 = vdwg.mxu0
  %4463 = vmatpush.bf16.msra.mxu0 %v1759
  %4464 = vmatpush.bf16.msra.mxu0 %v1758
  %4465 = vmatpush.bf16.msra.mxu0 %v1757
  %4466 = vmatpush.bf16.msra.mxu0 %v1756
  %4467 = vmatpush.bf16.msra.mxu0 %v1755
  %4468 = vmatpush.bf16.msra.mxu0 %v1754
  %4469 = vmatpush.bf16.msra.mxu0 %v1753
  %4470 = vmatpush.bf16.msra.mxu0 %v1752
  %4471 = vmatmul.bf16.gmra.mxu0 %v4057
  %v4472 = vpop.f32.mrf.mxu0
  %v4473 = vadd.f32 %v4439, %v4472
  %v4474 = vpop.f32.mrf.mxu0
  %v4475 = vadd.f32 %v4441, %v4474
  %4476 = vmatmul.bf16.gmra.mxu0 %v4061
  %v4477 = vpop.f32.mrf.mxu0
  %v4478 = vadd.f32 %v4444, %v4477
  %v4479 = vpop.f32.mrf.mxu0
  %v4480 = vadd.f32 %v4446, %v4479
  %4481 = vmatmul.bf16.gmra.mxu0 %v4065
  %v4482 = vpop.f32.mrf.mxu0
  %v4483 = vadd.f32 %v4449, %v4482
  %v4484 = vpop.f32.mrf.mxu0
  %v4485 = vadd.f32 %v4451, %v4484
  %4486 = vmatmul.bf16.gmra.mxu0 %v4069
  %v4487 = vpop.f32.mrf.mxu0
  %v4488 = vadd.f32 %v4454, %v4487
  %v4489 = vpop.f32.mrf.mxu0
  %v4490 = vadd.f32 %v4456, %v4489
  %4491 = vmatmul.bf16.gmra.mxu0 %v4073
  %v4492 = vpop.f32.mrf.mxu0
  %v4493 = vadd.f32 %v4459, %v4492
  %v4494 = vpop.f32.mrf.mxu0
  %v4495 = vadd.f32 %v4461, %v4494
  %4496 = vdwg.mxu0
  %4497 = vmatpush.bf16.msra.mxu0 0
  %4498 = vmatpush.bf16.msra.mxu0 0
  %4499 = vmatpush.bf16.msra.mxu0 0
  %4500 = vmatpush.bf16.msra.mxu0 0
  %4501 = vmatpush.bf16.msra.mxu0 %v1763
  %4502 = vmatpush.bf16.msra.mxu0 %v1762
  %4503 = vmatpush.bf16.msra.mxu0 %v1761
  %4504 = vmatpush.bf16.msra.mxu0 %v1760
  %4505 = vmatmul.bf16.gmra.mxu0 %v4076
  %v4506 = vpop.f32.mrf.mxu0
  %v4507 = vadd.f32 %v4473, %v4506
  %v4508 = vpop.f32.mrf.mxu0
  %v4509 = vadd.f32 %v4475, %v4508
  %4510 = vmatmul.bf16.gmra.mxu0 %v4079
  %v4511 = vpop.f32.mrf.mxu0
  %v4512 = vadd.f32 %v4478, %v4511
  %v4513 = vpop.f32.mrf.mxu0
  %v4514 = vadd.f32 %v4480, %v4513
  %4515 = vmatmul.bf16.gmra.mxu0 %v4082
  %v4516 = vpop.f32.mrf.mxu0
  %v4517 = vadd.f32 %v4483, %v4516
  %v4518 = vpop.f32.mrf.mxu0
  %v4519 = vadd.f32 %v4485, %v4518
  %4520 = vmatmul.bf16.gmra.mxu0 %v4085
  %v4521 = vpop.f32.mrf.mxu0
  %v4522 = vadd.f32 %v4488, %v4521
  %v4523 = vpop.f32.mrf.mxu0
  %v4524 = vadd.f32 %v4490, %v4523
  %4525 = vmatmul.bf16.gmra.mxu0 %v4087
  %v4526 = vpop.f32.mrf.mxu0
  %v4527 = vadd.f32 %v4493, %v4526
  %v4528 = vpop.f32.mrf.mxu0
  %v4529 = vadd.f32 %v4495, %v4528
  %4530 = vdwg.mxu0
  %v4531 = vmax.f32 %v3915, %v4507
  %v4532 = vmax.f32 %v3916, %v4509
  %v4533 = vmax.f32 %v3917, %v4512
  %v4534 = vmax.f32 %v3918, %v4514
  %v4535 = vmax.f32 %v3919, %v4517
  %v4536 = vmax.f32 %v3920, %v4519
  %v4537 = vmax.f32 %v3921, %v4522
  %v4538 = vmax.f32 %v3922, %v4524
  %v4539 = vmax.f32 %v3923, %v4527
  %v4540 = vmax.f32 %v3924, %v4529
  %v4541 = vld [vmem:[%s5] sm:$0x1]
  %v4543 = vperm.slane %v4541, 0
  %v4545 = vadd.f32 %v4531, %v4543
  %v4546 = vadd.f32 %v4532, %v4543
  %v4547 = vadd.f32 %v4533, %v4543
  %v4548 = vadd.f32 %v4534, %v4543
  %v4549 = vadd.f32 %v4535, %v4543
  %v4550 = vadd.f32 %v4536, %v4543
  %v4551 = vadd.f32 %v4537, %v4543
  %v4552 = vadd.f32 %v4538, %v4543
  %v4553 = vadd.f32 %v4539, %v4543
  %v4554 = vadd.f32 %v4540, %v4543
  %v4555 = vmax.f32 %v4545, 0.0
  %v4556 = vmax.f32 %v4546, 0.0
  %v4557 = vmax.f32 %v4547, 0.0
  %v4558 = vmax.f32 %v4548, 0.0
  %v4559 = vmax.f32 %v4549, 0.0
  %v4560 = vmax.f32 %v4550, 0.0
  %v4561 = vmax.f32 %v4551, 0.0
  %v4562 = vmax.f32 %v4552, 0.0
  %v4563 = vmax.f32 %v4553, 0.0
  %v4564 = vmax.f32 %v4554, 0.0
  %v4565 = vpack.c.bf16 %v4555, %v4555
  %v4566 = vpack.c.bf16 %v4556, %v4556
  %v4567 = vpack.c.bf16 %v4557, %v4557
  %v4568 = vpack.c.bf16 %v4558, %v4558
  %v4569 = vpack.c.bf16 %v4559, %v4559
  %v4570 = vpack.c.bf16 %v4560, %v4560
  %v4571 = vpack.c.bf16 %v4561, %v4561
  %v4572 = vpack.c.bf16 %v4562, %v4562
  %v4573 = vpack.c.bf16 %v4563, %v4563
  %v4574 = vpack.c.bf16 %v4564, %v4564
  %vm4575 = vcmask 519168
  %4576 = vst.msk [vmem:[%s6] sm:$0xf] %vm4575, %v4565
  %4577 = vst.msk [vmem:[%s6 + $0x4] sm:$0xf] %vm4575, %v4566
  %4578 = vst.msk [vmem:[%s6 + $0x8] sm:$0xf] %vm4575, %v4567
  %4579 = vst.msk [vmem:[%s6 + $0xc] sm:$0xf] %vm4575, %v4568
  %4580 = vst.msk [vmem:[%s6 + $0x10] sm:$0xf] %vm4575, %v4569
  %4581 = vst.msk [vmem:[%s6 + $0x14] sm:$0xf] %vm4575, %v4570
  %4582 = vst.msk [vmem:[%s6 + $0x18] sm:$0xf] %vm4575, %v4571
  %4583 = vst.msk [vmem:[%s6 + $0x1c] sm:$0xf] %vm4575, %v4572
  %4584 = vst.msk [vmem:[%s6 + $0x20] sm:$0xf] %vm4575, %v4573
  %4585 = vst.msk [vmem:[%s6 + $0x24] sm:$0xf] %vm4575, %v4574
  // Predicated region
  $region26: #{cnn_model_forward.4} parent=0 // pred_check
    _
  $region27: #{cnn_model_forward.4} parent=0 // pred_check_branch
    %4587 = sbr.rel (0) target = $region29
  $region28: #{cnn_model_forward.4} parent=0 // pred_region
    _
  $region29: #{cnn_model_forward.4} parent=0 // pred_fallthru
    _
  // Predicated region
  $region30: #{cnn_model_forward.4} parent=0 // pred_check
    _
  $region31: #{cnn_model_forward.4} parent=0 // pred_check_branch
    %4589 = sbr.rel (0) target = $region33
  $region32: #{cnn_model_forward.4} parent=0 // pred_region
    _
  $region33: #{cnn_model_forward.4} parent=0 // pred_fallthru
    _

</llo_original>
